<compile_context>
chip_gen: v7x
topology: tpu7x:2x2x1
jax: 0.10.0
libtpu: 0.0.40
codegen_flags: <defaults>
</compile_context>

<pallas_src>
import jax
import jax.numpy as jnp
from jax.experimental import pallas as pl
from jax.experimental.pallas import tpu as pltpu


# (Cout, kernel, stride) -- scaled-down CREPE-style stack on a 1024-sample frame
ARCH = [
    (32, 16, 4),
    (8, 8, 1),
    (8, 8, 1),
    (8, 8, 1),
    (16, 8, 1),
    (32, 8, 1),
]
DENSE_OUT = 360


# ----------------------------- fused Pallas kernel --------------------------

def _crepe_fused_kernel(xcol_ref,
                        w1, p1, w2, p2, w3, p3, w4, p4, w5, p5, w6, p6,
                        wd, bd, o_ref,
                        b1, b2, b3, b4, b5, b6):
    """Entire CREPE forward for one batch element; activations live in VMEM."""
    f32 = jnp.float32

    def post(z, p_ref):
        # bias + ReLU, then inference BatchNorm folded to one scale/shift FMA.
        z = jnp.maximum(z + p_ref[pl.ds(0, 1), :], 0.0)
        return z * p_ref[pl.ds(1, 1), :] + p_ref[pl.ds(2, 1), :]

    def pool_into(buf, z, l_in, pad_next):
        """MaxPool1d(2,2) on conv output `z` (l_in, C); if another conv follows,
        park the pooled activation zero-padded (3 left / 4 right, K=8 'same')
        at row offset 8 of the same scratch buffer."""
        c = buf.shape[1]
        buf[pl.ds(0, l_in), :] = z
        lh = l_in // 2
        pooled = jnp.maximum(buf[pl.ds(0, lh, stride=2), :],
                             buf[pl.ds(1, lh, stride=2), :])
        if pad_next:
            zeros8 = jnp.zeros((8, c), f32)
            buf[pl.ds(0, 8), :] = zeros8             # left pad (rows 5..7 used)
            buf[pl.ds(8 + lh, 8), :] = zeros8        # right pad (rows 8+lh..11+lh)
            buf[pl.ds(8, lh), :] = pooled
        return pooled

    def conv_same(buf, w_ref, p_ref, lh):
        """Stride-1 'same' Conv1d (K=8) reading the padded pooled activation
        parked in `buf`; per-tap MXU accumulation (taps at row offsets 5..12)."""
        k_taps, _, cout = w_ref.shape
        acc = jnp.zeros((lh, cout), f32)
        for k in range(k_taps):                      # static unroll, K = 8
            acc = acc + jnp.dot(buf[pl.ds(5 + k, lh), :], w_ref[k],
                                preferred_element_type=f32)
        return post(acc, p_ref)

    # ---- layer 1: stride-4 conv as a single im2col matmul (im2col in wrapper)
    z = jnp.dot(xcol_ref[...], w1[...], preferred_element_type=f32)   # (256, 32)
    pool_into(b1, post(z, p1), 256, True)

    # ---- layers 2..6: Conv1d('same') + ReLU + BN + MaxPool(2,2), all in VMEM
    pool_into(b2, conv_same(b1, w2, p2, 128), 128, True)
    pool_into(b3, conv_same(b2, w3, p3, 64), 64, True)
    pool_into(b4, conv_same(b3, w4, p4, 32), 32, True)
    pool_into(b5, conv_same(b4, w5, p5, 16), 16, True)
    pooled = pool_into(b6, conv_same(b5, w6, p6, 8), 8, False)        # (4, 32)

    # ---- dense (128 -> 360) + sigmoid; (L, C) flatten == permute(0,2,1).view
    acc = bd[...]                                                     # (1, 360)
    for r in range(4):
        acc = acc + jnp.dot(pooled[r:r + 1, :], wd[r],
                            preferred_element_type=f32)
    o_ref[...] = 1.0 / (1.0 + jnp.exp(-acc))


# ------------------------------ wrappers -------------------------------------

def _same_pad(L, K, S):
    Lout = L // S
    Pc = (Lout - 1) * S + (K - 1) + 1 - L
    left = Pc // 2
    right = Pc - left
    return Lout, left, right


def preprocess_params(params, eps=0.0):
    """One-time repack of PyTorch-layout parameters into kernel layouts."""
    def bn_pack(bias, bn):
        scale = bn["gamma"] / jnp.sqrt(bn["var"] + eps)   # eps=0.0 per module
        shift = bn["beta"] - bn["mean"] * scale
        return jnp.stack([bias, scale, shift], axis=0)    # (3, Cout)

    args = []
    for i, (cp, bp) in enumerate(zip(params["convs"], params["bns"])):
        w = jnp.transpose(cp["w"], (2, 1, 0))             # (K, Cin, Cout)
        if i == 0:                                        # layer-1 im2col weight
            w = w.reshape(w.shape[0] * w.shape[1], w.shape[2])   # (16, 32)
        args.append(w)
        args.append(bn_pack(cp["b"], bp))
    wd = jnp.transpose(params["dense"]["w"]).reshape(4, 32, DENSE_OUT)
    args.append(wd)
    args.append(params["dense"]["b"].reshape(1, DENSE_OUT))
    return tuple(args)


def crepe_forward(x_ncl, prep):
    """Fused Pallas forward pass.  x_ncl: (N, 1, 1024) float32 (PyTorch NCL)."""
    N = x_ncl.shape[0]
    # Layer-1 im2col (layout plumbing only): 'same' with stride 4, K=16
    # -> pad (6, 6); xcol[n, t, k] = xpad[n, 4*t + k].
    xpad = jnp.pad(x_ncl[:, 0, :], ((0, 0), (6, 6)))              # (N, 1036)
    idx = 4 * jnp.arange(256)[:, None] + jnp.arange(16)[None, :]
    xcol = xpad[:, idx]                                           # (N, 256, 16)

    def _full_spec(shape):
        nd = len(shape)
        return pl.BlockSpec(shape, lambda n, nd=nd: (0,) * nd)

    in_specs = [pl.BlockSpec((None, 256, 16), lambda n: (n, 0, 0))]
    in_specs += [_full_spec(a.shape) for a in prep]

    out = pl.pallas_call(
        _crepe_fused_kernel,
        out_shape=jax.ShapeDtypeStruct((N, 1, DENSE_OUT), jnp.float32),
        grid=(N,),
        in_specs=in_specs,
        out_specs=pl.BlockSpec((None, 1, DENSE_OUT), lambda n: (n, 0, 0)),
        scratch_shapes=[
            pltpu.VMEM((256, 32), jnp.float32),   # layer-1 out / padded pooled
            pltpu.VMEM((128, 8), jnp.float32),    # layer-2
            pltpu.VMEM((64, 8), jnp.float32),     # layer-3
            pltpu.VMEM((32, 8), jnp.float32),     # layer-4
            pltpu.VMEM((24, 16), jnp.float32),    # layer-5
            pltpu.VMEM((8, 32), jnp.float32),     # layer-6
        ],
        compiler_params=pltpu.CompilerParams(dimension_semantics=("parallel",)),
    )(xcol, *prep)
    return out[:, 0, :]


# ------------------------------ model params ---------------------------------

def init_params(key):
    params = {"convs": [], "bns": []}
    cin, L = 1, 1024
    for (cout, K, S) in ARCH:
        key, k1, k2, k3, k4, k5, k6 = jax.random.split(key, 7)
        params["convs"].append({
            "w": jax.random.normal(k1, (cout, cin, K), jnp.float32) * 0.1,
            "b": jax.random.normal(k2, (cout,), jnp.float32) * 0.1,
            "stride": S,
        })
        params["bns"].append({
            "gamma": jax.random.uniform(k3, (cout,), jnp.float32, 0.5, 1.5),
            "beta": jax.random.normal(k4, (cout,), jnp.float32) * 0.1,
            "mean": jax.random.normal(k5, (cout,), jnp.float32) * 0.1,
            "var": jax.random.uniform(k6, (cout,), jnp.float32, 0.5, 1.5),
        })
        cin = cout
        L = (L // S) // 2
    F = cin * L
    key, k1, k2 = jax.random.split(key, 3)
    params["dense"] = {
        "w": jax.random.normal(k1, (DENSE_OUT, F), jnp.float32) * 0.05,
        "b": jax.random.normal(k2, (DENSE_OUT,), jnp.float32) * 0.05,
    }
    return params


# --------------------------- pure-JAX reference ------------------------------

def ref_forward(x_ncl, params):
    x = x_ncl
    for cp, bp in zip(params["convs"], params["bns"]):
        N, Cin, L = x.shape
        Cout, _, K = cp["w"].shape
        S = cp["stride"]
        _, left, right = _same_pad(L, K, S)
        xp = jnp.pad(x, ((0, 0), (0, 0), (left, right)))
        y = jax.lax.conv_general_dilated(
            xp, cp["w"], window_strides=(S,), padding="VALID",
            dimension_numbers=("NCH", "OIH", "NCH"),
            precision=jax.lax.Precision.HIGHEST)
        y = jnp.maximum(y + cp["b"][None, :, None], 0.0)
        inv_std = bp["gamma"] / jnp.sqrt(bp["var"])          # eps = 0.0
        y = (y - bp["mean"][None, :, None]) * inv_std[None, :, None] \
            + bp["beta"][None, :, None]
        Lh = y.shape[2] // 2
        y = y[:, :, : Lh * 2].reshape(N, Cout, Lh, 2).max(axis=-1)
        x = y
    xf = jnp.transpose(x, (0, 2, 1)).reshape(x.shape[0], -1)
    z = jnp.dot(xf, params["dense"]["w"].T,
                precision=jax.lax.Precision.HIGHEST) + params["dense"]["b"]
    return 1.0 / (1.0 + jnp.exp(-z))


# -------------------------------- main ----------------------------------------

if __name__ == "__main__":
    key = jax.random.PRNGKey(0)
    pkey, xkey = jax.random.split(key)
    params = init_params(pkey)
    prep = preprocess_params(params)                       # one-time repack
    x = jax.random.normal(xkey, (2, 1, 1024), jnp.float32)  # (N, C=1, L=1024)

    fwd = jax.jit(crepe_forward)
    y = jax.block_until_ready(fwd(x, prep))

    assert y.shape == (2, DENSE_OUT), y.shape
    y_ref = ref_forward(x, params)
    if not jnp.allclose(y, y_ref, atol=1e-2, rtol=1e-2):
        max_err = float(jnp.max(jnp.abs(y - y_ref)))
        raise AssertionError(f"Pallas output mismatch vs reference, max_err={max_err}")

    print("KERNEL_OK")
</pallas_src>

<mosaic_0001>
module attributes {stable_mosaic.version = 11 : i64} {
  func.func @_crepe_fused_kernel(%arg0: i32, %arg1: memref<1x256x16xf32, #tpu.memory_space<vmem>>, %arg2: memref<16x32xf32, #tpu.memory_space<vmem>>, %arg3: memref<3x32xf32, #tpu.memory_space<vmem>>, %arg4: memref<8x32x8xf32, #tpu.memory_space<vmem>>, %arg5: memref<3x8xf32, #tpu.memory_space<vmem>>, %arg6: memref<8x8x8xf32, #tpu.memory_space<vmem>>, %arg7: memref<3x8xf32, #tpu.memory_space<vmem>>, %arg8: memref<8x8x8xf32, #tpu.memory_space<vmem>>, %arg9: memref<3x8xf32, #tpu.memory_space<vmem>>, %arg10: memref<8x8x16xf32, #tpu.memory_space<vmem>>, %arg11: memref<3x16xf32, #tpu.memory_space<vmem>>, %arg12: memref<8x16x32xf32, #tpu.memory_space<vmem>>, %arg13: memref<3x32xf32, #tpu.memory_space<vmem>>, %arg14: memref<4x32x360xf32, #tpu.memory_space<vmem>>, %arg15: memref<1x360xf32, #tpu.memory_space<vmem>>, %arg16: memref<1x1x360xf32, #tpu.memory_space<vmem>>, %arg17: memref<256x32xf32, #tpu.memory_space<vmem>>, %arg18: memref<128x8xf32, #tpu.memory_space<vmem>>, %arg19: memref<64x8xf32, #tpu.memory_space<vmem>>, %arg20: memref<32x8xf32, #tpu.memory_space<vmem>>, %arg21: memref<24x16xf32, #tpu.memory_space<vmem>>, %arg22: memref<8x32xf32, #tpu.memory_space<vmem>>) attributes {dimension_semantics = [#tpu.dimension_semantics<parallel>], iteration_bounds = array<i64: 2>, scalar_prefetch = 0 : i64, scratch_operands = 6 : i64, tpu.core_type = #tpu.core_type<tc>, window_params = [{transform_indices = @transform_0, window_bounds = array<i64: 1, 256, 16>}, {pipeline_mode = #tpu.pipeline_mode<synchronous>, transform_indices = @transform_1, window_bounds = array<i64: 16, 32>}, {pipeline_mode = #tpu.pipeline_mode<synchronous>, transform_indices = @transform_2, window_bounds = array<i64: 3, 32>}, {pipeline_mode = #tpu.pipeline_mode<synchronous>, transform_indices = @transform_3, window_bounds = array<i64: 8, 32, 8>}, {pipeline_mode = #tpu.pipeline_mode<synchronous>, transform_indices = @transform_4, window_bounds = array<i64: 3, 8>}, {pipeline_mode = #tpu.pipeline_mode<synchronous>, transform_indices = @transform_5, window_bounds = array<i64: 8, 8, 8>}, {pipeline_mode = #tpu.pipeline_mode<synchronous>, transform_indices = @transform_6, window_bounds = array<i64: 3, 8>}, {pipeline_mode = #tpu.pipeline_mode<synchronous>, transform_indices = @transform_7, window_bounds = array<i64: 8, 8, 8>}, {pipeline_mode = #tpu.pipeline_mode<synchronous>, transform_indices = @transform_8, window_bounds = array<i64: 3, 8>}, {pipeline_mode = #tpu.pipeline_mode<synchronous>, transform_indices = @transform_9, window_bounds = array<i64: 8, 8, 16>}, {pipeline_mode = #tpu.pipeline_mode<synchronous>, transform_indices = @transform_10, window_bounds = array<i64: 3, 16>}, {pipeline_mode = #tpu.pipeline_mode<synchronous>, transform_indices = @transform_11, window_bounds = array<i64: 8, 16, 32>}, {pipeline_mode = #tpu.pipeline_mode<synchronous>, transform_indices = @transform_12, window_bounds = array<i64: 3, 32>}, {pipeline_mode = #tpu.pipeline_mode<synchronous>, transform_indices = @transform_13, window_bounds = array<i64: 4, 32, 360>}, {pipeline_mode = #tpu.pipeline_mode<synchronous>, transform_indices = @transform_14, window_bounds = array<i64: 1, 360>}, {transform_indices = @transform_15, window_bounds = array<i64: 1, 1, 360>}]} {
    %c0 = arith.constant 0 : index
    %c0_0 = arith.constant 0 : index
    %c0_1 = arith.constant 0 : index
    %0 = vector.load %arg1[%c0, %c0_0, %c0_1] : memref<1x256x16xf32, #tpu.memory_space<vmem>>, vector<1x256x16xf32>
    %1 = vector.shape_cast %0 : vector<1x256x16xf32> to vector<256x16xf32>
    %c0_2 = arith.constant 0 : index
    %c0_3 = arith.constant 0 : index
    %2 = vector.load %arg2[%c0_2, %c0_3] : memref<16x32xf32, #tpu.memory_space<vmem>>, vector<16x32xf32>
    %cst = arith.constant dense<0.000000e+00> : vector<256x32xf32>
    %3 = tpu.matmul %1, %2, %cst {dimension_numbers = #tpu.dot_dimension_numbers<[1], [0], [0], [1], [0, 0, 1, 1], [], []>} : vector<256x16xf32>, vector<16x32xf32>, vector<256x32xf32> -> vector<256x32xf32>
    %c0_4 = arith.constant 0 : index
    %c0_5 = arith.constant 0 : index
    %4 = vector.load %arg3[%c0_4, %c0_5] : memref<3x32xf32, #tpu.memory_space<vmem>>, vector<1x32xf32>
    %5 = vector.broadcast %4 : vector<1x32xf32> to vector<256x32xf32>
    %6 = arith.addf %3, %5 : vector<256x32xf32>
    %cst_6 = arith.constant 0.000000e+00 : f32
    %7 = vector.broadcast %cst_6 : f32 to vector<256x32xf32>
    %8 = arith.maximumf %6, %7 : vector<256x32xf32>
    %c1 = arith.constant 1 : index
    %c0_7 = arith.constant 0 : index
    %9 = vector.load %arg3[%c1, %c0_7] : memref<3x32xf32, #tpu.memory_space<vmem>>, vector<1x32xf32>
    %10 = vector.broadcast %9 : vector<1x32xf32> to vector<256x32xf32>
    %11 = arith.mulf %8, %10 : vector<256x32xf32>
    %c2 = arith.constant 2 : index
    %c0_8 = arith.constant 0 : index
    %12 = vector.load %arg3[%c2, %c0_8] : memref<3x32xf32, #tpu.memory_space<vmem>>, vector<1x32xf32>
    %13 = vector.broadcast %12 : vector<1x32xf32> to vector<256x32xf32>
    %14 = arith.addf %11, %13 : vector<256x32xf32>
    %c0_9 = arith.constant 0 : index
    %c0_10 = arith.constant 0 : index
    %15 = vector.load %arg17[%c0_9, %c0_10] : memref<256x32xf32, #tpu.memory_space<vmem>>, vector<256x32xf32>
    tpu.vector_store %arg17[%c0_9, %c0_10], %14 {strides = array<i32>} : memref<256x32xf32, #tpu.memory_space<vmem>>, vector<256x32xf32>,
    %c0_11 = arith.constant 0 : index
    %c0_12 = arith.constant 0 : index
    %16 = tpu.strided_load %arg17[%c0_11, %c0_12] {strides = array<i32: 2, 1>} : memref<256x32xf32, #tpu.memory_space<vmem>>, vector<128x32xf32>
    %c1_13 = arith.constant 1 : index
    %c0_14 = arith.constant 0 : index
    %17 = tpu.strided_load %arg17[%c1_13, %c0_14] {strides = array<i32: 2, 1>} : memref<256x32xf32, #tpu.memory_space<vmem>>, vector<128x32xf32>
    %18 = arith.maximumf %16, %17 : vector<128x32xf32>
    %cst_15 = arith.constant 0.000000e+00 : f32
    %19 = vector.broadcast %cst_15 : f32 to vector<8x32xf32>
    %c0_16 = arith.constant 0 : index
    %c0_17 = arith.constant 0 : index
    %20 = vector.load %arg17[%c0_16, %c0_17] : memref<256x32xf32, #tpu.memory_space<vmem>>, vector<8x32xf32>
    tpu.vector_store %arg17[%c0_16, %c0_17], %19 {strides = array<i32>} : memref<256x32xf32, #tpu.memory_space<vmem>>, vector<8x32xf32>,
    %c136 = arith.constant 136 : index
    %c0_18 = arith.constant 0 : index
    %21 = vector.load %arg17[%c136, %c0_18] : memref<256x32xf32, #tpu.memory_space<vmem>>, vector<8x32xf32>
    tpu.vector_store %arg17[%c136, %c0_18], %19 {strides = array<i32>} : memref<256x32xf32, #tpu.memory_space<vmem>>, vector<8x32xf32>,
    %c8 = arith.constant 8 : index
    %c0_19 = arith.constant 0 : index
    %22 = vector.load %arg17[%c8, %c0_19] : memref<256x32xf32, #tpu.memory_space<vmem>>, vector<128x32xf32>
    tpu.vector_store %arg17[%c8, %c0_19], %18 {strides = array<i32>} : memref<256x32xf32, #tpu.memory_space<vmem>>, vector<128x32xf32>,
    %cst_20 = arith.constant 0.000000e+00 : f32
    %23 = vector.broadcast %cst_20 : f32 to vector<128x8xf32>
    %c5 = arith.constant 5 : index
    %c0_21 = arith.constant 0 : index
    %24 = vector.load %arg17[%c5, %c0_21] : memref<256x32xf32, #tpu.memory_space<vmem>>, vector<128x32xf32>
    %c0_22 = arith.constant 0 : index
    %c0_23 = arith.constant 0 : index
    %c0_24 = arith.constant 0 : index
    %25 = vector.load %arg4[%c0_22, %c0_23, %c0_24] : memref<8x32x8xf32, #tpu.memory_space<vmem>>, vector<1x32x8xf32>
    %26 = vector.shape_cast %25 : vector<1x32x8xf32> to vector<32x8xf32>
    %cst_25 = arith.constant dense<0.000000e+00> : vector<128x8xf32>
    %27 = tpu.matmul %24, %26, %cst_25 {dimension_numbers = #tpu.dot_dimension_numbers<[1], [0], [0], [1], [0, 0, 1, 1], [], []>} : vector<128x32xf32>, vector<32x8xf32>, vector<128x8xf32> -> vector<128x8xf32>
    %28 = arith.addf %23, %27 : vector<128x8xf32>
    %c6 = arith.constant 6 : index
    %c0_26 = arith.constant 0 : index
    %29 = vector.load %arg17[%c6, %c0_26] : memref<256x32xf32, #tpu.memory_space<vmem>>, vector<128x32xf32>
    %c1_27 = arith.constant 1 : index
    %c0_28 = arith.constant 0 : index
    %c0_29 = arith.constant 0 : index
    %30 = vector.load %arg4[%c1_27, %c0_28, %c0_29] : memref<8x32x8xf32, #tpu.memory_space<vmem>>, vector<1x32x8xf32>
    %31 = vector.shape_cast %30 : vector<1x32x8xf32> to vector<32x8xf32>
    %cst_30 = arith.constant dense<0.000000e+00> : vector<128x8xf32>
    %32 = tpu.matmul %29, %31, %cst_30 {dimension_numbers = #tpu.dot_dimension_numbers<[1], [0], [0], [1], [0, 0, 1, 1], [], []>} : vector<128x32xf32>, vector<32x8xf32>, vector<128x8xf32> -> vector<128x8xf32>
    %33 = arith.addf %28, %32 : vector<128x8xf32>
    %c7 = arith.constant 7 : index
    %c0_31 = arith.constant 0 : index
    %34 = vector.load %arg17[%c7, %c0_31] : memref<256x32xf32, #tpu.memory_space<vmem>>, vector<128x32xf32>
    %c2_32 = arith.constant 2 : index
    %c0_33 = arith.constant 0 : index
    %c0_34 = arith.constant 0 : index
    %35 = vector.load %arg4[%c2_32, %c0_33, %c0_34] : memref<8x32x8xf32, #tpu.memory_space<vmem>>, vector<1x32x8xf32>
    %36 = vector.shape_cast %35 : vector<1x32x8xf32> to vector<32x8xf32>
    %cst_35 = arith.constant dense<0.000000e+00> : vector<128x8xf32>
    %37 = tpu.matmul %34, %36, %cst_35 {dimension_numbers = #tpu.dot_dimension_numbers<[1], [0], [0], [1], [0, 0, 1, 1], [], []>} : vector<128x32xf32>, vector<32x8xf32>, vector<128x8xf32> -> vector<128x8xf32>
    %38 = arith.addf %33, %37 : vector<128x8xf32>
    %c8_36 = arith.constant 8 : index
    %c0_37 = arith.constant 0 : index
    %39 = vector.load %arg17[%c8_36, %c0_37] : memref<256x32xf32, #tpu.memory_space<vmem>>, vector<128x32xf32>
    %c3 = arith.constant 3 : index
    %c0_38 = arith.constant 0 : index
    %c0_39 = arith.constant 0 : index
    %40 = vector.load %arg4[%c3, %c0_38, %c0_39] : memref<8x32x8xf32, #tpu.memory_space<vmem>>, vector<1x32x8xf32>
    %41 = vector.shape_cast %40 : vector<1x32x8xf32> to vector<32x8xf32>
    %cst_40 = arith.constant dense<0.000000e+00> : vector<128x8xf32>
    %42 = tpu.matmul %39, %41, %cst_40 {dimension_numbers = #tpu.dot_dimension_numbers<[1], [0], [0], [1], [0, 0, 1, 1], [], []>} : vector<128x32xf32>, vector<32x8xf32>, vector<128x8xf32> -> vector<128x8xf32>
    %43 = arith.addf %38, %42 : vector<128x8xf32>
    %c9 = arith.constant 9 : index
    %c0_41 = arith.constant 0 : index
    %44 = vector.load %arg17[%c9, %c0_41] : memref<256x32xf32, #tpu.memory_space<vmem>>, vector<128x32xf32>
    %c4 = arith.constant 4 : index
    %c0_42 = arith.constant 0 : index
    %c0_43 = arith.constant 0 : index
    %45 = vector.load %arg4[%c4, %c0_42, %c0_43] : memref<8x32x8xf32, #tpu.memory_space<vmem>>, vector<1x32x8xf32>
    %46 = vector.shape_cast %45 : vector<1x32x8xf32> to vector<32x8xf32>
    %cst_44 = arith.constant dense<0.000000e+00> : vector<128x8xf32>
    %47 = tpu.matmul %44, %46, %cst_44 {dimension_numbers = #tpu.dot_dimension_numbers<[1], [0], [0], [1], [0, 0, 1, 1], [], []>} : vector<128x32xf32>, vector<32x8xf32>, vector<128x8xf32> -> vector<128x8xf32>
    %48 = arith.addf %43, %47 : vector<128x8xf32>
    %c10 = arith.constant 10 : index
    %c0_45 = arith.constant 0 : index
    %49 = vector.load %arg17[%c10, %c0_45] : memref<256x32xf32, #tpu.memory_space<vmem>>, vector<128x32xf32>
    %c5_46 = arith.constant 5 : index
    %c0_47 = arith.constant 0 : index
    %c0_48 = arith.constant 0 : index
    %50 = vector.load %arg4[%c5_46, %c0_47, %c0_48] : memref<8x32x8xf32, #tpu.memory_space<vmem>>, vector<1x32x8xf32>
    %51 = vector.shape_cast %50 : vector<1x32x8xf32> to vector<32x8xf32>
    %cst_49 = arith.constant dense<0.000000e+00> : vector<128x8xf32>
    %52 = tpu.matmul %49, %51, %cst_49 {dimension_numbers = #tpu.dot_dimension_numbers<[1], [0], [0], [1], [0, 0, 1, 1], [], []>} : vector<128x32xf32>, vector<32x8xf32>, vector<128x8xf32> -> vector<128x8xf32>
    %53 = arith.addf %48, %52 : vector<128x8xf32>
    %c11 = arith.constant 11 : index
    %c0_50 = arith.constant 0 : index
    %54 = vector.load %arg17[%c11, %c0_50] : memref<256x32xf32, #tpu.memory_space<vmem>>, vector<128x32xf32>
    %c6_51 = arith.constant 6 : index
    %c0_52 = arith.constant 0 : index
    %c0_53 = arith.constant 0 : index
    %55 = vector.load %arg4[%c6_51, %c0_52, %c0_53] : memref<8x32x8xf32, #tpu.memory_space<vmem>>, vector<1x32x8xf32>
    %56 = vector.shape_cast %55 : vector<1x32x8xf32> to vector<32x8xf32>
    %cst_54 = arith.constant dense<0.000000e+00> : vector<128x8xf32>
    %57 = tpu.matmul %54, %56, %cst_54 {dimension_numbers = #tpu.dot_dimension_numbers<[1], [0], [0], [1], [0, 0, 1, 1], [], []>} : vector<128x32xf32>, vector<32x8xf32>, vector<128x8xf32> -> vector<128x8xf32>
    %58 = arith.addf %53, %57 : vector<128x8xf32>
    %c12 = arith.constant 12 : index
    %c0_55 = arith.constant 0 : index
    %59 = vector.load %arg17[%c12, %c0_55] : memref<256x32xf32, #tpu.memory_space<vmem>>, vector<128x32xf32>
    %c7_56 = arith.constant 7 : index
    %c0_57 = arith.constant 0 : index
    %c0_58 = arith.constant 0 : index
    %60 = vector.load %arg4[%c7_56, %c0_57, %c0_58] : memref<8x32x8xf32, #tpu.memory_space<vmem>>, vector<1x32x8xf32>
    %61 = vector.shape_cast %60 : vector<1x32x8xf32> to vector<32x8xf32>
    %cst_59 = arith.constant dense<0.000000e+00> : vector<128x8xf32>
    %62 = tpu.matmul %59, %61, %cst_59 {dimension_numbers = #tpu.dot_dimension_numbers<[1], [0], [0], [1], [0, 0, 1, 1], [], []>} : vector<128x32xf32>, vector<32x8xf32>, vector<128x8xf32> -> vector<128x8xf32>
    %63 = arith.addf %58, %62 : vector<128x8xf32>
    %c0_60 = arith.constant 0 : index
    %c0_61 = arith.constant 0 : index
    %64 = vector.load %arg5[%c0_60, %c0_61] : memref<3x8xf32, #tpu.memory_space<vmem>>, vector<1x8xf32>
    %65 = vector.broadcast %64 : vector<1x8xf32> to vector<128x8xf32>
    %66 = arith.addf %63, %65 : vector<128x8xf32>
    %cst_62 = arith.constant 0.000000e+00 : f32
    %67 = vector.broadcast %cst_62 : f32 to vector<128x8xf32>
    %68 = arith.maximumf %66, %67 : vector<128x8xf32>
    %c1_63 = arith.constant 1 : index
    %c0_64 = arith.constant 0 : index
    %69 = vector.load %arg5[%c1_63, %c0_64] : memref<3x8xf32, #tpu.memory_space<vmem>>, vector<1x8xf32>
    %70 = vector.broadcast %69 : vector<1x8xf32> to vector<128x8xf32>
    %71 = arith.mulf %68, %70 : vector<128x8xf32>
    %c2_65 = arith.constant 2 : index
    %c0_66 = arith.constant 0 : index
    %72 = vector.load %arg5[%c2_65, %c0_66] : memref<3x8xf32, #tpu.memory_space<vmem>>, vector<1x8xf32>
    %73 = vector.broadcast %72 : vector<1x8xf32> to vector<128x8xf32>
    %74 = arith.addf %71, %73 : vector<128x8xf32>
    %c0_67 = arith.constant 0 : index
    %c0_68 = arith.constant 0 : index
    %75 = vector.load %arg18[%c0_67, %c0_68] : memref<128x8xf32, #tpu.memory_space<vmem>>, vector<128x8xf32>
    tpu.vector_store %arg18[%c0_67, %c0_68], %74 {strides = array<i32>} : memref<128x8xf32, #tpu.memory_space<vmem>>, vector<128x8xf32>,
    %c0_69 = arith.constant 0 : index
    %c0_70 = arith.constant 0 : index
    %76 = tpu.strided_load %arg18[%c0_69, %c0_70] {strides = array<i32: 2, 1>} : memref<128x8xf32, #tpu.memory_space<vmem>>, vector<64x8xf32>
    %c1_71 = arith.constant 1 : index
    %c0_72 = arith.constant 0 : index
    %77 = tpu.strided_load %arg18[%c1_71, %c0_72] {strides = array<i32: 2, 1>} : memref<128x8xf32, #tpu.memory_space<vmem>>, vector<64x8xf32>
    %78 = arith.maximumf %76, %77 : vector<64x8xf32>
    %cst_73 = arith.constant 0.000000e+00 : f32
    %79 = vector.broadcast %cst_73 : f32 to vector<8x8xf32>
    %c0_74 = arith.constant 0 : index
    %c0_75 = arith.constant 0 : index
    %80 = vector.load %arg18[%c0_74, %c0_75] : memref<128x8xf32, #tpu.memory_space<vmem>>, vector<8x8xf32>
    tpu.vector_store %arg18[%c0_74, %c0_75], %79 {strides = array<i32>} : memref<128x8xf32, #tpu.memory_space<vmem>>, vector<8x8xf32>,
    %c72 = arith.constant 72 : index
    %c0_76 = arith.constant 0 : index
    %81 = vector.load %arg18[%c72, %c0_76] : memref<128x8xf32, #tpu.memory_space<vmem>>, vector<8x8xf32>
    tpu.vector_store %arg18[%c72, %c0_76], %79 {strides = array<i32>} : memref<128x8xf32, #tpu.memory_space<vmem>>, vector<8x8xf32>,
    %c8_77 = arith.constant 8 : index
    %c0_78 = arith.constant 0 : index
    %82 = vector.load %arg18[%c8_77, %c0_78] : memref<128x8xf32, #tpu.memory_space<vmem>>, vector<64x8xf32>
    tpu.vector_store %arg18[%c8_77, %c0_78], %78 {strides = array<i32>} : memref<128x8xf32, #tpu.memory_space<vmem>>, vector<64x8xf32>,
    %cst_79 = arith.constant 0.000000e+00 : f32
    %83 = vector.broadcast %cst_79 : f32 to vector<64x8xf32>
    %c5_80 = arith.constant 5 : index
    %c0_81 = arith.constant 0 : index
    %84 = vector.load %arg18[%c5_80, %c0_81] : memref<128x8xf32, #tpu.memory_space<vmem>>, vector<64x8xf32>
    %c0_82 = arith.constant 0 : index
    %c0_83 = arith.constant 0 : index
    %c0_84 = arith.constant 0 : index
    %85 = vector.load %arg6[%c0_82, %c0_83, %c0_84] : memref<8x8x8xf32, #tpu.memory_space<vmem>>, vector<1x8x8xf32>
    %86 = vector.shape_cast %85 : vector<1x8x8xf32> to vector<8x8xf32>
    %cst_85 = arith.constant dense<0.000000e+00> : vector<64x8xf32>
    %87 = tpu.matmul %84, %86, %cst_85 {dimension_numbers = #tpu.dot_dimension_numbers<[1], [0], [0], [1], [0, 0, 1, 1], [], []>} : vector<64x8xf32>, vector<8x8xf32>, vector<64x8xf32> -> vector<64x8xf32>
    %88 = arith.addf %83, %87 : vector<64x8xf32>
    %c6_86 = arith.constant 6 : index
    %c0_87 = arith.constant 0 : index
    %89 = vector.load %arg18[%c6_86, %c0_87] : memref<128x8xf32, #tpu.memory_space<vmem>>, vector<64x8xf32>
    %c1_88 = arith.constant 1 : index
    %c0_89 = arith.constant 0 : index
    %c0_90 = arith.constant 0 : index
    %90 = vector.load %arg6[%c1_88, %c0_89, %c0_90] : memref<8x8x8xf32, #tpu.memory_space<vmem>>, vector<1x8x8xf32>
    %91 = vector.shape_cast %90 : vector<1x8x8xf32> to vector<8x8xf32>
    %cst_91 = arith.constant dense<0.000000e+00> : vector<64x8xf32>
    %92 = tpu.matmul %89, %91, %cst_91 {dimension_numbers = #tpu.dot_dimension_numbers<[1], [0], [0], [1], [0, 0, 1, 1], [], []>} : vector<64x8xf32>, vector<8x8xf32>, vector<64x8xf32> -> vector<64x8xf32>
    %93 = arith.addf %88, %92 : vector<64x8xf32>
    %c7_92 = arith.constant 7 : index
    %c0_93 = arith.constant 0 : index
    %94 = vector.load %arg18[%c7_92, %c0_93] : memref<128x8xf32, #tpu.memory_space<vmem>>, vector<64x8xf32>
    %c2_94 = arith.constant 2 : index
    %c0_95 = arith.constant 0 : index
    %c0_96 = arith.constant 0 : index
    %95 = vector.load %arg6[%c2_94, %c0_95, %c0_96] : memref<8x8x8xf32, #tpu.memory_space<vmem>>, vector<1x8x8xf32>
    %96 = vector.shape_cast %95 : vector<1x8x8xf32> to vector<8x8xf32>
    %cst_97 = arith.constant dense<0.000000e+00> : vector<64x8xf32>
    %97 = tpu.matmul %94, %96, %cst_97 {dimension_numbers = #tpu.dot_dimension_numbers<[1], [0], [0], [1], [0, 0, 1, 1], [], []>} : vector<64x8xf32>, vector<8x8xf32>, vector<64x8xf32> -> vector<64x8xf32>
    %98 = arith.addf %93, %97 : vector<64x8xf32>
    %c8_98 = arith.constant 8 : index
    %c0_99 = arith.constant 0 : index
    %99 = vector.load %arg18[%c8_98, %c0_99] : memref<128x8xf32, #tpu.memory_space<vmem>>, vector<64x8xf32>
    %c3_100 = arith.constant 3 : index
    %c0_101 = arith.constant 0 : index
    %c0_102 = arith.constant 0 : index
    %100 = vector.load %arg6[%c3_100, %c0_101, %c0_102] : memref<8x8x8xf32, #tpu.memory_space<vmem>>, vector<1x8x8xf32>
    %101 = vector.shape_cast %100 : vector<1x8x8xf32> to vector<8x8xf32>
    %cst_103 = arith.constant dense<0.000000e+00> : vector<64x8xf32>
    %102 = tpu.matmul %99, %101, %cst_103 {dimension_numbers = #tpu.dot_dimension_numbers<[1], [0], [0], [1], [0, 0, 1, 1], [], []>} : vector<64x8xf32>, vector<8x8xf32>, vector<64x8xf32> -> vector<64x8xf32>
    %103 = arith.addf %98, %102 : vector<64x8xf32>
    %c9_104 = arith.constant 9 : index
    %c0_105 = arith.constant 0 : index
    %104 = vector.load %arg18[%c9_104, %c0_105] : memref<128x8xf32, #tpu.memory_space<vmem>>, vector<64x8xf32>
    %c4_106 = arith.constant 4 : index
    %c0_107 = arith.constant 0 : index
    %c0_108 = arith.constant 0 : index
    %105 = vector.load %arg6[%c4_106, %c0_107, %c0_108] : memref<8x8x8xf32, #tpu.memory_space<vmem>>, vector<1x8x8xf32>
    %106 = vector.shape_cast %105 : vector<1x8x8xf32> to vector<8x8xf32>
    %cst_109 = arith.constant dense<0.000000e+00> : vector<64x8xf32>
    %107 = tpu.matmul %104, %106, %cst_109 {dimension_numbers = #tpu.dot_dimension_numbers<[1], [0], [0], [1], [0, 0, 1, 1], [], []>} : vector<64x8xf32>, vector<8x8xf32>, vector<64x8xf32> -> vector<64x8xf32>
    %108 = arith.addf %103, %107 : vector<64x8xf32>
    %c10_110 = arith.constant 10 : index
    %c0_111 = arith.constant 0 : index
    %109 = vector.load %arg18[%c10_110, %c0_111] : memref<128x8xf32, #tpu.memory_space<vmem>>, vector<64x8xf32>
    %c5_112 = arith.constant 5 : index
    %c0_113 = arith.constant 0 : index
    %c0_114 = arith.constant 0 : index
    %110 = vector.load %arg6[%c5_112, %c0_113, %c0_114] : memref<8x8x8xf32, #tpu.memory_space<vmem>>, vector<1x8x8xf32>
    %111 = vector.shape_cast %110 : vector<1x8x8xf32> to vector<8x8xf32>
    %cst_115 = arith.constant dense<0.000000e+00> : vector<64x8xf32>
    %112 = tpu.matmul %109, %111, %cst_115 {dimension_numbers = #tpu.dot_dimension_numbers<[1], [0], [0], [1], [0, 0, 1, 1], [], []>} : vector<64x8xf32>, vector<8x8xf32>, vector<64x8xf32> -> vector<64x8xf32>
    %113 = arith.addf %108, %112 : vector<64x8xf32>
    %c11_116 = arith.constant 11 : index
    %c0_117 = arith.constant 0 : index
    %114 = vector.load %arg18[%c11_116, %c0_117] : memref<128x8xf32, #tpu.memory_space<vmem>>, vector<64x8xf32>
    %c6_118 = arith.constant 6 : index
    %c0_119 = arith.constant 0 : index
    %c0_120 = arith.constant 0 : index
    %115 = vector.load %arg6[%c6_118, %c0_119, %c0_120] : memref<8x8x8xf32, #tpu.memory_space<vmem>>, vector<1x8x8xf32>
    %116 = vector.shape_cast %115 : vector<1x8x8xf32> to vector<8x8xf32>
    %cst_121 = arith.constant dense<0.000000e+00> : vector<64x8xf32>
    %117 = tpu.matmul %114, %116, %cst_121 {dimension_numbers = #tpu.dot_dimension_numbers<[1], [0], [0], [1], [0, 0, 1, 1], [], []>} : vector<64x8xf32>, vector<8x8xf32>, vector<64x8xf32> -> vector<64x8xf32>
    %118 = arith.addf %113, %117 : vector<64x8xf32>
    %c12_122 = arith.constant 12 : index
    %c0_123 = arith.constant 0 : index
    %119 = vector.load %arg18[%c12_122, %c0_123] : memref<128x8xf32, #tpu.memory_space<vmem>>, vector<64x8xf32>
    %c7_124 = arith.constant 7 : index
    %c0_125 = arith.constant 0 : index
    %c0_126 = arith.constant 0 : index
    %120 = vector.load %arg6[%c7_124, %c0_125, %c0_126] : memref<8x8x8xf32, #tpu.memory_space<vmem>>, vector<1x8x8xf32>
    %121 = vector.shape_cast %120 : vector<1x8x8xf32> to vector<8x8xf32>
    %cst_127 = arith.constant dense<0.000000e+00> : vector<64x8xf32>
    %122 = tpu.matmul %119, %121, %cst_127 {dimension_numbers = #tpu.dot_dimension_numbers<[1], [0], [0], [1], [0, 0, 1, 1], [], []>} : vector<64x8xf32>, vector<8x8xf32>, vector<64x8xf32> -> vector<64x8xf32>
    %123 = arith.addf %118, %122 : vector<64x8xf32>
    %c0_128 = arith.constant 0 : index
    %c0_129 = arith.constant 0 : index
    %124 = vector.load %arg7[%c0_128, %c0_129] : memref<3x8xf32, #tpu.memory_space<vmem>>, vector<1x8xf32>
    %125 = vector.broadcast %124 : vector<1x8xf32> to vector<64x8xf32>
    %126 = arith.addf %123, %125 : vector<64x8xf32>
    %cst_130 = arith.constant 0.000000e+00 : f32
    %127 = vector.broadcast %cst_130 : f32 to vector<64x8xf32>
    %128 = arith.maximumf %126, %127 : vector<64x8xf32>
    %c1_131 = arith.constant 1 : index
    %c0_132 = arith.constant 0 : index
    %129 = vector.load %arg7[%c1_131, %c0_132] : memref<3x8xf32, #tpu.memory_space<vmem>>, vector<1x8xf32>
    %130 = vector.broadcast %129 : vector<1x8xf32> to vector<64x8xf32>
    %131 = arith.mulf %128, %130 : vector<64x8xf32>
    %c2_133 = arith.constant 2 : index
    %c0_134 = arith.constant 0 : index
    %132 = vector.load %arg7[%c2_133, %c0_134] : memref<3x8xf32, #tpu.memory_space<vmem>>, vector<1x8xf32>
    %133 = vector.broadcast %132 : vector<1x8xf32> to vector<64x8xf32>
    %134 = arith.addf %131, %133 : vector<64x8xf32>
    %c0_135 = arith.constant 0 : index
    %c0_136 = arith.constant 0 : index
    %135 = vector.load %arg19[%c0_135, %c0_136] : memref<64x8xf32, #tpu.memory_space<vmem>>, vector<64x8xf32>
    tpu.vector_store %arg19[%c0_135, %c0_136], %134 {strides = array<i32>} : memref<64x8xf32, #tpu.memory_space<vmem>>, vector<64x8xf32>,
    %c0_137 = arith.constant 0 : index
    %c0_138 = arith.constant 0 : index
    %136 = tpu.strided_load %arg19[%c0_137, %c0_138] {strides = array<i32: 2, 1>} : memref<64x8xf32, #tpu.memory_space<vmem>>, vector<32x8xf32>
    %c1_139 = arith.constant 1 : index
    %c0_140 = arith.constant 0 : index
    %137 = tpu.strided_load %arg19[%c1_139, %c0_140] {strides = array<i32: 2, 1>} : memref<64x8xf32, #tpu.memory_space<vmem>>, vector<32x8xf32>
    %138 = arith.maximumf %136, %137 : vector<32x8xf32>
    %cst_141 = arith.constant 0.000000e+00 : f32
    %139 = vector.broadcast %cst_141 : f32 to vector<8x8xf32>
    %c0_142 = arith.constant 0 : index
    %c0_143 = arith.constant 0 : index
    %140 = vector.load %arg19[%c0_142, %c0_143] : memref<64x8xf32, #tpu.memory_space<vmem>>, vector<8x8xf32>
    tpu.vector_store %arg19[%c0_142, %c0_143], %139 {strides = array<i32>} : memref<64x8xf32, #tpu.memory_space<vmem>>, vector<8x8xf32>,
    %c40 = arith.constant 40 : index
    %c0_144 = arith.constant 0 : index
    %141 = vector.load %arg19[%c40, %c0_144] : memref<64x8xf32, #tpu.memory_space<vmem>>, vector<8x8xf32>
    tpu.vector_store %arg19[%c40, %c0_144], %139 {strides = array<i32>} : memref<64x8xf32, #tpu.memory_space<vmem>>, vector<8x8xf32>,
    %c8_145 = arith.constant 8 : index
    %c0_146 = arith.constant 0 : index
    %142 = vector.load %arg19[%c8_145, %c0_146] : memref<64x8xf32, #tpu.memory_space<vmem>>, vector<32x8xf32>
    tpu.vector_store %arg19[%c8_145, %c0_146], %138 {strides = array<i32>} : memref<64x8xf32, #tpu.memory_space<vmem>>, vector<32x8xf32>,
    %cst_147 = arith.constant 0.000000e+00 : f32
    %143 = vector.broadcast %cst_147 : f32 to vector<32x8xf32>
    %c5_148 = arith.constant 5 : index
    %c0_149 = arith.constant 0 : index
    %144 = vector.load %arg19[%c5_148, %c0_149] : memref<64x8xf32, #tpu.memory_space<vmem>>, vector<32x8xf32>
    %c0_150 = arith.constant 0 : index
    %c0_151 = arith.constant 0 : index
    %c0_152 = arith.constant 0 : index
    %145 = vector.load %arg8[%c0_150, %c0_151, %c0_152] : memref<8x8x8xf32, #tpu.memory_space<vmem>>, vector<1x8x8xf32>
    %146 = vector.shape_cast %145 : vector<1x8x8xf32> to vector<8x8xf32>
    %cst_153 = arith.constant dense<0.000000e+00> : vector<32x8xf32>
    %147 = tpu.matmul %144, %146, %cst_153 {dimension_numbers = #tpu.dot_dimension_numbers<[1], [0], [0], [1], [0, 0, 1, 1], [], []>} : vector<32x8xf32>, vector<8x8xf32>, vector<32x8xf32> -> vector<32x8xf32>
    %148 = arith.addf %143, %147 : vector<32x8xf32>
    %c6_154 = arith.constant 6 : index
    %c0_155 = arith.constant 0 : index
    %149 = vector.load %arg19[%c6_154, %c0_155] : memref<64x8xf32, #tpu.memory_space<vmem>>, vector<32x8xf32>
    %c1_156 = arith.constant 1 : index
    %c0_157 = arith.constant 0 : index
    %c0_158 = arith.constant 0 : index
    %150 = vector.load %arg8[%c1_156, %c0_157, %c0_158] : memref<8x8x8xf32, #tpu.memory_space<vmem>>, vector<1x8x8xf32>
    %151 = vector.shape_cast %150 : vector<1x8x8xf32> to vector<8x8xf32>
    %cst_159 = arith.constant dense<0.000000e+00> : vector<32x8xf32>
    %152 = tpu.matmul %149, %151, %cst_159 {dimension_numbers = #tpu.dot_dimension_numbers<[1], [0], [0], [1], [0, 0, 1, 1], [], []>} : vector<32x8xf32>, vector<8x8xf32>, vector<32x8xf32> -> vector<32x8xf32>
    %153 = arith.addf %148, %152 : vector<32x8xf32>
    %c7_160 = arith.constant 7 : index
    %c0_161 = arith.constant 0 : index
    %154 = vector.load %arg19[%c7_160, %c0_161] : memref<64x8xf32, #tpu.memory_space<vmem>>, vector<32x8xf32>
    %c2_162 = arith.constant 2 : index
    %c0_163 = arith.constant 0 : index
    %c0_164 = arith.constant 0 : index
    %155 = vector.load %arg8[%c2_162, %c0_163, %c0_164] : memref<8x8x8xf32, #tpu.memory_space<vmem>>, vector<1x8x8xf32>
    %156 = vector.shape_cast %155 : vector<1x8x8xf32> to vector<8x8xf32>
    %cst_165 = arith.constant dense<0.000000e+00> : vector<32x8xf32>
    %157 = tpu.matmul %154, %156, %cst_165 {dimension_numbers = #tpu.dot_dimension_numbers<[1], [0], [0], [1], [0, 0, 1, 1], [], []>} : vector<32x8xf32>, vector<8x8xf32>, vector<32x8xf32> -> vector<32x8xf32>
    %158 = arith.addf %153, %157 : vector<32x8xf32>
    %c8_166 = arith.constant 8 : index
    %c0_167 = arith.constant 0 : index
    %159 = vector.load %arg19[%c8_166, %c0_167] : memref<64x8xf32, #tpu.memory_space<vmem>>, vector<32x8xf32>
    %c3_168 = arith.constant 3 : index
    %c0_169 = arith.constant 0 : index
    %c0_170 = arith.constant 0 : index
    %160 = vector.load %arg8[%c3_168, %c0_169, %c0_170] : memref<8x8x8xf32, #tpu.memory_space<vmem>>, vector<1x8x8xf32>
    %161 = vector.shape_cast %160 : vector<1x8x8xf32> to vector<8x8xf32>
    %cst_171 = arith.constant dense<0.000000e+00> : vector<32x8xf32>
    %162 = tpu.matmul %159, %161, %cst_171 {dimension_numbers = #tpu.dot_dimension_numbers<[1], [0], [0], [1], [0, 0, 1, 1], [], []>} : vector<32x8xf32>, vector<8x8xf32>, vector<32x8xf32> -> vector<32x8xf32>
    %163 = arith.addf %158, %162 : vector<32x8xf32>
    %c9_172 = arith.constant 9 : index
    %c0_173 = arith.constant 0 : index
    %164 = vector.load %arg19[%c9_172, %c0_173] : memref<64x8xf32, #tpu.memory_space<vmem>>, vector<32x8xf32>
    %c4_174 = arith.constant 4 : index
    %c0_175 = arith.constant 0 : index
    %c0_176 = arith.constant 0 : index
    %165 = vector.load %arg8[%c4_174, %c0_175, %c0_176] : memref<8x8x8xf32, #tpu.memory_space<vmem>>, vector<1x8x8xf32>
    %166 = vector.shape_cast %165 : vector<1x8x8xf32> to vector<8x8xf32>
    %cst_177 = arith.constant dense<0.000000e+00> : vector<32x8xf32>
    %167 = tpu.matmul %164, %166, %cst_177 {dimension_numbers = #tpu.dot_dimension_numbers<[1], [0], [0], [1], [0, 0, 1, 1], [], []>} : vector<32x8xf32>, vector<8x8xf32>, vector<32x8xf32> -> vector<32x8xf32>
    %168 = arith.addf %163, %167 : vector<32x8xf32>
    %c10_178 = arith.constant 10 : index
    %c0_179 = arith.constant 0 : index
    %169 = vector.load %arg19[%c10_178, %c0_179] : memref<64x8xf32, #tpu.memory_space<vmem>>, vector<32x8xf32>
    %c5_180 = arith.constant 5 : index
    %c0_181 = arith.constant 0 : index
    %c0_182 = arith.constant 0 : index
    %170 = vector.load %arg8[%c5_180, %c0_181, %c0_182] : memref<8x8x8xf32, #tpu.memory_space<vmem>>, vector<1x8x8xf32>
    %171 = vector.shape_cast %170 : vector<1x8x8xf32> to vector<8x8xf32>
    %cst_183 = arith.constant dense<0.000000e+00> : vector<32x8xf32>
    %172 = tpu.matmul %169, %171, %cst_183 {dimension_numbers = #tpu.dot_dimension_numbers<[1], [0], [0], [1], [0, 0, 1, 1], [], []>} : vector<32x8xf32>, vector<8x8xf32>, vector<32x8xf32> -> vector<32x8xf32>
    %173 = arith.addf %168, %172 : vector<32x8xf32>
    %c11_184 = arith.constant 11 : index
    %c0_185 = arith.constant 0 : index
    %174 = vector.load %arg19[%c11_184, %c0_185] : memref<64x8xf32, #tpu.memory_space<vmem>>, vector<32x8xf32>
    %c6_186 = arith.constant 6 : index
    %c0_187 = arith.constant 0 : index
    %c0_188 = arith.constant 0 : index
    %175 = vector.load %arg8[%c6_186, %c0_187, %c0_188] : memref<8x8x8xf32, #tpu.memory_space<vmem>>, vector<1x8x8xf32>
    %176 = vector.shape_cast %175 : vector<1x8x8xf32> to vector<8x8xf32>
    %cst_189 = arith.constant dense<0.000000e+00> : vector<32x8xf32>
    %177 = tpu.matmul %174, %176, %cst_189 {dimension_numbers = #tpu.dot_dimension_numbers<[1], [0], [0], [1], [0, 0, 1, 1], [], []>} : vector<32x8xf32>, vector<8x8xf32>, vector<32x8xf32> -> vector<32x8xf32>
    %178 = arith.addf %173, %177 : vector<32x8xf32>
    %c12_190 = arith.constant 12 : index
    %c0_191 = arith.constant 0 : index
    %179 = vector.load %arg19[%c12_190, %c0_191] : memref<64x8xf32, #tpu.memory_space<vmem>>, vector<32x8xf32>
    %c7_192 = arith.constant 7 : index
    %c0_193 = arith.constant 0 : index
    %c0_194 = arith.constant 0 : index
    %180 = vector.load %arg8[%c7_192, %c0_193, %c0_194] : memref<8x8x8xf32, #tpu.memory_space<vmem>>, vector<1x8x8xf32>
    %181 = vector.shape_cast %180 : vector<1x8x8xf32> to vector<8x8xf32>
    %cst_195 = arith.constant dense<0.000000e+00> : vector<32x8xf32>
    %182 = tpu.matmul %179, %181, %cst_195 {dimension_numbers = #tpu.dot_dimension_numbers<[1], [0], [0], [1], [0, 0, 1, 1], [], []>} : vector<32x8xf32>, vector<8x8xf32>, vector<32x8xf32> -> vector<32x8xf32>
    %183 = arith.addf %178, %182 : vector<32x8xf32>
    %c0_196 = arith.constant 0 : index
    %c0_197 = arith.constant 0 : index
    %184 = vector.load %arg9[%c0_196, %c0_197] : memref<3x8xf32, #tpu.memory_space<vmem>>, vector<1x8xf32>
    %185 = vector.broadcast %184 : vector<1x8xf32> to vector<32x8xf32>
    %186 = arith.addf %183, %185 : vector<32x8xf32>
    %cst_198 = arith.constant 0.000000e+00 : f32
    %187 = vector.broadcast %cst_198 : f32 to vector<32x8xf32>
    %188 = arith.maximumf %186, %187 : vector<32x8xf32>
    %c1_199 = arith.constant 1 : index
    %c0_200 = arith.constant 0 : index
    %189 = vector.load %arg9[%c1_199, %c0_200] : memref<3x8xf32, #tpu.memory_space<vmem>>, vector<1x8xf32>
    %190 = vector.broadcast %189 : vector<1x8xf32> to vector<32x8xf32>
    %191 = arith.mulf %188, %190 : vector<32x8xf32>
    %c2_201 = arith.constant 2 : index
    %c0_202 = arith.constant 0 : index
    %192 = vector.load %arg9[%c2_201, %c0_202] : memref<3x8xf32, #tpu.memory_space<vmem>>, vector<1x8xf32>
    %193 = vector.broadcast %192 : vector<1x8xf32> to vector<32x8xf32>
    %194 = arith.addf %191, %193 : vector<32x8xf32>
    %c0_203 = arith.constant 0 : index
    %c0_204 = arith.constant 0 : index
    %195 = vector.load %arg20[%c0_203, %c0_204] : memref<32x8xf32, #tpu.memory_space<vmem>>, vector<32x8xf32>
    tpu.vector_store %arg20[%c0_203, %c0_204], %194 {strides = array<i32>} : memref<32x8xf32, #tpu.memory_space<vmem>>, vector<32x8xf32>,
    %c0_205 = arith.constant 0 : index
    %c0_206 = arith.constant 0 : index
    %196 = tpu.strided_load %arg20[%c0_205, %c0_206] {strides = array<i32: 2, 1>} : memref<32x8xf32, #tpu.memory_space<vmem>>, vector<16x8xf32>
    %c1_207 = arith.constant 1 : index
    %c0_208 = arith.constant 0 : index
    %197 = tpu.strided_load %arg20[%c1_207, %c0_208] {strides = array<i32: 2, 1>} : memref<32x8xf32, #tpu.memory_space<vmem>>, vector<16x8xf32>
    %198 = arith.maximumf %196, %197 : vector<16x8xf32>
    %cst_209 = arith.constant 0.000000e+00 : f32
    %199 = vector.broadcast %cst_209 : f32 to vector<8x8xf32>
    %c0_210 = arith.constant 0 : index
    %c0_211 = arith.constant 0 : index
    %200 = vector.load %arg20[%c0_210, %c0_211] : memref<32x8xf32, #tpu.memory_space<vmem>>, vector<8x8xf32>
    tpu.vector_store %arg20[%c0_210, %c0_211], %199 {strides = array<i32>} : memref<32x8xf32, #tpu.memory_space<vmem>>, vector<8x8xf32>,
    %c24 = arith.constant 24 : index
    %c0_212 = arith.constant 0 : index
    %201 = vector.load %arg20[%c24, %c0_212] : memref<32x8xf32, #tpu.memory_space<vmem>>, vector<8x8xf32>
    tpu.vector_store %arg20[%c24, %c0_212], %199 {strides = array<i32>} : memref<32x8xf32, #tpu.memory_space<vmem>>, vector<8x8xf32>,
    %c8_213 = arith.constant 8 : index
    %c0_214 = arith.constant 0 : index
    %202 = vector.load %arg20[%c8_213, %c0_214] : memref<32x8xf32, #tpu.memory_space<vmem>>, vector<16x8xf32>
    tpu.vector_store %arg20[%c8_213, %c0_214], %198 {strides = array<i32>} : memref<32x8xf32, #tpu.memory_space<vmem>>, vector<16x8xf32>,
    %cst_215 = arith.constant 0.000000e+00 : f32
    %203 = vector.broadcast %cst_215 : f32 to vector<16x16xf32>
    %c5_216 = arith.constant 5 : index
    %c0_217 = arith.constant 0 : index
    %204 = vector.load %arg20[%c5_216, %c0_217] : memref<32x8xf32, #tpu.memory_space<vmem>>, vector<16x8xf32>
    %c0_218 = arith.constant 0 : index
    %c0_219 = arith.constant 0 : index
    %c0_220 = arith.constant 0 : index
    %205 = vector.load %arg10[%c0_218, %c0_219, %c0_220] : memref<8x8x16xf32, #tpu.memory_space<vmem>>, vector<1x8x16xf32>
    %206 = vector.shape_cast %205 : vector<1x8x16xf32> to vector<8x16xf32>
    %cst_221 = arith.constant dense<0.000000e+00> : vector<16x16xf32>
    %207 = tpu.matmul %204, %206, %cst_221 {dimension_numbers = #tpu.dot_dimension_numbers<[1], [0], [0], [1], [0, 0, 1, 1], [], []>} : vector<16x8xf32>, vector<8x16xf32>, vector<16x16xf32> -> vector<16x16xf32>
    %208 = arith.addf %203, %207 : vector<16x16xf32>
    %c6_222 = arith.constant 6 : index
    %c0_223 = arith.constant 0 : index
    %209 = vector.load %arg20[%c6_222, %c0_223] : memref<32x8xf32, #tpu.memory_space<vmem>>, vector<16x8xf32>
    %c1_224 = arith.constant 1 : index
    %c0_225 = arith.constant 0 : index
    %c0_226 = arith.constant 0 : index
    %210 = vector.load %arg10[%c1_224, %c0_225, %c0_226] : memref<8x8x16xf32, #tpu.memory_space<vmem>>, vector<1x8x16xf32>
    %211 = vector.shape_cast %210 : vector<1x8x16xf32> to vector<8x16xf32>
    %cst_227 = arith.constant dense<0.000000e+00> : vector<16x16xf32>
    %212 = tpu.matmul %209, %211, %cst_227 {dimension_numbers = #tpu.dot_dimension_numbers<[1], [0], [0], [1], [0, 0, 1, 1], [], []>} : vector<16x8xf32>, vector<8x16xf32>, vector<16x16xf32> -> vector<16x16xf32>
    %213 = arith.addf %208, %212 : vector<16x16xf32>
    %c7_228 = arith.constant 7 : index
    %c0_229 = arith.constant 0 : index
    %214 = vector.load %arg20[%c7_228, %c0_229] : memref<32x8xf32, #tpu.memory_space<vmem>>, vector<16x8xf32>
    %c2_230 = arith.constant 2 : index
    %c0_231 = arith.constant 0 : index
    %c0_232 = arith.constant 0 : index
    %215 = vector.load %arg10[%c2_230, %c0_231, %c0_232] : memref<8x8x16xf32, #tpu.memory_space<vmem>>, vector<1x8x16xf32>
    %216 = vector.shape_cast %215 : vector<1x8x16xf32> to vector<8x16xf32>
    %cst_233 = arith.constant dense<0.000000e+00> : vector<16x16xf32>
    %217 = tpu.matmul %214, %216, %cst_233 {dimension_numbers = #tpu.dot_dimension_numbers<[1], [0], [0], [1], [0, 0, 1, 1], [], []>} : vector<16x8xf32>, vector<8x16xf32>, vector<16x16xf32> -> vector<16x16xf32>
    %218 = arith.addf %213, %217 : vector<16x16xf32>
    %c8_234 = arith.constant 8 : index
    %c0_235 = arith.constant 0 : index
    %219 = vector.load %arg20[%c8_234, %c0_235] : memref<32x8xf32, #tpu.memory_space<vmem>>, vector<16x8xf32>
    %c3_236 = arith.constant 3 : index
    %c0_237 = arith.constant 0 : index
    %c0_238 = arith.constant 0 : index
    %220 = vector.load %arg10[%c3_236, %c0_237, %c0_238] : memref<8x8x16xf32, #tpu.memory_space<vmem>>, vector<1x8x16xf32>
    %221 = vector.shape_cast %220 : vector<1x8x16xf32> to vector<8x16xf32>
    %cst_239 = arith.constant dense<0.000000e+00> : vector<16x16xf32>
    %222 = tpu.matmul %219, %221, %cst_239 {dimension_numbers = #tpu.dot_dimension_numbers<[1], [0], [0], [1], [0, 0, 1, 1], [], []>} : vector<16x8xf32>, vector<8x16xf32>, vector<16x16xf32> -> vector<16x16xf32>
    %223 = arith.addf %218, %222 : vector<16x16xf32>
    %c9_240 = arith.constant 9 : index
    %c0_241 = arith.constant 0 : index
    %224 = vector.load %arg20[%c9_240, %c0_241] : memref<32x8xf32, #tpu.memory_space<vmem>>, vector<16x8xf32>
    %c4_242 = arith.constant 4 : index
    %c0_243 = arith.constant 0 : index
    %c0_244 = arith.constant 0 : index
    %225 = vector.load %arg10[%c4_242, %c0_243, %c0_244] : memref<8x8x16xf32, #tpu.memory_space<vmem>>, vector<1x8x16xf32>
    %226 = vector.shape_cast %225 : vector<1x8x16xf32> to vector<8x16xf32>
    %cst_245 = arith.constant dense<0.000000e+00> : vector<16x16xf32>
    %227 = tpu.matmul %224, %226, %cst_245 {dimension_numbers = #tpu.dot_dimension_numbers<[1], [0], [0], [1], [0, 0, 1, 1], [], []>} : vector<16x8xf32>, vector<8x16xf32>, vector<16x16xf32> -> vector<16x16xf32>
    %228 = arith.addf %223, %227 : vector<16x16xf32>
    %c10_246 = arith.constant 10 : index
    %c0_247 = arith.constant 0 : index
    %229 = vector.load %arg20[%c10_246, %c0_247] : memref<32x8xf32, #tpu.memory_space<vmem>>, vector<16x8xf32>
    %c5_248 = arith.constant 5 : index
    %c0_249 = arith.constant 0 : index
    %c0_250 = arith.constant 0 : index
    %230 = vector.load %arg10[%c5_248, %c0_249, %c0_250] : memref<8x8x16xf32, #tpu.memory_space<vmem>>, vector<1x8x16xf32>
    %231 = vector.shape_cast %230 : vector<1x8x16xf32> to vector<8x16xf32>
    %cst_251 = arith.constant dense<0.000000e+00> : vector<16x16xf32>
    %232 = tpu.matmul %229, %231, %cst_251 {dimension_numbers = #tpu.dot_dimension_numbers<[1], [0], [0], [1], [0, 0, 1, 1], [], []>} : vector<16x8xf32>, vector<8x16xf32>, vector<16x16xf32> -> vector<16x16xf32>
    %233 = arith.addf %228, %232 : vector<16x16xf32>
    %c11_252 = arith.constant 11 : index
    %c0_253 = arith.constant 0 : index
    %234 = vector.load %arg20[%c11_252, %c0_253] : memref<32x8xf32, #tpu.memory_space<vmem>>, vector<16x8xf32>
    %c6_254 = arith.constant 6 : index
    %c0_255 = arith.constant 0 : index
    %c0_256 = arith.constant 0 : index
    %235 = vector.load %arg10[%c6_254, %c0_255, %c0_256] : memref<8x8x16xf32, #tpu.memory_space<vmem>>, vector<1x8x16xf32>
    %236 = vector.shape_cast %235 : vector<1x8x16xf32> to vector<8x16xf32>
    %cst_257 = arith.constant dense<0.000000e+00> : vector<16x16xf32>
    %237 = tpu.matmul %234, %236, %cst_257 {dimension_numbers = #tpu.dot_dimension_numbers<[1], [0], [0], [1], [0, 0, 1, 1], [], []>} : vector<16x8xf32>, vector<8x16xf32>, vector<16x16xf32> -> vector<16x16xf32>
    %238 = arith.addf %233, %237 : vector<16x16xf32>
    %c12_258 = arith.constant 12 : index
    %c0_259 = arith.constant 0 : index
    %239 = vector.load %arg20[%c12_258, %c0_259] : memref<32x8xf32, #tpu.memory_space<vmem>>, vector<16x8xf32>
    %c7_260 = arith.constant 7 : index
    %c0_261 = arith.constant 0 : index
    %c0_262 = arith.constant 0 : index
    %240 = vector.load %arg10[%c7_260, %c0_261, %c0_262] : memref<8x8x16xf32, #tpu.memory_space<vmem>>, vector<1x8x16xf32>
    %241 = vector.shape_cast %240 : vector<1x8x16xf32> to vector<8x16xf32>
    %cst_263 = arith.constant dense<0.000000e+00> : vector<16x16xf32>
    %242 = tpu.matmul %239, %241, %cst_263 {dimension_numbers = #tpu.dot_dimension_numbers<[1], [0], [0], [1], [0, 0, 1, 1], [], []>} : vector<16x8xf32>, vector<8x16xf32>, vector<16x16xf32> -> vector<16x16xf32>
    %243 = arith.addf %238, %242 : vector<16x16xf32>
    %c0_264 = arith.constant 0 : index
    %c0_265 = arith.constant 0 : index
    %244 = vector.load %arg11[%c0_264, %c0_265] : memref<3x16xf32, #tpu.memory_space<vmem>>, vector<1x16xf32>
    %245 = vector.broadcast %244 : vector<1x16xf32> to vector<16x16xf32>
    %246 = arith.addf %243, %245 : vector<16x16xf32>
    %cst_266 = arith.constant 0.000000e+00 : f32
    %247 = vector.broadcast %cst_266 : f32 to vector<16x16xf32>
    %248 = arith.maximumf %246, %247 : vector<16x16xf32>
    %c1_267 = arith.constant 1 : index
    %c0_268 = arith.constant 0 : index
    %249 = vector.load %arg11[%c1_267, %c0_268] : memref<3x16xf32, #tpu.memory_space<vmem>>, vector<1x16xf32>
    %250 = vector.broadcast %249 : vector<1x16xf32> to vector<16x16xf32>
    %251 = arith.mulf %248, %250 : vector<16x16xf32>
    %c2_269 = arith.constant 2 : index
    %c0_270 = arith.constant 0 : index
    %252 = vector.load %arg11[%c2_269, %c0_270] : memref<3x16xf32, #tpu.memory_space<vmem>>, vector<1x16xf32>
    %253 = vector.broadcast %252 : vector<1x16xf32> to vector<16x16xf32>
    %254 = arith.addf %251, %253 : vector<16x16xf32>
    %c0_271 = arith.constant 0 : index
    %c0_272 = arith.constant 0 : index
    %255 = vector.load %arg21[%c0_271, %c0_272] : memref<24x16xf32, #tpu.memory_space<vmem>>, vector<16x16xf32>
    tpu.vector_store %arg21[%c0_271, %c0_272], %254 {strides = array<i32>} : memref<24x16xf32, #tpu.memory_space<vmem>>, vector<16x16xf32>,
    %c0_273 = arith.constant 0 : index
    %c0_274 = arith.constant 0 : index
    %256 = tpu.strided_load %arg21[%c0_273, %c0_274] {strides = array<i32: 2, 1>} : memref<24x16xf32, #tpu.memory_space<vmem>>, vector<8x16xf32>
    %c1_275 = arith.constant 1 : index
    %c0_276 = arith.constant 0 : index
    %257 = tpu.strided_load %arg21[%c1_275, %c0_276] {strides = array<i32: 2, 1>} : memref<24x16xf32, #tpu.memory_space<vmem>>, vector<8x16xf32>
    %258 = arith.maximumf %256, %257 : vector<8x16xf32>
    %cst_277 = arith.constant 0.000000e+00 : f32
    %259 = vector.broadcast %cst_277 : f32 to vector<8x16xf32>
    %c0_278 = arith.constant 0 : index
    %c0_279 = arith.constant 0 : index
    %260 = vector.load %arg21[%c0_278, %c0_279] : memref<24x16xf32, #tpu.memory_space<vmem>>, vector<8x16xf32>
    tpu.vector_store %arg21[%c0_278, %c0_279], %259 {strides = array<i32>} : memref<24x16xf32, #tpu.memory_space<vmem>>, vector<8x16xf32>,
    %c16 = arith.constant 16 : index
    %c0_280 = arith.constant 0 : index
    %261 = vector.load %arg21[%c16, %c0_280] : memref<24x16xf32, #tpu.memory_space<vmem>>, vector<8x16xf32>
    tpu.vector_store %arg21[%c16, %c0_280], %259 {strides = array<i32>} : memref<24x16xf32, #tpu.memory_space<vmem>>, vector<8x16xf32>,
    %c8_281 = arith.constant 8 : index
    %c0_282 = arith.constant 0 : index
    %262 = vector.load %arg21[%c8_281, %c0_282] : memref<24x16xf32, #tpu.memory_space<vmem>>, vector<8x16xf32>
    tpu.vector_store %arg21[%c8_281, %c0_282], %258 {strides = array<i32>} : memref<24x16xf32, #tpu.memory_space<vmem>>, vector<8x16xf32>,
    %cst_283 = arith.constant 0.000000e+00 : f32
    %263 = vector.broadcast %cst_283 : f32 to vector<8x32xf32>
    %c5_284 = arith.constant 5 : index
    %c0_285 = arith.constant 0 : index
    %264 = vector.load %arg21[%c5_284, %c0_285] : memref<24x16xf32, #tpu.memory_space<vmem>>, vector<8x16xf32>
    %c0_286 = arith.constant 0 : index
    %c0_287 = arith.constant 0 : index
    %c0_288 = arith.constant 0 : index
    %265 = vector.load %arg12[%c0_286, %c0_287, %c0_288] : memref<8x16x32xf32, #tpu.memory_space<vmem>>, vector<1x16x32xf32>
    %266 = vector.shape_cast %265 : vector<1x16x32xf32> to vector<16x32xf32>
    %cst_289 = arith.constant dense<0.000000e+00> : vector<8x32xf32>
    %267 = tpu.matmul %264, %266, %cst_289 {dimension_numbers = #tpu.dot_dimension_numbers<[1], [0], [0], [1], [0, 0, 1, 1], [], []>} : vector<8x16xf32>, vector<16x32xf32>, vector<8x32xf32> -> vector<8x32xf32>
    %268 = arith.addf %263, %267 : vector<8x32xf32>
    %c6_290 = arith.constant 6 : index
    %c0_291 = arith.constant 0 : index
    %269 = vector.load %arg21[%c6_290, %c0_291] : memref<24x16xf32, #tpu.memory_space<vmem>>, vector<8x16xf32>
    %c1_292 = arith.constant 1 : index
    %c0_293 = arith.constant 0 : index
    %c0_294 = arith.constant 0 : index
    %270 = vector.load %arg12[%c1_292, %c0_293, %c0_294] : memref<8x16x32xf32, #tpu.memory_space<vmem>>, vector<1x16x32xf32>
    %271 = vector.shape_cast %270 : vector<1x16x32xf32> to vector<16x32xf32>
    %cst_295 = arith.constant dense<0.000000e+00> : vector<8x32xf32>
    %272 = tpu.matmul %269, %271, %cst_295 {dimension_numbers = #tpu.dot_dimension_numbers<[1], [0], [0], [1], [0, 0, 1, 1], [], []>} : vector<8x16xf32>, vector<16x32xf32>, vector<8x32xf32> -> vector<8x32xf32>
    %273 = arith.addf %268, %272 : vector<8x32xf32>
    %c7_296 = arith.constant 7 : index
    %c0_297 = arith.constant 0 : index
    %274 = vector.load %arg21[%c7_296, %c0_297] : memref<24x16xf32, #tpu.memory_space<vmem>>, vector<8x16xf32>
    %c2_298 = arith.constant 2 : index
    %c0_299 = arith.constant 0 : index
    %c0_300 = arith.constant 0 : index
    %275 = vector.load %arg12[%c2_298, %c0_299, %c0_300] : memref<8x16x32xf32, #tpu.memory_space<vmem>>, vector<1x16x32xf32>
    %276 = vector.shape_cast %275 : vector<1x16x32xf32> to vector<16x32xf32>
    %cst_301 = arith.constant dense<0.000000e+00> : vector<8x32xf32>
    %277 = tpu.matmul %274, %276, %cst_301 {dimension_numbers = #tpu.dot_dimension_numbers<[1], [0], [0], [1], [0, 0, 1, 1], [], []>} : vector<8x16xf32>, vector<16x32xf32>, vector<8x32xf32> -> vector<8x32xf32>
    %278 = arith.addf %273, %277 : vector<8x32xf32>
    %c8_302 = arith.constant 8 : index
    %c0_303 = arith.constant 0 : index
    %279 = vector.load %arg21[%c8_302, %c0_303] : memref<24x16xf32, #tpu.memory_space<vmem>>, vector<8x16xf32>
    %c3_304 = arith.constant 3 : index
    %c0_305 = arith.constant 0 : index
    %c0_306 = arith.constant 0 : index
    %280 = vector.load %arg12[%c3_304, %c0_305, %c0_306] : memref<8x16x32xf32, #tpu.memory_space<vmem>>, vector<1x16x32xf32>
    %281 = vector.shape_cast %280 : vector<1x16x32xf32> to vector<16x32xf32>
    %cst_307 = arith.constant dense<0.000000e+00> : vector<8x32xf32>
    %282 = tpu.matmul %279, %281, %cst_307 {dimension_numbers = #tpu.dot_dimension_numbers<[1], [0], [0], [1], [0, 0, 1, 1], [], []>} : vector<8x16xf32>, vector<16x32xf32>, vector<8x32xf32> -> vector<8x32xf32>
    %283 = arith.addf %278, %282 : vector<8x32xf32>
    %c9_308 = arith.constant 9 : index
    %c0_309 = arith.constant 0 : index
    %284 = vector.load %arg21[%c9_308, %c0_309] : memref<24x16xf32, #tpu.memory_space<vmem>>, vector<8x16xf32>
    %c4_310 = arith.constant 4 : index
    %c0_311 = arith.constant 0 : index
    %c0_312 = arith.constant 0 : index
    %285 = vector.load %arg12[%c4_310, %c0_311, %c0_312] : memref<8x16x32xf32, #tpu.memory_space<vmem>>, vector<1x16x32xf32>
    %286 = vector.shape_cast %285 : vector<1x16x32xf32> to vector<16x32xf32>
    %cst_313 = arith.constant dense<0.000000e+00> : vector<8x32xf32>
    %287 = tpu.matmul %284, %286, %cst_313 {dimension_numbers = #tpu.dot_dimension_numbers<[1], [0], [0], [1], [0, 0, 1, 1], [], []>} : vector<8x16xf32>, vector<16x32xf32>, vector<8x32xf32> -> vector<8x32xf32>
    %288 = arith.addf %283, %287 : vector<8x32xf32>
    %c10_314 = arith.constant 10 : index
    %c0_315 = arith.constant 0 : index
    %289 = vector.load %arg21[%c10_314, %c0_315] : memref<24x16xf32, #tpu.memory_space<vmem>>, vector<8x16xf32>
    %c5_316 = arith.constant 5 : index
    %c0_317 = arith.constant 0 : index
    %c0_318 = arith.constant 0 : index
    %290 = vector.load %arg12[%c5_316, %c0_317, %c0_318] : memref<8x16x32xf32, #tpu.memory_space<vmem>>, vector<1x16x32xf32>
    %291 = vector.shape_cast %290 : vector<1x16x32xf32> to vector<16x32xf32>
    %cst_319 = arith.constant dense<0.000000e+00> : vector<8x32xf32>
    %292 = tpu.matmul %289, %291, %cst_319 {dimension_numbers = #tpu.dot_dimension_numbers<[1], [0], [0], [1], [0, 0, 1, 1], [], []>} : vector<8x16xf32>, vector<16x32xf32>, vector<8x32xf32> -> vector<8x32xf32>
    %293 = arith.addf %288, %292 : vector<8x32xf32>
    %c11_320 = arith.constant 11 : index
    %c0_321 = arith.constant 0 : index
    %294 = vector.load %arg21[%c11_320, %c0_321] : memref<24x16xf32, #tpu.memory_space<vmem>>, vector<8x16xf32>
    %c6_322 = arith.constant 6 : index
    %c0_323 = arith.constant 0 : index
    %c0_324 = arith.constant 0 : index
    %295 = vector.load %arg12[%c6_322, %c0_323, %c0_324] : memref<8x16x32xf32, #tpu.memory_space<vmem>>, vector<1x16x32xf32>
    %296 = vector.shape_cast %295 : vector<1x16x32xf32> to vector<16x32xf32>
    %cst_325 = arith.constant dense<0.000000e+00> : vector<8x32xf32>
    %297 = tpu.matmul %294, %296, %cst_325 {dimension_numbers = #tpu.dot_dimension_numbers<[1], [0], [0], [1], [0, 0, 1, 1], [], []>} : vector<8x16xf32>, vector<16x32xf32>, vector<8x32xf32> -> vector<8x32xf32>
    %298 = arith.addf %293, %297 : vector<8x32xf32>
    %c12_326 = arith.constant 12 : index
    %c0_327 = arith.constant 0 : index
    %299 = vector.load %arg21[%c12_326, %c0_327] : memref<24x16xf32, #tpu.memory_space<vmem>>, vector<8x16xf32>
    %c7_328 = arith.constant 7 : index
    %c0_329 = arith.constant 0 : index
    %c0_330 = arith.constant 0 : index
    %300 = vector.load %arg12[%c7_328, %c0_329, %c0_330] : memref<8x16x32xf32, #tpu.memory_space<vmem>>, vector<1x16x32xf32>
    %301 = vector.shape_cast %300 : vector<1x16x32xf32> to vector<16x32xf32>
    %cst_331 = arith.constant dense<0.000000e+00> : vector<8x32xf32>
    %302 = tpu.matmul %299, %301, %cst_331 {dimension_numbers = #tpu.dot_dimension_numbers<[1], [0], [0], [1], [0, 0, 1, 1], [], []>} : vector<8x16xf32>, vector<16x32xf32>, vector<8x32xf32> -> vector<8x32xf32>
    %303 = arith.addf %298, %302 : vector<8x32xf32>
    %c0_332 = arith.constant 0 : index
    %c0_333 = arith.constant 0 : index
    %304 = vector.load %arg13[%c0_332, %c0_333] : memref<3x32xf32, #tpu.memory_space<vmem>>, vector<1x32xf32>
    %305 = vector.broadcast %304 : vector<1x32xf32> to vector<8x32xf32>
    %306 = arith.addf %303, %305 : vector<8x32xf32>
    %cst_334 = arith.constant 0.000000e+00 : f32
    %307 = vector.broadcast %cst_334 : f32 to vector<8x32xf32>
    %308 = arith.maximumf %306, %307 : vector<8x32xf32>
    %c1_335 = arith.constant 1 : index
    %c0_336 = arith.constant 0 : index
    %309 = vector.load %arg13[%c1_335, %c0_336] : memref<3x32xf32, #tpu.memory_space<vmem>>, vector<1x32xf32>
    %310 = vector.broadcast %309 : vector<1x32xf32> to vector<8x32xf32>
    %311 = arith.mulf %308, %310 : vector<8x32xf32>
    %c2_337 = arith.constant 2 : index
    %c0_338 = arith.constant 0 : index
    %312 = vector.load %arg13[%c2_337, %c0_338] : memref<3x32xf32, #tpu.memory_space<vmem>>, vector<1x32xf32>
    %313 = vector.broadcast %312 : vector<1x32xf32> to vector<8x32xf32>
    %314 = arith.addf %311, %313 : vector<8x32xf32>
    %c0_339 = arith.constant 0 : index
    %c0_340 = arith.constant 0 : index
    %315 = vector.load %arg22[%c0_339, %c0_340] : memref<8x32xf32, #tpu.memory_space<vmem>>, vector<8x32xf32>
    tpu.vector_store %arg22[%c0_339, %c0_340], %314 {strides = array<i32>} : memref<8x32xf32, #tpu.memory_space<vmem>>, vector<8x32xf32>,
    %c0_341 = arith.constant 0 : index
    %c0_342 = arith.constant 0 : index
    %316 = tpu.strided_load %arg22[%c0_341, %c0_342] {strides = array<i32: 2, 1>} : memref<8x32xf32, #tpu.memory_space<vmem>>, vector<4x32xf32>
    %c1_343 = arith.constant 1 : index
    %c0_344 = arith.constant 0 : index
    %317 = tpu.strided_load %arg22[%c1_343, %c0_344] {strides = array<i32: 2, 1>} : memref<8x32xf32, #tpu.memory_space<vmem>>, vector<4x32xf32>
    %318 = arith.maximumf %316, %317 : vector<4x32xf32>
    %c0_345 = arith.constant 0 : index
    %c0_346 = arith.constant 0 : index
    %319 = vector.load %arg15[%c0_345, %c0_346] : memref<1x360xf32, #tpu.memory_space<vmem>>, vector<1x360xf32>
    %320 = vector.extract_strided_slice %318 {offsets = [0, 0], sizes = [1, 32], strides = [1, 1]} : vector<4x32xf32> to vector<1x32xf32>
    %c0_347 = arith.constant 0 : index
    %c0_348 = arith.constant 0 : index
    %c0_349 = arith.constant 0 : index
    %321 = vector.load %arg14[%c0_347, %c0_348, %c0_349] : memref<4x32x360xf32, #tpu.memory_space<vmem>>, vector<1x32x360xf32>
    %322 = vector.shape_cast %321 : vector<1x32x360xf32> to vector<32x360xf32>
    %cst_350 = arith.constant dense<0.000000e+00> : vector<1x360xf32>
    %323 = tpu.matmul %320, %322, %cst_350 {dimension_numbers = #tpu.dot_dimension_numbers<[1], [0], [0], [1], [0, 0, 1, 1], [], []>} : vector<1x32xf32>, vector<32x360xf32>, vector<1x360xf32> -> vector<1x360xf32>
    %324 = arith.addf %319, %323 : vector<1x360xf32>
    %325 = vector.extract_strided_slice %318 {offsets = [1, 0], sizes = [1, 32], strides = [1, 1]} : vector<4x32xf32> to vector<1x32xf32>
    %c1_351 = arith.constant 1 : index
    %c0_352 = arith.constant 0 : index
    %c0_353 = arith.constant 0 : index
    %326 = vector.load %arg14[%c1_351, %c0_352, %c0_353] : memref<4x32x360xf32, #tpu.memory_space<vmem>>, vector<1x32x360xf32>
    %327 = vector.shape_cast %326 : vector<1x32x360xf32> to vector<32x360xf32>
    %cst_354 = arith.constant dense<0.000000e+00> : vector<1x360xf32>
    %328 = tpu.matmul %325, %327, %cst_354 {dimension_numbers = #tpu.dot_dimension_numbers<[1], [0], [0], [1], [0, 0, 1, 1], [], []>} : vector<1x32xf32>, vector<32x360xf32>, vector<1x360xf32> -> vector<1x360xf32>
    %329 = arith.addf %324, %328 : vector<1x360xf32>
    %330 = vector.extract_strided_slice %318 {offsets = [2, 0], sizes = [1, 32], strides = [1, 1]} : vector<4x32xf32> to vector<1x32xf32>
    %c2_355 = arith.constant 2 : index
    %c0_356 = arith.constant 0 : index
    %c0_357 = arith.constant 0 : index
    %331 = vector.load %arg14[%c2_355, %c0_356, %c0_357] : memref<4x32x360xf32, #tpu.memory_space<vmem>>, vector<1x32x360xf32>
    %332 = vector.shape_cast %331 : vector<1x32x360xf32> to vector<32x360xf32>
    %cst_358 = arith.constant dense<0.000000e+00> : vector<1x360xf32>
    %333 = tpu.matmul %330, %332, %cst_358 {dimension_numbers = #tpu.dot_dimension_numbers<[1], [0], [0], [1], [0, 0, 1, 1], [], []>} : vector<1x32xf32>, vector<32x360xf32>, vector<1x360xf32> -> vector<1x360xf32>
    %334 = arith.addf %329, %333 : vector<1x360xf32>
    %335 = vector.extract_strided_slice %318 {offsets = [3, 0], sizes = [1, 32], strides = [1, 1]} : vector<4x32xf32> to vector<1x32xf32>
    %c3_359 = arith.constant 3 : index
    %c0_360 = arith.constant 0 : index
    %c0_361 = arith.constant 0 : index
    %336 = vector.load %arg14[%c3_359, %c0_360, %c0_361] : memref<4x32x360xf32, #tpu.memory_space<vmem>>, vector<1x32x360xf32>
    %337 = vector.shape_cast %336 : vector<1x32x360xf32> to vector<32x360xf32>
    %cst_362 = arith.constant dense<0.000000e+00> : vector<1x360xf32>
    %338 = tpu.matmul %335, %337, %cst_362 {dimension_numbers = #tpu.dot_dimension_numbers<[1], [0], [0], [1], [0, 0, 1, 1], [], []>} : vector<1x32xf32>, vector<32x360xf32>, vector<1x360xf32> -> vector<1x360xf32>
    %339 = arith.addf %334, %338 : vector<1x360xf32>
    %cst_363 = arith.constant 0.000000e+00 : f32
    %340 = vector.broadcast %cst_363 : f32 to vector<1x360xf32>
    %341 = arith.subf %340, %339 : vector<1x360xf32>
    %342 = math.exp %341 : vector<1x360xf32>
    %cst_364 = arith.constant 1.000000e+00 : f32
    %343 = vector.broadcast %cst_364 : f32 to vector<1x360xf32>
    %344 = arith.addf %343, %342 : vector<1x360xf32>
    %cst_365 = arith.constant 1.000000e+00 : f32
    %345 = vector.broadcast %cst_365 : f32 to vector<1x360xf32>
    %346 = arith.divf %345, %344 : vector<1x360xf32>
    %c0_366 = arith.constant 0 : index
    %c0_367 = arith.constant 0 : index
    %c0_368 = arith.constant 0 : index
    %347 = vector.load %arg16[%c0_366, %c0_367, %c0_368] : memref<1x1x360xf32, #tpu.memory_space<vmem>>, vector<1x1x360xf32>
    %348 = vector.shape_cast %347 : vector<1x1x360xf32> to vector<1x360xf32>
    %349 = vector.shape_cast %346 : vector<1x360xf32> to vector<1x1x360xf32>
    tpu.vector_store %arg16[%c0_366, %c0_367, %c0_368], %349 {strides = array<i32>} : memref<1x1x360xf32, #tpu.memory_space<vmem>>, vector<1x1x360xf32>,
    return
  }
  func.func @transform_0(%arg0: i32) -> (i32, i32, i32) {
    %c0_i32 = arith.constant 0 : i32
    %c0_i32_0 = arith.constant 0 : i32
    %c0_i32_1 = arith.constant 0 : i32
    return %arg0, %c0_i32, %c0_i32_0 : i32, i32, i32
  }
  func.func @transform_1(%arg0: i32) -> (i32, i32) {
    %c0_i32 = arith.constant 0 : i32
    %c0_i32_0 = arith.constant 0 : i32
    %c0_i32_1 = arith.constant 0 : i32
    return %c0_i32, %c0_i32_0 : i32, i32
  }
  func.func @transform_2(%arg0: i32) -> (i32, i32) {
    %c0_i32 = arith.constant 0 : i32
    %c0_i32_0 = arith.constant 0 : i32
    %c0_i32_1 = arith.constant 0 : i32
    return %c0_i32, %c0_i32_0 : i32, i32
  }
  func.func @transform_3(%arg0: i32) -> (i32, i32, i32) {
    %c0_i32 = arith.constant 0 : i32
    %c0_i32_0 = arith.constant 0 : i32
    %c0_i32_1 = arith.constant 0 : i32
    %c0_i32_2 = arith.constant 0 : i32
    return %c0_i32, %c0_i32_0, %c0_i32_1 : i32, i32, i32
  }
  func.func @transform_4(%arg0: i32) -> (i32, i32) {
    %c0_i32 = arith.constant 0 : i32
    %c0_i32_0 = arith.constant 0 : i32
    %c0_i32_1 = arith.constant 0 : i32
    return %c0_i32, %c0_i32_0 : i32, i32
  }
  func.func @transform_5(%arg0: i32) -> (i32, i32, i32) {
    %c0_i32 = arith.constant 0 : i32
    %c0_i32_0 = arith.constant 0 : i32
    %c0_i32_1 = arith.constant 0 : i32
    %c0_i32_2 = arith.constant 0 : i32
    return %c0_i32, %c0_i32_0, %c0_i32_1 : i32, i32, i32
  }
  func.func @transform_6(%arg0: i32) -> (i32, i32) {
    %c0_i32 = arith.constant 0 : i32
    %c0_i32_0 = arith.constant 0 : i32
    %c0_i32_1 = arith.constant 0 : i32
    return %c0_i32, %c0_i32_0 : i32, i32
  }
  func.func @transform_7(%arg0: i32) -> (i32, i32, i32) {
    %c0_i32 = arith.constant 0 : i32
    %c0_i32_0 = arith.constant 0 : i32
    %c0_i32_1 = arith.constant 0 : i32
    %c0_i32_2 = arith.constant 0 : i32
    return %c0_i32, %c0_i32_0, %c0_i32_1 : i32, i32, i32
  }
  func.func @transform_8(%arg0: i32) -> (i32, i32) {
    %c0_i32 = arith.constant 0 : i32
    %c0_i32_0 = arith.constant 0 : i32
    %c0_i32_1 = arith.constant 0 : i32
    return %c0_i32, %c0_i32_0 : i32, i32
  }
  func.func @transform_9(%arg0: i32) -> (i32, i32, i32) {
    %c0_i32 = arith.constant 0 : i32
    %c0_i32_0 = arith.constant 0 : i32
    %c0_i32_1 = arith.constant 0 : i32
    %c0_i32_2 = arith.constant 0 : i32
    return %c0_i32, %c0_i32_0, %c0_i32_1 : i32, i32, i32
  }
  func.func @transform_10(%arg0: i32) -> (i32, i32) {
    %c0_i32 = arith.constant 0 : i32
    %c0_i32_0 = arith.constant 0 : i32
    %c0_i32_1 = arith.constant 0 : i32
    return %c0_i32, %c0_i32_0 : i32, i32
  }
  func.func @transform_11(%arg0: i32) -> (i32, i32, i32) {
    %c0_i32 = arith.constant 0 : i32
    %c0_i32_0 = arith.constant 0 : i32
    %c0_i32_1 = arith.constant 0 : i32
    %c0_i32_2 = arith.constant 0 : i32
    return %c0_i32, %c0_i32_0, %c0_i32_1 : i32, i32, i32
  }
  func.func @transform_12(%arg0: i32) -> (i32, i32) {
    %c0_i32 = arith.constant 0 : i32
    %c0_i32_0 = arith.constant 0 : i32
    %c0_i32_1 = arith.constant 0 : i32
    return %c0_i32, %c0_i32_0 : i32, i32
  }
  func.func @transform_13(%arg0: i32) -> (i32, i32, i32) {
    %c0_i32 = arith.constant 0 : i32
    %c0_i32_0 = arith.constant 0 : i32
    %c0_i32_1 = arith.constant 0 : i32
    %c0_i32_2 = arith.constant 0 : i32
    return %c0_i32, %c0_i32_0, %c0_i32_1 : i32, i32, i32
  }
  func.func @transform_14(%arg0: i32) -> (i32, i32) {
    %c0_i32 = arith.constant 0 : i32
    %c0_i32_0 = arith.constant 0 : i32
    %c0_i32_1 = arith.constant 0 : i32
    return %c0_i32, %c0_i32_0 : i32, i32
  }
  func.func @transform_15(%arg0: i32) -> (i32, i32, i32) {
    %c0_i32 = arith.constant 0 : i32
    %c0_i32_0 = arith.constant 0 : i32
    %c0_i32_1 = arith.constant 0 : i32
    return %arg0, %c0_i32, %c0_i32_0 : i32, i32, i32
  }
}

</mosaic_0001>

<llo_original>
// kernel: crepe_forward.1
$region0: #{crepe_forward.1}
  #allocation0 [shape = 'u32[]', space=smem, size = 0x4, offset = 0x4, fixed_abs, tag = 'smem constant byte address 0x4 - core index']
  #allocation1 [shape = 'u32[144,128]{1,0:T(1,128)}', space=vmem, size = 0x12000, scoped, tag = 'internal scratch']
  #allocation2 [shape = 'f32[256,32]{1,0:T(8,128)}', space=vmem, size = 0x20000, scoped, tag = 'scratch operand']
  #allocation3 [shape = 'f32[128,8]{1,0:T(8,128)}', space=vmem, size = 0x10000, scoped, tag = 'scratch operand']
  #allocation4 [shape = 'f32[64,8]{1,0:T(8,128)}', space=vmem, size = 0x8000, scoped, tag = 'scratch operand']
  #allocation5 [shape = 'f32[32,8]{1,0:T(8,128)}', space=vmem, size = 0x4000, scoped, tag = 'scratch operand']
  #allocation6 [shape = 'f32[24,16]{1,0:T(8,128)}', space=vmem, size = 0x3000, scoped, tag = 'scratch operand']
  #allocation7 [shape = 'f32[8,32]{1,0:T(8,128)}', space=vmem, size = 0x1000, scoped, tag = 'scratch operand']
  %s0 = inlined_call_operand.vmem [shape: f32[2,256,16], index: 0, kind: input, shape index: {}]
  %s1 = inlined_call_operand.vmem [shape: f32[16,32], index: 1, kind: input, shape index: {}]
  %s2 = inlined_call_operand.vmem [shape: f32[3,32], index: 2, kind: input, shape index: {}]
  %s3 = inlined_call_operand.vmem [shape: f32[8,32,8], index: 3, kind: input, shape index: {}]
  %s4 = inlined_call_operand.vmem [shape: f32[3,8], index: 4, kind: input, shape index: {}]
  %s5 = inlined_call_operand.vmem [shape: f32[8,8,8], index: 5, kind: input, shape index: {}]
  %s6 = inlined_call_operand.vmem [shape: f32[3,8], index: 6, kind: input, shape index: {}]
  %s7 = inlined_call_operand.vmem [shape: f32[8,8,8], index: 7, kind: input, shape index: {}]
  %s8 = inlined_call_operand.vmem [shape: f32[3,8], index: 8, kind: input, shape index: {}]
  %s9 = inlined_call_operand.vmem [shape: f32[8,8,16], index: 9, kind: input, shape index: {}]
  %s10 = inlined_call_operand.vmem [shape: f32[3,16], index: 10, kind: input, shape index: {}]
  %s11 = inlined_call_operand.vmem [shape: f32[8,16,32], index: 11, kind: input, shape index: {}]
  %s12 = inlined_call_operand.vmem [shape: f32[3,32], index: 12, kind: input, shape index: {}]
  %s13 = inlined_call_operand.vmem [shape: f32[4,32,360], index: 13, kind: input, shape index: {}]
  %s14 = inlined_call_operand.vmem [shape: f32[1,360], index: 14, kind: input, shape index: {}]
  %s15 = inlined_call_operand.vmem [shape: f32[2,1,360], index: 15, kind: output, shape index: {}]
  %s16 = sld [smem:[#allocation0]]
  $region93: #{crepe_forward.1} parent=0
    _
  %s18 = ssub.s32 1, %s16
  %s19 = scalar_select 0, %s18, %s16
  loop: start=0, step=1, limit=4
  $region2: #{crepe_forward.1} parent=0 // loop_pre_header
    _
  $region3: #{crepe_forward.1} parent=0 // loop_header
    %s21 = sphi 0, %s25
    %p22 = scmp.ge.s32.totalorder %s21, 4
    %s31 = sphi 0, %s33
    %s34 = sphi 0, %s31
    %s35 = sphi 0, %s34
    %s51 = sphi 0, %s35
    %s55 = sphi 0, %s55
    %s57 = sphi 0, %s55
    %s58 = sphi 0, %s57
    %s72 = sphi 0, %s58
    %s76 = sphi 0, %s76
    %s78 = sphi 0, %s76
    %s79 = sphi 0, %s78
    %s93 = sphi 0, %s79
    %s97 = sphi 0, %s97
    %s99 = sphi 0, %s97
    %s100 = sphi 0, %s99
    %s114 = sphi 0, %s100
    %s118 = sphi 0, %s118
    %s120 = sphi 0, %s118
    %s121 = sphi 0, %s120
    %s135 = sphi 0, %s121
    %s139 = sphi 0, %s139
    %s141 = sphi 0, %s139
    %s142 = sphi 0, %s141
    %s156 = sphi 0, %s142
    %s160 = sphi 0, %s160
    %s162 = sphi 0, %s160
    %s163 = sphi 0, %s162
    %s177 = sphi 0, %s163
    %s181 = sphi 0, %s181
    %s183 = sphi 0, %s181
    %s184 = sphi 0, %s183
    %s198 = sphi 0, %s184
    %s202 = sphi 0, %s202
    %s204 = sphi 0, %s202
    %s205 = sphi 0, %s204
    %s219 = sphi 0, %s205
    %s223 = sphi 0, %s223
    %s225 = sphi 0, %s223
    %s226 = sphi 0, %s225
    %s240 = sphi 0, %s226
    %s244 = sphi 0, %s244
    %s246 = sphi 0, %s244
    %s247 = sphi 0, %s246
    %s261 = sphi 0, %s247
    %s265 = sphi 0, %s265
    %s267 = sphi 0, %s265
    %s268 = sphi 0, %s267
    %s282 = sphi 0, %s268
    %s286 = sphi 0, %s286
    %s288 = sphi 0, %s286
    %s289 = sphi 0, %s288
    %s303 = sphi 0, %s289
    %s307 = sphi 0, %s307
    %s309 = sphi 0, %s307
    %s310 = sphi 0, %s309
    %s324 = sphi 0, %s310
    %s328 = sphi 0, %s328
    %s330 = sphi 0, %s328
    %s331 = sphi 0, %s330
    %s345 = sphi 0, %s331
    %s351 = sphi 0, %s353
    %s354 = sphi 0, %s351
    %s355 = sphi 0, %s354
    %s371 = sphi 0, %s355
  $region4: #{crepe_forward.1} parent=0 // loop_header_branch
    %24 = sbr.rel (%p22) target = $region8
  $region5: #{crepe_forward.1} parent=0 // loop_body
    %s26 = ssub.s32 %s21, 1
    %s27 = ssub.s32 %s21, 2
    %s28 = sadd.s32 %s21, 1
    %s29 = ssub.s32 %s21, %s28
    %p30 = scmp.eq.s32.totalorder %s29, 0
    %s32 = sadd.s32 %s31, 1
    %s33 = scalar_select %p30, %s31, %s32
    %p36 = pneg %p30
    %p37 = scmp.eq.s32.totalorder %s21, 1
    %p38 = por %p36, %p37
    %p39 = scmp.ne.s32.totalorder %s31, %s34
    %p40 = scmp.eq.s32.totalorder %s21, 0
    %p41 = por %p39, %p40
    %p42 = scmp.ne.s32.totalorder %s31, %s34
    %p43 = scmp.eq.s32.totalorder %s26, 1
    %p44 = por %p42, %p43
    %p45 = scmp.ne.s32.totalorder %s34, %s35
    %p46 = scmp.eq.s32.totalorder %s26, 0
    %p47 = por %p45, %p46
    %p48 = scmp.ne.s32.totalorder %s34, %s35
    %p49 = scmp.eq.s32.totalorder %s27, 1
    %p50 = por %p48, %p49
    %p52 = scmp.ne.s32.totalorder %s35, %s51
    %p53 = scmp.eq.s32.totalorder %s27, 0
    %p54 = por %p52, %p53
    %s56 = sadd.s32 %s55, 1
    %p59 = scmp.eq.s32.totalorder %s21, 1
    %p60 = scmp.ne.s32.totalorder %s55, %s57
    %p61 = scmp.eq.s32.totalorder %s21, 0
    %p62 = por %p60, %p61
    %p63 = scmp.ne.s32.totalorder %s55, %s57
    %p64 = scmp.eq.s32.totalorder %s26, 1
    %p65 = por %p63, %p64
    %p66 = scmp.ne.s32.totalorder %s57, %s58
    %p67 = scmp.eq.s32.totalorder %s26, 0
    %p68 = por %p66, %p67
    %p69 = scmp.ne.s32.totalorder %s57, %s58
    %p70 = scmp.eq.s32.totalorder %s27, 1
    %p71 = por %p69, %p70
    %p73 = scmp.ne.s32.totalorder %s58, %s72
    %p74 = scmp.eq.s32.totalorder %s27, 0
    %p75 = por %p73, %p74
    %s77 = sadd.s32 %s76, 1
    %p80 = scmp.eq.s32.totalorder %s21, 1
    %p81 = scmp.ne.s32.totalorder %s76, %s78
    %p82 = scmp.eq.s32.totalorder %s21, 0
    %p83 = por %p81, %p82
    %p84 = scmp.ne.s32.totalorder %s76, %s78
    %p85 = scmp.eq.s32.totalorder %s26, 1
    %p86 = por %p84, %p85
    %p87 = scmp.ne.s32.totalorder %s78, %s79
    %p88 = scmp.eq.s32.totalorder %s26, 0
    %p89 = por %p87, %p88
    %p90 = scmp.ne.s32.totalorder %s78, %s79
    %p91 = scmp.eq.s32.totalorder %s27, 1
    %p92 = por %p90, %p91
    %p94 = scmp.ne.s32.totalorder %s79, %s93
    %p95 = scmp.eq.s32.totalorder %s27, 0
    %p96 = por %p94, %p95
    %s98 = sadd.s32 %s97, 1
    %p101 = scmp.eq.s32.totalorder %s21, 1
    %p102 = scmp.ne.s32.totalorder %s97, %s99
    %p103 = scmp.eq.s32.totalorder %s21, 0
    %p104 = por %p102, %p103
    %p105 = scmp.ne.s32.totalorder %s97, %s99
    %p106 = scmp.eq.s32.totalorder %s26, 1
    %p107 = por %p105, %p106
    %p108 = scmp.ne.s32.totalorder %s99, %s100
    %p109 = scmp.eq.s32.totalorder %s26, 0
    %p110 = por %p108, %p109
    %p111 = scmp.ne.s32.totalorder %s99, %s100
    %p112 = scmp.eq.s32.totalorder %s27, 1
    %p113 = por %p111, %p112
    %p115 = scmp.ne.s32.totalorder %s100, %s114
    %p116 = scmp.eq.s32.totalorder %s27, 0
    %p117 = por %p115, %p116
    %s119 = sadd.s32 %s118, 1
    %p122 = scmp.eq.s32.totalorder %s21, 1
    %p123 = scmp.ne.s32.totalorder %s118, %s120
    %p124 = scmp.eq.s32.totalorder %s21, 0
    %p125 = por %p123, %p124
    %p126 = scmp.ne.s32.totalorder %s118, %s120
    %p127 = scmp.eq.s32.totalorder %s26, 1
    %p128 = por %p126, %p127
    %p129 = scmp.ne.s32.totalorder %s120, %s121
    %p130 = scmp.eq.s32.totalorder %s26, 0
    %p131 = por %p129, %p130
    %p132 = scmp.ne.s32.totalorder %s120, %s121
    %p133 = scmp.eq.s32.totalorder %s27, 1
    %p134 = por %p132, %p133
    %p136 = scmp.ne.s32.totalorder %s121, %s135
    %p137 = scmp.eq.s32.totalorder %s27, 0
    %p138 = por %p136, %p137
    %s140 = sadd.s32 %s139, 1
    %p143 = scmp.eq.s32.totalorder %s21, 1
    %p144 = scmp.ne.s32.totalorder %s139, %s141
    %p145 = scmp.eq.s32.totalorder %s21, 0
    %p146 = por %p144, %p145
    %p147 = scmp.ne.s32.totalorder %s139, %s141
    %p148 = scmp.eq.s32.totalorder %s26, 1
    %p149 = por %p147, %p148
    %p150 = scmp.ne.s32.totalorder %s141, %s142
    %p151 = scmp.eq.s32.totalorder %s26, 0
    %p152 = por %p150, %p151
    %p153 = scmp.ne.s32.totalorder %s141, %s142
    %p154 = scmp.eq.s32.totalorder %s27, 1
    %p155 = por %p153, %p154
    %p157 = scmp.ne.s32.totalorder %s142, %s156
    %p158 = scmp.eq.s32.totalorder %s27, 0
    %p159 = por %p157, %p158
    %s161 = sadd.s32 %s160, 1
    %p164 = scmp.eq.s32.totalorder %s21, 1
    %p165 = scmp.ne.s32.totalorder %s160, %s162
    %p166 = scmp.eq.s32.totalorder %s21, 0
    %p167 = por %p165, %p166
    %p168 = scmp.ne.s32.totalorder %s160, %s162
    %p169 = scmp.eq.s32.totalorder %s26, 1
    %p170 = por %p168, %p169
    %p171 = scmp.ne.s32.totalorder %s162, %s163
    %p172 = scmp.eq.s32.totalorder %s26, 0
    %p173 = por %p171, %p172
    %p174 = scmp.ne.s32.totalorder %s162, %s163
    %p175 = scmp.eq.s32.totalorder %s27, 1
    %p176 = por %p174, %p175
    %p178 = scmp.ne.s32.totalorder %s163, %s177
    %p179 = scmp.eq.s32.totalorder %s27, 0
    %p180 = por %p178, %p179
    %s182 = sadd.s32 %s181, 1
    %p185 = scmp.eq.s32.totalorder %s21, 1
    %p186 = scmp.ne.s32.totalorder %s181, %s183
    %p187 = scmp.eq.s32.totalorder %s21, 0
    %p188 = por %p186, %p187
    %p189 = scmp.ne.s32.totalorder %s181, %s183
    %p190 = scmp.eq.s32.totalorder %s26, 1
    %p191 = por %p189, %p190
    %p192 = scmp.ne.s32.totalorder %s183, %s184
    %p193 = scmp.eq.s32.totalorder %s26, 0
    %p194 = por %p192, %p193
    %p195 = scmp.ne.s32.totalorder %s183, %s184
    %p196 = scmp.eq.s32.totalorder %s27, 1
    %p197 = por %p195, %p196
    %p199 = scmp.ne.s32.totalorder %s184, %s198
    %p200 = scmp.eq.s32.totalorder %s27, 0
    %p201 = por %p199, %p200
    %s203 = sadd.s32 %s202, 1
    %p206 = scmp.eq.s32.totalorder %s21, 1
    %p207 = scmp.ne.s32.totalorder %s202, %s204
    %p208 = scmp.eq.s32.totalorder %s21, 0
    %p209 = por %p207, %p208
    %p210 = scmp.ne.s32.totalorder %s202, %s204
    %p211 = scmp.eq.s32.totalorder %s26, 1
    %p212 = por %p210, %p211
    %p213 = scmp.ne.s32.totalorder %s204, %s205
    %p214 = scmp.eq.s32.totalorder %s26, 0
    %p215 = por %p213, %p214
    %p216 = scmp.ne.s32.totalorder %s204, %s205
    %p217 = scmp.eq.s32.totalorder %s27, 1
    %p218 = por %p216, %p217
    %p220 = scmp.ne.s32.totalorder %s205, %s219
    %p221 = scmp.eq.s32.totalorder %s27, 0
    %p222 = por %p220, %p221
    %s224 = sadd.s32 %s223, 1
    %p227 = scmp.eq.s32.totalorder %s21, 1
    %p228 = scmp.ne.s32.totalorder %s223, %s225
    %p229 = scmp.eq.s32.totalorder %s21, 0
    %p230 = por %p228, %p229
    %p231 = scmp.ne.s32.totalorder %s223, %s225
    %p232 = scmp.eq.s32.totalorder %s26, 1
    %p233 = por %p231, %p232
    %p234 = scmp.ne.s32.totalorder %s225, %s226
    %p235 = scmp.eq.s32.totalorder %s26, 0
    %p236 = por %p234, %p235
    %p237 = scmp.ne.s32.totalorder %s225, %s226
    %p238 = scmp.eq.s32.totalorder %s27, 1
    %p239 = por %p237, %p238
    %p241 = scmp.ne.s32.totalorder %s226, %s240
    %p242 = scmp.eq.s32.totalorder %s27, 0
    %p243 = por %p241, %p242
    %s245 = sadd.s32 %s244, 1
    %p248 = scmp.eq.s32.totalorder %s21, 1
    %p249 = scmp.ne.s32.totalorder %s244, %s246
    %p250 = scmp.eq.s32.totalorder %s21, 0
    %p251 = por %p249, %p250
    %p252 = scmp.ne.s32.totalorder %s244, %s246
    %p253 = scmp.eq.s32.totalorder %s26, 1
    %p254 = por %p252, %p253
    %p255 = scmp.ne.s32.totalorder %s246, %s247
    %p256 = scmp.eq.s32.totalorder %s26, 0
    %p257 = por %p255, %p256
    %p258 = scmp.ne.s32.totalorder %s246, %s247
    %p259 = scmp.eq.s32.totalorder %s27, 1
    %p260 = por %p258, %p259
    %p262 = scmp.ne.s32.totalorder %s247, %s261
    %p263 = scmp.eq.s32.totalorder %s27, 0
    %p264 = por %p262, %p263
    %s266 = sadd.s32 %s265, 1
    %p269 = scmp.eq.s32.totalorder %s21, 1
    %p270 = scmp.ne.s32.totalorder %s265, %s267
    %p271 = scmp.eq.s32.totalorder %s21, 0
    %p272 = por %p270, %p271
    %p273 = scmp.ne.s32.totalorder %s265, %s267
    %p274 = scmp.eq.s32.totalorder %s26, 1
    %p275 = por %p273, %p274
    %p276 = scmp.ne.s32.totalorder %s267, %s268
    %p277 = scmp.eq.s32.totalorder %s26, 0
    %p278 = por %p276, %p277
    %p279 = scmp.ne.s32.totalorder %s267, %s268
    %p280 = scmp.eq.s32.totalorder %s27, 1
    %p281 = por %p279, %p280
    %p283 = scmp.ne.s32.totalorder %s268, %s282
    %p284 = scmp.eq.s32.totalorder %s27, 0
    %p285 = por %p283, %p284
    %s287 = sadd.s32 %s286, 1
    %p290 = scmp.eq.s32.totalorder %s21, 1
    %p291 = scmp.ne.s32.totalorder %s286, %s288
    %p292 = scmp.eq.s32.totalorder %s21, 0
    %p293 = por %p291, %p292
    %p294 = scmp.ne.s32.totalorder %s286, %s288
    %p295 = scmp.eq.s32.totalorder %s26, 1
    %p296 = por %p294, %p295
    %p297 = scmp.ne.s32.totalorder %s288, %s289
    %p298 = scmp.eq.s32.totalorder %s26, 0
    %p299 = por %p297, %p298
    %p300 = scmp.ne.s32.totalorder %s288, %s289
    %p301 = scmp.eq.s32.totalorder %s27, 1
    %p302 = por %p300, %p301
    %p304 = scmp.ne.s32.totalorder %s289, %s303
    %p305 = scmp.eq.s32.totalorder %s27, 0
    %p306 = por %p304, %p305
    %s308 = sadd.s32 %s307, 1
    %p311 = scmp.eq.s32.totalorder %s21, 1
    %p312 = scmp.ne.s32.totalorder %s307, %s309
    %p313 = scmp.eq.s32.totalorder %s21, 0
    %p314 = por %p312, %p313
    %p315 = scmp.ne.s32.totalorder %s307, %s309
    %p316 = scmp.eq.s32.totalorder %s26, 1
    %p317 = por %p315, %p316
    %p318 = scmp.ne.s32.totalorder %s309, %s310
    %p319 = scmp.eq.s32.totalorder %s26, 0
    %p320 = por %p318, %p319
    %p321 = scmp.ne.s32.totalorder %s309, %s310
    %p322 = scmp.eq.s32.totalorder %s27, 1
    %p323 = por %p321, %p322
    %p325 = scmp.ne.s32.totalorder %s310, %s324
    %p326 = scmp.eq.s32.totalorder %s27, 0
    %p327 = por %p325, %p326
    %s329 = sadd.s32 %s328, 1
    %p332 = scmp.eq.s32.totalorder %s21, 1
    %p333 = scmp.ne.s32.totalorder %s328, %s330
    %p334 = scmp.eq.s32.totalorder %s21, 0
    %p335 = por %p333, %p334
    %p336 = scmp.ne.s32.totalorder %s328, %s330
    %p337 = scmp.eq.s32.totalorder %s26, 1
    %p338 = por %p336, %p337
    %p339 = scmp.ne.s32.totalorder %s330, %s331
    %p340 = scmp.eq.s32.totalorder %s26, 0
    %p341 = por %p339, %p340
    %p342 = scmp.ne.s32.totalorder %s330, %s331
    %p343 = scmp.eq.s32.totalorder %s27, 1
    %p344 = por %p342, %p343
    %p346 = scmp.ne.s32.totalorder %s331, %s345
    %p347 = scmp.eq.s32.totalorder %s27, 0
    %p348 = por %p346, %p347
    %s349 = ssub.s32 %s21, %s28
    %p350 = scmp.eq.s32.totalorder %s349, 0
    %s352 = sadd.s32 %s351, 1
    %s353 = scalar_select %p350, %s351, %s352
    %p356 = pneg %p350
    %p357 = scmp.eq.s32.totalorder %s21, 1
    %p358 = por %p356, %p357
    %p359 = scmp.ne.s32.totalorder %s351, %s354
    %p360 = scmp.eq.s32.totalorder %s21, 0
    %p361 = por %p359, %p360
    %p362 = scmp.ne.s32.totalorder %s351, %s354
    %p363 = scmp.eq.s32.totalorder %s26, 1
    %p364 = por %p362, %p363
    %p365 = scmp.ne.s32.totalorder %s354, %s355
    %p366 = scmp.eq.s32.totalorder %s26, 0
    %p367 = por %p365, %p366
    %p368 = scmp.ne.s32.totalorder %s354, %s355
    %p369 = scmp.eq.s32.totalorder %s27, 1
    %p370 = por %p368, %p369
    %p372 = scmp.ne.s32.totalorder %s355, %s371
    %p373 = scmp.eq.s32.totalorder %s27, 0
    %p374 = por %p372, %p373
    %p375 = scmp.le.s32.totalorder 1, %s21
    %p376 = scmp.lt.s32.totalorder %s21, 3
    %p377 = pnand %p375, %p376
    %p378 = pneg %p377
    // Predicated region
    $region9: #{crepe_forward.1} parent=5 // pred_check
      _
    $region10: #{crepe_forward.1} parent=5 // pred_check_branch
      %380 = sbr.rel (%p377) target = $region12
    $region11: #{crepe_forward.1} parent=5 // pred_region
      %s381 = ssub.s32 %s21, 1
      // Predicated region
      $region13: #{crepe_forward.1} parent=11 // pred_check
        %p382 = pneg %p68
      $region14: #{crepe_forward.1} parent=11 // pred_check_branch
        %384 = sbr.rel (%p382) target = $region16
      $region15: #{crepe_forward.1} parent=11 // pred_region
        _
      $region16: #{crepe_forward.1} parent=11 // pred_fallthru
        _
      // Predicated region
      $region17: #{crepe_forward.1} parent=11 // pred_check
        %p385 = pneg %p89
      $region18: #{crepe_forward.1} parent=11 // pred_check_branch
        %387 = sbr.rel (%p385) target = $region20
      $region19: #{crepe_forward.1} parent=11 // pred_region
        _
      $region20: #{crepe_forward.1} parent=11 // pred_fallthru
        _
      // Predicated region
      $region21: #{crepe_forward.1} parent=11 // pred_check
        %p388 = pneg %p110
      $region22: #{crepe_forward.1} parent=11 // pred_check_branch
        %390 = sbr.rel (%p388) target = $region24
      $region23: #{crepe_forward.1} parent=11 // pred_region
        _
      $region24: #{crepe_forward.1} parent=11 // pred_fallthru
        _
      // Predicated region
      $region25: #{crepe_forward.1} parent=11 // pred_check
        %p391 = pneg %p131
      $region26: #{crepe_forward.1} parent=11 // pred_check_branch
        %393 = sbr.rel (%p391) target = $region28
      $region27: #{crepe_forward.1} parent=11 // pred_region
        _
      $region28: #{crepe_forward.1} parent=11 // pred_fallthru
        _
      // Predicated region
      $region29: #{crepe_forward.1} parent=11 // pred_check
        %p394 = pneg %p152
      $region30: #{crepe_forward.1} parent=11 // pred_check_branch
        %396 = sbr.rel (%p394) target = $region32
      $region31: #{crepe_forward.1} parent=11 // pred_region
        _
      $region32: #{crepe_forward.1} parent=11 // pred_fallthru
        _
      // Predicated region
      $region33: #{crepe_forward.1} parent=11 // pred_check
        %p397 = pneg %p173
      $region34: #{crepe_forward.1} parent=11 // pred_check_branch
        %399 = sbr.rel (%p397) target = $region36
      $region35: #{crepe_forward.1} parent=11 // pred_region
        _
      $region36: #{crepe_forward.1} parent=11 // pred_fallthru
        _
      // Predicated region
      $region37: #{crepe_forward.1} parent=11 // pred_check
        %p400 = pneg %p194
      $region38: #{crepe_forward.1} parent=11 // pred_check_branch
        %402 = sbr.rel (%p400) target = $region40
      $region39: #{crepe_forward.1} parent=11 // pred_region
        _
      $region40: #{crepe_forward.1} parent=11 // pred_fallthru
        _
      // Predicated region
      $region41: #{crepe_forward.1} parent=11 // pred_check
        %p403 = pneg %p215
      $region42: #{crepe_forward.1} parent=11 // pred_check_branch
        %405 = sbr.rel (%p403) target = $region44
      $region43: #{crepe_forward.1} parent=11 // pred_region
        _
      $region44: #{crepe_forward.1} parent=11 // pred_fallthru
        _
      // Predicated region
      $region45: #{crepe_forward.1} parent=11 // pred_check
        %p406 = pneg %p236
      $region46: #{crepe_forward.1} parent=11 // pred_check_branch
        %408 = sbr.rel (%p406) target = $region48
      $region47: #{crepe_forward.1} parent=11 // pred_region
        _
      $region48: #{crepe_forward.1} parent=11 // pred_fallthru
        _
      // Predicated region
      $region49: #{crepe_forward.1} parent=11 // pred_check
        %p409 = pneg %p257
      $region50: #{crepe_forward.1} parent=11 // pred_check_branch
        %411 = sbr.rel (%p409) target = $region52
      $region51: #{crepe_forward.1} parent=11 // pred_region
        _
      $region52: #{crepe_forward.1} parent=11 // pred_fallthru
        _
      // Predicated region
      $region53: #{crepe_forward.1} parent=11 // pred_check
        %p412 = pneg %p278
      $region54: #{crepe_forward.1} parent=11 // pred_check_branch
        %414 = sbr.rel (%p412) target = $region56
      $region55: #{crepe_forward.1} parent=11 // pred_region
        _
      $region56: #{crepe_forward.1} parent=11 // pred_fallthru
        _
      // Predicated region
      $region57: #{crepe_forward.1} parent=11 // pred_check
        %p415 = pneg %p299
      $region58: #{crepe_forward.1} parent=11 // pred_check_branch
        %417 = sbr.rel (%p415) target = $region60
      $region59: #{crepe_forward.1} parent=11 // pred_region
        _
      $region60: #{crepe_forward.1} parent=11 // pred_fallthru
        _
      // Predicated region
      $region61: #{crepe_forward.1} parent=11 // pred_check
        %p418 = pneg %p320
      $region62: #{crepe_forward.1} parent=11 // pred_check_branch
        %420 = sbr.rel (%p418) target = $region64
      $region63: #{crepe_forward.1} parent=11 // pred_region
        _
      $region64: #{crepe_forward.1} parent=11 // pred_fallthru
        _
      // Predicated region
      $region65: #{crepe_forward.1} parent=11 // pred_check
        %p421 = pneg %p341
      $region66: #{crepe_forward.1} parent=11 // pred_check_branch
        %423 = sbr.rel (%p421) target = $region68
      $region67: #{crepe_forward.1} parent=11 // pred_region
        _
      $region68: #{crepe_forward.1} parent=11 // pred_fallthru
        _
    $region12: #{crepe_forward.1} parent=5 // pred_fallthru
      _
    %p424 = scmp.lt.s32.totalorder %s21, 2
    // Predicated region
    $region69: #{crepe_forward.1} parent=5 // pred_check
      %p425 = pneg %p424
    $region70: #{crepe_forward.1} parent=5 // pred_check_branch
      %427 = sbr.rel (%p425) target = $region72
    $region71: #{crepe_forward.1} parent=5 // pred_region
      // Predicated region
      $region73: #{crepe_forward.1} parent=71 // pred_check
        %p428 = pneg %p41
      $region74: #{crepe_forward.1} parent=71 // pred_check_branch
        %430 = sbr.rel (%p428) target = $region76
      $region75: #{crepe_forward.1} parent=71 // pred_region
        %p431 = scmp.lt.s32.totalorder %s21, 1
        %s432 = scalar_select %p431, %s21, 1
        %s433 = smul.addr %s432, 32
        %s434 = smul.addr %s433, 8
        %s435 = scalar_lea.vmem %s0, %s434
      $region76: #{crepe_forward.1} parent=71 // pred_fallthru
        _
    $region72: #{crepe_forward.1} parent=5 // pred_fallthru
      _
    %p436 = scmp.le.s32.totalorder 1, %s21
    %p437 = scmp.lt.s32.totalorder %s21, 3
    %p438 = pnand %p436, %p437
    %p439 = pneg %p438
    // Predicated region
    $region77: #{crepe_forward.1} parent=5 // pred_check
      _
    $region78: #{crepe_forward.1} parent=5 // pred_check_branch
      %441 = sbr.rel (%p438) target = $region80
    $region79: #{crepe_forward.1} parent=5 // pred_region
      %s442 = ssub.s32 %s21, 1
      %p443 = scmp.lt.s32.totalorder %s26, 1
      %s444 = scalar_select %p443, %s26, 1
      %s445 = smul.addr %s444, 32
      %s446 = smul.addr %s445, 8
      %s447 = scalar_lea.vmem %s0, %s446
      %p448 = pneg %p47
      %p449 = pneg %p44
      %p450 = pneg %p68
      %p451 = pneg %p65
      %p452 = pneg %p89
      %p453 = pneg %p86
      %p454 = pneg %p110
      %p455 = pneg %p107
      %p456 = pneg %p131
      %p457 = pneg %p128
      %p458 = pneg %p152
      %p459 = pneg %p149
      %p460 = pneg %p173
      %p461 = pneg %p170
      %p462 = pneg %p194
      %p463 = pneg %p191
      %p464 = pneg %p215
      %p465 = pneg %p212
      %p466 = pneg %p236
      %p467 = pneg %p233
      %p468 = pneg %p257
      %p469 = pneg %p254
      %p470 = pneg %p278
      %p471 = pneg %p275
      %p472 = pneg %p299
      %p473 = pneg %p296
      %p474 = pneg %p320
      %p475 = pneg %p317
      %p476 = pneg %p341
      %p477 = pneg %p338
      %p478 = pneg %p367
      %p479 = pneg %p364
      %p480 = scmp.lt.s32.totalorder %s26, 1
      %s481 = scalar_select %p480, %s26, 1
      %s482 = smul.addr %s481, 3
      %s483 = scalar_lea.vmem %s15, %s482
      %p484 = scmp.lt.s32.totalorder %s26, 1
      %s485 = scalar_select %p484, %s26, 1
      %s486 = smul.addr %s485, 32
      %s487 = smul.addr %s486, 8
      %s488 = scalar_lea.vmem %s0, %s487
      %p489 = scmp.lt.s32.totalorder %s26, 1
      %s490 = scalar_select %p489, %s26, 1
      %s491 = smul.addr %s490, 3
      %s492 = scalar_lea.vmem %s15, %s491
      %v493 = vld [vmem:[%s488] sm:$0xff]
      %v494 = vld [vmem:[%s488 + $0x8] sm:$0xff]
      %v495 = vld [vmem:[%s488 + $0x10] sm:$0xff]
      %v496 = vld [vmem:[%s488 + $0x18] sm:$0xff]
      %v497 = vld [vmem:[%s488 + $0x20] sm:$0xff]
      %v498 = vld [vmem:[%s488 + $0x28] sm:$0xff]
      %v499 = vld [vmem:[%s488 + $0x30] sm:$0xff]
      %v500 = vld [vmem:[%s488 + $0x38] sm:$0xff]
      %v501 = vld [vmem:[%s488 + $0x40] sm:$0xff]
      %v502 = vld [vmem:[%s488 + $0x48] sm:$0xff]
      %v503 = vld [vmem:[%s488 + $0x50] sm:$0xff]
      %v504 = vld [vmem:[%s488 + $0x58] sm:$0xff]
      %v505 = vld [vmem:[%s488 + $0x60] sm:$0xff]
      %v506 = vld [vmem:[%s488 + $0x68] sm:$0xff]
      %v507 = vld [vmem:[%s488 + $0x70] sm:$0xff]
      %v508 = vld [vmem:[%s488 + $0x78] sm:$0xff]
      %v509 = vld [vmem:[%s488 + $0x80] sm:$0xff]
      %v510 = vld [vmem:[%s488 + $0x88] sm:$0xff]
      %v511 = vld [vmem:[%s488 + $0x90] sm:$0xff]
      %v512 = vld [vmem:[%s488 + $0x98] sm:$0xff]
      %v513 = vld [vmem:[%s488 + $0xa0] sm:$0xff]
      %v514 = vld [vmem:[%s488 + $0xa8] sm:$0xff]
      %v515 = vld [vmem:[%s488 + $0xb0] sm:$0xff]
      %v516 = vld [vmem:[%s488 + $0xb8] sm:$0xff]
      %v517 = vld [vmem:[%s488 + $0xc0] sm:$0xff]
      %v518 = vld [vmem:[%s488 + $0xc8] sm:$0xff]
      %v519 = vld [vmem:[%s488 + $0xd0] sm:$0xff]
      %v520 = vld [vmem:[%s488 + $0xd8] sm:$0xff]
      %v521 = vld [vmem:[%s488 + $0xe0] sm:$0xff]
      %v522 = vld [vmem:[%s488 + $0xe8] sm:$0xff]
      %v523 = vld [vmem:[%s488 + $0xf0] sm:$0xff]
      %v524 = vld [vmem:[%s488 + $0xf8] sm:$0xff]
      %v525 = vld [vmem:[%s1] sm:$0xff]
      %v526 = vld [vmem:[%s1 + $0x8] sm:$0xff]
      %v527 = vld [vmem:[%s2] sm:$0x1]
      %v528 = vlaneseq
      %v529 = vshrl.u32 %v528, 7
      %v530 = vsub.s32 0, %v529
      %v531 = vrot.slane %v527, %v530
      %vm532 = vcmask 130048
      %v534 = vsel %vm532, %v493, 0
      %v537 = vsel %vm532, %v494, 0
      %v540 = vsel %vm532, %v495, 0
      %v543 = vsel %vm532, %v496, 0
      %v546 = vsel %vm532, %v497, 0
      %v549 = vsel %vm532, %v498, 0
      %v552 = vsel %vm532, %v499, 0
      %v555 = vsel %vm532, %v500, 0
      %v558 = vsel %vm532, %v501, 0
      %v561 = vsel %vm532, %v502, 0
      %v564 = vsel %vm532, %v503, 0
      %v567 = vsel %vm532, %v504, 0
      %v570 = vsel %vm532, %v505, 0
      %v573 = vsel %vm532, %v506, 0
      %v576 = vsel %vm532, %v507, 0
      %v579 = vsel %vm532, %v508, 0
      %v582 = vsel %vm532, %v509, 0
      %v585 = vsel %vm532, %v510, 0
      %v588 = vsel %vm532, %v511, 0
      %v591 = vsel %vm532, %v512, 0
      %v594 = vsel %vm532, %v513, 0
      %v597 = vsel %vm532, %v514, 0
      %v600 = vsel %vm532, %v515, 0
      %v603 = vsel %vm532, %v516, 0
      %v606 = vsel %vm532, %v517, 0
      %v609 = vsel %vm532, %v518, 0
      %v612 = vsel %vm532, %v519, 0
      %v615 = vsel %vm532, %v520, 0
      %v618 = vsel %vm532, %v521, 0
      %v621 = vsel %vm532, %v522, 0
      %v624 = vsel %vm532, %v523, 0
      %v627 = vsel %vm532, %v524, 0
      %629 = vmatprep.subr.mxu0 0.0
      %630 = vmatpush1.msra.mxu0 %v525
      %631 = vmatprep.subr.mxu0 0.0
      %632 = vmatpush1.msra.mxu0 %v526
      %633 = vmatprep.subr.mxu0 0.0
      %634 = vmatpush1.msra.mxu0 0.0
      %635 = vmatprep.subr.mxu0 0.0
      %636 = vmatpush1.msra.mxu0 0.0
      %637 = vmatprep.subr.mxu0 0.0
      %638 = vmatpush1.msra.mxu0 0.0
      %639 = vmatprep.subr.mxu0 0.0
      %640 = vmatpush1.msra.mxu0 0.0
      %641 = vmatprep.subr.mxu0 0.0
      %642 = vmatpush1.msra.mxu0 0.0
      %643 = vmatprep.subr.mxu0 0.0
      %644 = vmatpush1.msra.mxu0 0.0
      %645 = vmatprep.subr.mxu0 0.0
      %646 = vmatpush1.msra.mxu0 0.0
      %647 = vmatprep.subr.mxu0 0.0
      %648 = vmatpush1.msra.mxu0 0.0
      %649 = vmatprep.subr.mxu0 0.0
      %650 = vmatpush1.msra.mxu0 0.0
      %651 = vmatprep.subr.mxu0 0.0
      %652 = vmatpush1.msra.mxu0 0.0
      %653 = vmatprep.subr.mxu0 0.0
      %654 = vmatpush1.msra.mxu0 0.0
      %655 = vmatprep.subr.mxu0 0.0
      %656 = vmatpush1.msra.mxu0 0.0
      %657 = vmatprep.subr.mxu0 0.0
      %658 = vmatpush1.msra.mxu0 0.0
      %659 = vmatprep.subr.mxu0 0.0
      %660 = vmatpush1.msra.mxu0 0.0
      %661 = vmatprep.subr.mxu0 0.0
      %662 = vmatpush1.msra.mxu0 0.0
      %663 = vmatprep.subr.mxu0 0.0
      %664 = vmatpush1.msra.mxu0 0.0
      %665 = vmatprep.subr.mxu0 0.0
      %666 = vmatpush1.msra.mxu0 0.0
      %667 = vmatprep.subr.mxu0 0.0
      %668 = vmatpush1.msra.mxu0 0.0
      %669 = vmatprep.subr.mxu0 0.0
      %670 = vmatpush1.msra.mxu0 0.0
      %671 = vmatprep.subr.mxu0 0.0
      %672 = vmatpush1.msra.mxu0 0.0
      %673 = vmatprep.subr.mxu0 0.0
      %674 = vmatpush1.msra.mxu0 0.0
      %675 = vmatprep.subr.mxu0 0.0
      %676 = vmatpush1.msra.mxu0 0.0
      %677 = vmatprep.subr.mxu0 0.0
      %678 = vmatpush1.msra.mxu0 0.0
      %679 = vmatprep.subr.mxu0 0.0
      %680 = vmatpush1.msra.mxu0 0.0
      %681 = vmatprep.subr.mxu0 0.0
      %682 = vmatpush1.msra.mxu0 0.0
      %683 = vmatprep.subr.mxu0 0.0
      %684 = vmatpush1.msra.mxu0 0.0
      %685 = vmatprep.subr.mxu0 0.0
      %686 = vmatpush1.msra.mxu0 0.0
      %687 = vmatprep.subr.mxu0 0.0
      %688 = vmatpush1.msra.mxu0 0.0
      %689 = vmatprep.subr.mxu0 0.0
      %690 = vmatpush1.msra.mxu0 0.0
      %691 = vmatprep.subr.mxu0 0.0
      %692 = vmatpush1.msra.mxu0 0.0
      %693 = vmatprep.mubr.f32.mxu0 0.0
      %694 = vmatmul.mubr.f32.gmra.mrb[0].mxu0 %v534
      %v695 = vpop.f32.mrb[0].mxu0
      %v696 = vadd.f32 %v531, %v695
      %v697 = vpop.f32.mrb[0].mxu0
      %698 = vmatprep.mubr.f32.mxu0 0.0
      %699 = vmatmul.mubr.f32.gmra.mrb[0].mxu0 %v537
      %v700 = vpop.f32.mrb[0].mxu0
      %v701 = vadd.f32 %v531, %v700
      %v702 = vpop.f32.mrb[0].mxu0
      %703 = vmatprep.mubr.f32.mxu0 0.0
      %704 = vmatmul.mubr.f32.gmra.mrb[0].mxu0 %v540
      %v705 = vpop.f32.mrb[0].mxu0
      %v706 = vadd.f32 %v531, %v705
      %v707 = vpop.f32.mrb[0].mxu0
      %708 = vmatprep.mubr.f32.mxu0 0.0
      %709 = vmatmul.mubr.f32.gmra.mrb[0].mxu0 %v543
      %v710 = vpop.f32.mrb[0].mxu0
      %v711 = vadd.f32 %v531, %v710
      %v712 = vpop.f32.mrb[0].mxu0
      %713 = vmatprep.mubr.f32.mxu0 0.0
      %714 = vmatmul.mubr.f32.gmra.mrb[0].mxu0 %v546
      %v715 = vpop.f32.mrb[0].mxu0
      %v716 = vadd.f32 %v531, %v715
      %v717 = vpop.f32.mrb[0].mxu0
      %718 = vmatprep.mubr.f32.mxu0 0.0
      %719 = vmatmul.mubr.f32.gmra.mrb[0].mxu0 %v549
      %v720 = vpop.f32.mrb[0].mxu0
      %v721 = vadd.f32 %v531, %v720
      %v722 = vpop.f32.mrb[0].mxu0
      %723 = vmatprep.mubr.f32.mxu0 0.0
      %724 = vmatmul.mubr.f32.gmra.mrb[0].mxu0 %v552
      %v725 = vpop.f32.mrb[0].mxu0
      %v726 = vadd.f32 %v531, %v725
      %v727 = vpop.f32.mrb[0].mxu0
      %728 = vmatprep.mubr.f32.mxu0 0.0
      %729 = vmatmul.mubr.f32.gmra.mrb[0].mxu0 %v555
      %v730 = vpop.f32.mrb[0].mxu0
      %v731 = vadd.f32 %v531, %v730
      %v732 = vpop.f32.mrb[0].mxu0
      %733 = vmatprep.mubr.f32.mxu0 0.0
      %734 = vmatmul.mubr.f32.gmra.mrb[0].mxu0 %v558
      %v735 = vpop.f32.mrb[0].mxu0
      %v736 = vadd.f32 %v531, %v735
      %v737 = vpop.f32.mrb[0].mxu0
      %738 = vmatprep.mubr.f32.mxu0 0.0
      %739 = vmatmul.mubr.f32.gmra.mrb[0].mxu0 %v561
      %v740 = vpop.f32.mrb[0].mxu0
      %v741 = vadd.f32 %v531, %v740
      %v742 = vpop.f32.mrb[0].mxu0
      %743 = vmatprep.mubr.f32.mxu0 0.0
      %744 = vmatmul.mubr.f32.gmra.mrb[0].mxu0 %v564
      %v745 = vpop.f32.mrb[0].mxu0
      %v746 = vadd.f32 %v531, %v745
      %v747 = vpop.f32.mrb[0].mxu0
      %748 = vmatprep.mubr.f32.mxu0 0.0
      %749 = vmatmul.mubr.f32.gmra.mrb[0].mxu0 %v567
      %v750 = vpop.f32.mrb[0].mxu0
      %v751 = vadd.f32 %v531, %v750
      %v752 = vpop.f32.mrb[0].mxu0
      %753 = vmatprep.mubr.f32.mxu0 0.0
      %754 = vmatmul.mubr.f32.gmra.mrb[0].mxu0 %v570
      %v755 = vpop.f32.mrb[0].mxu0
      %v756 = vadd.f32 %v531, %v755
      %v757 = vpop.f32.mrb[0].mxu0
      %758 = vmatprep.mubr.f32.mxu0 0.0
      %759 = vmatmul.mubr.f32.gmra.mrb[0].mxu0 %v573
      %v760 = vpop.f32.mrb[0].mxu0
      %v761 = vadd.f32 %v531, %v760
      %v762 = vpop.f32.mrb[0].mxu0
      %763 = vmatprep.mubr.f32.mxu0 0.0
      %764 = vmatmul.mubr.f32.gmra.mrb[0].mxu0 %v576
      %v765 = vpop.f32.mrb[0].mxu0
      %v766 = vadd.f32 %v531, %v765
      %v767 = vpop.f32.mrb[0].mxu0
      %768 = vmatprep.mubr.f32.mxu0 0.0
      %769 = vmatmul.mubr.f32.gmra.mrb[0].mxu0 %v579
      %v770 = vpop.f32.mrb[0].mxu0
      %v771 = vadd.f32 %v531, %v770
      %v772 = vpop.f32.mrb[0].mxu0
      %773 = vmatprep.mubr.f32.mxu0 0.0
      %774 = vmatmul.mubr.f32.gmra.mrb[0].mxu0 %v582
      %v775 = vpop.f32.mrb[0].mxu0
      %v776 = vadd.f32 %v531, %v775
      %v777 = vpop.f32.mrb[0].mxu0
      %778 = vmatprep.mubr.f32.mxu0 0.0
      %779 = vmatmul.mubr.f32.gmra.mrb[0].mxu0 %v585
      %v780 = vpop.f32.mrb[0].mxu0
      %v781 = vadd.f32 %v531, %v780
      %v782 = vpop.f32.mrb[0].mxu0
      %783 = vmatprep.mubr.f32.mxu0 0.0
      %784 = vmatmul.mubr.f32.gmra.mrb[0].mxu0 %v588
      %v785 = vpop.f32.mrb[0].mxu0
      %v786 = vadd.f32 %v531, %v785
      %v787 = vpop.f32.mrb[0].mxu0
      %788 = vmatprep.mubr.f32.mxu0 0.0
      %789 = vmatmul.mubr.f32.gmra.mrb[0].mxu0 %v591
      %v790 = vpop.f32.mrb[0].mxu0
      %v791 = vadd.f32 %v531, %v790
      %v792 = vpop.f32.mrb[0].mxu0
      %793 = vmatprep.mubr.f32.mxu0 0.0
      %794 = vmatmul.mubr.f32.gmra.mrb[0].mxu0 %v594
      %v795 = vpop.f32.mrb[0].mxu0
      %v796 = vadd.f32 %v531, %v795
      %v797 = vpop.f32.mrb[0].mxu0
      %798 = vmatprep.mubr.f32.mxu0 0.0
      %799 = vmatmul.mubr.f32.gmra.mrb[0].mxu0 %v597
      %v800 = vpop.f32.mrb[0].mxu0
      %v801 = vadd.f32 %v531, %v800
      %v802 = vpop.f32.mrb[0].mxu0
      %803 = vmatprep.mubr.f32.mxu0 0.0
      %804 = vmatmul.mubr.f32.gmra.mrb[0].mxu0 %v600
      %v805 = vpop.f32.mrb[0].mxu0
      %v806 = vadd.f32 %v531, %v805
      %v807 = vpop.f32.mrb[0].mxu0
      %808 = vmatprep.mubr.f32.mxu0 0.0
      %809 = vmatmul.mubr.f32.gmra.mrb[0].mxu0 %v603
      %v810 = vpop.f32.mrb[0].mxu0
      %v811 = vadd.f32 %v531, %v810
      %v812 = vpop.f32.mrb[0].mxu0
      %813 = vmatprep.mubr.f32.mxu0 0.0
      %814 = vmatmul.mubr.f32.gmra.mrb[0].mxu0 %v606
      %v815 = vpop.f32.mrb[0].mxu0
      %v816 = vadd.f32 %v531, %v815
      %v817 = vpop.f32.mrb[0].mxu0
      %818 = vmatprep.mubr.f32.mxu0 0.0
      %819 = vmatmul.mubr.f32.gmra.mrb[0].mxu0 %v609
      %v820 = vpop.f32.mrb[0].mxu0
      %v821 = vadd.f32 %v531, %v820
      %v822 = vpop.f32.mrb[0].mxu0
      %823 = vmatprep.mubr.f32.mxu0 0.0
      %824 = vmatmul.mubr.f32.gmra.mrb[0].mxu0 %v612
      %v825 = vpop.f32.mrb[0].mxu0
      %v826 = vadd.f32 %v531, %v825
      %v827 = vpop.f32.mrb[0].mxu0
      %828 = vmatprep.mubr.f32.mxu0 0.0
      %829 = vmatmul.mubr.f32.gmra.mrb[0].mxu0 %v615
      %v830 = vpop.f32.mrb[0].mxu0
      %v831 = vadd.f32 %v531, %v830
      %v832 = vpop.f32.mrb[0].mxu0
      %833 = vmatprep.mubr.f32.mxu0 0.0
      %834 = vmatmul.mubr.f32.gmra.mrb[0].mxu0 %v618
      %v835 = vpop.f32.mrb[0].mxu0
      %v836 = vadd.f32 %v531, %v835
      %v837 = vpop.f32.mrb[0].mxu0
      %838 = vmatprep.mubr.f32.mxu0 0.0
      %839 = vmatmul.mubr.f32.gmra.mrb[0].mxu0 %v621
      %v840 = vpop.f32.mrb[0].mxu0
      %v841 = vadd.f32 %v531, %v840
      %v842 = vpop.f32.mrb[0].mxu0
      %843 = vmatprep.mubr.f32.mxu0 0.0
      %844 = vmatmul.mubr.f32.gmra.mrb[0].mxu0 %v624
      %v845 = vpop.f32.mrb[0].mxu0
      %v846 = vadd.f32 %v531, %v845
      %v847 = vpop.f32.mrb[0].mxu0
      %848 = vmatprep.mubr.f32.mxu0 0.0
      %849 = vmatmul.mubr.f32.gmra.mrb[0].mxu0 %v627
      %v850 = vpop.f32.mrb[0].mxu0
      %v851 = vadd.f32 %v531, %v850
      %v852 = vpop.f32.mrb[0].mxu0
      %853 = vdwg.mxu0
      %v854 = vmax.f32 %v696, 0.0
      %v855 = vmax.f32 %v701, 0.0
      %v856 = vmax.f32 %v706, 0.0
      %v857 = vmax.f32 %v711, 0.0
      %v858 = vmax.f32 %v716, 0.0
      %v859 = vmax.f32 %v721, 0.0
      %v860 = vmax.f32 %v726, 0.0
      %v861 = vmax.f32 %v731, 0.0
      %v862 = vmax.f32 %v736, 0.0
      %v863 = vmax.f32 %v741, 0.0
      %v864 = vmax.f32 %v746, 0.0
      %v865 = vmax.f32 %v751, 0.0
      %v866 = vmax.f32 %v756, 0.0
      %v867 = vmax.f32 %v761, 0.0
      %v868 = vmax.f32 %v766, 0.0
      %v869 = vmax.f32 %v771, 0.0
      %v870 = vmax.f32 %v776, 0.0
      %v871 = vmax.f32 %v781, 0.0
      %v872 = vmax.f32 %v786, 0.0
      %v873 = vmax.f32 %v791, 0.0
      %v874 = vmax.f32 %v796, 0.0
      %v875 = vmax.f32 %v801, 0.0
      %v876 = vmax.f32 %v806, 0.0
      %v877 = vmax.f32 %v811, 0.0
      %v878 = vmax.f32 %v816, 0.0
      %v879 = vmax.f32 %v821, 0.0
      %v880 = vmax.f32 %v826, 0.0
      %v881 = vmax.f32 %v831, 0.0
      %v882 = vmax.f32 %v836, 0.0
      %v883 = vmax.f32 %v841, 0.0
      %v884 = vmax.f32 %v846, 0.0
      %v885 = vmax.f32 %v851, 0.0
      %v886 = vld [vmem:[%s2 + $0x1] sm:$0x1]
      %v887 = vlaneseq
      %v888 = vshrl.u32 %v887, 7
      %v889 = vsub.s32 0, %v888
      %v890 = vrot.slane %v886, %v889
      %v891 = vmul.f32 %v854, %v890
      %v892 = vmul.f32 %v855, %v890
      %v893 = vmul.f32 %v856, %v890
      %v894 = vmul.f32 %v857, %v890
      %v895 = vmul.f32 %v858, %v890
      %v896 = vmul.f32 %v859, %v890
      %v897 = vmul.f32 %v860, %v890
      %v898 = vmul.f32 %v861, %v890
      %v899 = vmul.f32 %v862, %v890
      %v900 = vmul.f32 %v863, %v890
      %v901 = vmul.f32 %v864, %v890
      %v902 = vmul.f32 %v865, %v890
      %v903 = vmul.f32 %v866, %v890
      %v904 = vmul.f32 %v867, %v890
      %v905 = vmul.f32 %v868, %v890
      %v906 = vmul.f32 %v869, %v890
      %v907 = vmul.f32 %v870, %v890
      %v908 = vmul.f32 %v871, %v890
      %v909 = vmul.f32 %v872, %v890
      %v910 = vmul.f32 %v873, %v890
      %v911 = vmul.f32 %v874, %v890
      %v912 = vmul.f32 %v875, %v890
      %v913 = vmul.f32 %v876, %v890
      %v914 = vmul.f32 %v877, %v890
      %v915 = vmul.f32 %v878, %v890
      %v916 = vmul.f32 %v879, %v890
      %v917 = vmul.f32 %v880, %v890
      %v918 = vmul.f32 %v881, %v890
      %v919 = vmul.f32 %v882, %v890
      %v920 = vmul.f32 %v883, %v890
      %v921 = vmul.f32 %v884, %v890
      %v922 = vmul.f32 %v885, %v890
      %v923 = vld [vmem:[%s2 + $0x2] sm:$0x1]
      %v924 = vlaneseq
      %v925 = vshrl.u32 %v924, 7
      %v926 = vsub.s32 0, %v925
      %v927 = vrot.slane %v923, %v926
      %v928 = vadd.f32 %v891, %v927
      %v929 = vadd.f32 %v892, %v927
      %v930 = vadd.f32 %v893, %v927
      %v931 = vadd.f32 %v894, %v927
      %v932 = vadd.f32 %v895, %v927
      %v933 = vadd.f32 %v896, %v927
      %v934 = vadd.f32 %v897, %v927
      %v935 = vadd.f32 %v898, %v927
      %v936 = vadd.f32 %v899, %v927
      %v937 = vadd.f32 %v900, %v927
      %v938 = vadd.f32 %v901, %v927
      %v939 = vadd.f32 %v902, %v927
      %v940 = vadd.f32 %v903, %v927
      %v941 = vadd.f32 %v904, %v927
      %v942 = vadd.f32 %v905, %v927
      %v943 = vadd.f32 %v906, %v927
      %v944 = vadd.f32 %v907, %v927
      %v945 = vadd.f32 %v908, %v927
      %v946 = vadd.f32 %v909, %v927
      %v947 = vadd.f32 %v910, %v927
      %v948 = vadd.f32 %v911, %v927
      %v949 = vadd.f32 %v912, %v927
      %v950 = vadd.f32 %v913, %v927
      %v951 = vadd.f32 %v914, %v927
      %v952 = vadd.f32 %v915, %v927
      %v953 = vadd.f32 %v916, %v927
      %v954 = vadd.f32 %v917, %v927
      %v955 = vadd.f32 %v918, %v927
      %v956 = vadd.f32 %v919, %v927
      %v957 = vadd.f32 %v920, %v927
      %v958 = vadd.f32 %v921, %v927
      %v959 = vadd.f32 %v922, %v927
      %vm960 = vcmask 261120
      %961 = vst.msk [vmem:[#allocation2] sm:$0xff] %vm960, %v928
      %962 = vst.msk [vmem:[#allocation2 + $0x8] sm:$0xff] %vm960, %v929
      %963 = vst.msk [vmem:[#allocation2 + $0x10] sm:$0xff] %vm960, %v930
      %964 = vst.msk [vmem:[#allocation2 + $0x18] sm:$0xff] %vm960, %v931
      %965 = vst.msk [vmem:[#allocation2 + $0x20] sm:$0xff] %vm960, %v932
      %966 = vst.msk [vmem:[#allocation2 + $0x28] sm:$0xff] %vm960, %v933
      %967 = vst.msk [vmem:[#allocation2 + $0x30] sm:$0xff] %vm960, %v934
      %968 = vst.msk [vmem:[#allocation2 + $0x38] sm:$0xff] %vm960, %v935
      %969 = vst.msk [vmem:[#allocation2 + $0x40] sm:$0xff] %vm960, %v936
      %970 = vst.msk [vmem:[#allocation2 + $0x48] sm:$0xff] %vm960, %v937
      %971 = vst.msk [vmem:[#allocation2 + $0x50] sm:$0xff] %vm960, %v938
      %972 = vst.msk [vmem:[#allocation2 + $0x58] sm:$0xff] %vm960, %v939
      %973 = vst.msk [vmem:[#allocation2 + $0x60] sm:$0xff] %vm960, %v940
      %974 = vst.msk [vmem:[#allocation2 + $0x68] sm:$0xff] %vm960, %v941
      %975 = vst.msk [vmem:[#allocation2 + $0x70] sm:$0xff] %vm960, %v942
      %976 = vst.msk [vmem:[#allocation2 + $0x78] sm:$0xff] %vm960, %v943
      %977 = vst.msk [vmem:[#allocation2 + $0x80] sm:$0xff] %vm960, %v944
      %978 = vst.msk [vmem:[#allocation2 + $0x88] sm:$0xff] %vm960, %v945
      %979 = vst.msk [vmem:[#allocation2 + $0x90] sm:$0xff] %vm960, %v946
      %980 = vst.msk [vmem:[#allocation2 + $0x98] sm:$0xff] %vm960, %v947
      %981 = vst.msk [vmem:[#allocation2 + $0xa0] sm:$0xff] %vm960, %v948
      %982 = vst.msk [vmem:[#allocation2 + $0xa8] sm:$0xff] %vm960, %v949
      %983 = vst.msk [vmem:[#allocation2 + $0xb0] sm:$0xff] %vm960, %v950
      %984 = vst.msk [vmem:[#allocation2 + $0xb8] sm:$0xff] %vm960, %v951
      %985 = vst.msk [vmem:[#allocation2 + $0xc0] sm:$0xff] %vm960, %v952
      %986 = vst.msk [vmem:[#allocation2 + $0xc8] sm:$0xff] %vm960, %v953
      %987 = vst.msk [vmem:[#allocation2 + $0xd0] sm:$0xff] %vm960, %v954
      %988 = vst.msk [vmem:[#allocation2 + $0xd8] sm:$0xff] %vm960, %v955
      %989 = vst.msk [vmem:[#allocation2 + $0xe0] sm:$0xff] %vm960, %v956
      %990 = vst.msk [vmem:[#allocation2 + $0xe8] sm:$0xff] %vm960, %v957
      %991 = vst.msk [vmem:[#allocation2 + $0xf0] sm:$0xff] %vm960, %v958
      %992 = vst.msk [vmem:[#allocation2 + $0xf8] sm:$0xff] %vm960, %v959
      %v993 = vld [vmem:[#allocation2] ss:$2 sm:$0xff]
      %s994 = scalar_lea.vmem [#allocation2], 16
      %v995 = vld [vmem:[%s994] ss:$2 sm:$0xff]
      %s996 = scalar_lea.vmem [#allocation2], 32
      %v997 = vld [vmem:[%s996] ss:$2 sm:$0xff]
      %s998 = scalar_lea.vmem [#allocation2], 48
      %v999 = vld [vmem:[%s998] ss:$2 sm:$0xff]
      %s1000 = scalar_lea.vmem [#allocation2], 64
      %v1001 = vld [vmem:[%s1000] ss:$2 sm:$0xff]
      %s1002 = scalar_lea.vmem [#allocation2], 80
      %v1003 = vld [vmem:[%s1002] ss:$2 sm:$0xff]
      %s1004 = scalar_lea.vmem [#allocation2], 96
      %v1005 = vld [vmem:[%s1004] ss:$2 sm:$0xff]
      %s1006 = scalar_lea.vmem [#allocation2], 112
      %v1007 = vld [vmem:[%s1006] ss:$2 sm:$0xff]
      %s1008 = scalar_lea.vmem [#allocation2], 128
      %v1009 = vld [vmem:[%s1008] ss:$2 sm:$0xff]
      %s1010 = scalar_lea.vmem [#allocation2], 144
      %v1011 = vld [vmem:[%s1010] ss:$2 sm:$0xff]
      %s1012 = scalar_lea.vmem [#allocation2], 160
      %v1013 = vld [vmem:[%s1012] ss:$2 sm:$0xff]
      %s1014 = scalar_lea.vmem [#allocation2], 176
      %v1015 = vld [vmem:[%s1014] ss:$2 sm:$0xff]
      %s1016 = scalar_lea.vmem [#allocation2], 192
      %v1017 = vld [vmem:[%s1016] ss:$2 sm:$0xff]
      %s1018 = scalar_lea.vmem [#allocation2], 208
      %v1019 = vld [vmem:[%s1018] ss:$2 sm:$0xff]
      %s1020 = scalar_lea.vmem [#allocation2], 224
      %v1021 = vld [vmem:[%s1020] ss:$2 sm:$0xff]
      %s1022 = scalar_lea.vmem [#allocation2], 240
      %v1023 = vld [vmem:[%s1022] ss:$2 sm:$0xff]
      %s1024 = scalar_lea.vmem [#allocation2], 1
      %v1025 = vld [vmem:[%s1024] ss:$2 sm:$0xff]
      %s1026 = scalar_lea.vmem [#allocation2], 17
      %v1027 = vld [vmem:[%s1026] ss:$2 sm:$0xff]
      %s1028 = scalar_lea.vmem [#allocation2], 33
      %v1029 = vld [vmem:[%s1028] ss:$2 sm:$0xff]
      %s1030 = scalar_lea.vmem [#allocation2], 49
      %v1031 = vld [vmem:[%s1030] ss:$2 sm:$0xff]
      %s1032 = scalar_lea.vmem [#allocation2], 65
      %v1033 = vld [vmem:[%s1032] ss:$2 sm:$0xff]
      %s1034 = scalar_lea.vmem [#allocation2], 81
      %v1035 = vld [vmem:[%s1034] ss:$2 sm:$0xff]
      %s1036 = scalar_lea.vmem [#allocation2], 97
      %v1037 = vld [vmem:[%s1036] ss:$2 sm:$0xff]
      %s1038 = scalar_lea.vmem [#allocation2], 113
      %v1039 = vld [vmem:[%s1038] ss:$2 sm:$0xff]
      %s1040 = scalar_lea.vmem [#allocation2], 129
      %v1041 = vld [vmem:[%s1040] ss:$2 sm:$0xff]
      %s1042 = scalar_lea.vmem [#allocation2], 145
      %v1043 = vld [vmem:[%s1042] ss:$2 sm:$0xff]
      %s1044 = scalar_lea.vmem [#allocation2], 161
      %v1045 = vld [vmem:[%s1044] ss:$2 sm:$0xff]
      %s1046 = scalar_lea.vmem [#allocation2], 177
      %v1047 = vld [vmem:[%s1046] ss:$2 sm:$0xff]
      %s1048 = scalar_lea.vmem [#allocation2], 193
      %v1049 = vld [vmem:[%s1048] ss:$2 sm:$0xff]
      %s1050 = scalar_lea.vmem [#allocation2], 209
      %v1051 = vld [vmem:[%s1050] ss:$2 sm:$0xff]
      %s1052 = scalar_lea.vmem [#allocation2], 225
      %v1053 = vld [vmem:[%s1052] ss:$2 sm:$0xff]
      %s1054 = scalar_lea.vmem [#allocation2], 241
      %v1055 = vld [vmem:[%s1054] ss:$2 sm:$0xff]
      %v1056 = vmax.f32 %v993, %v1025
      %v1057 = vmax.f32 %v995, %v1027
      %v1058 = vmax.f32 %v997, %v1029
      %v1059 = vmax.f32 %v999, %v1031
      %v1060 = vmax.f32 %v1001, %v1033
      %v1061 = vmax.f32 %v1003, %v1035
      %v1062 = vmax.f32 %v1005, %v1037
      %v1063 = vmax.f32 %v1007, %v1039
      %v1064 = vmax.f32 %v1009, %v1041
      %v1065 = vmax.f32 %v1011, %v1043
      %v1066 = vmax.f32 %v1013, %v1045
      %v1067 = vmax.f32 %v1015, %v1047
      %v1068 = vmax.f32 %v1017, %v1049
      %v1069 = vmax.f32 %v1019, %v1051
      %v1070 = vmax.f32 %v1021, %v1053
      %v1071 = vmax.f32 %v1023, %v1055
      %1072 = vst.msk [vmem:[#allocation2] sm:$0xff] %vm960, 0.0
      %1073 = vst.msk [vmem:[#allocation2 + $0x88] sm:$0xff] %vm960, 0.0
      %1074 = vst.msk [vmem:[#allocation2 + $0x8] sm:$0xff] %vm960, %v1056
      %1075 = vst.msk [vmem:[#allocation2 + $0x10] sm:$0xff] %vm960, %v1057
      %1076 = vst.msk [vmem:[#allocation2 + $0x18] sm:$0xff] %vm960, %v1058
      %1077 = vst.msk [vmem:[#allocation2 + $0x20] sm:$0xff] %vm960, %v1059
      %1078 = vst.msk [vmem:[#allocation2 + $0x28] sm:$0xff] %vm960, %v1060
      %1079 = vst.msk [vmem:[#allocation2 + $0x30] sm:$0xff] %vm960, %v1061
      %1080 = vst.msk [vmem:[#allocation2 + $0x38] sm:$0xff] %vm960, %v1062
      %1081 = vst.msk [vmem:[#allocation2 + $0x40] sm:$0xff] %vm960, %v1063
      %1082 = vst.msk [vmem:[#allocation2 + $0x48] sm:$0xff] %vm960, %v1064
      %1083 = vst.msk [vmem:[#allocation2 + $0x50] sm:$0xff] %vm960, %v1065
      %1084 = vst.msk [vmem:[#allocation2 + $0x58] sm:$0xff] %vm960, %v1066
      %1085 = vst.msk [vmem:[#allocation2 + $0x60] sm:$0xff] %vm960, %v1067
      %1086 = vst.msk [vmem:[#allocation2 + $0x68] sm:$0xff] %vm960, %v1068
      %1087 = vst.msk [vmem:[#allocation2 + $0x70] sm:$0xff] %vm960, %v1069
      %1088 = vst.msk [vmem:[#allocation2 + $0x78] sm:$0xff] %vm960, %v1070
      %1089 = vst.msk [vmem:[#allocation2 + $0x80] sm:$0xff] %vm960, %v1071
      %v1090 = vld [vmem:[#allocation2 + $0x5] sm:$0xff]
      %v1091 = vld [vmem:[#allocation2 + $0xd] sm:$0xff]
      %v1092 = vld [vmem:[#allocation2 + $0x15] sm:$0xff]
      %v1093 = vld [vmem:[#allocation2 + $0x1d] sm:$0xff]
      %v1094 = vld [vmem:[#allocation2 + $0x25] sm:$0xff]
      %v1095 = vld [vmem:[#allocation2 + $0x2d] sm:$0xff]
      %v1096 = vld [vmem:[#allocation2 + $0x35] sm:$0xff]
      %v1097 = vld [vmem:[#allocation2 + $0x3d] sm:$0xff]
      %v1098 = vld [vmem:[#allocation2 + $0x45] sm:$0xff]
      %v1099 = vld [vmem:[#allocation2 + $0x4d] sm:$0xff]
      %v1100 = vld [vmem:[#allocation2 + $0x55] sm:$0xff]
      %v1101 = vld [vmem:[#allocation2 + $0x5d] sm:$0xff]
      %v1102 = vld [vmem:[#allocation2 + $0x65] sm:$0xff]
      %v1103 = vld [vmem:[#allocation2 + $0x6d] sm:$0xff]
      %v1104 = vld [vmem:[#allocation2 + $0x75] sm:$0xff]
      %v1105 = vld [vmem:[#allocation2 + $0x7d] sm:$0xff]
      %v1106 = vld [vmem:[%s3] sm:$0xff]
      %v1107 = vld [vmem:[%s3 + $0x8] sm:$0xff]
      %v1108 = vld [vmem:[%s3 + $0x10] sm:$0xff]
      %v1109 = vld [vmem:[%s3 + $0x18] sm:$0xff]
      %v1110 = vld [vmem:[#allocation2 + $0x6] sm:$0xff]
      %v1111 = vld [vmem:[#allocation2 + $0xe] sm:$0xff]
      %v1112 = vld [vmem:[#allocation2 + $0x16] sm:$0xff]
      %v1113 = vld [vmem:[#allocation2 + $0x1e] sm:$0xff]
      %v1114 = vld [vmem:[#allocation2 + $0x26] sm:$0xff]
      %v1115 = vld [vmem:[#allocation2 + $0x2e] sm:$0xff]
      %v1116 = vld [vmem:[#allocation2 + $0x36] sm:$0xff]
      %v1117 = vld [vmem:[#allocation2 + $0x3e] sm:$0xff]
      %v1118 = vld [vmem:[#allocation2 + $0x46] sm:$0xff]
      %v1119 = vld [vmem:[#allocation2 + $0x4e] sm:$0xff]
      %v1120 = vld [vmem:[#allocation2 + $0x56] sm:$0xff]
      %v1121 = vld [vmem:[#allocation2 + $0x5e] sm:$0xff]
      %v1122 = vld [vmem:[#allocation2 + $0x66] sm:$0xff]
      %v1123 = vld [vmem:[#allocation2 + $0x6e] sm:$0xff]
      %v1124 = vld [vmem:[#allocation2 + $0x76] sm:$0xff]
      %v1125 = vld [vmem:[#allocation2 + $0x7e] sm:$0xff]
      %s1126 = scalar_lea.vmem %s3, 32
      %v1127 = vld [vmem:[%s1126] sm:$0xff]
      %v1128 = vld [vmem:[%s1126 + $0x8] sm:$0xff]
      %v1129 = vld [vmem:[%s1126 + $0x10] sm:$0xff]
      %v1130 = vld [vmem:[%s1126 + $0x18] sm:$0xff]
      %v1132 = vsel %vm960, %v1110, 0
      %v1135 = vsel %vm960, %v1111, 0
      %v1138 = vsel %vm960, %v1112, 0
      %v1141 = vsel %vm960, %v1113, 0
      %v1144 = vsel %vm960, %v1114, 0
      %v1147 = vsel %vm960, %v1115, 0
      %v1150 = vsel %vm960, %v1116, 0
      %v1153 = vsel %vm960, %v1117, 0
      %v1156 = vsel %vm960, %v1118, 0
      %v1159 = vsel %vm960, %v1119, 0
      %v1162 = vsel %vm960, %v1120, 0
      %v1165 = vsel %vm960, %v1121, 0
      %v1168 = vsel %vm960, %v1122, 0
      %v1171 = vsel %vm960, %v1123, 0
      %v1174 = vsel %vm960, %v1124, 0
      %v1177 = vsel %vm960, %v1125, 0
      %1179 = vmatprep.subr.mxu0 0.0
      %1180 = vmatpush1.msra.mxu0 %v1127
      %1181 = vmatprep.subr.mxu0 0.0
      %1182 = vmatpush1.msra.mxu0 %v1128
      %1183 = vmatprep.subr.mxu0 0.0
      %1184 = vmatpush1.msra.mxu0 %v1129
      %1185 = vmatprep.subr.mxu0 0.0
      %1186 = vmatpush1.msra.mxu0 %v1130
      %1187 = vmatprep.subr.mxu0 0.0
      %1188 = vmatpush1.msra.mxu0 0.0
      %1189 = vmatprep.subr.mxu0 0.0
      %1190 = vmatpush1.msra.mxu0 0.0
      %1191 = vmatprep.subr.mxu0 0.0
      %1192 = vmatpush1.msra.mxu0 0.0
      %1193 = vmatprep.subr.mxu0 0.0
      %1194 = vmatpush1.msra.mxu0 0.0
      %1195 = vmatprep.subr.mxu0 0.0
      %1196 = vmatpush1.msra.mxu0 0.0
      %1197 = vmatprep.subr.mxu0 0.0
      %1198 = vmatpush1.msra.mxu0 0.0
      %1199 = vmatprep.subr.mxu0 0.0
      %1200 = vmatpush1.msra.mxu0 0.0
      %1201 = vmatprep.subr.mxu0 0.0
      %1202 = vmatpush1.msra.mxu0 0.0
      %1203 = vmatprep.subr.mxu0 0.0
      %1204 = vmatpush1.msra.mxu0 0.0
      %1205 = vmatprep.subr.mxu0 0.0
      %1206 = vmatpush1.msra.mxu0 0.0
      %1207 = vmatprep.subr.mxu0 0.0
      %1208 = vmatpush1.msra.mxu0 0.0
      %1209 = vmatprep.subr.mxu0 0.0
      %1210 = vmatpush1.msra.mxu0 0.0
      %1211 = vmatprep.subr.mxu0 0.0
      %1212 = vmatpush1.msra.mxu0 0.0
      %1213 = vmatprep.subr.mxu0 0.0
      %1214 = vmatpush1.msra.mxu0 0.0
      %1215 = vmatprep.subr.mxu0 0.0
      %1216 = vmatpush1.msra.mxu0 0.0
      %1217 = vmatprep.subr.mxu0 0.0
      %1218 = vmatpush1.msra.mxu0 0.0
      %1219 = vmatprep.subr.mxu0 0.0
      %1220 = vmatpush1.msra.mxu0 0.0
      %1221 = vmatprep.subr.mxu0 0.0
      %1222 = vmatpush1.msra.mxu0 0.0
      %1223 = vmatprep.subr.mxu0 0.0
      %1224 = vmatpush1.msra.mxu0 0.0
      %1225 = vmatprep.subr.mxu0 0.0
      %1226 = vmatpush1.msra.mxu0 0.0
      %1227 = vmatprep.subr.mxu0 0.0
      %1228 = vmatpush1.msra.mxu0 0.0
      %1229 = vmatprep.subr.mxu0 0.0
      %1230 = vmatpush1.msra.mxu0 0.0
      %1231 = vmatprep.subr.mxu0 0.0
      %1232 = vmatpush1.msra.mxu0 0.0
      %1233 = vmatprep.subr.mxu0 0.0
      %1234 = vmatpush1.msra.mxu0 0.0
      %1235 = vmatprep.subr.mxu0 0.0
      %1236 = vmatpush1.msra.mxu0 0.0
      %1237 = vmatprep.subr.mxu0 0.0
      %1238 = vmatpush1.msra.mxu0 0.0
      %1239 = vmatprep.subr.mxu0 0.0
      %1240 = vmatpush1.msra.mxu0 0.0
      %1241 = vmatprep.subr.mxu0 0.0
      %1242 = vmatpush1.msra.mxu0 0.0
      %1243 = vmatprep.mubr.f32.mxu0 0.0
      %1244 = vmatmul.mubr.f32.gmra.mrb[0].mxu0 %v1132
      %v1245 = vpop.f32.mrb[0].mxu0
      %v1246 = vadd.f32 0.0, %v1245
      %v1247 = vpop.f32.mrb[0].mxu0
      %1248 = vmatprep.mubr.f32.mxu0 0.0
      %1249 = vmatmul.mubr.f32.gmra.mrb[0].mxu0 %v1135
      %v1250 = vpop.f32.mrb[0].mxu0
      %v1251 = vadd.f32 0.0, %v1250
      %v1252 = vpop.f32.mrb[0].mxu0
      %1253 = vmatprep.mubr.f32.mxu0 0.0
      %1254 = vmatmul.mubr.f32.gmra.mrb[0].mxu0 %v1138
      %v1255 = vpop.f32.mrb[0].mxu0
      %v1256 = vadd.f32 0.0, %v1255
      %v1257 = vpop.f32.mrb[0].mxu0
      %1258 = vmatprep.mubr.f32.mxu0 0.0
      %1259 = vmatmul.mubr.f32.gmra.mrb[0].mxu0 %v1141
      %v1260 = vpop.f32.mrb[0].mxu0
      %v1261 = vadd.f32 0.0, %v1260
      %v1262 = vpop.f32.mrb[0].mxu0
      %1263 = vmatprep.mubr.f32.mxu0 0.0
      %1264 = vmatmul.mubr.f32.gmra.mrb[0].mxu0 %v1144
      %v1265 = vpop.f32.mrb[0].mxu0
      %v1266 = vadd.f32 0.0, %v1265
      %v1267 = vpop.f32.mrb[0].mxu0
      %1268 = vmatprep.mubr.f32.mxu0 0.0
      %1269 = vmatmul.mubr.f32.gmra.mrb[0].mxu0 %v1147
      %v1270 = vpop.f32.mrb[0].mxu0
      %v1271 = vadd.f32 0.0, %v1270
      %v1272 = vpop.f32.mrb[0].mxu0
      %1273 = vmatprep.mubr.f32.mxu0 0.0
      %1274 = vmatmul.mubr.f32.gmra.mrb[0].mxu0 %v1150
      %v1275 = vpop.f32.mrb[0].mxu0
      %v1276 = vadd.f32 0.0, %v1275
      %v1277 = vpop.f32.mrb[0].mxu0
      %1278 = vmatprep.mubr.f32.mxu0 0.0
      %1279 = vmatmul.mubr.f32.gmra.mrb[0].mxu0 %v1153
      %v1280 = vpop.f32.mrb[0].mxu0
      %v1281 = vadd.f32 0.0, %v1280
      %v1282 = vpop.f32.mrb[0].mxu0
      %1283 = vmatprep.mubr.f32.mxu0 0.0
      %1284 = vmatmul.mubr.f32.gmra.mrb[0].mxu0 %v1156
      %v1285 = vpop.f32.mrb[0].mxu0
      %v1286 = vadd.f32 0.0, %v1285
      %v1287 = vpop.f32.mrb[0].mxu0
      %1288 = vmatprep.mubr.f32.mxu0 0.0
      %1289 = vmatmul.mubr.f32.gmra.mrb[0].mxu0 %v1159
      %v1290 = vpop.f32.mrb[0].mxu0
      %v1291 = vadd.f32 0.0, %v1290
      %v1292 = vpop.f32.mrb[0].mxu0
      %1293 = vmatprep.mubr.f32.mxu0 0.0
      %1294 = vmatmul.mubr.f32.gmra.mrb[0].mxu0 %v1162
      %v1295 = vpop.f32.mrb[0].mxu0
      %v1296 = vadd.f32 0.0, %v1295
      %v1297 = vpop.f32.mrb[0].mxu0
      %1298 = vmatprep.mubr.f32.mxu0 0.0
      %1299 = vmatmul.mubr.f32.gmra.mrb[0].mxu0 %v1165
      %v1300 = vpop.f32.mrb[0].mxu0
      %v1301 = vadd.f32 0.0, %v1300
      %v1302 = vpop.f32.mrb[0].mxu0
      %1303 = vmatprep.mubr.f32.mxu0 0.0
      %1304 = vmatmul.mubr.f32.gmra.mrb[0].mxu0 %v1168
      %v1305 = vpop.f32.mrb[0].mxu0
      %v1306 = vadd.f32 0.0, %v1305
      %v1307 = vpop.f32.mrb[0].mxu0
      %1308 = vmatprep.mubr.f32.mxu0 0.0
      %1309 = vmatmul.mubr.f32.gmra.mrb[0].mxu0 %v1171
      %v1310 = vpop.f32.mrb[0].mxu0
      %v1311 = vadd.f32 0.0, %v1310
      %v1312 = vpop.f32.mrb[0].mxu0
      %1313 = vmatprep.mubr.f32.mxu0 0.0
      %1314 = vmatmul.mubr.f32.gmra.mrb[0].mxu0 %v1174
      %v1315 = vpop.f32.mrb[0].mxu0
      %v1316 = vadd.f32 0.0, %v1315
      %v1317 = vpop.f32.mrb[0].mxu0
      %1318 = vmatprep.mubr.f32.mxu0 0.0
      %1319 = vmatmul.mubr.f32.gmra.mrb[0].mxu0 %v1177
      %v1320 = vpop.f32.mrb[0].mxu0
      %v1321 = vadd.f32 0.0, %v1320
      %v1322 = vpop.f32.mrb[0].mxu0
      %1323 = vdwg.mxu0
      %v1325 = vsel %vm960, %v1090, 0
      %v1328 = vsel %vm960, %v1091, 0
      %v1331 = vsel %vm960, %v1092, 0
      %v1334 = vsel %vm960, %v1093, 0
      %v1337 = vsel %vm960, %v1094, 0
      %v1340 = vsel %vm960, %v1095, 0
      %v1343 = vsel %vm960, %v1096, 0
      %v1346 = vsel %vm960, %v1097, 0
      %v1349 = vsel %vm960, %v1098, 0
      %v1352 = vsel %vm960, %v1099, 0
      %v1355 = vsel %vm960, %v1100, 0
      %v1358 = vsel %vm960, %v1101, 0
      %v1361 = vsel %vm960, %v1102, 0
      %v1364 = vsel %vm960, %v1103, 0
      %v1367 = vsel %vm960, %v1104, 0
      %v1370 = vsel %vm960, %v1105, 0
      %1372 = vmatprep.subr.mxu0 0.0
      %1373 = vmatpush1.msra.mxu0 %v1106
      %1374 = vmatprep.subr.mxu0 0.0
      %1375 = vmatpush1.msra.mxu0 %v1107
      %1376 = vmatprep.subr.mxu0 0.0
      %1377 = vmatpush1.msra.mxu0 %v1108
      %1378 = vmatprep.subr.mxu0 0.0
      %1379 = vmatpush1.msra.mxu0 %v1109
      %1380 = vmatprep.subr.mxu0 0.0
      %1381 = vmatpush1.msra.mxu0 0.0
      %1382 = vmatprep.subr.mxu0 0.0
      %1383 = vmatpush1.msra.mxu0 0.0
      %1384 = vmatprep.subr.mxu0 0.0
      %1385 = vmatpush1.msra.mxu0 0.0
      %1386 = vmatprep.subr.mxu0 0.0
      %1387 = vmatpush1.msra.mxu0 0.0
      %1388 = vmatprep.subr.mxu0 0.0
      %1389 = vmatpush1.msra.mxu0 0.0
      %1390 = vmatprep.subr.mxu0 0.0
      %1391 = vmatpush1.msra.mxu0 0.0
      %1392 = vmatprep.subr.mxu0 0.0
      %1393 = vmatpush1.msra.mxu0 0.0
      %1394 = vmatprep.subr.mxu0 0.0
      %1395 = vmatpush1.msra.mxu0 0.0
      %1396 = vmatprep.subr.mxu0 0.0
      %1397 = vmatpush1.msra.mxu0 0.0
      %1398 = vmatprep.subr.mxu0 0.0
      %1399 = vmatpush1.msra.mxu0 0.0
      %1400 = vmatprep.subr.mxu0 0.0
      %1401 = vmatpush1.msra.mxu0 0.0
      %1402 = vmatprep.subr.mxu0 0.0
      %1403 = vmatpush1.msra.mxu0 0.0
      %1404 = vmatprep.subr.mxu0 0.0
      %1405 = vmatpush1.msra.mxu0 0.0
      %1406 = vmatprep.subr.mxu0 0.0
      %1407 = vmatpush1.msra.mxu0 0.0
      %1408 = vmatprep.subr.mxu0 0.0
      %1409 = vmatpush1.msra.mxu0 0.0
      %1410 = vmatprep.subr.mxu0 0.0
      %1411 = vmatpush1.msra.mxu0 0.0
      %1412 = vmatprep.subr.mxu0 0.0
      %1413 = vmatpush1.msra.mxu0 0.0
      %1414 = vmatprep.subr.mxu0 0.0
      %1415 = vmatpush1.msra.mxu0 0.0
      %1416 = vmatprep.subr.mxu0 0.0
      %1417 = vmatpush1.msra.mxu0 0.0
      %1418 = vmatprep.subr.mxu0 0.0
      %1419 = vmatpush1.msra.mxu0 0.0
      %1420 = vmatprep.subr.mxu0 0.0
      %1421 = vmatpush1.msra.mxu0 0.0
      %1422 = vmatprep.subr.mxu0 0.0
      %1423 = vmatpush1.msra.mxu0 0.0
      %1424 = vmatprep.subr.mxu0 0.0
      %1425 = vmatpush1.msra.mxu0 0.0
      %1426 = vmatprep.subr.mxu0 0.0
      %1427 = vmatpush1.msra.mxu0 0.0
      %1428 = vmatprep.subr.mxu0 0.0
      %1429 = vmatpush1.msra.mxu0 0.0
      %1430 = vmatprep.subr.mxu0 0.0
      %1431 = vmatpush1.msra.mxu0 0.0
      %1432 = vmatprep.subr.mxu0 0.0
      %1433 = vmatpush1.msra.mxu0 0.0
      %1434 = vmatprep.subr.mxu0 0.0
      %1435 = vmatpush1.msra.mxu0 0.0
      %1436 = vmatprep.mubr.f32.mxu0 0.0
      %1437 = vmatmul.mubr.f32.gmra.mrb[0].mxu0 %v1325
      %v1438 = vpop.f32.mrb[0].mxu0
      %v1439 = vadd.f32 %v1246, %v1438
      %v1440 = vpop.f32.mrb[0].mxu0
      %1441 = vmatprep.mubr.f32.mxu0 0.0
      %1442 = vmatmul.mubr.f32.gmra.mrb[0].mxu0 %v1328
      %v1443 = vpop.f32.mrb[0].mxu0
      %v1444 = vadd.f32 %v1251, %v1443
      %v1445 = vpop.f32.mrb[0].mxu0
      %1446 = vmatprep.mubr.f32.mxu0 0.0
      %1447 = vmatmul.mubr.f32.gmra.mrb[0].mxu0 %v1331
      %v1448 = vpop.f32.mrb[0].mxu0
      %v1449 = vadd.f32 %v1256, %v1448
      %v1450 = vpop.f32.mrb[0].mxu0
      %1451 = vmatprep.mubr.f32.mxu0 0.0
      %1452 = vmatmul.mubr.f32.gmra.mrb[0].mxu0 %v1334
      %v1453 = vpop.f32.mrb[0].mxu0
      %v1454 = vadd.f32 %v1261, %v1453
      %v1455 = vpop.f32.mrb[0].mxu0
      %1456 = vmatprep.mubr.f32.mxu0 0.0
      %1457 = vmatmul.mubr.f32.gmra.mrb[0].mxu0 %v1337
      %v1458 = vpop.f32.mrb[0].mxu0
      %v1459 = vadd.f32 %v1266, %v1458
      %v1460 = vpop.f32.mrb[0].mxu0
      %1461 = vmatprep.mubr.f32.mxu0 0.0
      %1462 = vmatmul.mubr.f32.gmra.mrb[0].mxu0 %v1340
      %v1463 = vpop.f32.mrb[0].mxu0
      %v1464 = vadd.f32 %v1271, %v1463
      %v1465 = vpop.f32.mrb[0].mxu0
      %1466 = vmatprep.mubr.f32.mxu0 0.0
      %1467 = vmatmul.mubr.f32.gmra.mrb[0].mxu0 %v1343
      %v1468 = vpop.f32.mrb[0].mxu0
      %v1469 = vadd.f32 %v1276, %v1468
      %v1470 = vpop.f32.mrb[0].mxu0
      %1471 = vmatprep.mubr.f32.mxu0 0.0
      %1472 = vmatmul.mubr.f32.gmra.mrb[0].mxu0 %v1346
      %v1473 = vpop.f32.mrb[0].mxu0
      %v1474 = vadd.f32 %v1281, %v1473
      %v1475 = vpop.f32.mrb[0].mxu0
      %1476 = vmatprep.mubr.f32.mxu0 0.0
      %1477 = vmatmul.mubr.f32.gmra.mrb[0].mxu0 %v1349
      %v1478 = vpop.f32.mrb[0].mxu0
      %v1479 = vadd.f32 %v1286, %v1478
      %v1480 = vpop.f32.mrb[0].mxu0
      %1481 = vmatprep.mubr.f32.mxu0 0.0
      %1482 = vmatmul.mubr.f32.gmra.mrb[0].mxu0 %v1352
      %v1483 = vpop.f32.mrb[0].mxu0
      %v1484 = vadd.f32 %v1291, %v1483
      %v1485 = vpop.f32.mrb[0].mxu0
      %1486 = vmatprep.mubr.f32.mxu0 0.0
      %1487 = vmatmul.mubr.f32.gmra.mrb[0].mxu0 %v1355
      %v1488 = vpop.f32.mrb[0].mxu0
      %v1489 = vadd.f32 %v1296, %v1488
      %v1490 = vpop.f32.mrb[0].mxu0
      %1491 = vmatprep.mubr.f32.mxu0 0.0
      %1492 = vmatmul.mubr.f32.gmra.mrb[0].mxu0 %v1358
      %v1493 = vpop.f32.mrb[0].mxu0
      %v1494 = vadd.f32 %v1301, %v1493
      %v1495 = vpop.f32.mrb[0].mxu0
      %1496 = vmatprep.mubr.f32.mxu0 0.0
      %1497 = vmatmul.mubr.f32.gmra.mrb[0].mxu0 %v1361
      %v1498 = vpop.f32.mrb[0].mxu0
      %v1499 = vadd.f32 %v1306, %v1498
      %v1500 = vpop.f32.mrb[0].mxu0
      %1501 = vmatprep.mubr.f32.mxu0 0.0
      %1502 = vmatmul.mubr.f32.gmra.mrb[0].mxu0 %v1364
      %v1503 = vpop.f32.mrb[0].mxu0
      %v1504 = vadd.f32 %v1311, %v1503
      %v1505 = vpop.f32.mrb[0].mxu0
      %1506 = vmatprep.mubr.f32.mxu0 0.0
      %1507 = vmatmul.mubr.f32.gmra.mrb[0].mxu0 %v1367
      %v1508 = vpop.f32.mrb[0].mxu0
      %v1509 = vadd.f32 %v1316, %v1508
      %v1510 = vpop.f32.mrb[0].mxu0
      %1511 = vmatprep.mubr.f32.mxu0 0.0
      %1512 = vmatmul.mubr.f32.gmra.mrb[0].mxu0 %v1370
      %v1513 = vpop.f32.mrb[0].mxu0
      %v1514 = vadd.f32 %v1321, %v1513
      %v1515 = vpop.f32.mrb[0].mxu0
      %1516 = vdwg.mxu0
      %v1517 = vld [vmem:[#allocation2 + $0x7] sm:$0xff]
      %v1518 = vld [vmem:[#allocation2 + $0xf] sm:$0xff]
      %v1519 = vld [vmem:[#allocation2 + $0x17] sm:$0xff]
      %v1520 = vld [vmem:[#allocation2 + $0x1f] sm:$0xff]
      %v1521 = vld [vmem:[#allocation2 + $0x27] sm:$0xff]
      %v1522 = vld [vmem:[#allocation2 + $0x2f] sm:$0xff]
      %v1523 = vld [vmem:[#allocation2 + $0x37] sm:$0xff]
      %v1524 = vld [vmem:[#allocation2 + $0x3f] sm:$0xff]
      %v1525 = vld [vmem:[#allocation2 + $0x47] sm:$0xff]
      %v1526 = vld [vmem:[#allocation2 + $0x4f] sm:$0xff]
      %v1527 = vld [vmem:[#allocation2 + $0x57] sm:$0xff]
      %v1528 = vld [vmem:[#allocation2 + $0x5f] sm:$0xff]
      %v1529 = vld [vmem:[#allocation2 + $0x67] sm:$0xff]
      %v1530 = vld [vmem:[#allocation2 + $0x6f] sm:$0xff]
      %v1531 = vld [vmem:[#allocation2 + $0x77] sm:$0xff]
      %v1532 = vld [vmem:[#allocation2 + $0x7f] sm:$0xff]
      %s1533 = scalar_lea.vmem %s3, 64
      %v1534 = vld [vmem:[%s1533] sm:$0xff]
      %v1535 = vld [vmem:[%s1533 + $0x8] sm:$0xff]
      %v1536 = vld [vmem:[%s1533 + $0x10] sm:$0xff]
      %v1537 = vld [vmem:[%s1533 + $0x18] sm:$0xff]
      %v1539 = vsel %vm960, %v1517, 0
      %v1542 = vsel %vm960, %v1518, 0
      %v1545 = vsel %vm960, %v1519, 0
      %v1548 = vsel %vm960, %v1520, 0
      %v1551 = vsel %vm960, %v1521, 0
      %v1554 = vsel %vm960, %v1522, 0
      %v1557 = vsel %vm960, %v1523, 0
      %v1560 = vsel %vm960, %v1524, 0
      %v1563 = vsel %vm960, %v1525, 0
      %v1566 = vsel %vm960, %v1526, 0
      %v1569 = vsel %vm960, %v1527, 0
      %v1572 = vsel %vm960, %v1528, 0
      %v1575 = vsel %vm960, %v1529, 0
      %v1578 = vsel %vm960, %v1530, 0
      %v1581 = vsel %vm960, %v1531, 0
      %v1584 = vsel %vm960, %v1532, 0
      %1586 = vmatprep.subr.mxu0 0.0
      %1587 = vmatpush1.msra.mxu0 %v1534
      %1588 = vmatprep.subr.mxu0 0.0
      %1589 = vmatpush1.msra.mxu0 %v1535
      %1590 = vmatprep.subr.mxu0 0.0
      %1591 = vmatpush1.msra.mxu0 %v1536
      %1592 = vmatprep.subr.mxu0 0.0
      %1593 = vmatpush1.msra.mxu0 %v1537
      %1594 = vmatprep.subr.mxu0 0.0
      %1595 = vmatpush1.msra.mxu0 0.0
      %1596 = vmatprep.subr.mxu0 0.0
      %1597 = vmatpush1.msra.mxu0 0.0
      %1598 = vmatprep.subr.mxu0 0.0
      %1599 = vmatpush1.msra.mxu0 0.0
      %1600 = vmatprep.subr.mxu0 0.0
      %1601 = vmatpush1.msra.mxu0 0.0
      %1602 = vmatprep.subr.mxu0 0.0
      %1603 = vmatpush1.msra.mxu0 0.0
      %1604 = vmatprep.subr.mxu0 0.0
      %1605 = vmatpush1.msra.mxu0 0.0
      %1606 = vmatprep.subr.mxu0 0.0
      %1607 = vmatpush1.msra.mxu0 0.0
      %1608 = vmatprep.subr.mxu0 0.0
      %1609 = vmatpush1.msra.mxu0 0.0
      %1610 = vmatprep.subr.mxu0 0.0
      %1611 = vmatpush1.msra.mxu0 0.0
      %1612 = vmatprep.subr.mxu0 0.0
      %1613 = vmatpush1.msra.mxu0 0.0
      %1614 = vmatprep.subr.mxu0 0.0
      %1615 = vmatpush1.msra.mxu0 0.0
      %1616 = vmatprep.subr.mxu0 0.0
      %1617 = vmatpush1.msra.mxu0 0.0
      %1618 = vmatprep.subr.mxu0 0.0
      %1619 = vmatpush1.msra.mxu0 0.0
      %1620 = vmatprep.subr.mxu0 0.0
      %1621 = vmatpush1.msra.mxu0 0.0
      %1622 = vmatprep.subr.mxu0 0.0
      %1623 = vmatpush1.msra.mxu0 0.0
      %1624 = vmatprep.subr.mxu0 0.0
      %1625 = vmatpush1.msra.mxu0 0.0
      %1626 = vmatprep.subr.mxu0 0.0
      %1627 = vmatpush1.msra.mxu0 0.0
      %1628 = vmatprep.subr.mxu0 0.0
      %1629 = vmatpush1.msra.mxu0 0.0
      %1630 = vmatprep.subr.mxu0 0.0
      %1631 = vmatpush1.msra.mxu0 0.0
      %1632 = vmatprep.subr.mxu0 0.0
      %1633 = vmatpush1.msra.mxu0 0.0
      %1634 = vmatprep.subr.mxu0 0.0
      %1635 = vmatpush1.msra.mxu0 0.0
      %1636 = vmatprep.subr.mxu0 0.0
      %1637 = vmatpush1.msra.mxu0 0.0
      %1638 = vmatprep.subr.mxu0 0.0
      %1639 = vmatpush1.msra.mxu0 0.0
      %1640 = vmatprep.subr.mxu0 0.0
      %1641 = vmatpush1.msra.mxu0 0.0
      %1642 = vmatprep.subr.mxu0 0.0
      %1643 = vmatpush1.msra.mxu0 0.0
      %1644 = vmatprep.subr.mxu0 0.0
      %1645 = vmatpush1.msra.mxu0 0.0
      %1646 = vmatprep.subr.mxu0 0.0
      %1647 = vmatpush1.msra.mxu0 0.0
      %1648 = vmatprep.subr.mxu0 0.0
      %1649 = vmatpush1.msra.mxu0 0.0
      %1650 = vmatprep.mubr.f32.mxu0 0.0
      %1651 = vmatmul.mubr.f32.gmra.mrb[0].mxu0 %v1539
      %v1652 = vpop.f32.mrb[0].mxu0
      %v1653 = vadd.f32 0.0, %v1652
      %v1654 = vpop.f32.mrb[0].mxu0
      %1655 = vmatprep.mubr.f32.mxu0 0.0
      %1656 = vmatmul.mubr.f32.gmra.mrb[0].mxu0 %v1542
      %v1657 = vpop.f32.mrb[0].mxu0
      %v1658 = vadd.f32 0.0, %v1657
      %v1659 = vpop.f32.mrb[0].mxu0
      %1660 = vmatprep.mubr.f32.mxu0 0.0
      %1661 = vmatmul.mubr.f32.gmra.mrb[0].mxu0 %v1545
      %v1662 = vpop.f32.mrb[0].mxu0
      %v1663 = vadd.f32 0.0, %v1662
      %v1664 = vpop.f32.mrb[0].mxu0
      %1665 = vmatprep.mubr.f32.mxu0 0.0
      %1666 = vmatmul.mubr.f32.gmra.mrb[0].mxu0 %v1548
      %v1667 = vpop.f32.mrb[0].mxu0
      %v1668 = vadd.f32 0.0, %v1667
      %v1669 = vpop.f32.mrb[0].mxu0
      %1670 = vmatprep.mubr.f32.mxu0 0.0
      %1671 = vmatmul.mubr.f32.gmra.mrb[0].mxu0 %v1551
      %v1672 = vpop.f32.mrb[0].mxu0
      %v1673 = vadd.f32 0.0, %v1672
      %v1674 = vpop.f32.mrb[0].mxu0
      %1675 = vmatprep.mubr.f32.mxu0 0.0
      %1676 = vmatmul.mubr.f32.gmra.mrb[0].mxu0 %v1554
      %v1677 = vpop.f32.mrb[0].mxu0
      %v1678 = vadd.f32 0.0, %v1677
      %v1679 = vpop.f32.mrb[0].mxu0
      %1680 = vmatprep.mubr.f32.mxu0 0.0
      %1681 = vmatmul.mubr.f32.gmra.mrb[0].mxu0 %v1557
      %v1682 = vpop.f32.mrb[0].mxu0
      %v1683 = vadd.f32 0.0, %v1682
      %v1684 = vpop.f32.mrb[0].mxu0
      %1685 = vmatprep.mubr.f32.mxu0 0.0
      %1686 = vmatmul.mubr.f32.gmra.mrb[0].mxu0 %v1560
      %v1687 = vpop.f32.mrb[0].mxu0
      %v1688 = vadd.f32 0.0, %v1687
      %v1689 = vpop.f32.mrb[0].mxu0
      %1690 = vmatprep.mubr.f32.mxu0 0.0
      %1691 = vmatmul.mubr.f32.gmra.mrb[0].mxu0 %v1563
      %v1692 = vpop.f32.mrb[0].mxu0
      %v1693 = vadd.f32 0.0, %v1692
      %v1694 = vpop.f32.mrb[0].mxu0
      %1695 = vmatprep.mubr.f32.mxu0 0.0
      %1696 = vmatmul.mubr.f32.gmra.mrb[0].mxu0 %v1566
      %v1697 = vpop.f32.mrb[0].mxu0
      %v1698 = vadd.f32 0.0, %v1697
      %v1699 = vpop.f32.mrb[0].mxu0
      %1700 = vmatprep.mubr.f32.mxu0 0.0
      %1701 = vmatmul.mubr.f32.gmra.mrb[0].mxu0 %v1569
      %v1702 = vpop.f32.mrb[0].mxu0
      %v1703 = vadd.f32 0.0, %v1702
      %v1704 = vpop.f32.mrb[0].mxu0
      %1705 = vmatprep.mubr.f32.mxu0 0.0
      %1706 = vmatmul.mubr.f32.gmra.mrb[0].mxu0 %v1572
      %v1707 = vpop.f32.mrb[0].mxu0
      %v1708 = vadd.f32 0.0, %v1707
      %v1709 = vpop.f32.mrb[0].mxu0
      %1710 = vmatprep.mubr.f32.mxu0 0.0
      %1711 = vmatmul.mubr.f32.gmra.mrb[0].mxu0 %v1575
      %v1712 = vpop.f32.mrb[0].mxu0
      %v1713 = vadd.f32 0.0, %v1712
      %v1714 = vpop.f32.mrb[0].mxu0
      %1715 = vmatprep.mubr.f32.mxu0 0.0
      %1716 = vmatmul.mubr.f32.gmra.mrb[0].mxu0 %v1578
      %v1717 = vpop.f32.mrb[0].mxu0
      %v1718 = vadd.f32 0.0, %v1717
      %v1719 = vpop.f32.mrb[0].mxu0
      %1720 = vmatprep.mubr.f32.mxu0 0.0
      %1721 = vmatmul.mubr.f32.gmra.mrb[0].mxu0 %v1581
      %v1722 = vpop.f32.mrb[0].mxu0
      %v1723 = vadd.f32 0.0, %v1722
      %v1724 = vpop.f32.mrb[0].mxu0
      %1725 = vmatprep.mubr.f32.mxu0 0.0
      %1726 = vmatmul.mubr.f32.gmra.mrb[0].mxu0 %v1584
      %v1727 = vpop.f32.mrb[0].mxu0
      %v1728 = vadd.f32 0.0, %v1727
      %v1729 = vpop.f32.mrb[0].mxu0
      %1730 = vdwg.mxu0
      %v1731 = vadd.f32 %v1439, %v1653
      %v1732 = vadd.f32 %v1444, %v1658
      %v1733 = vadd.f32 %v1449, %v1663
      %v1734 = vadd.f32 %v1454, %v1668
      %v1735 = vadd.f32 %v1459, %v1673
      %v1736 = vadd.f32 %v1464, %v1678
      %v1737 = vadd.f32 %v1469, %v1683
      %v1738 = vadd.f32 %v1474, %v1688
      %v1739 = vadd.f32 %v1479, %v1693
      %v1740 = vadd.f32 %v1484, %v1698
      %v1741 = vadd.f32 %v1489, %v1703
      %v1742 = vadd.f32 %v1494, %v1708
      %v1743 = vadd.f32 %v1499, %v1713
      %v1744 = vadd.f32 %v1504, %v1718
      %v1745 = vadd.f32 %v1509, %v1723
      %v1746 = vadd.f32 %v1514, %v1728
      %v1747 = vld [vmem:[#allocation2 + $0x8] sm:$0xff]
      %v1748 = vld [vmem:[#allocation2 + $0x10] sm:$0xff]
      %v1749 = vld [vmem:[#allocation2 + $0x18] sm:$0xff]
      %v1750 = vld [vmem:[#allocation2 + $0x20] sm:$0xff]
      %v1751 = vld [vmem:[#allocation2 + $0x28] sm:$0xff]
      %v1752 = vld [vmem:[#allocation2 + $0x30] sm:$0xff]
      %v1753 = vld [vmem:[#allocation2 + $0x38] sm:$0xff]
      %v1754 = vld [vmem:[#allocation2 + $0x40] sm:$0xff]
      %v1755 = vld [vmem:[#allocation2 + $0x48] sm:$0xff]
      %v1756 = vld [vmem:[#allocation2 + $0x50] sm:$0xff]
      %v1757 = vld [vmem:[#allocation2 + $0x58] sm:$0xff]
      %v1758 = vld [vmem:[#allocation2 + $0x60] sm:$0xff]
      %v1759 = vld [vmem:[#allocation2 + $0x68] sm:$0xff]
      %v1760 = vld [vmem:[#allocation2 + $0x70] sm:$0xff]
      %v1761 = vld [vmem:[#allocation2 + $0x78] sm:$0xff]
      %v1762 = vld [vmem:[#allocation2 + $0x80] sm:$0xff]
      %s1763 = scalar_lea.vmem %s3, 96
      %v1764 = vld [vmem:[%s1763] sm:$0xff]
      %v1765 = vld [vmem:[%s1763 + $0x8] sm:$0xff]
      %v1766 = vld [vmem:[%s1763 + $0x10] sm:$0xff]
      %v1767 = vld [vmem:[%s1763 + $0x18] sm:$0xff]
      %v1769 = vsel %vm960, %v1747, 0
      %v1772 = vsel %vm960, %v1748, 0
      %v1775 = vsel %vm960, %v1749, 0
      %v1778 = vsel %vm960, %v1750, 0
      %v1781 = vsel %vm960, %v1751, 0
      %v1784 = vsel %vm960, %v1752, 0
      %v1787 = vsel %vm960, %v1753, 0
      %v1790 = vsel %vm960, %v1754, 0
      %v1793 = vsel %vm960, %v1755, 0
      %v1796 = vsel %vm960, %v1756, 0
      %v1799 = vsel %vm960, %v1757, 0
      %v1802 = vsel %vm960, %v1758, 0
      %v1805 = vsel %vm960, %v1759, 0
      %v1808 = vsel %vm960, %v1760, 0
      %v1811 = vsel %vm960, %v1761, 0
      %v1814 = vsel %vm960, %v1762, 0
      %1816 = vmatprep.subr.mxu0 0.0
      %1817 = vmatpush1.msra.mxu0 %v1764
      %1818 = vmatprep.subr.mxu0 0.0
      %1819 = vmatpush1.msra.mxu0 %v1765
      %1820 = vmatprep.subr.mxu0 0.0
      %1821 = vmatpush1.msra.mxu0 %v1766
      %1822 = vmatprep.subr.mxu0 0.0
      %1823 = vmatpush1.msra.mxu0 %v1767
      %1824 = vmatprep.subr.mxu0 0.0
      %1825 = vmatpush1.msra.mxu0 0.0
      %1826 = vmatprep.subr.mxu0 0.0
      %1827 = vmatpush1.msra.mxu0 0.0
      %1828 = vmatprep.subr.mxu0 0.0
      %1829 = vmatpush1.msra.mxu0 0.0
      %1830 = vmatprep.subr.mxu0 0.0
      %1831 = vmatpush1.msra.mxu0 0.0
      %1832 = vmatprep.subr.mxu0 0.0
      %1833 = vmatpush1.msra.mxu0 0.0
      %1834 = vmatprep.subr.mxu0 0.0
      %1835 = vmatpush1.msra.mxu0 0.0
      %1836 = vmatprep.subr.mxu0 0.0
      %1837 = vmatpush1.msra.mxu0 0.0
      %1838 = vmatprep.subr.mxu0 0.0
      %1839 = vmatpush1.msra.mxu0 0.0
      %1840 = vmatprep.subr.mxu0 0.0
      %1841 = vmatpush1.msra.mxu0 0.0
      %1842 = vmatprep.subr.mxu0 0.0
      %1843 = vmatpush1.msra.mxu0 0.0
      %1844 = vmatprep.subr.mxu0 0.0
      %1845 = vmatpush1.msra.mxu0 0.0
      %1846 = vmatprep.subr.mxu0 0.0
      %1847 = vmatpush1.msra.mxu0 0.0
      %1848 = vmatprep.subr.mxu0 0.0
      %1849 = vmatpush1.msra.mxu0 0.0
      %1850 = vmatprep.subr.mxu0 0.0
      %1851 = vmatpush1.msra.mxu0 0.0
      %1852 = vmatprep.subr.mxu0 0.0
      %1853 = vmatpush1.msra.mxu0 0.0
      %1854 = vmatprep.subr.mxu0 0.0
      %1855 = vmatpush1.msra.mxu0 0.0
      %1856 = vmatprep.subr.mxu0 0.0
      %1857 = vmatpush1.msra.mxu0 0.0
      %1858 = vmatprep.subr.mxu0 0.0
      %1859 = vmatpush1.msra.mxu0 0.0
      %1860 = vmatprep.subr.mxu0 0.0
      %1861 = vmatpush1.msra.mxu0 0.0
      %1862 = vmatprep.subr.mxu0 0.0
      %1863 = vmatpush1.msra.mxu0 0.0
      %1864 = vmatprep.subr.mxu0 0.0
      %1865 = vmatpush1.msra.mxu0 0.0
      %1866 = vmatprep.subr.mxu0 0.0
      %1867 = vmatpush1.msra.mxu0 0.0
      %1868 = vmatprep.subr.mxu0 0.0
      %1869 = vmatpush1.msra.mxu0 0.0
      %1870 = vmatprep.subr.mxu0 0.0
      %1871 = vmatpush1.msra.mxu0 0.0
      %1872 = vmatprep.subr.mxu0 0.0
      %1873 = vmatpush1.msra.mxu0 0.0
      %1874 = vmatprep.subr.mxu0 0.0
      %1875 = vmatpush1.msra.mxu0 0.0
      %1876 = vmatprep.subr.mxu0 0.0
      %1877 = vmatpush1.msra.mxu0 0.0
      %1878 = vmatprep.subr.mxu0 0.0
      %1879 = vmatpush1.msra.mxu0 0.0
      %1880 = vmatprep.mubr.f32.mxu0 0.0
      %1881 = vmatmul.mubr.f32.gmra.mrb[0].mxu0 %v1769
      %v1882 = vpop.f32.mrb[0].mxu0
      %v1883 = vadd.f32 0.0, %v1882
      %v1884 = vpop.f32.mrb[0].mxu0
      %1885 = vmatprep.mubr.f32.mxu0 0.0
      %1886 = vmatmul.mubr.f32.gmra.mrb[0].mxu0 %v1772
      %v1887 = vpop.f32.mrb[0].mxu0
      %v1888 = vadd.f32 0.0, %v1887
      %v1889 = vpop.f32.mrb[0].mxu0
      %1890 = vmatprep.mubr.f32.mxu0 0.0
      %1891 = vmatmul.mubr.f32.gmra.mrb[0].mxu0 %v1775
      %v1892 = vpop.f32.mrb[0].mxu0
      %v1893 = vadd.f32 0.0, %v1892
      %v1894 = vpop.f32.mrb[0].mxu0
      %1895 = vmatprep.mubr.f32.mxu0 0.0
      %1896 = vmatmul.mubr.f32.gmra.mrb[0].mxu0 %v1778
      %v1897 = vpop.f32.mrb[0].mxu0
      %v1898 = vadd.f32 0.0, %v1897
      %v1899 = vpop.f32.mrb[0].mxu0
      %1900 = vmatprep.mubr.f32.mxu0 0.0
      %1901 = vmatmul.mubr.f32.gmra.mrb[0].mxu0 %v1781
      %v1902 = vpop.f32.mrb[0].mxu0
      %v1903 = vadd.f32 0.0, %v1902
      %v1904 = vpop.f32.mrb[0].mxu0
      %1905 = vmatprep.mubr.f32.mxu0 0.0
      %1906 = vmatmul.mubr.f32.gmra.mrb[0].mxu0 %v1784
      %v1907 = vpop.f32.mrb[0].mxu0
      %v1908 = vadd.f32 0.0, %v1907
      %v1909 = vpop.f32.mrb[0].mxu0
      %1910 = vmatprep.mubr.f32.mxu0 0.0
      %1911 = vmatmul.mubr.f32.gmra.mrb[0].mxu0 %v1787
      %v1912 = vpop.f32.mrb[0].mxu0
      %v1913 = vadd.f32 0.0, %v1912
      %v1914 = vpop.f32.mrb[0].mxu0
      %1915 = vmatprep.mubr.f32.mxu0 0.0
      %1916 = vmatmul.mubr.f32.gmra.mrb[0].mxu0 %v1790
      %v1917 = vpop.f32.mrb[0].mxu0
      %v1918 = vadd.f32 0.0, %v1917
      %v1919 = vpop.f32.mrb[0].mxu0
      %1920 = vmatprep.mubr.f32.mxu0 0.0
      %1921 = vmatmul.mubr.f32.gmra.mrb[0].mxu0 %v1793
      %v1922 = vpop.f32.mrb[0].mxu0
      %v1923 = vadd.f32 0.0, %v1922
      %v1924 = vpop.f32.mrb[0].mxu0
      %1925 = vmatprep.mubr.f32.mxu0 0.0
      %1926 = vmatmul.mubr.f32.gmra.mrb[0].mxu0 %v1796
      %v1927 = vpop.f32.mrb[0].mxu0
      %v1928 = vadd.f32 0.0, %v1927
      %v1929 = vpop.f32.mrb[0].mxu0
      %1930 = vmatprep.mubr.f32.mxu0 0.0
      %1931 = vmatmul.mubr.f32.gmra.mrb[0].mxu0 %v1799
      %v1932 = vpop.f32.mrb[0].mxu0
      %v1933 = vadd.f32 0.0, %v1932
      %v1934 = vpop.f32.mrb[0].mxu0
      %1935 = vmatprep.mubr.f32.mxu0 0.0
      %1936 = vmatmul.mubr.f32.gmra.mrb[0].mxu0 %v1802
      %v1937 = vpop.f32.mrb[0].mxu0
      %v1938 = vadd.f32 0.0, %v1937
      %v1939 = vpop.f32.mrb[0].mxu0
      %1940 = vmatprep.mubr.f32.mxu0 0.0
      %1941 = vmatmul.mubr.f32.gmra.mrb[0].mxu0 %v1805
      %v1942 = vpop.f32.mrb[0].mxu0
      %v1943 = vadd.f32 0.0, %v1942
      %v1944 = vpop.f32.mrb[0].mxu0
      %1945 = vmatprep.mubr.f32.mxu0 0.0
      %1946 = vmatmul.mubr.f32.gmra.mrb[0].mxu0 %v1808
      %v1947 = vpop.f32.mrb[0].mxu0
      %v1948 = vadd.f32 0.0, %v1947
      %v1949 = vpop.f32.mrb[0].mxu0
      %1950 = vmatprep.mubr.f32.mxu0 0.0
      %1951 = vmatmul.mubr.f32.gmra.mrb[0].mxu0 %v1811
      %v1952 = vpop.f32.mrb[0].mxu0
      %v1953 = vadd.f32 0.0, %v1952
      %v1954 = vpop.f32.mrb[0].mxu0
      %1955 = vmatprep.mubr.f32.mxu0 0.0
      %1956 = vmatmul.mubr.f32.gmra.mrb[0].mxu0 %v1814
      %v1957 = vpop.f32.mrb[0].mxu0
      %v1958 = vadd.f32 0.0, %v1957
      %v1959 = vpop.f32.mrb[0].mxu0
      %1960 = vdwg.mxu0
      %v1961 = vadd.f32 %v1731, %v1883
      %v1962 = vadd.f32 %v1732, %v1888
      %v1963 = vadd.f32 %v1733, %v1893
      %v1964 = vadd.f32 %v1734, %v1898
      %v1965 = vadd.f32 %v1735, %v1903
      %v1966 = vadd.f32 %v1736, %v1908
      %v1967 = vadd.f32 %v1737, %v1913
      %v1968 = vadd.f32 %v1738, %v1918
      %v1969 = vadd.f32 %v1739, %v1923
      %v1970 = vadd.f32 %v1740, %v1928
      %v1971 = vadd.f32 %v1741, %v1933
      %v1972 = vadd.f32 %v1742, %v1938
      %v1973 = vadd.f32 %v1743, %v1943
      %v1974 = vadd.f32 %v1744, %v1948
      %v1975 = vadd.f32 %v1745, %v1953
      %v1976 = vadd.f32 %v1746, %v1958
      %v1977 = vld [vmem:[#allocation2 + $0x9] sm:$0xff]
      %v1978 = vld [vmem:[#allocation2 + $0x11] sm:$0xff]
      %v1979 = vld [vmem:[#allocation2 + $0x19] sm:$0xff]
      %v1980 = vld [vmem:[#allocation2 + $0x21] sm:$0xff]
      %v1981 = vld [vmem:[#allocation2 + $0x29] sm:$0xff]
      %v1982 = vld [vmem:[#allocation2 + $0x31] sm:$0xff]
      %v1983 = vld [vmem:[#allocation2 + $0x39] sm:$0xff]
      %v1984 = vld [vmem:[#allocation2 + $0x41] sm:$0xff]
      %v1985 = vld [vmem:[#allocation2 + $0x49] sm:$0xff]
      %v1986 = vld [vmem:[#allocation2 + $0x51] sm:$0xff]
      %v1987 = vld [vmem:[#allocation2 + $0x59] sm:$0xff]
      %v1988 = vld [vmem:[#allocation2 + $0x61] sm:$0xff]
      %v1989 = vld [vmem:[#allocation2 + $0x69] sm:$0xff]
      %v1990 = vld [vmem:[#allocation2 + $0x71] sm:$0xff]
      %v1991 = vld [vmem:[#allocation2 + $0x79] sm:$0xff]
      %v1992 = vld [vmem:[#allocation2 + $0x81] sm:$0xff]
      %s1993 = scalar_lea.vmem %s3, 128
      %v1994 = vld [vmem:[%s1993] sm:$0xff]
      %v1995 = vld [vmem:[%s1993 + $0x8] sm:$0xff]
      %v1996 = vld [vmem:[%s1993 + $0x10] sm:$0xff]
      %v1997 = vld [vmem:[%s1993 + $0x18] sm:$0xff]
      %v1999 = vsel %vm960, %v1977, 0
      %v2002 = vsel %vm960, %v1978, 0
      %v2005 = vsel %vm960, %v1979, 0
      %v2008 = vsel %vm960, %v1980, 0
      %v2011 = vsel %vm960, %v1981, 0
      %v2014 = vsel %vm960, %v1982, 0
      %v2017 = vsel %vm960, %v1983, 0
      %v2020 = vsel %vm960, %v1984, 0
      %v2023 = vsel %vm960, %v1985, 0
      %v2026 = vsel %vm960, %v1986, 0
      %v2029 = vsel %vm960, %v1987, 0
      %v2032 = vsel %vm960, %v1988, 0
      %v2035 = vsel %vm960, %v1989, 0
      %v2038 = vsel %vm960, %v1990, 0
      %v2041 = vsel %vm960, %v1991, 0
      %v2044 = vsel %vm960, %v1992, 0
      %2046 = vmatprep.subr.mxu0 0.0
      %2047 = vmatpush1.msra.mxu0 %v1994
      %2048 = vmatprep.subr.mxu0 0.0
      %2049 = vmatpush1.msra.mxu0 %v1995
      %2050 = vmatprep.subr.mxu0 0.0
      %2051 = vmatpush1.msra.mxu0 %v1996
      %2052 = vmatprep.subr.mxu0 0.0
      %2053 = vmatpush1.msra.mxu0 %v1997
      %2054 = vmatprep.subr.mxu0 0.0
      %2055 = vmatpush1.msra.mxu0 0.0
      %2056 = vmatprep.subr.mxu0 0.0
      %2057 = vmatpush1.msra.mxu0 0.0
      %2058 = vmatprep.subr.mxu0 0.0
      %2059 = vmatpush1.msra.mxu0 0.0
      %2060 = vmatprep.subr.mxu0 0.0
      %2061 = vmatpush1.msra.mxu0 0.0
      %2062 = vmatprep.subr.mxu0 0.0
      %2063 = vmatpush1.msra.mxu0 0.0
      %2064 = vmatprep.subr.mxu0 0.0
      %2065 = vmatpush1.msra.mxu0 0.0
      %2066 = vmatprep.subr.mxu0 0.0
      %2067 = vmatpush1.msra.mxu0 0.0
      %2068 = vmatprep.subr.mxu0 0.0
      %2069 = vmatpush1.msra.mxu0 0.0
      %2070 = vmatprep.subr.mxu0 0.0
      %2071 = vmatpush1.msra.mxu0 0.0
      %2072 = vmatprep.subr.mxu0 0.0
      %2073 = vmatpush1.msra.mxu0 0.0
      %2074 = vmatprep.subr.mxu0 0.0
      %2075 = vmatpush1.msra.mxu0 0.0
      %2076 = vmatprep.subr.mxu0 0.0
      %2077 = vmatpush1.msra.mxu0 0.0
      %2078 = vmatprep.subr.mxu0 0.0
      %2079 = vmatpush1.msra.mxu0 0.0
      %2080 = vmatprep.subr.mxu0 0.0
      %2081 = vmatpush1.msra.mxu0 0.0
      %2082 = vmatprep.subr.mxu0 0.0
      %2083 = vmatpush1.msra.mxu0 0.0
      %2084 = vmatprep.subr.mxu0 0.0
      %2085 = vmatpush1.msra.mxu0 0.0
      %2086 = vmatprep.subr.mxu0 0.0
      %2087 = vmatpush1.msra.mxu0 0.0
      %2088 = vmatprep.subr.mxu0 0.0
      %2089 = vmatpush1.msra.mxu0 0.0
      %2090 = vmatprep.subr.mxu0 0.0
      %2091 = vmatpush1.msra.mxu0 0.0
      %2092 = vmatprep.subr.mxu0 0.0
      %2093 = vmatpush1.msra.mxu0 0.0
      %2094 = vmatprep.subr.mxu0 0.0
      %2095 = vmatpush1.msra.mxu0 0.0
      %2096 = vmatprep.subr.mxu0 0.0
      %2097 = vmatpush1.msra.mxu0 0.0
      %2098 = vmatprep.subr.mxu0 0.0
      %2099 = vmatpush1.msra.mxu0 0.0
      %2100 = vmatprep.subr.mxu0 0.0
      %2101 = vmatpush1.msra.mxu0 0.0
      %2102 = vmatprep.subr.mxu0 0.0
      %2103 = vmatpush1.msra.mxu0 0.0
      %2104 = vmatprep.subr.mxu0 0.0
      %2105 = vmatpush1.msra.mxu0 0.0
      %2106 = vmatprep.subr.mxu0 0.0
      %2107 = vmatpush1.msra.mxu0 0.0
      %2108 = vmatprep.subr.mxu0 0.0
      %2109 = vmatpush1.msra.mxu0 0.0
      %2110 = vmatprep.mubr.f32.mxu0 0.0
      %2111 = vmatmul.mubr.f32.gmra.mrb[0].mxu0 %v1999
      %v2112 = vpop.f32.mrb[0].mxu0
      %v2113 = vadd.f32 0.0, %v2112
      %v2114 = vpop.f32.mrb[0].mxu0
      %2115 = vmatprep.mubr.f32.mxu0 0.0
      %2116 = vmatmul.mubr.f32.gmra.mrb[0].mxu0 %v2002
      %v2117 = vpop.f32.mrb[0].mxu0
      %v2118 = vadd.f32 0.0, %v2117
      %v2119 = vpop.f32.mrb[0].mxu0
      %2120 = vmatprep.mubr.f32.mxu0 0.0
      %2121 = vmatmul.mubr.f32.gmra.mrb[0].mxu0 %v2005
      %v2122 = vpop.f32.mrb[0].mxu0
      %v2123 = vadd.f32 0.0, %v2122
      %v2124 = vpop.f32.mrb[0].mxu0
      %2125 = vmatprep.mubr.f32.mxu0 0.0
      %2126 = vmatmul.mubr.f32.gmra.mrb[0].mxu0 %v2008
      %v2127 = vpop.f32.mrb[0].mxu0
      %v2128 = vadd.f32 0.0, %v2127
      %v2129 = vpop.f32.mrb[0].mxu0
      %2130 = vmatprep.mubr.f32.mxu0 0.0
      %2131 = vmatmul.mubr.f32.gmra.mrb[0].mxu0 %v2011
      %v2132 = vpop.f32.mrb[0].mxu0
      %v2133 = vadd.f32 0.0, %v2132
      %v2134 = vpop.f32.mrb[0].mxu0
      %2135 = vmatprep.mubr.f32.mxu0 0.0
      %2136 = vmatmul.mubr.f32.gmra.mrb[0].mxu0 %v2014
      %v2137 = vpop.f32.mrb[0].mxu0
      %v2138 = vadd.f32 0.0, %v2137
      %v2139 = vpop.f32.mrb[0].mxu0
      %2140 = vmatprep.mubr.f32.mxu0 0.0
      %2141 = vmatmul.mubr.f32.gmra.mrb[0].mxu0 %v2017
      %v2142 = vpop.f32.mrb[0].mxu0
      %v2143 = vadd.f32 0.0, %v2142
      %v2144 = vpop.f32.mrb[0].mxu0
      %2145 = vmatprep.mubr.f32.mxu0 0.0
      %2146 = vmatmul.mubr.f32.gmra.mrb[0].mxu0 %v2020
      %v2147 = vpop.f32.mrb[0].mxu0
      %v2148 = vadd.f32 0.0, %v2147
      %v2149 = vpop.f32.mrb[0].mxu0
      %2150 = vmatprep.mubr.f32.mxu0 0.0
      %2151 = vmatmul.mubr.f32.gmra.mrb[0].mxu0 %v2023
      %v2152 = vpop.f32.mrb[0].mxu0
      %v2153 = vadd.f32 0.0, %v2152
      %v2154 = vpop.f32.mrb[0].mxu0
      %2155 = vmatprep.mubr.f32.mxu0 0.0
      %2156 = vmatmul.mubr.f32.gmra.mrb[0].mxu0 %v2026
      %v2157 = vpop.f32.mrb[0].mxu0
      %v2158 = vadd.f32 0.0, %v2157
      %v2159 = vpop.f32.mrb[0].mxu0
      %2160 = vmatprep.mubr.f32.mxu0 0.0
      %2161 = vmatmul.mubr.f32.gmra.mrb[0].mxu0 %v2029
      %v2162 = vpop.f32.mrb[0].mxu0
      %v2163 = vadd.f32 0.0, %v2162
      %v2164 = vpop.f32.mrb[0].mxu0
      %2165 = vmatprep.mubr.f32.mxu0 0.0
      %2166 = vmatmul.mubr.f32.gmra.mrb[0].mxu0 %v2032
      %v2167 = vpop.f32.mrb[0].mxu0
      %v2168 = vadd.f32 0.0, %v2167
      %v2169 = vpop.f32.mrb[0].mxu0
      %2170 = vmatprep.mubr.f32.mxu0 0.0
      %2171 = vmatmul.mubr.f32.gmra.mrb[0].mxu0 %v2035
      %v2172 = vpop.f32.mrb[0].mxu0
      %v2173 = vadd.f32 0.0, %v2172
      %v2174 = vpop.f32.mrb[0].mxu0
      %2175 = vmatprep.mubr.f32.mxu0 0.0
      %2176 = vmatmul.mubr.f32.gmra.mrb[0].mxu0 %v2038
      %v2177 = vpop.f32.mrb[0].mxu0
      %v2178 = vadd.f32 0.0, %v2177
      %v2179 = vpop.f32.mrb[0].mxu0
      %2180 = vmatprep.mubr.f32.mxu0 0.0
      %2181 = vmatmul.mubr.f32.gmra.mrb[0].mxu0 %v2041
      %v2182 = vpop.f32.mrb[0].mxu0
      %v2183 = vadd.f32 0.0, %v2182
      %v2184 = vpop.f32.mrb[0].mxu0
      %2185 = vmatprep.mubr.f32.mxu0 0.0
      %2186 = vmatmul.mubr.f32.gmra.mrb[0].mxu0 %v2044
      %v2187 = vpop.f32.mrb[0].mxu0
      %v2188 = vadd.f32 0.0, %v2187
      %v2189 = vpop.f32.mrb[0].mxu0
      %2190 = vdwg.mxu0
      %v2191 = vadd.f32 %v1961, %v2113
      %v2192 = vadd.f32 %v1962, %v2118
      %v2193 = vadd.f32 %v1963, %v2123
      %v2194 = vadd.f32 %v1964, %v2128
      %v2195 = vadd.f32 %v1965, %v2133
      %v2196 = vadd.f32 %v1966, %v2138
      %v2197 = vadd.f32 %v1967, %v2143
      %v2198 = vadd.f32 %v1968, %v2148
      %v2199 = vadd.f32 %v1969, %v2153
      %v2200 = vadd.f32 %v1970, %v2158
      %v2201 = vadd.f32 %v1971, %v2163
      %v2202 = vadd.f32 %v1972, %v2168
      %v2203 = vadd.f32 %v1973, %v2173
      %v2204 = vadd.f32 %v1974, %v2178
      %v2205 = vadd.f32 %v1975, %v2183
      %v2206 = vadd.f32 %v1976, %v2188
      %v2207 = vld [vmem:[#allocation2 + $0xa] sm:$0xff]
      %v2208 = vld [vmem:[#allocation2 + $0x12] sm:$0xff]
      %v2209 = vld [vmem:[#allocation2 + $0x1a] sm:$0xff]
      %v2210 = vld [vmem:[#allocation2 + $0x22] sm:$0xff]
      %v2211 = vld [vmem:[#allocation2 + $0x2a] sm:$0xff]
      %v2212 = vld [vmem:[#allocation2 + $0x32] sm:$0xff]
      %v2213 = vld [vmem:[#allocation2 + $0x3a] sm:$0xff]
      %v2214 = vld [vmem:[#allocation2 + $0x42] sm:$0xff]
      %v2215 = vld [vmem:[#allocation2 + $0x4a] sm:$0xff]
      %v2216 = vld [vmem:[#allocation2 + $0x52] sm:$0xff]
      %v2217 = vld [vmem:[#allocation2 + $0x5a] sm:$0xff]
      %v2218 = vld [vmem:[#allocation2 + $0x62] sm:$0xff]
      %v2219 = vld [vmem:[#allocation2 + $0x6a] sm:$0xff]
      %v2220 = vld [vmem:[#allocation2 + $0x72] sm:$0xff]
      %v2221 = vld [vmem:[#allocation2 + $0x7a] sm:$0xff]
      %v2222 = vld [vmem:[#allocation2 + $0x82] sm:$0xff]
      %s2223 = scalar_lea.vmem %s3, 160
      %v2224 = vld [vmem:[%s2223] sm:$0xff]
      %v2225 = vld [vmem:[%s2223 + $0x8] sm:$0xff]
      %v2226 = vld [vmem:[%s2223 + $0x10] sm:$0xff]
      %v2227 = vld [vmem:[%s2223 + $0x18] sm:$0xff]
      %v2229 = vsel %vm960, %v2207, 0
      %v2232 = vsel %vm960, %v2208, 0
      %v2235 = vsel %vm960, %v2209, 0
      %v2238 = vsel %vm960, %v2210, 0
      %v2241 = vsel %vm960, %v2211, 0
      %v2244 = vsel %vm960, %v2212, 0
      %v2247 = vsel %vm960, %v2213, 0
      %v2250 = vsel %vm960, %v2214, 0
      %v2253 = vsel %vm960, %v2215, 0
      %v2256 = vsel %vm960, %v2216, 0
      %v2259 = vsel %vm960, %v2217, 0
      %v2262 = vsel %vm960, %v2218, 0
      %v2265 = vsel %vm960, %v2219, 0
      %v2268 = vsel %vm960, %v2220, 0
      %v2271 = vsel %vm960, %v2221, 0
      %v2274 = vsel %vm960, %v2222, 0
      %2276 = vmatprep.subr.mxu0 0.0
      %2277 = vmatpush1.msra.mxu0 %v2224
      %2278 = vmatprep.subr.mxu0 0.0
      %2279 = vmatpush1.msra.mxu0 %v2225
      %2280 = vmatprep.subr.mxu0 0.0
      %2281 = vmatpush1.msra.mxu0 %v2226
      %2282 = vmatprep.subr.mxu0 0.0
      %2283 = vmatpush1.msra.mxu0 %v2227
      %2284 = vmatprep.subr.mxu0 0.0
      %2285 = vmatpush1.msra.mxu0 0.0
      %2286 = vmatprep.subr.mxu0 0.0
      %2287 = vmatpush1.msra.mxu0 0.0
      %2288 = vmatprep.subr.mxu0 0.0
      %2289 = vmatpush1.msra.mxu0 0.0
      %2290 = vmatprep.subr.mxu0 0.0
      %2291 = vmatpush1.msra.mxu0 0.0
      %2292 = vmatprep.subr.mxu0 0.0
      %2293 = vmatpush1.msra.mxu0 0.0
      %2294 = vmatprep.subr.mxu0 0.0
      %2295 = vmatpush1.msra.mxu0 0.0
      %2296 = vmatprep.subr.mxu0 0.0
      %2297 = vmatpush1.msra.mxu0 0.0
      %2298 = vmatprep.subr.mxu0 0.0
      %2299 = vmatpush1.msra.mxu0 0.0
      %2300 = vmatprep.subr.mxu0 0.0
      %2301 = vmatpush1.msra.mxu0 0.0
      %2302 = vmatprep.subr.mxu0 0.0
      %2303 = vmatpush1.msra.mxu0 0.0
      %2304 = vmatprep.subr.mxu0 0.0
      %2305 = vmatpush1.msra.mxu0 0.0
      %2306 = vmatprep.subr.mxu0 0.0
      %2307 = vmatpush1.msra.mxu0 0.0
      %2308 = vmatprep.subr.mxu0 0.0
      %2309 = vmatpush1.msra.mxu0 0.0
      %2310 = vmatprep.subr.mxu0 0.0
      %2311 = vmatpush1.msra.mxu0 0.0
      %2312 = vmatprep.subr.mxu0 0.0
      %2313 = vmatpush1.msra.mxu0 0.0
      %2314 = vmatprep.subr.mxu0 0.0
      %2315 = vmatpush1.msra.mxu0 0.0
      %2316 = vmatprep.subr.mxu0 0.0
      %2317 = vmatpush1.msra.mxu0 0.0
      %2318 = vmatprep.subr.mxu0 0.0
      %2319 = vmatpush1.msra.mxu0 0.0
      %2320 = vmatprep.subr.mxu0 0.0
      %2321 = vmatpush1.msra.mxu0 0.0
      %2322 = vmatprep.subr.mxu0 0.0
      %2323 = vmatpush1.msra.mxu0 0.0
      %2324 = vmatprep.subr.mxu0 0.0
      %2325 = vmatpush1.msra.mxu0 0.0
      %2326 = vmatprep.subr.mxu0 0.0
      %2327 = vmatpush1.msra.mxu0 0.0
      %2328 = vmatprep.subr.mxu0 0.0
      %2329 = vmatpush1.msra.mxu0 0.0
      %2330 = vmatprep.subr.mxu0 0.0
      %2331 = vmatpush1.msra.mxu0 0.0
      %2332 = vmatprep.subr.mxu0 0.0
      %2333 = vmatpush1.msra.mxu0 0.0
      %2334 = vmatprep.subr.mxu0 0.0
      %2335 = vmatpush1.msra.mxu0 0.0
      %2336 = vmatprep.subr.mxu0 0.0
      %2337 = vmatpush1.msra.mxu0 0.0
      %2338 = vmatprep.subr.mxu0 0.0
      %2339 = vmatpush1.msra.mxu0 0.0
      %2340 = vmatprep.mubr.f32.mxu0 0.0
      %2341 = vmatmul.mubr.f32.gmra.mrb[0].mxu0 %v2229
      %v2342 = vpop.f32.mrb[0].mxu0
      %v2343 = vadd.f32 0.0, %v2342
      %v2344 = vpop.f32.mrb[0].mxu0
      %2345 = vmatprep.mubr.f32.mxu0 0.0
      %2346 = vmatmul.mubr.f32.gmra.mrb[0].mxu0 %v2232
      %v2347 = vpop.f32.mrb[0].mxu0
      %v2348 = vadd.f32 0.0, %v2347
      %v2349 = vpop.f32.mrb[0].mxu0
      %2350 = vmatprep.mubr.f32.mxu0 0.0
      %2351 = vmatmul.mubr.f32.gmra.mrb[0].mxu0 %v2235
      %v2352 = vpop.f32.mrb[0].mxu0
      %v2353 = vadd.f32 0.0, %v2352
      %v2354 = vpop.f32.mrb[0].mxu0
      %2355 = vmatprep.mubr.f32.mxu0 0.0
      %2356 = vmatmul.mubr.f32.gmra.mrb[0].mxu0 %v2238
      %v2357 = vpop.f32.mrb[0].mxu0
      %v2358 = vadd.f32 0.0, %v2357
      %v2359 = vpop.f32.mrb[0].mxu0
      %2360 = vmatprep.mubr.f32.mxu0 0.0
      %2361 = vmatmul.mubr.f32.gmra.mrb[0].mxu0 %v2241
      %v2362 = vpop.f32.mrb[0].mxu0
      %v2363 = vadd.f32 0.0, %v2362
      %v2364 = vpop.f32.mrb[0].mxu0
      %2365 = vmatprep.mubr.f32.mxu0 0.0
      %2366 = vmatmul.mubr.f32.gmra.mrb[0].mxu0 %v2244
      %v2367 = vpop.f32.mrb[0].mxu0
      %v2368 = vadd.f32 0.0, %v2367
      %v2369 = vpop.f32.mrb[0].mxu0
      %2370 = vmatprep.mubr.f32.mxu0 0.0
      %2371 = vmatmul.mubr.f32.gmra.mrb[0].mxu0 %v2247
      %v2372 = vpop.f32.mrb[0].mxu0
      %v2373 = vadd.f32 0.0, %v2372
      %v2374 = vpop.f32.mrb[0].mxu0
      %2375 = vmatprep.mubr.f32.mxu0 0.0
      %2376 = vmatmul.mubr.f32.gmra.mrb[0].mxu0 %v2250
      %v2377 = vpop.f32.mrb[0].mxu0
      %v2378 = vadd.f32 0.0, %v2377
      %v2379 = vpop.f32.mrb[0].mxu0
      %2380 = vmatprep.mubr.f32.mxu0 0.0
      %2381 = vmatmul.mubr.f32.gmra.mrb[0].mxu0 %v2253
      %v2382 = vpop.f32.mrb[0].mxu0
      %v2383 = vadd.f32 0.0, %v2382
      %v2384 = vpop.f32.mrb[0].mxu0
      %2385 = vmatprep.mubr.f32.mxu0 0.0
      %2386 = vmatmul.mubr.f32.gmra.mrb[0].mxu0 %v2256
      %v2387 = vpop.f32.mrb[0].mxu0
      %v2388 = vadd.f32 0.0, %v2387
      %v2389 = vpop.f32.mrb[0].mxu0
      %2390 = vmatprep.mubr.f32.mxu0 0.0
      %2391 = vmatmul.mubr.f32.gmra.mrb[0].mxu0 %v2259
      %v2392 = vpop.f32.mrb[0].mxu0
      %v2393 = vadd.f32 0.0, %v2392
      %v2394 = vpop.f32.mrb[0].mxu0
      %2395 = vmatprep.mubr.f32.mxu0 0.0
      %2396 = vmatmul.mubr.f32.gmra.mrb[0].mxu0 %v2262
      %v2397 = vpop.f32.mrb[0].mxu0
      %v2398 = vadd.f32 0.0, %v2397
      %v2399 = vpop.f32.mrb[0].mxu0
      %2400 = vmatprep.mubr.f32.mxu0 0.0
      %2401 = vmatmul.mubr.f32.gmra.mrb[0].mxu0 %v2265
      %v2402 = vpop.f32.mrb[0].mxu0
      %v2403 = vadd.f32 0.0, %v2402
      %v2404 = vpop.f32.mrb[0].mxu0
      %2405 = vmatprep.mubr.f32.mxu0 0.0
      %2406 = vmatmul.mubr.f32.gmra.mrb[0].mxu0 %v2268
      %v2407 = vpop.f32.mrb[0].mxu0
      %v2408 = vadd.f32 0.0, %v2407
      %v2409 = vpop.f32.mrb[0].mxu0
      %2410 = vmatprep.mubr.f32.mxu0 0.0
      %2411 = vmatmul.mubr.f32.gmra.mrb[0].mxu0 %v2271
      %v2412 = vpop.f32.mrb[0].mxu0
      %v2413 = vadd.f32 0.0, %v2412
      %v2414 = vpop.f32.mrb[0].mxu0
      %2415 = vmatprep.mubr.f32.mxu0 0.0
      %2416 = vmatmul.mubr.f32.gmra.mrb[0].mxu0 %v2274
      %v2417 = vpop.f32.mrb[0].mxu0
      %v2418 = vadd.f32 0.0, %v2417
      %v2419 = vpop.f32.mrb[0].mxu0
      %2420 = vdwg.mxu0
      %v2421 = vadd.f32 %v2191, %v2343
      %v2422 = vadd.f32 %v2192, %v2348
      %v2423 = vadd.f32 %v2193, %v2353
      %v2424 = vadd.f32 %v2194, %v2358
      %v2425 = vadd.f32 %v2195, %v2363
      %v2426 = vadd.f32 %v2196, %v2368
      %v2427 = vadd.f32 %v2197, %v2373
      %v2428 = vadd.f32 %v2198, %v2378
      %v2429 = vadd.f32 %v2199, %v2383
      %v2430 = vadd.f32 %v2200, %v2388
      %v2431 = vadd.f32 %v2201, %v2393
      %v2432 = vadd.f32 %v2202, %v2398
      %v2433 = vadd.f32 %v2203, %v2403
      %v2434 = vadd.f32 %v2204, %v2408
      %v2435 = vadd.f32 %v2205, %v2413
      %v2436 = vadd.f32 %v2206, %v2418
      %v2437 = vld [vmem:[#allocation2 + $0xb] sm:$0xff]
      %v2438 = vld [vmem:[#allocation2 + $0x13] sm:$0xff]
      %v2439 = vld [vmem:[#allocation2 + $0x1b] sm:$0xff]
      %v2440 = vld [vmem:[#allocation2 + $0x23] sm:$0xff]
      %v2441 = vld [vmem:[#allocation2 + $0x2b] sm:$0xff]
      %v2442 = vld [vmem:[#allocation2 + $0x33] sm:$0xff]
      %v2443 = vld [vmem:[#allocation2 + $0x3b] sm:$0xff]
      %v2444 = vld [vmem:[#allocation2 + $0x43] sm:$0xff]
      %v2445 = vld [vmem:[#allocation2 + $0x4b] sm:$0xff]
      %v2446 = vld [vmem:[#allocation2 + $0x53] sm:$0xff]
      %v2447 = vld [vmem:[#allocation2 + $0x5b] sm:$0xff]
      %v2448 = vld [vmem:[#allocation2 + $0x63] sm:$0xff]
      %v2449 = vld [vmem:[#allocation2 + $0x6b] sm:$0xff]
      %v2450 = vld [vmem:[#allocation2 + $0x73] sm:$0xff]
      %v2451 = vld [vmem:[#allocation2 + $0x7b] sm:$0xff]
      %v2452 = vld [vmem:[#allocation2 + $0x83] sm:$0xff]
      %s2453 = scalar_lea.vmem %s3, 192
      %v2454 = vld [vmem:[%s2453] sm:$0xff]
      %v2455 = vld [vmem:[%s2453 + $0x8] sm:$0xff]
      %v2456 = vld [vmem:[%s2453 + $0x10] sm:$0xff]
      %v2457 = vld [vmem:[%s2453 + $0x18] sm:$0xff]
      %v2459 = vsel %vm960, %v2437, 0
      %v2462 = vsel %vm960, %v2438, 0
      %v2465 = vsel %vm960, %v2439, 0
      %v2468 = vsel %vm960, %v2440, 0
      %v2471 = vsel %vm960, %v2441, 0
      %v2474 = vsel %vm960, %v2442, 0
      %v2477 = vsel %vm960, %v2443, 0
      %v2480 = vsel %vm960, %v2444, 0
      %v2483 = vsel %vm960, %v2445, 0
      %v2486 = vsel %vm960, %v2446, 0
      %v2489 = vsel %vm960, %v2447, 0
      %v2492 = vsel %vm960, %v2448, 0
      %v2495 = vsel %vm960, %v2449, 0
      %v2498 = vsel %vm960, %v2450, 0
      %v2501 = vsel %vm960, %v2451, 0
      %v2504 = vsel %vm960, %v2452, 0
      %2506 = vmatprep.subr.mxu0 0.0
      %2507 = vmatpush1.msra.mxu0 %v2454
      %2508 = vmatprep.subr.mxu0 0.0
      %2509 = vmatpush1.msra.mxu0 %v2455
      %2510 = vmatprep.subr.mxu0 0.0
      %2511 = vmatpush1.msra.mxu0 %v2456
      %2512 = vmatprep.subr.mxu0 0.0
      %2513 = vmatpush1.msra.mxu0 %v2457
      %2514 = vmatprep.subr.mxu0 0.0
      %2515 = vmatpush1.msra.mxu0 0.0
      %2516 = vmatprep.subr.mxu0 0.0
      %2517 = vmatpush1.msra.mxu0 0.0
      %2518 = vmatprep.subr.mxu0 0.0
      %2519 = vmatpush1.msra.mxu0 0.0
      %2520 = vmatprep.subr.mxu0 0.0
      %2521 = vmatpush1.msra.mxu0 0.0
      %2522 = vmatprep.subr.mxu0 0.0
      %2523 = vmatpush1.msra.mxu0 0.0
      %2524 = vmatprep.subr.mxu0 0.0
      %2525 = vmatpush1.msra.mxu0 0.0
      %2526 = vmatprep.subr.mxu0 0.0
      %2527 = vmatpush1.msra.mxu0 0.0
      %2528 = vmatprep.subr.mxu0 0.0
      %2529 = vmatpush1.msra.mxu0 0.0
      %2530 = vmatprep.subr.mxu0 0.0
      %2531 = vmatpush1.msra.mxu0 0.0
      %2532 = vmatprep.subr.mxu0 0.0
      %2533 = vmatpush1.msra.mxu0 0.0
      %2534 = vmatprep.subr.mxu0 0.0
      %2535 = vmatpush1.msra.mxu0 0.0
      %2536 = vmatprep.subr.mxu0 0.0
      %2537 = vmatpush1.msra.mxu0 0.0
      %2538 = vmatprep.subr.mxu0 0.0
      %2539 = vmatpush1.msra.mxu0 0.0
      %2540 = vmatprep.subr.mxu0 0.0
      %2541 = vmatpush1.msra.mxu0 0.0
      %2542 = vmatprep.subr.mxu0 0.0
      %2543 = vmatpush1.msra.mxu0 0.0
      %2544 = vmatprep.subr.mxu0 0.0
      %2545 = vmatpush1.msra.mxu0 0.0
      %2546 = vmatprep.subr.mxu0 0.0
      %2547 = vmatpush1.msra.mxu0 0.0
      %2548 = vmatprep.subr.mxu0 0.0
      %2549 = vmatpush1.msra.mxu0 0.0
      %2550 = vmatprep.subr.mxu0 0.0
      %2551 = vmatpush1.msra.mxu0 0.0
      %2552 = vmatprep.subr.mxu0 0.0
      %2553 = vmatpush1.msra.mxu0 0.0
      %2554 = vmatprep.subr.mxu0 0.0
      %2555 = vmatpush1.msra.mxu0 0.0
      %2556 = vmatprep.subr.mxu0 0.0
      %2557 = vmatpush1.msra.mxu0 0.0
      %2558 = vmatprep.subr.mxu0 0.0
      %2559 = vmatpush1.msra.mxu0 0.0
      %2560 = vmatprep.subr.mxu0 0.0
      %2561 = vmatpush1.msra.mxu0 0.0
      %2562 = vmatprep.subr.mxu0 0.0
      %2563 = vmatpush1.msra.mxu0 0.0
      %2564 = vmatprep.subr.mxu0 0.0
      %2565 = vmatpush1.msra.mxu0 0.0
      %2566 = vmatprep.subr.mxu0 0.0
      %2567 = vmatpush1.msra.mxu0 0.0
      %2568 = vmatprep.subr.mxu0 0.0
      %2569 = vmatpush1.msra.mxu0 0.0
      %2570 = vmatprep.mubr.f32.mxu0 0.0
      %2571 = vmatmul.mubr.f32.gmra.mrb[0].mxu0 %v2459
      %v2572 = vpop.f32.mrb[0].mxu0
      %v2573 = vadd.f32 0.0, %v2572
      %v2574 = vpop.f32.mrb[0].mxu0
      %2575 = vmatprep.mubr.f32.mxu0 0.0
      %2576 = vmatmul.mubr.f32.gmra.mrb[0].mxu0 %v2462
      %v2577 = vpop.f32.mrb[0].mxu0
      %v2578 = vadd.f32 0.0, %v2577
      %v2579 = vpop.f32.mrb[0].mxu0
      %2580 = vmatprep.mubr.f32.mxu0 0.0
      %2581 = vmatmul.mubr.f32.gmra.mrb[0].mxu0 %v2465
      %v2582 = vpop.f32.mrb[0].mxu0
      %v2583 = vadd.f32 0.0, %v2582
      %v2584 = vpop.f32.mrb[0].mxu0
      %2585 = vmatprep.mubr.f32.mxu0 0.0
      %2586 = vmatmul.mubr.f32.gmra.mrb[0].mxu0 %v2468
      %v2587 = vpop.f32.mrb[0].mxu0
      %v2588 = vadd.f32 0.0, %v2587
      %v2589 = vpop.f32.mrb[0].mxu0
      %2590 = vmatprep.mubr.f32.mxu0 0.0
      %2591 = vmatmul.mubr.f32.gmra.mrb[0].mxu0 %v2471
      %v2592 = vpop.f32.mrb[0].mxu0
      %v2593 = vadd.f32 0.0, %v2592
      %v2594 = vpop.f32.mrb[0].mxu0
      %2595 = vmatprep.mubr.f32.mxu0 0.0
      %2596 = vmatmul.mubr.f32.gmra.mrb[0].mxu0 %v2474
      %v2597 = vpop.f32.mrb[0].mxu0
      %v2598 = vadd.f32 0.0, %v2597
      %v2599 = vpop.f32.mrb[0].mxu0
      %2600 = vmatprep.mubr.f32.mxu0 0.0
      %2601 = vmatmul.mubr.f32.gmra.mrb[0].mxu0 %v2477
      %v2602 = vpop.f32.mrb[0].mxu0
      %v2603 = vadd.f32 0.0, %v2602
      %v2604 = vpop.f32.mrb[0].mxu0
      %2605 = vmatprep.mubr.f32.mxu0 0.0
      %2606 = vmatmul.mubr.f32.gmra.mrb[0].mxu0 %v2480
      %v2607 = vpop.f32.mrb[0].mxu0
      %v2608 = vadd.f32 0.0, %v2607
      %v2609 = vpop.f32.mrb[0].mxu0
      %2610 = vmatprep.mubr.f32.mxu0 0.0
      %2611 = vmatmul.mubr.f32.gmra.mrb[0].mxu0 %v2483
      %v2612 = vpop.f32.mrb[0].mxu0
      %v2613 = vadd.f32 0.0, %v2612
      %v2614 = vpop.f32.mrb[0].mxu0
      %2615 = vmatprep.mubr.f32.mxu0 0.0
      %2616 = vmatmul.mubr.f32.gmra.mrb[0].mxu0 %v2486
      %v2617 = vpop.f32.mrb[0].mxu0
      %v2618 = vadd.f32 0.0, %v2617
      %v2619 = vpop.f32.mrb[0].mxu0
      %2620 = vmatprep.mubr.f32.mxu0 0.0
      %2621 = vmatmul.mubr.f32.gmra.mrb[0].mxu0 %v2489
      %v2622 = vpop.f32.mrb[0].mxu0
      %v2623 = vadd.f32 0.0, %v2622
      %v2624 = vpop.f32.mrb[0].mxu0
      %2625 = vmatprep.mubr.f32.mxu0 0.0
      %2626 = vmatmul.mubr.f32.gmra.mrb[0].mxu0 %v2492
      %v2627 = vpop.f32.mrb[0].mxu0
      %v2628 = vadd.f32 0.0, %v2627
      %v2629 = vpop.f32.mrb[0].mxu0
      %2630 = vmatprep.mubr.f32.mxu0 0.0
      %2631 = vmatmul.mubr.f32.gmra.mrb[0].mxu0 %v2495
      %v2632 = vpop.f32.mrb[0].mxu0
      %v2633 = vadd.f32 0.0, %v2632
      %v2634 = vpop.f32.mrb[0].mxu0
      %2635 = vmatprep.mubr.f32.mxu0 0.0
      %2636 = vmatmul.mubr.f32.gmra.mrb[0].mxu0 %v2498
      %v2637 = vpop.f32.mrb[0].mxu0
      %v2638 = vadd.f32 0.0, %v2637
      %v2639 = vpop.f32.mrb[0].mxu0
      %2640 = vmatprep.mubr.f32.mxu0 0.0
      %2641 = vmatmul.mubr.f32.gmra.mrb[0].mxu0 %v2501
      %v2642 = vpop.f32.mrb[0].mxu0
      %v2643 = vadd.f32 0.0, %v2642
      %v2644 = vpop.f32.mrb[0].mxu0
      %2645 = vmatprep.mubr.f32.mxu0 0.0
      %2646 = vmatmul.mubr.f32.gmra.mrb[0].mxu0 %v2504
      %v2647 = vpop.f32.mrb[0].mxu0
      %v2648 = vadd.f32 0.0, %v2647
      %v2649 = vpop.f32.mrb[0].mxu0
      %2650 = vdwg.mxu0
      %v2651 = vadd.f32 %v2421, %v2573
      %v2652 = vadd.f32 %v2422, %v2578
      %v2653 = vadd.f32 %v2423, %v2583
      %v2654 = vadd.f32 %v2424, %v2588
      %v2655 = vadd.f32 %v2425, %v2593
      %v2656 = vadd.f32 %v2426, %v2598
      %v2657 = vadd.f32 %v2427, %v2603
      %v2658 = vadd.f32 %v2428, %v2608
      %v2659 = vadd.f32 %v2429, %v2613
      %v2660 = vadd.f32 %v2430, %v2618
      %v2661 = vadd.f32 %v2431, %v2623
      %v2662 = vadd.f32 %v2432, %v2628
      %v2663 = vadd.f32 %v2433, %v2633
      %v2664 = vadd.f32 %v2434, %v2638
      %v2665 = vadd.f32 %v2435, %v2643
      %v2666 = vadd.f32 %v2436, %v2648
      %v2667 = vld [vmem:[#allocation2 + $0xc] sm:$0xff]
      %v2668 = vld [vmem:[#allocation2 + $0x14] sm:$0xff]
      %v2669 = vld [vmem:[#allocation2 + $0x1c] sm:$0xff]
      %v2670 = vld [vmem:[#allocation2 + $0x24] sm:$0xff]
      %v2671 = vld [vmem:[#allocation2 + $0x2c] sm:$0xff]
      %v2672 = vld [vmem:[#allocation2 + $0x34] sm:$0xff]
      %v2673 = vld [vmem:[#allocation2 + $0x3c] sm:$0xff]
      %v2674 = vld [vmem:[#allocation2 + $0x44] sm:$0xff]
      %v2675 = vld [vmem:[#allocation2 + $0x4c] sm:$0xff]
      %v2676 = vld [vmem:[#allocation2 + $0x54] sm:$0xff]
      %v2677 = vld [vmem:[#allocation2 + $0x5c] sm:$0xff]
      %v2678 = vld [vmem:[#allocation2 + $0x64] sm:$0xff]
      %v2679 = vld [vmem:[#allocation2 + $0x6c] sm:$0xff]
      %v2680 = vld [vmem:[#allocation2 + $0x74] sm:$0xff]
      %v2681 = vld [vmem:[#allocation2 + $0x7c] sm:$0xff]
      %v2682 = vld [vmem:[#allocation2 + $0x84] sm:$0xff]
      %s2683 = scalar_lea.vmem %s3, 224
      %v2684 = vld [vmem:[%s2683] sm:$0xff]
      %v2685 = vld [vmem:[%s2683 + $0x8] sm:$0xff]
      %v2686 = vld [vmem:[%s2683 + $0x10] sm:$0xff]
      %v2687 = vld [vmem:[%s2683 + $0x18] sm:$0xff]
      %v2689 = vsel %vm960, %v2667, 0
      %v2692 = vsel %vm960, %v2668, 0
      %v2695 = vsel %vm960, %v2669, 0
      %v2698 = vsel %vm960, %v2670, 0
      %v2701 = vsel %vm960, %v2671, 0
      %v2704 = vsel %vm960, %v2672, 0
      %v2707 = vsel %vm960, %v2673, 0
      %v2710 = vsel %vm960, %v2674, 0
      %v2713 = vsel %vm960, %v2675, 0
      %v2716 = vsel %vm960, %v2676, 0
      %v2719 = vsel %vm960, %v2677, 0
      %v2722 = vsel %vm960, %v2678, 0
      %v2725 = vsel %vm960, %v2679, 0
      %v2728 = vsel %vm960, %v2680, 0
      %v2731 = vsel %vm960, %v2681, 0
      %v2734 = vsel %vm960, %v2682, 0
      %2736 = vmatprep.subr.mxu0 0.0
      %2737 = vmatpush1.msra.mxu0 %v2684
      %2738 = vmatprep.subr.mxu0 0.0
      %2739 = vmatpush1.msra.mxu0 %v2685
      %2740 = vmatprep.subr.mxu0 0.0
      %2741 = vmatpush1.msra.mxu0 %v2686
      %2742 = vmatprep.subr.mxu0 0.0
      %2743 = vmatpush1.msra.mxu0 %v2687
      %2744 = vmatprep.subr.mxu0 0.0
      %2745 = vmatpush1.msra.mxu0 0.0
      %2746 = vmatprep.subr.mxu0 0.0
      %2747 = vmatpush1.msra.mxu0 0.0
      %2748 = vmatprep.subr.mxu0 0.0
      %2749 = vmatpush1.msra.mxu0 0.0
      %2750 = vmatprep.subr.mxu0 0.0
      %2751 = vmatpush1.msra.mxu0 0.0
      %2752 = vmatprep.subr.mxu0 0.0
      %2753 = vmatpush1.msra.mxu0 0.0
      %2754 = vmatprep.subr.mxu0 0.0
      %2755 = vmatpush1.msra.mxu0 0.0
      %2756 = vmatprep.subr.mxu0 0.0
      %2757 = vmatpush1.msra.mxu0 0.0
      %2758 = vmatprep.subr.mxu0 0.0
      %2759 = vmatpush1.msra.mxu0 0.0
      %2760 = vmatprep.subr.mxu0 0.0
      %2761 = vmatpush1.msra.mxu0 0.0
      %2762 = vmatprep.subr.mxu0 0.0
      %2763 = vmatpush1.msra.mxu0 0.0
      %2764 = vmatprep.subr.mxu0 0.0
      %2765 = vmatpush1.msra.mxu0 0.0
      %2766 = vmatprep.subr.mxu0 0.0
      %2767 = vmatpush1.msra.mxu0 0.0
      %2768 = vmatprep.subr.mxu0 0.0
      %2769 = vmatpush1.msra.mxu0 0.0
      %2770 = vmatprep.subr.mxu0 0.0
      %2771 = vmatpush1.msra.mxu0 0.0
      %2772 = vmatprep.subr.mxu0 0.0
      %2773 = vmatpush1.msra.mxu0 0.0
      %2774 = vmatprep.subr.mxu0 0.0
      %2775 = vmatpush1.msra.mxu0 0.0
      %2776 = vmatprep.subr.mxu0 0.0
      %2777 = vmatpush1.msra.mxu0 0.0
      %2778 = vmatprep.subr.mxu0 0.0
      %2779 = vmatpush1.msra.mxu0 0.0
      %2780 = vmatprep.subr.mxu0 0.0
      %2781 = vmatpush1.msra.mxu0 0.0
      %2782 = vmatprep.subr.mxu0 0.0
      %2783 = vmatpush1.msra.mxu0 0.0
      %2784 = vmatprep.subr.mxu0 0.0
      %2785 = vmatpush1.msra.mxu0 0.0
      %2786 = vmatprep.subr.mxu0 0.0
      %2787 = vmatpush1.msra.mxu0 0.0
      %2788 = vmatprep.subr.mxu0 0.0
      %2789 = vmatpush1.msra.mxu0 0.0
      %2790 = vmatprep.subr.mxu0 0.0
      %2791 = vmatpush1.msra.mxu0 0.0
      %2792 = vmatprep.subr.mxu0 0.0
      %2793 = vmatpush1.msra.mxu0 0.0
      %2794 = vmatprep.subr.mxu0 0.0
      %2795 = vmatpush1.msra.mxu0 0.0
      %2796 = vmatprep.subr.mxu0 0.0
      %2797 = vmatpush1.msra.mxu0 0.0
      %2798 = vmatprep.subr.mxu0 0.0
      %2799 = vmatpush1.msra.mxu0 0.0
      %2800 = vmatprep.mubr.f32.mxu0 0.0
      %2801 = vmatmul.mubr.f32.gmra.mrb[0].mxu0 %v2689
      %v2802 = vpop.f32.mrb[0].mxu0
      %v2803 = vadd.f32 0.0, %v2802
      %v2804 = vpop.f32.mrb[0].mxu0
      %2805 = vmatprep.mubr.f32.mxu0 0.0
      %2806 = vmatmul.mubr.f32.gmra.mrb[0].mxu0 %v2692
      %v2807 = vpop.f32.mrb[0].mxu0
      %v2808 = vadd.f32 0.0, %v2807
      %v2809 = vpop.f32.mrb[0].mxu0
      %2810 = vmatprep.mubr.f32.mxu0 0.0
      %2811 = vmatmul.mubr.f32.gmra.mrb[0].mxu0 %v2695
      %v2812 = vpop.f32.mrb[0].mxu0
      %v2813 = vadd.f32 0.0, %v2812
      %v2814 = vpop.f32.mrb[0].mxu0
      %2815 = vmatprep.mubr.f32.mxu0 0.0
      %2816 = vmatmul.mubr.f32.gmra.mrb[0].mxu0 %v2698
      %v2817 = vpop.f32.mrb[0].mxu0
      %v2818 = vadd.f32 0.0, %v2817
      %v2819 = vpop.f32.mrb[0].mxu0
      %2820 = vmatprep.mubr.f32.mxu0 0.0
      %2821 = vmatmul.mubr.f32.gmra.mrb[0].mxu0 %v2701
      %v2822 = vpop.f32.mrb[0].mxu0
      %v2823 = vadd.f32 0.0, %v2822
      %v2824 = vpop.f32.mrb[0].mxu0
      %2825 = vmatprep.mubr.f32.mxu0 0.0
      %2826 = vmatmul.mubr.f32.gmra.mrb[0].mxu0 %v2704
      %v2827 = vpop.f32.mrb[0].mxu0
      %v2828 = vadd.f32 0.0, %v2827
      %v2829 = vpop.f32.mrb[0].mxu0
      %2830 = vmatprep.mubr.f32.mxu0 0.0
      %2831 = vmatmul.mubr.f32.gmra.mrb[0].mxu0 %v2707
      %v2832 = vpop.f32.mrb[0].mxu0
      %v2833 = vadd.f32 0.0, %v2832
      %v2834 = vpop.f32.mrb[0].mxu0
      %2835 = vmatprep.mubr.f32.mxu0 0.0
      %2836 = vmatmul.mubr.f32.gmra.mrb[0].mxu0 %v2710
      %v2837 = vpop.f32.mrb[0].mxu0
      %v2838 = vadd.f32 0.0, %v2837
      %v2839 = vpop.f32.mrb[0].mxu0
      %2840 = vmatprep.mubr.f32.mxu0 0.0
      %2841 = vmatmul.mubr.f32.gmra.mrb[0].mxu0 %v2713
      %v2842 = vpop.f32.mrb[0].mxu0
      %v2843 = vadd.f32 0.0, %v2842
      %v2844 = vpop.f32.mrb[0].mxu0
      %2845 = vmatprep.mubr.f32.mxu0 0.0
      %2846 = vmatmul.mubr.f32.gmra.mrb[0].mxu0 %v2716
      %v2847 = vpop.f32.mrb[0].mxu0
      %v2848 = vadd.f32 0.0, %v2847
      %v2849 = vpop.f32.mrb[0].mxu0
      %2850 = vmatprep.mubr.f32.mxu0 0.0
      %2851 = vmatmul.mubr.f32.gmra.mrb[0].mxu0 %v2719
      %v2852 = vpop.f32.mrb[0].mxu0
      %v2853 = vadd.f32 0.0, %v2852
      %v2854 = vpop.f32.mrb[0].mxu0
      %2855 = vmatprep.mubr.f32.mxu0 0.0
      %2856 = vmatmul.mubr.f32.gmra.mrb[0].mxu0 %v2722
      %v2857 = vpop.f32.mrb[0].mxu0
      %v2858 = vadd.f32 0.0, %v2857
      %v2859 = vpop.f32.mrb[0].mxu0
      %2860 = vmatprep.mubr.f32.mxu0 0.0
      %2861 = vmatmul.mubr.f32.gmra.mrb[0].mxu0 %v2725
      %v2862 = vpop.f32.mrb[0].mxu0
      %v2863 = vadd.f32 0.0, %v2862
      %v2864 = vpop.f32.mrb[0].mxu0
      %2865 = vmatprep.mubr.f32.mxu0 0.0
      %2866 = vmatmul.mubr.f32.gmra.mrb[0].mxu0 %v2728
      %v2867 = vpop.f32.mrb[0].mxu0
      %v2868 = vadd.f32 0.0, %v2867
      %v2869 = vpop.f32.mrb[0].mxu0
      %2870 = vmatprep.mubr.f32.mxu0 0.0
      %2871 = vmatmul.mubr.f32.gmra.mrb[0].mxu0 %v2731
      %v2872 = vpop.f32.mrb[0].mxu0
      %v2873 = vadd.f32 0.0, %v2872
      %v2874 = vpop.f32.mrb[0].mxu0
      %2875 = vmatprep.mubr.f32.mxu0 0.0
      %2876 = vmatmul.mubr.f32.gmra.mrb[0].mxu0 %v2734
      %v2877 = vpop.f32.mrb[0].mxu0
      %v2878 = vadd.f32 0.0, %v2877
      %v2879 = vpop.f32.mrb[0].mxu0
      %2880 = vdwg.mxu0
      %v2881 = vadd.f32 %v2651, %v2803
      %v2882 = vadd.f32 %v2652, %v2808
      %v2883 = vadd.f32 %v2653, %v2813
      %v2884 = vadd.f32 %v2654, %v2818
      %v2885 = vadd.f32 %v2655, %v2823
      %v2886 = vadd.f32 %v2656, %v2828
      %v2887 = vadd.f32 %v2657, %v2833
      %v2888 = vadd.f32 %v2658, %v2838
      %v2889 = vadd.f32 %v2659, %v2843
      %v2890 = vadd.f32 %v2660, %v2848
      %v2891 = vadd.f32 %v2661, %v2853
      %v2892 = vadd.f32 %v2662, %v2858
      %v2893 = vadd.f32 %v2663, %v2863
      %v2894 = vadd.f32 %v2664, %v2868
      %v2895 = vadd.f32 %v2665, %v2873
      %v2896 = vadd.f32 %v2666, %v2878
      %v2897 = vld [vmem:[%s4] sm:$0x1]
      %v2898 = vlaneseq
      %v2899 = vshrl.u32 %v2898, 7
      %v2900 = vsub.s32 0, %v2899
      %v2901 = vrot.slane %v2897, %v2900
      %v2902 = vadd.f32 %v2881, %v2901
      %v2903 = vadd.f32 %v2882, %v2901
      %v2904 = vadd.f32 %v2883, %v2901
      %v2905 = vadd.f32 %v2884, %v2901
      %v2906 = vadd.f32 %v2885, %v2901
      %v2907 = vadd.f32 %v2886, %v2901
      %v2908 = vadd.f32 %v2887, %v2901
      %v2909 = vadd.f32 %v2888, %v2901
      %v2910 = vadd.f32 %v2889, %v2901
      %v2911 = vadd.f32 %v2890, %v2901
      %v2912 = vadd.f32 %v2891, %v2901
      %v2913 = vadd.f32 %v2892, %v2901
      %v2914 = vadd.f32 %v2893, %v2901
      %v2915 = vadd.f32 %v2894, %v2901
      %v2916 = vadd.f32 %v2895, %v2901
      %v2917 = vadd.f32 %v2896, %v2901
      %v2918 = vmax.f32 %v2902, 0.0
      %v2919 = vmax.f32 %v2903, 0.0
      %v2920 = vmax.f32 %v2904, 0.0
      %v2921 = vmax.f32 %v2905, 0.0
      %v2922 = vmax.f32 %v2906, 0.0
      %v2923 = vmax.f32 %v2907, 0.0
      %v2924 = vmax.f32 %v2908, 0.0
      %v2925 = vmax.f32 %v2909, 0.0
      %v2926 = vmax.f32 %v2910, 0.0
      %v2927 = vmax.f32 %v2911, 0.0
      %v2928 = vmax.f32 %v2912, 0.0
      %v2929 = vmax.f32 %v2913, 0.0
      %v2930 = vmax.f32 %v2914, 0.0
      %v2931 = vmax.f32 %v2915, 0.0
      %v2932 = vmax.f32 %v2916, 0.0
      %v2933 = vmax.f32 %v2917, 0.0
      %v2934 = vld [vmem:[%s4 + $0x1] sm:$0x1]
      %v2935 = vlaneseq
      %v2936 = vshrl.u32 %v2935, 7
      %v2937 = vsub.s32 0, %v2936
      %v2938 = vrot.slane %v2934, %v2937
      %v2939 = vmul.f32 %v2918, %v2938
      %v2940 = vmul.f32 %v2919, %v2938
      %v2941 = vmul.f32 %v2920, %v2938
      %v2942 = vmul.f32 %v2921, %v2938
      %v2943 = vmul.f32 %v2922, %v2938
      %v2944 = vmul.f32 %v2923, %v2938
      %v2945 = vmul.f32 %v2924, %v2938
      %v2946 = vmul.f32 %v2925, %v2938
      %v2947 = vmul.f32 %v2926, %v2938
      %v2948 = vmul.f32 %v2927, %v2938
      %v2949 = vmul.f32 %v2928, %v2938
      %v2950 = vmul.f32 %v2929, %v2938
      %v2951 = vmul.f32 %v2930, %v2938
      %v2952 = vmul.f32 %v2931, %v2938
      %v2953 = vmul.f32 %v2932, %v2938
      %v2954 = vmul.f32 %v2933, %v2938
      %v2955 = vld [vmem:[%s4 + $0x2] sm:$0x1]
      %v2956 = vlaneseq
      %v2957 = vshrl.u32 %v2956, 7
      %v2958 = vsub.s32 0, %v2957
      %v2959 = vrot.slane %v2955, %v2958
      %v2960 = vadd.f32 %v2939, %v2959
      %v2961 = vadd.f32 %v2940, %v2959
      %v2962 = vadd.f32 %v2941, %v2959
      %v2963 = vadd.f32 %v2942, %v2959
      %v2964 = vadd.f32 %v2943, %v2959
      %v2965 = vadd.f32 %v2944, %v2959
      %v2966 = vadd.f32 %v2945, %v2959
      %v2967 = vadd.f32 %v2946, %v2959
      %v2968 = vadd.f32 %v2947, %v2959
      %v2969 = vadd.f32 %v2948, %v2959
      %v2970 = vadd.f32 %v2949, %v2959
      %v2971 = vadd.f32 %v2950, %v2959
      %v2972 = vadd.f32 %v2951, %v2959
      %v2973 = vadd.f32 %v2952, %v2959
      %v2974 = vadd.f32 %v2953, %v2959
      %v2975 = vadd.f32 %v2954, %v2959
      %vm2976 = vcmask 64512
      %2977 = vst.msk [vmem:[#allocation3] sm:$0xff] %vm2976, %v2960
      %2978 = vst.msk [vmem:[#allocation3 + $0x8] sm:$0xff] %vm2976, %v2961
      %2979 = vst.msk [vmem:[#allocation3 + $0x10] sm:$0xff] %vm2976, %v2962
      %2980 = vst.msk [vmem:[#allocation3 + $0x18] sm:$0xff] %vm2976, %v2963
      %2981 = vst.msk [vmem:[#allocation3 + $0x20] sm:$0xff] %vm2976, %v2964
      %2982 = vst.msk [vmem:[#allocation3 + $0x28] sm:$0xff] %vm2976, %v2965
      %2983 = vst.msk [vmem:[#allocation3 + $0x30] sm:$0xff] %vm2976, %v2966
      %2984 = vst.msk [vmem:[#allocation3 + $0x38] sm:$0xff] %vm2976, %v2967
      %2985 = vst.msk [vmem:[#allocation3 + $0x40] sm:$0xff] %vm2976, %v2968
      %2986 = vst.msk [vmem:[#allocation3 + $0x48] sm:$0xff] %vm2976, %v2969
      %2987 = vst.msk [vmem:[#allocation3 + $0x50] sm:$0xff] %vm2976, %v2970
      %2988 = vst.msk [vmem:[#allocation3 + $0x58] sm:$0xff] %vm2976, %v2971
      %2989 = vst.msk [vmem:[#allocation3 + $0x60] sm:$0xff] %vm2976, %v2972
      %2990 = vst.msk [vmem:[#allocation3 + $0x68] sm:$0xff] %vm2976, %v2973
      %2991 = vst.msk [vmem:[#allocation3 + $0x70] sm:$0xff] %vm2976, %v2974
      %2992 = vst.msk [vmem:[#allocation3 + $0x78] sm:$0xff] %vm2976, %v2975
      %v2993 = vld [vmem:[#allocation3] ss:$2 sm:$0xff]
      %s2994 = scalar_lea.vmem [#allocation3], 16
      %v2995 = vld [vmem:[%s2994] ss:$2 sm:$0xff]
      %s2996 = scalar_lea.vmem [#allocation3], 32
      %v2997 = vld [vmem:[%s2996] ss:$2 sm:$0xff]
      %s2998 = scalar_lea.vmem [#allocation3], 48
      %v2999 = vld [vmem:[%s2998] ss:$2 sm:$0xff]
      %s3000 = scalar_lea.vmem [#allocation3], 64
      %v3001 = vld [vmem:[%s3000] ss:$2 sm:$0xff]
      %s3002 = scalar_lea.vmem [#allocation3], 80
      %v3003 = vld [vmem:[%s3002] ss:$2 sm:$0xff]
      %s3004 = scalar_lea.vmem [#allocation3], 96
      %v3005 = vld [vmem:[%s3004] ss:$2 sm:$0xff]
      %s3006 = scalar_lea.vmem [#allocation3], 112
      %v3007 = vld [vmem:[%s3006] ss:$2 sm:$0xff]
      %s3008 = scalar_lea.vmem [#allocation3], 1
      %v3009 = vld [vmem:[%s3008] ss:$2 sm:$0xff]
      %s3010 = scalar_lea.vmem [#allocation3], 17
      %v3011 = vld [vmem:[%s3010] ss:$2 sm:$0xff]
      %s3012 = scalar_lea.vmem [#allocation3], 33
      %v3013 = vld [vmem:[%s3012] ss:$2 sm:$0xff]
      %s3014 = scalar_lea.vmem [#allocation3], 49
      %v3015 = vld [vmem:[%s3014] ss:$2 sm:$0xff]
      %s3016 = scalar_lea.vmem [#allocation3], 65
      %v3017 = vld [vmem:[%s3016] ss:$2 sm:$0xff]
      %s3018 = scalar_lea.vmem [#allocation3], 81
      %v3019 = vld [vmem:[%s3018] ss:$2 sm:$0xff]
      %s3020 = scalar_lea.vmem [#allocation3], 97
      %v3021 = vld [vmem:[%s3020] ss:$2 sm:$0xff]
      %s3022 = scalar_lea.vmem [#allocation3], 113
      %v3023 = vld [vmem:[%s3022] ss:$2 sm:$0xff]
      %v3024 = vmax.f32 %v2993, %v3009
      %v3025 = vmax.f32 %v2995, %v3011
      %v3026 = vmax.f32 %v2997, %v3013
      %v3027 = vmax.f32 %v2999, %v3015
      %v3028 = vmax.f32 %v3001, %v3017
      %v3029 = vmax.f32 %v3003, %v3019
      %v3030 = vmax.f32 %v3005, %v3021
      %v3031 = vmax.f32 %v3007, %v3023
      %3032 = vst.msk [vmem:[#allocation3] sm:$0xff] %vm2976, 0.0
      %3033 = vst.msk [vmem:[#allocation3 + $0x48] sm:$0xff] %vm2976, 0.0
      %3034 = vst.msk [vmem:[#allocation3 + $0x8] sm:$0xff] %vm2976, %v3024
      %3035 = vst.msk [vmem:[#allocation3 + $0x10] sm:$0xff] %vm2976, %v3025
      %3036 = vst.msk [vmem:[#allocation3 + $0x18] sm:$0xff] %vm2976, %v3026
      %3037 = vst.msk [vmem:[#allocation3 + $0x20] sm:$0xff] %vm2976, %v3027
      %3038 = vst.msk [vmem:[#allocation3 + $0x28] sm:$0xff] %vm2976, %v3028
      %3039 = vst.msk [vmem:[#allocation3 + $0x30] sm:$0xff] %vm2976, %v3029
      %3040 = vst.msk [vmem:[#allocation3 + $0x38] sm:$0xff] %vm2976, %v3030
      %3041 = vst.msk [vmem:[#allocation3 + $0x40] sm:$0xff] %vm2976, %v3031
      %v3042 = vld [vmem:[#allocation3 + $0x5] sm:$0xff]
      %v3043 = vld [vmem:[#allocation3 + $0xd] sm:$0xff]
      %v3044 = vld [vmem:[#allocation3 + $0x15] sm:$0xff]
      %v3045 = vld [vmem:[#allocation3 + $0x1d] sm:$0xff]
      %v3046 = vld [vmem:[#allocation3 + $0x25] sm:$0xff]
      %v3047 = vld [vmem:[#allocation3 + $0x2d] sm:$0xff]
      %v3048 = vld [vmem:[#allocation3 + $0x35] sm:$0xff]
      %v3049 = vld [vmem:[#allocation3 + $0x3d] sm:$0xff]
      %v3050 = vld [vmem:[%s5] sm:$0xff]
      %v3051 = vld [vmem:[#allocation3 + $0x6] sm:$0xff]
      %v3052 = vld [vmem:[#allocation3 + $0xe] sm:$0xff]
      %v3053 = vld [vmem:[#allocation3 + $0x16] sm:$0xff]
      %v3054 = vld [vmem:[#allocation3 + $0x1e] sm:$0xff]
      %v3055 = vld [vmem:[#allocation3 + $0x26] sm:$0xff]
      %v3056 = vld [vmem:[#allocation3 + $0x2e] sm:$0xff]
      %v3057 = vld [vmem:[#allocation3 + $0x36] sm:$0xff]
      %v3058 = vld [vmem:[#allocation3 + $0x3e] sm:$0xff]
      %s3059 = scalar_lea.vmem %s5, 8
      %v3060 = vld [vmem:[%s3059] sm:$0xff]
      %v3062 = vsel %vm2976, %v3051, 0
      %v3065 = vsel %vm2976, %v3052, 0
      %v3068 = vsel %vm2976, %v3053, 0
      %v3071 = vsel %vm2976, %v3054, 0
      %v3074 = vsel %vm2976, %v3055, 0
      %v3077 = vsel %vm2976, %v3056, 0
      %v3080 = vsel %vm2976, %v3057, 0
      %v3083 = vsel %vm2976, %v3058, 0
      %3085 = vmatprep.subr.mxu0 0.0
      %3086 = vmatpush1.msra.mxu0 %v3060
      %3087 = vmatprep.subr.mxu0 0.0
      %3088 = vmatpush1.msra.mxu0 0.0
      %3089 = vmatprep.subr.mxu0 0.0
      %3090 = vmatpush1.msra.mxu0 0.0
      %3091 = vmatprep.subr.mxu0 0.0
      %3092 = vmatpush1.msra.mxu0 0.0
      %3093 = vmatprep.subr.mxu0 0.0
      %3094 = vmatpush1.msra.mxu0 0.0
      %3095 = vmatprep.subr.mxu0 0.0
      %3096 = vmatpush1.msra.mxu0 0.0
      %3097 = vmatprep.subr.mxu0 0.0
      %3098 = vmatpush1.msra.mxu0 0.0
      %3099 = vmatprep.subr.mxu0 0.0
      %3100 = vmatpush1.msra.mxu0 0.0
      %3101 = vmatprep.subr.mxu0 0.0
      %3102 = vmatpush1.msra.mxu0 0.0
      %3103 = vmatprep.subr.mxu0 0.0
      %3104 = vmatpush1.msra.mxu0 0.0
      %3105 = vmatprep.subr.mxu0 0.0
      %3106 = vmatpush1.msra.mxu0 0.0
      %3107 = vmatprep.subr.mxu0 0.0
      %3108 = vmatpush1.msra.mxu0 0.0
      %3109 = vmatprep.subr.mxu0 0.0
      %3110 = vmatpush1.msra.mxu0 0.0
      %3111 = vmatprep.subr.mxu0 0.0
      %3112 = vmatpush1.msra.mxu0 0.0
      %3113 = vmatprep.subr.mxu0 0.0
      %3114 = vmatpush1.msra.mxu0 0.0
      %3115 = vmatprep.subr.mxu0 0.0
      %3116 = vmatpush1.msra.mxu0 0.0
      %3117 = vmatprep.subr.mxu0 0.0
      %3118 = vmatpush1.msra.mxu0 0.0
      %3119 = vmatprep.subr.mxu0 0.0
      %3120 = vmatpush1.msra.mxu0 0.0
      %3121 = vmatprep.subr.mxu0 0.0
      %3122 = vmatpush1.msra.mxu0 0.0
      %3123 = vmatprep.subr.mxu0 0.0
      %3124 = vmatpush1.msra.mxu0 0.0
      %3125 = vmatprep.subr.mxu0 0.0
      %3126 = vmatpush1.msra.mxu0 0.0
      %3127 = vmatprep.subr.mxu0 0.0
      %3128 = vmatpush1.msra.mxu0 0.0
      %3129 = vmatprep.subr.mxu0 0.0
      %3130 = vmatpush1.msra.mxu0 0.0
      %3131 = vmatprep.subr.mxu0 0.0
      %3132 = vmatpush1.msra.mxu0 0.0
      %3133 = vmatprep.subr.mxu0 0.0
      %3134 = vmatpush1.msra.mxu0 0.0
      %3135 = vmatprep.subr.mxu0 0.0
      %3136 = vmatpush1.msra.mxu0 0.0
      %3137 = vmatprep.subr.mxu0 0.0
      %3138 = vmatpush1.msra.mxu0 0.0
      %3139 = vmatprep.subr.mxu0 0.0
      %3140 = vmatpush1.msra.mxu0 0.0
      %3141 = vmatprep.subr.mxu0 0.0
      %3142 = vmatpush1.msra.mxu0 0.0
      %3143 = vmatprep.subr.mxu0 0.0
      %3144 = vmatpush1.msra.mxu0 0.0
      %3145 = vmatprep.subr.mxu0 0.0
      %3146 = vmatpush1.msra.mxu0 0.0
      %3147 = vmatprep.subr.mxu0 0.0
      %3148 = vmatpush1.msra.mxu0 0.0
      %3149 = vmatprep.mubr.f32.mxu0 0.0
      %3150 = vmatmul.mubr.f32.gmra.mrb[0].mxu0 %v3062
      %v3151 = vpop.f32.mrb[0].mxu0
      %v3152 = vadd.f32 0.0, %v3151
      %v3153 = vpop.f32.mrb[0].mxu0
      %3154 = vmatprep.mubr.f32.mxu0 0.0
      %3155 = vmatmul.mubr.f32.gmra.mrb[0].mxu0 %v3065
      %v3156 = vpop.f32.mrb[0].mxu0
      %v3157 = vadd.f32 0.0, %v3156
      %v3158 = vpop.f32.mrb[0].mxu0
      %3159 = vmatprep.mubr.f32.mxu0 0.0
      %3160 = vmatmul.mubr.f32.gmra.mrb[0].mxu0 %v3068
      %v3161 = vpop.f32.mrb[0].mxu0
      %v3162 = vadd.f32 0.0, %v3161
      %v3163 = vpop.f32.mrb[0].mxu0
      %3164 = vmatprep.mubr.f32.mxu0 0.0
      %3165 = vmatmul.mubr.f32.gmra.mrb[0].mxu0 %v3071
      %v3166 = vpop.f32.mrb[0].mxu0
      %v3167 = vadd.f32 0.0, %v3166
      %v3168 = vpop.f32.mrb[0].mxu0
      %3169 = vmatprep.mubr.f32.mxu0 0.0
      %3170 = vmatmul.mubr.f32.gmra.mrb[0].mxu0 %v3074
      %v3171 = vpop.f32.mrb[0].mxu0
      %v3172 = vadd.f32 0.0, %v3171
      %v3173 = vpop.f32.mrb[0].mxu0
      %3174 = vmatprep.mubr.f32.mxu0 0.0
      %3175 = vmatmul.mubr.f32.gmra.mrb[0].mxu0 %v3077
      %v3176 = vpop.f32.mrb[0].mxu0
      %v3177 = vadd.f32 0.0, %v3176
      %v3178 = vpop.f32.mrb[0].mxu0
      %3179 = vmatprep.mubr.f32.mxu0 0.0
      %3180 = vmatmul.mubr.f32.gmra.mrb[0].mxu0 %v3080
      %v3181 = vpop.f32.mrb[0].mxu0
      %v3182 = vadd.f32 0.0, %v3181
      %v3183 = vpop.f32.mrb[0].mxu0
      %3184 = vmatprep.mubr.f32.mxu0 0.0
      %3185 = vmatmul.mubr.f32.gmra.mrb[0].mxu0 %v3083
      %v3186 = vpop.f32.mrb[0].mxu0
      %v3187 = vadd.f32 0.0, %v3186
      %v3188 = vpop.f32.mrb[0].mxu0
      %3189 = vdwg.mxu0
      %v3191 = vsel %vm2976, %v3042, 0
      %v3194 = vsel %vm2976, %v3043, 0
      %v3197 = vsel %vm2976, %v3044, 0
      %v3200 = vsel %vm2976, %v3045, 0
      %v3203 = vsel %vm2976, %v3046, 0
      %v3206 = vsel %vm2976, %v3047, 0
      %v3209 = vsel %vm2976, %v3048, 0
      %v3212 = vsel %vm2976, %v3049, 0
      %3214 = vmatprep.subr.mxu0 0.0
      %3215 = vmatpush1.msra.mxu0 %v3050
      %3216 = vmatprep.subr.mxu0 0.0
      %3217 = vmatpush1.msra.mxu0 0.0
      %3218 = vmatprep.subr.mxu0 0.0
      %3219 = vmatpush1.msra.mxu0 0.0
      %3220 = vmatprep.subr.mxu0 0.0
      %3221 = vmatpush1.msra.mxu0 0.0
      %3222 = vmatprep.subr.mxu0 0.0
      %3223 = vmatpush1.msra.mxu0 0.0
      %3224 = vmatprep.subr.mxu0 0.0
      %3225 = vmatpush1.msra.mxu0 0.0
      %3226 = vmatprep.subr.mxu0 0.0
      %3227 = vmatpush1.msra.mxu0 0.0
      %3228 = vmatprep.subr.mxu0 0.0
      %3229 = vmatpush1.msra.mxu0 0.0
      %3230 = vmatprep.subr.mxu0 0.0
      %3231 = vmatpush1.msra.mxu0 0.0
      %3232 = vmatprep.subr.mxu0 0.0
      %3233 = vmatpush1.msra.mxu0 0.0
      %3234 = vmatprep.subr.mxu0 0.0
      %3235 = vmatpush1.msra.mxu0 0.0
      %3236 = vmatprep.subr.mxu0 0.0
      %3237 = vmatpush1.msra.mxu0 0.0
      %3238 = vmatprep.subr.mxu0 0.0
      %3239 = vmatpush1.msra.mxu0 0.0
      %3240 = vmatprep.subr.mxu0 0.0
      %3241 = vmatpush1.msra.mxu0 0.0
      %3242 = vmatprep.subr.mxu0 0.0
      %3243 = vmatpush1.msra.mxu0 0.0
      %3244 = vmatprep.subr.mxu0 0.0
      %3245 = vmatpush1.msra.mxu0 0.0
      %3246 = vmatprep.subr.mxu0 0.0
      %3247 = vmatpush1.msra.mxu0 0.0
      %3248 = vmatprep.subr.mxu0 0.0
      %3249 = vmatpush1.msra.mxu0 0.0
      %3250 = vmatprep.subr.mxu0 0.0
      %3251 = vmatpush1.msra.mxu0 0.0
      %3252 = vmatprep.subr.mxu0 0.0
      %3253 = vmatpush1.msra.mxu0 0.0
      %3254 = vmatprep.subr.mxu0 0.0
      %3255 = vmatpush1.msra.mxu0 0.0
      %3256 = vmatprep.subr.mxu0 0.0
      %3257 = vmatpush1.msra.mxu0 0.0
      %3258 = vmatprep.subr.mxu0 0.0
      %3259 = vmatpush1.msra.mxu0 0.0
      %3260 = vmatprep.subr.mxu0 0.0
      %3261 = vmatpush1.msra.mxu0 0.0
      %3262 = vmatprep.subr.mxu0 0.0
      %3263 = vmatpush1.msra.mxu0 0.0
      %3264 = vmatprep.subr.mxu0 0.0
      %3265 = vmatpush1.msra.mxu0 0.0
      %3266 = vmatprep.subr.mxu0 0.0
      %3267 = vmatpush1.msra.mxu0 0.0
      %3268 = vmatprep.subr.mxu0 0.0
      %3269 = vmatpush1.msra.mxu0 0.0
      %3270 = vmatprep.subr.mxu0 0.0
      %3271 = vmatpush1.msra.mxu0 0.0
      %3272 = vmatprep.subr.mxu0 0.0
      %3273 = vmatpush1.msra.mxu0 0.0
      %3274 = vmatprep.subr.mxu0 0.0
      %3275 = vmatpush1.msra.mxu0 0.0
      %3276 = vmatprep.subr.mxu0 0.0
      %3277 = vmatpush1.msra.mxu0 0.0
      %3278 = vmatprep.mubr.f32.mxu0 0.0
      %3279 = vmatmul.mubr.f32.gmra.mrb[0].mxu0 %v3191
      %v3280 = vpop.f32.mrb[0].mxu0
      %v3281 = vadd.f32 %v3152, %v3280
      %v3282 = vpop.f32.mrb[0].mxu0
      %3283 = vmatprep.mubr.f32.mxu0 0.0
      %3284 = vmatmul.mubr.f32.gmra.mrb[0].mxu0 %v3194
      %v3285 = vpop.f32.mrb[0].mxu0
      %v3286 = vadd.f32 %v3157, %v3285
      %v3287 = vpop.f32.mrb[0].mxu0
      %3288 = vmatprep.mubr.f32.mxu0 0.0
      %3289 = vmatmul.mubr.f32.gmra.mrb[0].mxu0 %v3197
      %v3290 = vpop.f32.mrb[0].mxu0
      %v3291 = vadd.f32 %v3162, %v3290
      %v3292 = vpop.f32.mrb[0].mxu0
      %3293 = vmatprep.mubr.f32.mxu0 0.0
      %3294 = vmatmul.mubr.f32.gmra.mrb[0].mxu0 %v3200
      %v3295 = vpop.f32.mrb[0].mxu0
      %v3296 = vadd.f32 %v3167, %v3295
      %v3297 = vpop.f32.mrb[0].mxu0
      %3298 = vmatprep.mubr.f32.mxu0 0.0
      %3299 = vmatmul.mubr.f32.gmra.mrb[0].mxu0 %v3203
      %v3300 = vpop.f32.mrb[0].mxu0
      %v3301 = vadd.f32 %v3172, %v3300
      %v3302 = vpop.f32.mrb[0].mxu0
      %3303 = vmatprep.mubr.f32.mxu0 0.0
      %3304 = vmatmul.mubr.f32.gmra.mrb[0].mxu0 %v3206
      %v3305 = vpop.f32.mrb[0].mxu0
      %v3306 = vadd.f32 %v3177, %v3305
      %v3307 = vpop.f32.mrb[0].mxu0
      %3308 = vmatprep.mubr.f32.mxu0 0.0
      %3309 = vmatmul.mubr.f32.gmra.mrb[0].mxu0 %v3209
      %v3310 = vpop.f32.mrb[0].mxu0
      %v3311 = vadd.f32 %v3182, %v3310
      %v3312 = vpop.f32.mrb[0].mxu0
      %3313 = vmatprep.mubr.f32.mxu0 0.0
      %3314 = vmatmul.mubr.f32.gmra.mrb[0].mxu0 %v3212
      %v3315 = vpop.f32.mrb[0].mxu0
      %v3316 = vadd.f32 %v3187, %v3315
      %v3317 = vpop.f32.mrb[0].mxu0
      %3318 = vdwg.mxu0
      %v3319 = vld [vmem:[#allocation3 + $0x7] sm:$0xff]
      %v3320 = vld [vmem:[#allocation3 + $0xf] sm:$0xff]
      %v3321 = vld [vmem:[#allocation3 + $0x17] sm:$0xff]
      %v3322 = vld [vmem:[#allocation3 + $0x1f] sm:$0xff]
      %v3323 = vld [vmem:[#allocation3 + $0x27] sm:$0xff]
      %v3324 = vld [vmem:[#allocation3 + $0x2f] sm:$0xff]
      %v3325 = vld [vmem:[#allocation3 + $0x37] sm:$0xff]
      %v3326 = vld [vmem:[#allocation3 + $0x3f] sm:$0xff]
      %s3327 = scalar_lea.vmem %s5, 16
      %v3328 = vld [vmem:[%s3327] sm:$0xff]
      %v3330 = vsel %vm2976, %v3319, 0
      %v3333 = vsel %vm2976, %v3320, 0
      %v3336 = vsel %vm2976, %v3321, 0
      %v3339 = vsel %vm2976, %v3322, 0
      %v3342 = vsel %vm2976, %v3323, 0
      %v3345 = vsel %vm2976, %v3324, 0
      %v3348 = vsel %vm2976, %v3325, 0
      %v3351 = vsel %vm2976, %v3326, 0
      %3353 = vmatprep.subr.mxu0 0.0
      %3354 = vmatpush1.msra.mxu0 %v3328
      %3355 = vmatprep.subr.mxu0 0.0
      %3356 = vmatpush1.msra.mxu0 0.0
      %3357 = vmatprep.subr.mxu0 0.0
      %3358 = vmatpush1.msra.mxu0 0.0
      %3359 = vmatprep.subr.mxu0 0.0
      %3360 = vmatpush1.msra.mxu0 0.0
      %3361 = vmatprep.subr.mxu0 0.0
      %3362 = vmatpush1.msra.mxu0 0.0
      %3363 = vmatprep.subr.mxu0 0.0
      %3364 = vmatpush1.msra.mxu0 0.0
      %3365 = vmatprep.subr.mxu0 0.0
      %3366 = vmatpush1.msra.mxu0 0.0
      %3367 = vmatprep.subr.mxu0 0.0
      %3368 = vmatpush1.msra.mxu0 0.0
      %3369 = vmatprep.subr.mxu0 0.0
      %3370 = vmatpush1.msra.mxu0 0.0
      %3371 = vmatprep.subr.mxu0 0.0
      %3372 = vmatpush1.msra.mxu0 0.0
      %3373 = vmatprep.subr.mxu0 0.0
      %3374 = vmatpush1.msra.mxu0 0.0
      %3375 = vmatprep.subr.mxu0 0.0
      %3376 = vmatpush1.msra.mxu0 0.0
      %3377 = vmatprep.subr.mxu0 0.0
      %3378 = vmatpush1.msra.mxu0 0.0
      %3379 = vmatprep.subr.mxu0 0.0
      %3380 = vmatpush1.msra.mxu0 0.0
      %3381 = vmatprep.subr.mxu0 0.0
      %3382 = vmatpush1.msra.mxu0 0.0
      %3383 = vmatprep.subr.mxu0 0.0
      %3384 = vmatpush1.msra.mxu0 0.0
      %3385 = vmatprep.subr.mxu0 0.0
      %3386 = vmatpush1.msra.mxu0 0.0
      %3387 = vmatprep.subr.mxu0 0.0
      %3388 = vmatpush1.msra.mxu0 0.0
      %3389 = vmatprep.subr.mxu0 0.0
      %3390 = vmatpush1.msra.mxu0 0.0
      %3391 = vmatprep.subr.mxu0 0.0
      %3392 = vmatpush1.msra.mxu0 0.0
      %3393 = vmatprep.subr.mxu0 0.0
      %3394 = vmatpush1.msra.mxu0 0.0
      %3395 = vmatprep.subr.mxu0 0.0
      %3396 = vmatpush1.msra.mxu0 0.0
      %3397 = vmatprep.subr.mxu0 0.0
      %3398 = vmatpush1.msra.mxu0 0.0
      %3399 = vmatprep.subr.mxu0 0.0
      %3400 = vmatpush1.msra.mxu0 0.0
      %3401 = vmatprep.subr.mxu0 0.0
      %3402 = vmatpush1.msra.mxu0 0.0
      %3403 = vmatprep.subr.mxu0 0.0
      %3404 = vmatpush1.msra.mxu0 0.0
      %3405 = vmatprep.subr.mxu0 0.0
      %3406 = vmatpush1.msra.mxu0 0.0
      %3407 = vmatprep.subr.mxu0 0.0
      %3408 = vmatpush1.msra.mxu0 0.0
      %3409 = vmatprep.subr.mxu0 0.0
      %3410 = vmatpush1.msra.mxu0 0.0
      %3411 = vmatprep.subr.mxu0 0.0
      %3412 = vmatpush1.msra.mxu0 0.0
      %3413 = vmatprep.subr.mxu0 0.0
      %3414 = vmatpush1.msra.mxu0 0.0
      %3415 = vmatprep.subr.mxu0 0.0
      %3416 = vmatpush1.msra.mxu0 0.0
      %3417 = vmatprep.mubr.f32.mxu0 0.0
      %3418 = vmatmul.mubr.f32.gmra.mrb[0].mxu0 %v3330
      %v3419 = vpop.f32.mrb[0].mxu0
      %v3420 = vadd.f32 0.0, %v3419
      %v3421 = vpop.f32.mrb[0].mxu0
      %3422 = vmatprep.mubr.f32.mxu0 0.0
      %3423 = vmatmul.mubr.f32.gmra.mrb[0].mxu0 %v3333
      %v3424 = vpop.f32.mrb[0].mxu0
      %v3425 = vadd.f32 0.0, %v3424
      %v3426 = vpop.f32.mrb[0].mxu0
      %3427 = vmatprep.mubr.f32.mxu0 0.0
      %3428 = vmatmul.mubr.f32.gmra.mrb[0].mxu0 %v3336
      %v3429 = vpop.f32.mrb[0].mxu0
      %v3430 = vadd.f32 0.0, %v3429
      %v3431 = vpop.f32.mrb[0].mxu0
      %3432 = vmatprep.mubr.f32.mxu0 0.0
      %3433 = vmatmul.mubr.f32.gmra.mrb[0].mxu0 %v3339
      %v3434 = vpop.f32.mrb[0].mxu0
      %v3435 = vadd.f32 0.0, %v3434
      %v3436 = vpop.f32.mrb[0].mxu0
      %3437 = vmatprep.mubr.f32.mxu0 0.0
      %3438 = vmatmul.mubr.f32.gmra.mrb[0].mxu0 %v3342
      %v3439 = vpop.f32.mrb[0].mxu0
      %v3440 = vadd.f32 0.0, %v3439
      %v3441 = vpop.f32.mrb[0].mxu0
      %3442 = vmatprep.mubr.f32.mxu0 0.0
      %3443 = vmatmul.mubr.f32.gmra.mrb[0].mxu0 %v3345
      %v3444 = vpop.f32.mrb[0].mxu0
      %v3445 = vadd.f32 0.0, %v3444
      %v3446 = vpop.f32.mrb[0].mxu0
      %3447 = vmatprep.mubr.f32.mxu0 0.0
      %3448 = vmatmul.mubr.f32.gmra.mrb[0].mxu0 %v3348
      %v3449 = vpop.f32.mrb[0].mxu0
      %v3450 = vadd.f32 0.0, %v3449
      %v3451 = vpop.f32.mrb[0].mxu0
      %3452 = vmatprep.mubr.f32.mxu0 0.0
      %3453 = vmatmul.mubr.f32.gmra.mrb[0].mxu0 %v3351
      %v3454 = vpop.f32.mrb[0].mxu0
      %v3455 = vadd.f32 0.0, %v3454
      %v3456 = vpop.f32.mrb[0].mxu0
      %3457 = vdwg.mxu0
      %v3458 = vadd.f32 %v3281, %v3420
      %v3459 = vadd.f32 %v3286, %v3425
      %v3460 = vadd.f32 %v3291, %v3430
      %v3461 = vadd.f32 %v3296, %v3435
      %v3462 = vadd.f32 %v3301, %v3440
      %v3463 = vadd.f32 %v3306, %v3445
      %v3464 = vadd.f32 %v3311, %v3450
      %v3465 = vadd.f32 %v3316, %v3455
      %v3466 = vld [vmem:[#allocation3 + $0x8] sm:$0xff]
      %v3467 = vld [vmem:[#allocation3 + $0x10] sm:$0xff]
      %v3468 = vld [vmem:[#allocation3 + $0x18] sm:$0xff]
      %v3469 = vld [vmem:[#allocation3 + $0x20] sm:$0xff]
      %v3470 = vld [vmem:[#allocation3 + $0x28] sm:$0xff]
      %v3471 = vld [vmem:[#allocation3 + $0x30] sm:$0xff]
      %v3472 = vld [vmem:[#allocation3 + $0x38] sm:$0xff]
      %v3473 = vld [vmem:[#allocation3 + $0x40] sm:$0xff]
      %s3474 = scalar_lea.vmem %s5, 24
      %v3475 = vld [vmem:[%s3474] sm:$0xff]
      %v3477 = vsel %vm2976, %v3466, 0
      %v3480 = vsel %vm2976, %v3467, 0
      %v3483 = vsel %vm2976, %v3468, 0
      %v3486 = vsel %vm2976, %v3469, 0
      %v3489 = vsel %vm2976, %v3470, 0
      %v3492 = vsel %vm2976, %v3471, 0
      %v3495 = vsel %vm2976, %v3472, 0
      %v3498 = vsel %vm2976, %v3473, 0
      %3500 = vmatprep.subr.mxu0 0.0
      %3501 = vmatpush1.msra.mxu0 %v3475
      %3502 = vmatprep.subr.mxu0 0.0
      %3503 = vmatpush1.msra.mxu0 0.0
      %3504 = vmatprep.subr.mxu0 0.0
      %3505 = vmatpush1.msra.mxu0 0.0
      %3506 = vmatprep.subr.mxu0 0.0
      %3507 = vmatpush1.msra.mxu0 0.0
      %3508 = vmatprep.subr.mxu0 0.0
      %3509 = vmatpush1.msra.mxu0 0.0
      %3510 = vmatprep.subr.mxu0 0.0
      %3511 = vmatpush1.msra.mxu0 0.0
      %3512 = vmatprep.subr.mxu0 0.0
      %3513 = vmatpush1.msra.mxu0 0.0
      %3514 = vmatprep.subr.mxu0 0.0
      %3515 = vmatpush1.msra.mxu0 0.0
      %3516 = vmatprep.subr.mxu0 0.0
      %3517 = vmatpush1.msra.mxu0 0.0
      %3518 = vmatprep.subr.mxu0 0.0
      %3519 = vmatpush1.msra.mxu0 0.0
      %3520 = vmatprep.subr.mxu0 0.0
      %3521 = vmatpush1.msra.mxu0 0.0
      %3522 = vmatprep.subr.mxu0 0.0
      %3523 = vmatpush1.msra.mxu0 0.0
      %3524 = vmatprep.subr.mxu0 0.0
      %3525 = vmatpush1.msra.mxu0 0.0
      %3526 = vmatprep.subr.mxu0 0.0
      %3527 = vmatpush1.msra.mxu0 0.0
      %3528 = vmatprep.subr.mxu0 0.0
      %3529 = vmatpush1.msra.mxu0 0.0
      %3530 = vmatprep.subr.mxu0 0.0
      %3531 = vmatpush1.msra.mxu0 0.0
      %3532 = vmatprep.subr.mxu0 0.0
      %3533 = vmatpush1.msra.mxu0 0.0
      %3534 = vmatprep.subr.mxu0 0.0
      %3535 = vmatpush1.msra.mxu0 0.0
      %3536 = vmatprep.subr.mxu0 0.0
      %3537 = vmatpush1.msra.mxu0 0.0
      %3538 = vmatprep.subr.mxu0 0.0
      %3539 = vmatpush1.msra.mxu0 0.0
      %3540 = vmatprep.subr.mxu0 0.0
      %3541 = vmatpush1.msra.mxu0 0.0
      %3542 = vmatprep.subr.mxu0 0.0
      %3543 = vmatpush1.msra.mxu0 0.0
      %3544 = vmatprep.subr.mxu0 0.0
      %3545 = vmatpush1.msra.mxu0 0.0
      %3546 = vmatprep.subr.mxu0 0.0
      %3547 = vmatpush1.msra.mxu0 0.0
      %3548 = vmatprep.subr.mxu0 0.0
      %3549 = vmatpush1.msra.mxu0 0.0
      %3550 = vmatprep.subr.mxu0 0.0
      %3551 = vmatpush1.msra.mxu0 0.0
      %3552 = vmatprep.subr.mxu0 0.0
      %3553 = vmatpush1.msra.mxu0 0.0
      %3554 = vmatprep.subr.mxu0 0.0
      %3555 = vmatpush1.msra.mxu0 0.0
      %3556 = vmatprep.subr.mxu0 0.0
      %3557 = vmatpush1.msra.mxu0 0.0
      %3558 = vmatprep.subr.mxu0 0.0
      %3559 = vmatpush1.msra.mxu0 0.0
      %3560 = vmatprep.subr.mxu0 0.0
      %3561 = vmatpush1.msra.mxu0 0.0
      %3562 = vmatprep.subr.mxu0 0.0
      %3563 = vmatpush1.msra.mxu0 0.0
      %3564 = vmatprep.mubr.f32.mxu0 0.0
      %3565 = vmatmul.mubr.f32.gmra.mrb[0].mxu0 %v3477
      %v3566 = vpop.f32.mrb[0].mxu0
      %v3567 = vadd.f32 0.0, %v3566
      %v3568 = vpop.f32.mrb[0].mxu0
      %3569 = vmatprep.mubr.f32.mxu0 0.0
      %3570 = vmatmul.mubr.f32.gmra.mrb[0].mxu0 %v3480
      %v3571 = vpop.f32.mrb[0].mxu0
      %v3572 = vadd.f32 0.0, %v3571
      %v3573 = vpop.f32.mrb[0].mxu0
      %3574 = vmatprep.mubr.f32.mxu0 0.0
      %3575 = vmatmul.mubr.f32.gmra.mrb[0].mxu0 %v3483
      %v3576 = vpop.f32.mrb[0].mxu0
      %v3577 = vadd.f32 0.0, %v3576
      %v3578 = vpop.f32.mrb[0].mxu0
      %3579 = vmatprep.mubr.f32.mxu0 0.0
      %3580 = vmatmul.mubr.f32.gmra.mrb[0].mxu0 %v3486
      %v3581 = vpop.f32.mrb[0].mxu0
      %v3582 = vadd.f32 0.0, %v3581
      %v3583 = vpop.f32.mrb[0].mxu0
      %3584 = vmatprep.mubr.f32.mxu0 0.0
      %3585 = vmatmul.mubr.f32.gmra.mrb[0].mxu0 %v3489
      %v3586 = vpop.f32.mrb[0].mxu0
      %v3587 = vadd.f32 0.0, %v3586
      %v3588 = vpop.f32.mrb[0].mxu0
      %3589 = vmatprep.mubr.f32.mxu0 0.0
      %3590 = vmatmul.mubr.f32.gmra.mrb[0].mxu0 %v3492
      %v3591 = vpop.f32.mrb[0].mxu0
      %v3592 = vadd.f32 0.0, %v3591
      %v3593 = vpop.f32.mrb[0].mxu0
      %3594 = vmatprep.mubr.f32.mxu0 0.0
      %3595 = vmatmul.mubr.f32.gmra.mrb[0].mxu0 %v3495
      %v3596 = vpop.f32.mrb[0].mxu0
      %v3597 = vadd.f32 0.0, %v3596
      %v3598 = vpop.f32.mrb[0].mxu0
      %3599 = vmatprep.mubr.f32.mxu0 0.0
      %3600 = vmatmul.mubr.f32.gmra.mrb[0].mxu0 %v3498
      %v3601 = vpop.f32.mrb[0].mxu0
      %v3602 = vadd.f32 0.0, %v3601
      %v3603 = vpop.f32.mrb[0].mxu0
      %3604 = vdwg.mxu0
      %v3605 = vadd.f32 %v3458, %v3567
      %v3606 = vadd.f32 %v3459, %v3572
      %v3607 = vadd.f32 %v3460, %v3577
      %v3608 = vadd.f32 %v3461, %v3582
      %v3609 = vadd.f32 %v3462, %v3587
      %v3610 = vadd.f32 %v3463, %v3592
      %v3611 = vadd.f32 %v3464, %v3597
      %v3612 = vadd.f32 %v3465, %v3602
      %v3613 = vld [vmem:[#allocation3 + $0x9] sm:$0xff]
      %v3614 = vld [vmem:[#allocation3 + $0x11] sm:$0xff]
      %v3615 = vld [vmem:[#allocation3 + $0x19] sm:$0xff]
      %v3616 = vld [vmem:[#allocation3 + $0x21] sm:$0xff]
      %v3617 = vld [vmem:[#allocation3 + $0x29] sm:$0xff]
      %v3618 = vld [vmem:[#allocation3 + $0x31] sm:$0xff]
      %v3619 = vld [vmem:[#allocation3 + $0x39] sm:$0xff]
      %v3620 = vld [vmem:[#allocation3 + $0x41] sm:$0xff]
      %s3621 = scalar_lea.vmem %s5, 32
      %v3622 = vld [vmem:[%s3621] sm:$0xff]
      %v3624 = vsel %vm2976, %v3613, 0
      %v3627 = vsel %vm2976, %v3614, 0
      %v3630 = vsel %vm2976, %v3615, 0
      %v3633 = vsel %vm2976, %v3616, 0
      %v3636 = vsel %vm2976, %v3617, 0
      %v3639 = vsel %vm2976, %v3618, 0
      %v3642 = vsel %vm2976, %v3619, 0
      %v3645 = vsel %vm2976, %v3620, 0
      %3647 = vmatprep.subr.mxu0 0.0
      %3648 = vmatpush1.msra.mxu0 %v3622
      %3649 = vmatprep.subr.mxu0 0.0
      %3650 = vmatpush1.msra.mxu0 0.0
      %3651 = vmatprep.subr.mxu0 0.0
      %3652 = vmatpush1.msra.mxu0 0.0
      %3653 = vmatprep.subr.mxu0 0.0
      %3654 = vmatpush1.msra.mxu0 0.0
      %3655 = vmatprep.subr.mxu0 0.0
      %3656 = vmatpush1.msra.mxu0 0.0
      %3657 = vmatprep.subr.mxu0 0.0
      %3658 = vmatpush1.msra.mxu0 0.0
      %3659 = vmatprep.subr.mxu0 0.0
      %3660 = vmatpush1.msra.mxu0 0.0
      %3661 = vmatprep.subr.mxu0 0.0
      %3662 = vmatpush1.msra.mxu0 0.0
      %3663 = vmatprep.subr.mxu0 0.0
      %3664 = vmatpush1.msra.mxu0 0.0
      %3665 = vmatprep.subr.mxu0 0.0
      %3666 = vmatpush1.msra.mxu0 0.0
      %3667 = vmatprep.subr.mxu0 0.0
      %3668 = vmatpush1.msra.mxu0 0.0
      %3669 = vmatprep.subr.mxu0 0.0
      %3670 = vmatpush1.msra.mxu0 0.0
      %3671 = vmatprep.subr.mxu0 0.0
      %3672 = vmatpush1.msra.mxu0 0.0
      %3673 = vmatprep.subr.mxu0 0.0
      %3674 = vmatpush1.msra.mxu0 0.0
      %3675 = vmatprep.subr.mxu0 0.0
      %3676 = vmatpush1.msra.mxu0 0.0
      %3677 = vmatprep.subr.mxu0 0.0
      %3678 = vmatpush1.msra.mxu0 0.0
      %3679 = vmatprep.subr.mxu0 0.0
      %3680 = vmatpush1.msra.mxu0 0.0
      %3681 = vmatprep.subr.mxu0 0.0
      %3682 = vmatpush1.msra.mxu0 0.0
      %3683 = vmatprep.subr.mxu0 0.0
      %3684 = vmatpush1.msra.mxu0 0.0
      %3685 = vmatprep.subr.mxu0 0.0
      %3686 = vmatpush1.msra.mxu0 0.0
      %3687 = vmatprep.subr.mxu0 0.0
      %3688 = vmatpush1.msra.mxu0 0.0
      %3689 = vmatprep.subr.mxu0 0.0
      %3690 = vmatpush1.msra.mxu0 0.0
      %3691 = vmatprep.subr.mxu0 0.0
      %3692 = vmatpush1.msra.mxu0 0.0
      %3693 = vmatprep.subr.mxu0 0.0
      %3694 = vmatpush1.msra.mxu0 0.0
      %3695 = vmatprep.subr.mxu0 0.0
      %3696 = vmatpush1.msra.mxu0 0.0
      %3697 = vmatprep.subr.mxu0 0.0
      %3698 = vmatpush1.msra.mxu0 0.0
      %3699 = vmatprep.subr.mxu0 0.0
      %3700 = vmatpush1.msra.mxu0 0.0
      %3701 = vmatprep.subr.mxu0 0.0
      %3702 = vmatpush1.msra.mxu0 0.0
      %3703 = vmatprep.subr.mxu0 0.0
      %3704 = vmatpush1.msra.mxu0 0.0
      %3705 = vmatprep.subr.mxu0 0.0
      %3706 = vmatpush1.msra.mxu0 0.0
      %3707 = vmatprep.subr.mxu0 0.0
      %3708 = vmatpush1.msra.mxu0 0.0
      %3709 = vmatprep.subr.mxu0 0.0
      %3710 = vmatpush1.msra.mxu0 0.0
      %3711 = vmatprep.mubr.f32.mxu0 0.0
      %3712 = vmatmul.mubr.f32.gmra.mrb[0].mxu0 %v3624
      %v3713 = vpop.f32.mrb[0].mxu0
      %v3714 = vadd.f32 0.0, %v3713
      %v3715 = vpop.f32.mrb[0].mxu0
      %3716 = vmatprep.mubr.f32.mxu0 0.0
      %3717 = vmatmul.mubr.f32.gmra.mrb[0].mxu0 %v3627
      %v3718 = vpop.f32.mrb[0].mxu0
      %v3719 = vadd.f32 0.0, %v3718
      %v3720 = vpop.f32.mrb[0].mxu0
      %3721 = vmatprep.mubr.f32.mxu0 0.0
      %3722 = vmatmul.mubr.f32.gmra.mrb[0].mxu0 %v3630
      %v3723 = vpop.f32.mrb[0].mxu0
      %v3724 = vadd.f32 0.0, %v3723
      %v3725 = vpop.f32.mrb[0].mxu0
      %3726 = vmatprep.mubr.f32.mxu0 0.0
      %3727 = vmatmul.mubr.f32.gmra.mrb[0].mxu0 %v3633
      %v3728 = vpop.f32.mrb[0].mxu0
      %v3729 = vadd.f32 0.0, %v3728
      %v3730 = vpop.f32.mrb[0].mxu0
      %3731 = vmatprep.mubr.f32.mxu0 0.0
      %3732 = vmatmul.mubr.f32.gmra.mrb[0].mxu0 %v3636
      %v3733 = vpop.f32.mrb[0].mxu0
      %v3734 = vadd.f32 0.0, %v3733
      %v3735 = vpop.f32.mrb[0].mxu0
      %3736 = vmatprep.mubr.f32.mxu0 0.0
      %3737 = vmatmul.mubr.f32.gmra.mrb[0].mxu0 %v3639
      %v3738 = vpop.f32.mrb[0].mxu0
      %v3739 = vadd.f32 0.0, %v3738
      %v3740 = vpop.f32.mrb[0].mxu0
      %3741 = vmatprep.mubr.f32.mxu0 0.0
      %3742 = vmatmul.mubr.f32.gmra.mrb[0].mxu0 %v3642
      %v3743 = vpop.f32.mrb[0].mxu0
      %v3744 = vadd.f32 0.0, %v3743
      %v3745 = vpop.f32.mrb[0].mxu0
      %3746 = vmatprep.mubr.f32.mxu0 0.0
      %3747 = vmatmul.mubr.f32.gmra.mrb[0].mxu0 %v3645
      %v3748 = vpop.f32.mrb[0].mxu0
      %v3749 = vadd.f32 0.0, %v3748
      %v3750 = vpop.f32.mrb[0].mxu0
      %3751 = vdwg.mxu0
      %v3752 = vadd.f32 %v3605, %v3714
      %v3753 = vadd.f32 %v3606, %v3719
      %v3754 = vadd.f32 %v3607, %v3724
      %v3755 = vadd.f32 %v3608, %v3729
      %v3756 = vadd.f32 %v3609, %v3734
      %v3757 = vadd.f32 %v3610, %v3739
      %v3758 = vadd.f32 %v3611, %v3744
      %v3759 = vadd.f32 %v3612, %v3749
      %v3760 = vld [vmem:[#allocation3 + $0xa] sm:$0xff]
      %v3761 = vld [vmem:[#allocation3 + $0x12] sm:$0xff]
      %v3762 = vld [vmem:[#allocation3 + $0x1a] sm:$0xff]
      %v3763 = vld [vmem:[#allocation3 + $0x22] sm:$0xff]
      %v3764 = vld [vmem:[#allocation3 + $0x2a] sm:$0xff]
      %v3765 = vld [vmem:[#allocation3 + $0x32] sm:$0xff]
      %v3766 = vld [vmem:[#allocation3 + $0x3a] sm:$0xff]
      %v3767 = vld [vmem:[#allocation3 + $0x42] sm:$0xff]
      %s3768 = scalar_lea.vmem %s5, 40
      %v3769 = vld [vmem:[%s3768] sm:$0xff]
      %v3771 = vsel %vm2976, %v3760, 0
      %v3774 = vsel %vm2976, %v3761, 0
      %v3777 = vsel %vm2976, %v3762, 0
      %v3780 = vsel %vm2976, %v3763, 0
      %v3783 = vsel %vm2976, %v3764, 0
      %v3786 = vsel %vm2976, %v3765, 0
      %v3789 = vsel %vm2976, %v3766, 0
      %v3792 = vsel %vm2976, %v3767, 0
      %3794 = vmatprep.subr.mxu0 0.0
      %3795 = vmatpush1.msra.mxu0 %v3769
      %3796 = vmatprep.subr.mxu0 0.0
      %3797 = vmatpush1.msra.mxu0 0.0
      %3798 = vmatprep.subr.mxu0 0.0
      %3799 = vmatpush1.msra.mxu0 0.0
      %3800 = vmatprep.subr.mxu0 0.0
      %3801 = vmatpush1.msra.mxu0 0.0
      %3802 = vmatprep.subr.mxu0 0.0
      %3803 = vmatpush1.msra.mxu0 0.0
      %3804 = vmatprep.subr.mxu0 0.0
      %3805 = vmatpush1.msra.mxu0 0.0
      %3806 = vmatprep.subr.mxu0 0.0
      %3807 = vmatpush1.msra.mxu0 0.0
      %3808 = vmatprep.subr.mxu0 0.0
      %3809 = vmatpush1.msra.mxu0 0.0
      %3810 = vmatprep.subr.mxu0 0.0
      %3811 = vmatpush1.msra.mxu0 0.0
      %3812 = vmatprep.subr.mxu0 0.0
      %3813 = vmatpush1.msra.mxu0 0.0
      %3814 = vmatprep.subr.mxu0 0.0
      %3815 = vmatpush1.msra.mxu0 0.0
      %3816 = vmatprep.subr.mxu0 0.0
      %3817 = vmatpush1.msra.mxu0 0.0
      %3818 = vmatprep.subr.mxu0 0.0
      %3819 = vmatpush1.msra.mxu0 0.0
      %3820 = vmatprep.subr.mxu0 0.0
      %3821 = vmatpush1.msra.mxu0 0.0
      %3822 = vmatprep.subr.mxu0 0.0
      %3823 = vmatpush1.msra.mxu0 0.0
      %3824 = vmatprep.subr.mxu0 0.0
      %3825 = vmatpush1.msra.mxu0 0.0
      %3826 = vmatprep.subr.mxu0 0.0
      %3827 = vmatpush1.msra.mxu0 0.0
      %3828 = vmatprep.subr.mxu0 0.0
      %3829 = vmatpush1.msra.mxu0 0.0
      %3830 = vmatprep.subr.mxu0 0.0
      %3831 = vmatpush1.msra.mxu0 0.0
      %3832 = vmatprep.subr.mxu0 0.0
      %3833 = vmatpush1.msra.mxu0 0.0
      %3834 = vmatprep.subr.mxu0 0.0
      %3835 = vmatpush1.msra.mxu0 0.0
      %3836 = vmatprep.subr.mxu0 0.0
      %3837 = vmatpush1.msra.mxu0 0.0
      %3838 = vmatprep.subr.mxu0 0.0
      %3839 = vmatpush1.msra.mxu0 0.0
      %3840 = vmatprep.subr.mxu0 0.0
      %3841 = vmatpush1.msra.mxu0 0.0
      %3842 = vmatprep.subr.mxu0 0.0
      %3843 = vmatpush1.msra.mxu0 0.0
      %3844 = vmatprep.subr.mxu0 0.0
      %3845 = vmatpush1.msra.mxu0 0.0
      %3846 = vmatprep.subr.mxu0 0.0
      %3847 = vmatpush1.msra.mxu0 0.0
      %3848 = vmatprep.subr.mxu0 0.0
      %3849 = vmatpush1.msra.mxu0 0.0
      %3850 = vmatprep.subr.mxu0 0.0
      %3851 = vmatpush1.msra.mxu0 0.0
      %3852 = vmatprep.subr.mxu0 0.0
      %3853 = vmatpush1.msra.mxu0 0.0
      %3854 = vmatprep.subr.mxu0 0.0
      %3855 = vmatpush1.msra.mxu0 0.0
      %3856 = vmatprep.subr.mxu0 0.0
      %3857 = vmatpush1.msra.mxu0 0.0
      %3858 = vmatprep.mubr.f32.mxu0 0.0
      %3859 = vmatmul.mubr.f32.gmra.mrb[0].mxu0 %v3771
      %v3860 = vpop.f32.mrb[0].mxu0
      %v3861 = vadd.f32 0.0, %v3860
      %v3862 = vpop.f32.mrb[0].mxu0
      %3863 = vmatprep.mubr.f32.mxu0 0.0
      %3864 = vmatmul.mubr.f32.gmra.mrb[0].mxu0 %v3774
      %v3865 = vpop.f32.mrb[0].mxu0
      %v3866 = vadd.f32 0.0, %v3865
      %v3867 = vpop.f32.mrb[0].mxu0
      %3868 = vmatprep.mubr.f32.mxu0 0.0
      %3869 = vmatmul.mubr.f32.gmra.mrb[0].mxu0 %v3777
      %v3870 = vpop.f32.mrb[0].mxu0
      %v3871 = vadd.f32 0.0, %v3870
      %v3872 = vpop.f32.mrb[0].mxu0
      %3873 = vmatprep.mubr.f32.mxu0 0.0
      %3874 = vmatmul.mubr.f32.gmra.mrb[0].mxu0 %v3780
      %v3875 = vpop.f32.mrb[0].mxu0
      %v3876 = vadd.f32 0.0, %v3875
      %v3877 = vpop.f32.mrb[0].mxu0
      %3878 = vmatprep.mubr.f32.mxu0 0.0
      %3879 = vmatmul.mubr.f32.gmra.mrb[0].mxu0 %v3783
      %v3880 = vpop.f32.mrb[0].mxu0
      %v3881 = vadd.f32 0.0, %v3880
      %v3882 = vpop.f32.mrb[0].mxu0
      %3883 = vmatprep.mubr.f32.mxu0 0.0
      %3884 = vmatmul.mubr.f32.gmra.mrb[0].mxu0 %v3786
      %v3885 = vpop.f32.mrb[0].mxu0
      %v3886 = vadd.f32 0.0, %v3885
      %v3887 = vpop.f32.mrb[0].mxu0
      %3888 = vmatprep.mubr.f32.mxu0 0.0
      %3889 = vmatmul.mubr.f32.gmra.mrb[0].mxu0 %v3789
      %v3890 = vpop.f32.mrb[0].mxu0
      %v3891 = vadd.f32 0.0, %v3890
      %v3892 = vpop.f32.mrb[0].mxu0
      %3893 = vmatprep.mubr.f32.mxu0 0.0
      %3894 = vmatmul.mubr.f32.gmra.mrb[0].mxu0 %v3792
      %v3895 = vpop.f32.mrb[0].mxu0
      %v3896 = vadd.f32 0.0, %v3895
      %v3897 = vpop.f32.mrb[0].mxu0
      %3898 = vdwg.mxu0
      %v3899 = vadd.f32 %v3752, %v3861
      %v3900 = vadd.f32 %v3753, %v3866
      %v3901 = vadd.f32 %v3754, %v3871
      %v3902 = vadd.f32 %v3755, %v3876
      %v3903 = vadd.f32 %v3756, %v3881
      %v3904 = vadd.f32 %v3757, %v3886
      %v3905 = vadd.f32 %v3758, %v3891
      %v3906 = vadd.f32 %v3759, %v3896
      %v3907 = vld [vmem:[#allocation3 + $0xb] sm:$0xff]
      %v3908 = vld [vmem:[#allocation3 + $0x13] sm:$0xff]
      %v3909 = vld [vmem:[#allocation3 + $0x1b] sm:$0xff]
      %v3910 = vld [vmem:[#allocation3 + $0x23] sm:$0xff]
      %v3911 = vld [vmem:[#allocation3 + $0x2b] sm:$0xff]
      %v3912 = vld [vmem:[#allocation3 + $0x33] sm:$0xff]
      %v3913 = vld [vmem:[#allocation3 + $0x3b] sm:$0xff]
      %v3914 = vld [vmem:[#allocation3 + $0x43] sm:$0xff]
      %s3915 = scalar_lea.vmem %s5, 48
      %v3916 = vld [vmem:[%s3915] sm:$0xff]
      %v3918 = vsel %vm2976, %v3907, 0
      %v3921 = vsel %vm2976, %v3908, 0
      %v3924 = vsel %vm2976, %v3909, 0
      %v3927 = vsel %vm2976, %v3910, 0
      %v3930 = vsel %vm2976, %v3911, 0
      %v3933 = vsel %vm2976, %v3912, 0
      %v3936 = vsel %vm2976, %v3913, 0
      %v3939 = vsel %vm2976, %v3914, 0
      %3941 = vmatprep.subr.mxu0 0.0
      %3942 = vmatpush1.msra.mxu0 %v3916
      %3943 = vmatprep.subr.mxu0 0.0
      %3944 = vmatpush1.msra.mxu0 0.0
      %3945 = vmatprep.subr.mxu0 0.0
      %3946 = vmatpush1.msra.mxu0 0.0
      %3947 = vmatprep.subr.mxu0 0.0
      %3948 = vmatpush1.msra.mxu0 0.0
      %3949 = vmatprep.subr.mxu0 0.0
      %3950 = vmatpush1.msra.mxu0 0.0
      %3951 = vmatprep.subr.mxu0 0.0
      %3952 = vmatpush1.msra.mxu0 0.0
      %3953 = vmatprep.subr.mxu0 0.0
      %3954 = vmatpush1.msra.mxu0 0.0
      %3955 = vmatprep.subr.mxu0 0.0
      %3956 = vmatpush1.msra.mxu0 0.0
      %3957 = vmatprep.subr.mxu0 0.0
      %3958 = vmatpush1.msra.mxu0 0.0
      %3959 = vmatprep.subr.mxu0 0.0
      %3960 = vmatpush1.msra.mxu0 0.0
      %3961 = vmatprep.subr.mxu0 0.0
      %3962 = vmatpush1.msra.mxu0 0.0
      %3963 = vmatprep.subr.mxu0 0.0
      %3964 = vmatpush1.msra.mxu0 0.0
      %3965 = vmatprep.subr.mxu0 0.0
      %3966 = vmatpush1.msra.mxu0 0.0
      %3967 = vmatprep.subr.mxu0 0.0
      %3968 = vmatpush1.msra.mxu0 0.0
      %3969 = vmatprep.subr.mxu0 0.0
      %3970 = vmatpush1.msra.mxu0 0.0
      %3971 = vmatprep.subr.mxu0 0.0
      %3972 = vmatpush1.msra.mxu0 0.0
      %3973 = vmatprep.subr.mxu0 0.0
      %3974 = vmatpush1.msra.mxu0 0.0
      %3975 = vmatprep.subr.mxu0 0.0
      %3976 = vmatpush1.msra.mxu0 0.0
      %3977 = vmatprep.subr.mxu0 0.0
      %3978 = vmatpush1.msra.mxu0 0.0
      %3979 = vmatprep.subr.mxu0 0.0
      %3980 = vmatpush1.msra.mxu0 0.0
      %3981 = vmatprep.subr.mxu0 0.0
      %3982 = vmatpush1.msra.mxu0 0.0
      %3983 = vmatprep.subr.mxu0 0.0
      %3984 = vmatpush1.msra.mxu0 0.0
      %3985 = vmatprep.subr.mxu0 0.0
      %3986 = vmatpush1.msra.mxu0 0.0
      %3987 = vmatprep.subr.mxu0 0.0
      %3988 = vmatpush1.msra.mxu0 0.0
      %3989 = vmatprep.subr.mxu0 0.0
      %3990 = vmatpush1.msra.mxu0 0.0
      %3991 = vmatprep.subr.mxu0 0.0
      %3992 = vmatpush1.msra.mxu0 0.0
      %3993 = vmatprep.subr.mxu0 0.0
      %3994 = vmatpush1.msra.mxu0 0.0
      %3995 = vmatprep.subr.mxu0 0.0
      %3996 = vmatpush1.msra.mxu0 0.0
      %3997 = vmatprep.subr.mxu0 0.0
      %3998 = vmatpush1.msra.mxu0 0.0
      %3999 = vmatprep.subr.mxu0 0.0
      %4000 = vmatpush1.msra.mxu0 0.0
      %4001 = vmatprep.subr.mxu0 0.0
      %4002 = vmatpush1.msra.mxu0 0.0
      %4003 = vmatprep.subr.mxu0 0.0
      %4004 = vmatpush1.msra.mxu0 0.0
      %4005 = vmatprep.mubr.f32.mxu0 0.0
      %4006 = vmatmul.mubr.f32.gmra.mrb[0].mxu0 %v3918
      %v4007 = vpop.f32.mrb[0].mxu0
      %v4008 = vadd.f32 0.0, %v4007
      %v4009 = vpop.f32.mrb[0].mxu0
      %4010 = vmatprep.mubr.f32.mxu0 0.0
      %4011 = vmatmul.mubr.f32.gmra.mrb[0].mxu0 %v3921
      %v4012 = vpop.f32.mrb[0].mxu0
      %v4013 = vadd.f32 0.0, %v4012
      %v4014 = vpop.f32.mrb[0].mxu0
      %4015 = vmatprep.mubr.f32.mxu0 0.0
      %4016 = vmatmul.mubr.f32.gmra.mrb[0].mxu0 %v3924
      %v4017 = vpop.f32.mrb[0].mxu0
      %v4018 = vadd.f32 0.0, %v4017
      %v4019 = vpop.f32.mrb[0].mxu0
      %4020 = vmatprep.mubr.f32.mxu0 0.0
      %4021 = vmatmul.mubr.f32.gmra.mrb[0].mxu0 %v3927
      %v4022 = vpop.f32.mrb[0].mxu0
      %v4023 = vadd.f32 0.0, %v4022
      %v4024 = vpop.f32.mrb[0].mxu0
      %4025 = vmatprep.mubr.f32.mxu0 0.0
      %4026 = vmatmul.mubr.f32.gmra.mrb[0].mxu0 %v3930
      %v4027 = vpop.f32.mrb[0].mxu0
      %v4028 = vadd.f32 0.0, %v4027
      %v4029 = vpop.f32.mrb[0].mxu0
      %4030 = vmatprep.mubr.f32.mxu0 0.0
      %4031 = vmatmul.mubr.f32.gmra.mrb[0].mxu0 %v3933
      %v4032 = vpop.f32.mrb[0].mxu0
      %v4033 = vadd.f32 0.0, %v4032
      %v4034 = vpop.f32.mrb[0].mxu0
      %4035 = vmatprep.mubr.f32.mxu0 0.0
      %4036 = vmatmul.mubr.f32.gmra.mrb[0].mxu0 %v3936
      %v4037 = vpop.f32.mrb[0].mxu0
      %v4038 = vadd.f32 0.0, %v4037
      %v4039 = vpop.f32.mrb[0].mxu0
      %4040 = vmatprep.mubr.f32.mxu0 0.0
      %4041 = vmatmul.mubr.f32.gmra.mrb[0].mxu0 %v3939
      %v4042 = vpop.f32.mrb[0].mxu0
      %v4043 = vadd.f32 0.0, %v4042
      %v4044 = vpop.f32.mrb[0].mxu0
      %4045 = vdwg.mxu0
      %v4046 = vadd.f32 %v3899, %v4008
      %v4047 = vadd.f32 %v3900, %v4013
      %v4048 = vadd.f32 %v3901, %v4018
      %v4049 = vadd.f32 %v3902, %v4023
      %v4050 = vadd.f32 %v3903, %v4028
      %v4051 = vadd.f32 %v3904, %v4033
      %v4052 = vadd.f32 %v3905, %v4038
      %v4053 = vadd.f32 %v3906, %v4043
      %v4054 = vld [vmem:[#allocation3 + $0xc] sm:$0xff]
      %v4055 = vld [vmem:[#allocation3 + $0x14] sm:$0xff]
      %v4056 = vld [vmem:[#allocation3 + $0x1c] sm:$0xff]
      %v4057 = vld [vmem:[#allocation3 + $0x24] sm:$0xff]
      %v4058 = vld [vmem:[#allocation3 + $0x2c] sm:$0xff]
      %v4059 = vld [vmem:[#allocation3 + $0x34] sm:$0xff]
      %v4060 = vld [vmem:[#allocation3 + $0x3c] sm:$0xff]
      %v4061 = vld [vmem:[#allocation3 + $0x44] sm:$0xff]
      %s4062 = scalar_lea.vmem %s5, 56
      %v4063 = vld [vmem:[%s4062] sm:$0xff]
      %v4065 = vsel %vm2976, %v4054, 0
      %v4068 = vsel %vm2976, %v4055, 0
      %v4071 = vsel %vm2976, %v4056, 0
      %v4074 = vsel %vm2976, %v4057, 0
      %v4077 = vsel %vm2976, %v4058, 0
      %v4080 = vsel %vm2976, %v4059, 0
      %v4083 = vsel %vm2976, %v4060, 0
      %v4086 = vsel %vm2976, %v4061, 0
      %4088 = vmatprep.subr.mxu0 0.0
      %4089 = vmatpush1.msra.mxu0 %v4063
      %4090 = vmatprep.subr.mxu0 0.0
      %4091 = vmatpush1.msra.mxu0 0.0
      %4092 = vmatprep.subr.mxu0 0.0
      %4093 = vmatpush1.msra.mxu0 0.0
      %4094 = vmatprep.subr.mxu0 0.0
      %4095 = vmatpush1.msra.mxu0 0.0
      %4096 = vmatprep.subr.mxu0 0.0
      %4097 = vmatpush1.msra.mxu0 0.0
      %4098 = vmatprep.subr.mxu0 0.0
      %4099 = vmatpush1.msra.mxu0 0.0
      %4100 = vmatprep.subr.mxu0 0.0
      %4101 = vmatpush1.msra.mxu0 0.0
      %4102 = vmatprep.subr.mxu0 0.0
      %4103 = vmatpush1.msra.mxu0 0.0
      %4104 = vmatprep.subr.mxu0 0.0
      %4105 = vmatpush1.msra.mxu0 0.0
      %4106 = vmatprep.subr.mxu0 0.0
      %4107 = vmatpush1.msra.mxu0 0.0
      %4108 = vmatprep.subr.mxu0 0.0
      %4109 = vmatpush1.msra.mxu0 0.0
      %4110 = vmatprep.subr.mxu0 0.0
      %4111 = vmatpush1.msra.mxu0 0.0
      %4112 = vmatprep.subr.mxu0 0.0
      %4113 = vmatpush1.msra.mxu0 0.0
      %4114 = vmatprep.subr.mxu0 0.0
      %4115 = vmatpush1.msra.mxu0 0.0
      %4116 = vmatprep.subr.mxu0 0.0
      %4117 = vmatpush1.msra.mxu0 0.0
      %4118 = vmatprep.subr.mxu0 0.0
      %4119 = vmatpush1.msra.mxu0 0.0
      %4120 = vmatprep.subr.mxu0 0.0
      %4121 = vmatpush1.msra.mxu0 0.0
      %4122 = vmatprep.subr.mxu0 0.0
      %4123 = vmatpush1.msra.mxu0 0.0
      %4124 = vmatprep.subr.mxu0 0.0
      %4125 = vmatpush1.msra.mxu0 0.0
      %4126 = vmatprep.subr.mxu0 0.0
      %4127 = vmatpush1.msra.mxu0 0.0
      %4128 = vmatprep.subr.mxu0 0.0
      %4129 = vmatpush1.msra.mxu0 0.0
      %4130 = vmatprep.subr.mxu0 0.0
      %4131 = vmatpush1.msra.mxu0 0.0
      %4132 = vmatprep.subr.mxu0 0.0
      %4133 = vmatpush1.msra.mxu0 0.0
      %4134 = vmatprep.subr.mxu0 0.0
      %4135 = vmatpush1.msra.mxu0 0.0
      %4136 = vmatprep.subr.mxu0 0.0
      %4137 = vmatpush1.msra.mxu0 0.0
      %4138 = vmatprep.subr.mxu0 0.0
      %4139 = vmatpush1.msra.mxu0 0.0
      %4140 = vmatprep.subr.mxu0 0.0
      %4141 = vmatpush1.msra.mxu0 0.0
      %4142 = vmatprep.subr.mxu0 0.0
      %4143 = vmatpush1.msra.mxu0 0.0
      %4144 = vmatprep.subr.mxu0 0.0
      %4145 = vmatpush1.msra.mxu0 0.0
      %4146 = vmatprep.subr.mxu0 0.0
      %4147 = vmatpush1.msra.mxu0 0.0
      %4148 = vmatprep.subr.mxu0 0.0
      %4149 = vmatpush1.msra.mxu0 0.0
      %4150 = vmatprep.subr.mxu0 0.0
      %4151 = vmatpush1.msra.mxu0 0.0
      %4152 = vmatprep.mubr.f32.mxu0 0.0
      %4153 = vmatmul.mubr.f32.gmra.mrb[0].mxu0 %v4065
      %v4154 = vpop.f32.mrb[0].mxu0
      %v4155 = vadd.f32 0.0, %v4154
      %v4156 = vpop.f32.mrb[0].mxu0
      %4157 = vmatprep.mubr.f32.mxu0 0.0
      %4158 = vmatmul.mubr.f32.gmra.mrb[0].mxu0 %v4068
      %v4159 = vpop.f32.mrb[0].mxu0
      %v4160 = vadd.f32 0.0, %v4159
      %v4161 = vpop.f32.mrb[0].mxu0
      %4162 = vmatprep.mubr.f32.mxu0 0.0
      %4163 = vmatmul.mubr.f32.gmra.mrb[0].mxu0 %v4071
      %v4164 = vpop.f32.mrb[0].mxu0
      %v4165 = vadd.f32 0.0, %v4164
      %v4166 = vpop.f32.mrb[0].mxu0
      %4167 = vmatprep.mubr.f32.mxu0 0.0
      %4168 = vmatmul.mubr.f32.gmra.mrb[0].mxu0 %v4074
      %v4169 = vpop.f32.mrb[0].mxu0
      %v4170 = vadd.f32 0.0, %v4169
      %v4171 = vpop.f32.mrb[0].mxu0
      %4172 = vmatprep.mubr.f32.mxu0 0.0
      %4173 = vmatmul.mubr.f32.gmra.mrb[0].mxu0 %v4077
      %v4174 = vpop.f32.mrb[0].mxu0
      %v4175 = vadd.f32 0.0, %v4174
      %v4176 = vpop.f32.mrb[0].mxu0
      %4177 = vmatprep.mubr.f32.mxu0 0.0
      %4178 = vmatmul.mubr.f32.gmra.mrb[0].mxu0 %v4080
      %v4179 = vpop.f32.mrb[0].mxu0
      %v4180 = vadd.f32 0.0, %v4179
      %v4181 = vpop.f32.mrb[0].mxu0
      %4182 = vmatprep.mubr.f32.mxu0 0.0
      %4183 = vmatmul.mubr.f32.gmra.mrb[0].mxu0 %v4083
      %v4184 = vpop.f32.mrb[0].mxu0
      %v4185 = vadd.f32 0.0, %v4184
      %v4186 = vpop.f32.mrb[0].mxu0
      %4187 = vmatprep.mubr.f32.mxu0 0.0
      %4188 = vmatmul.mubr.f32.gmra.mrb[0].mxu0 %v4086
      %v4189 = vpop.f32.mrb[0].mxu0
      %v4190 = vadd.f32 0.0, %v4189
      %v4191 = vpop.f32.mrb[0].mxu0
      %4192 = vdwg.mxu0
      %v4193 = vadd.f32 %v4046, %v4155
      %v4194 = vadd.f32 %v4047, %v4160
      %v4195 = vadd.f32 %v4048, %v4165
      %v4196 = vadd.f32 %v4049, %v4170
      %v4197 = vadd.f32 %v4050, %v4175
      %v4198 = vadd.f32 %v4051, %v4180
      %v4199 = vadd.f32 %v4052, %v4185
      %v4200 = vadd.f32 %v4053, %v4190
      %v4201 = vld [vmem:[%s6] sm:$0x1]
      %v4202 = vlaneseq
      %v4203 = vshrl.u32 %v4202, 7
      %v4204 = vsub.s32 0, %v4203
      %v4205 = vrot.slane %v4201, %v4204
      %v4206 = vadd.f32 %v4193, %v4205
      %v4207 = vadd.f32 %v4194, %v4205
      %v4208 = vadd.f32 %v4195, %v4205
      %v4209 = vadd.f32 %v4196, %v4205
      %v4210 = vadd.f32 %v4197, %v4205
      %v4211 = vadd.f32 %v4198, %v4205
      %v4212 = vadd.f32 %v4199, %v4205
      %v4213 = vadd.f32 %v4200, %v4205
      %v4214 = vmax.f32 %v4206, 0.0
      %v4215 = vmax.f32 %v4207, 0.0
      %v4216 = vmax.f32 %v4208, 0.0
      %v4217 = vmax.f32 %v4209, 0.0
      %v4218 = vmax.f32 %v4210, 0.0
      %v4219 = vmax.f32 %v4211, 0.0
      %v4220 = vmax.f32 %v4212, 0.0
      %v4221 = vmax.f32 %v4213, 0.0
      %v4222 = vld [vmem:[%s6 + $0x1] sm:$0x1]
      %v4223 = vlaneseq
      %v4224 = vshrl.u32 %v4223, 7
      %v4225 = vsub.s32 0, %v4224
      %v4226 = vrot.slane %v4222, %v4225
      %v4227 = vmul.f32 %v4214, %v4226
      %v4228 = vmul.f32 %v4215, %v4226
      %v4229 = vmul.f32 %v4216, %v4226
      %v4230 = vmul.f32 %v4217, %v4226
      %v4231 = vmul.f32 %v4218, %v4226
      %v4232 = vmul.f32 %v4219, %v4226
      %v4233 = vmul.f32 %v4220, %v4226
      %v4234 = vmul.f32 %v4221, %v4226
      %v4235 = vld [vmem:[%s6 + $0x2] sm:$0x1]
      %v4236 = vlaneseq
      %v4237 = vshrl.u32 %v4236, 7
      %v4238 = vsub.s32 0, %v4237
      %v4239 = vrot.slane %v4235, %v4238
      %v4240 = vadd.f32 %v4227, %v4239
      %v4241 = vadd.f32 %v4228, %v4239
      %v4242 = vadd.f32 %v4229, %v4239
      %v4243 = vadd.f32 %v4230, %v4239
      %v4244 = vadd.f32 %v4231, %v4239
      %v4245 = vadd.f32 %v4232, %v4239
      %v4246 = vadd.f32 %v4233, %v4239
      %v4247 = vadd.f32 %v4234, %v4239
      %4248 = vst.msk [vmem:[#allocation4] sm:$0xff] %vm2976, %v4240
      %4249 = vst.msk [vmem:[#allocation4 + $0x8] sm:$0xff] %vm2976, %v4241
      %4250 = vst.msk [vmem:[#allocation4 + $0x10] sm:$0xff] %vm2976, %v4242
      %4251 = vst.msk [vmem:[#allocation4 + $0x18] sm:$0xff] %vm2976, %v4243
      %4252 = vst.msk [vmem:[#allocation4 + $0x20] sm:$0xff] %vm2976, %v4244
      %4253 = vst.msk [vmem:[#allocation4 + $0x28] sm:$0xff] %vm2976, %v4245
      %4254 = vst.msk [vmem:[#allocation4 + $0x30] sm:$0xff] %vm2976, %v4246
      %4255 = vst.msk [vmem:[#allocation4 + $0x38] sm:$0xff] %vm2976, %v4247
      %v4256 = vld [vmem:[#allocation4] ss:$2 sm:$0xff]
      %s4257 = scalar_lea.vmem [#allocation4], 16
      %v4258 = vld [vmem:[%s4257] ss:$2 sm:$0xff]
      %s4259 = scalar_lea.vmem [#allocation4], 32
      %v4260 = vld [vmem:[%s4259] ss:$2 sm:$0xff]
      %s4261 = scalar_lea.vmem [#allocation4], 48
      %v4262 = vld [vmem:[%s4261] ss:$2 sm:$0xff]
      %s4263 = scalar_lea.vmem [#allocation4], 1
      %v4264 = vld [vmem:[%s4263] ss:$2 sm:$0xff]
      %s4265 = scalar_lea.vmem [#allocation4], 17
      %v4266 = vld [vmem:[%s4265] ss:$2 sm:$0xff]
      %s4267 = scalar_lea.vmem [#allocation4], 33
      %v4268 = vld [vmem:[%s4267] ss:$2 sm:$0xff]
      %s4269 = scalar_lea.vmem [#allocation4], 49
      %v4270 = vld [vmem:[%s4269] ss:$2 sm:$0xff]
      %v4271 = vmax.f32 %v4256, %v4264
      %v4272 = vmax.f32 %v4258, %v4266
      %v4273 = vmax.f32 %v4260, %v4268
      %v4274 = vmax.f32 %v4262, %v4270
      %4275 = vst.msk [vmem:[#allocation4] sm:$0xff] %vm2976, 0.0
      %4276 = vst.msk [vmem:[#allocation4 + $0x28] sm:$0xff] %vm2976, 0.0
      %4277 = vst.msk [vmem:[#allocation4 + $0x8] sm:$0xff] %vm2976, %v4271
      %4278 = vst.msk [vmem:[#allocation4 + $0x10] sm:$0xff] %vm2976, %v4272
      %4279 = vst.msk [vmem:[#allocation4 + $0x18] sm:$0xff] %vm2976, %v4273
      %4280 = vst.msk [vmem:[#allocation4 + $0x20] sm:$0xff] %vm2976, %v4274
      %v4281 = vld [vmem:[#allocation4 + $0x5] sm:$0xff]
      %v4282 = vld [vmem:[#allocation4 + $0xd] sm:$0xff]
      %v4283 = vld [vmem:[#allocation4 + $0x15] sm:$0xff]
      %v4284 = vld [vmem:[#allocation4 + $0x1d] sm:$0xff]
      %v4285 = vld [vmem:[%s7] sm:$0xff]
      %v4286 = vld [vmem:[#allocation4 + $0x6] sm:$0xff]
      %v4287 = vld [vmem:[#allocation4 + $0xe] sm:$0xff]
      %v4288 = vld [vmem:[#allocation4 + $0x16] sm:$0xff]
      %v4289 = vld [vmem:[#allocation4 + $0x1e] sm:$0xff]
      %s4290 = scalar_lea.vmem %s7, 8
      %v4291 = vld [vmem:[%s4290] sm:$0xff]
      %v4293 = vsel %vm2976, %v4286, 0
      %v4296 = vsel %vm2976, %v4287, 0
      %v4299 = vsel %vm2976, %v4288, 0
      %v4302 = vsel %vm2976, %v4289, 0
      %4304 = vmatprep.subr.mxu0 0.0
      %4305 = vmatpush1.msra.mxu0 %v4291
      %4306 = vmatprep.subr.mxu0 0.0
      %4307 = vmatpush1.msra.mxu0 0.0
      %4308 = vmatprep.subr.mxu0 0.0
      %4309 = vmatpush1.msra.mxu0 0.0
      %4310 = vmatprep.subr.mxu0 0.0
      %4311 = vmatpush1.msra.mxu0 0.0
      %4312 = vmatprep.subr.mxu0 0.0
      %4313 = vmatpush1.msra.mxu0 0.0
      %4314 = vmatprep.subr.mxu0 0.0
      %4315 = vmatpush1.msra.mxu0 0.0
      %4316 = vmatprep.subr.mxu0 0.0
      %4317 = vmatpush1.msra.mxu0 0.0
      %4318 = vmatprep.subr.mxu0 0.0
      %4319 = vmatpush1.msra.mxu0 0.0
      %4320 = vmatprep.subr.mxu0 0.0
      %4321 = vmatpush1.msra.mxu0 0.0
      %4322 = vmatprep.subr.mxu0 0.0
      %4323 = vmatpush1.msra.mxu0 0.0
      %4324 = vmatprep.subr.mxu0 0.0
      %4325 = vmatpush1.msra.mxu0 0.0
      %4326 = vmatprep.subr.mxu0 0.0
      %4327 = vmatpush1.msra.mxu0 0.0
      %4328 = vmatprep.subr.mxu0 0.0
      %4329 = vmatpush1.msra.mxu0 0.0
      %4330 = vmatprep.subr.mxu0 0.0
      %4331 = vmatpush1.msra.mxu0 0.0
      %4332 = vmatprep.subr.mxu0 0.0
      %4333 = vmatpush1.msra.mxu0 0.0
      %4334 = vmatprep.subr.mxu0 0.0
      %4335 = vmatpush1.msra.mxu0 0.0
      %4336 = vmatprep.subr.mxu0 0.0
      %4337 = vmatpush1.msra.mxu0 0.0
      %4338 = vmatprep.subr.mxu0 0.0
      %4339 = vmatpush1.msra.mxu0 0.0
      %4340 = vmatprep.subr.mxu0 0.0
      %4341 = vmatpush1.msra.mxu0 0.0
      %4342 = vmatprep.subr.mxu0 0.0
      %4343 = vmatpush1.msra.mxu0 0.0
      %4344 = vmatprep.subr.mxu0 0.0
      %4345 = vmatpush1.msra.mxu0 0.0
      %4346 = vmatprep.subr.mxu0 0.0
      %4347 = vmatpush1.msra.mxu0 0.0
      %4348 = vmatprep.subr.mxu0 0.0
      %4349 = vmatpush1.msra.mxu0 0.0
      %4350 = vmatprep.subr.mxu0 0.0
      %4351 = vmatpush1.msra.mxu0 0.0
      %4352 = vmatprep.subr.mxu0 0.0
      %4353 = vmatpush1.msra.mxu0 0.0
      %4354 = vmatprep.subr.mxu0 0.0
      %4355 = vmatpush1.msra.mxu0 0.0
      %4356 = vmatprep.subr.mxu0 0.0
      %4357 = vmatpush1.msra.mxu0 0.0
      %4358 = vmatprep.subr.mxu0 0.0
      %4359 = vmatpush1.msra.mxu0 0.0
      %4360 = vmatprep.subr.mxu0 0.0
      %4361 = vmatpush1.msra.mxu0 0.0
      %4362 = vmatprep.subr.mxu0 0.0
      %4363 = vmatpush1.msra.mxu0 0.0
      %4364 = vmatprep.subr.mxu0 0.0
      %4365 = vmatpush1.msra.mxu0 0.0
      %4366 = vmatprep.subr.mxu0 0.0
      %4367 = vmatpush1.msra.mxu0 0.0
      %4368 = vmatprep.mubr.f32.mxu0 0.0
      %4369 = vmatmul.mubr.f32.gmra.mrb[0].mxu0 %v4293
      %v4370 = vpop.f32.mrb[0].mxu0
      %v4371 = vadd.f32 0.0, %v4370
      %v4372 = vpop.f32.mrb[0].mxu0
      %4373 = vmatprep.mubr.f32.mxu0 0.0
      %4374 = vmatmul.mubr.f32.gmra.mrb[0].mxu0 %v4296
      %v4375 = vpop.f32.mrb[0].mxu0
      %v4376 = vadd.f32 0.0, %v4375
      %v4377 = vpop.f32.mrb[0].mxu0
      %4378 = vmatprep.mubr.f32.mxu0 0.0
      %4379 = vmatmul.mubr.f32.gmra.mrb[0].mxu0 %v4299
      %v4380 = vpop.f32.mrb[0].mxu0
      %v4381 = vadd.f32 0.0, %v4380
      %v4382 = vpop.f32.mrb[0].mxu0
      %4383 = vmatprep.mubr.f32.mxu0 0.0
      %4384 = vmatmul.mubr.f32.gmra.mrb[0].mxu0 %v4302
      %v4385 = vpop.f32.mrb[0].mxu0
      %v4386 = vadd.f32 0.0, %v4385
      %v4387 = vpop.f32.mrb[0].mxu0
      %4388 = vdwg.mxu0
      %v4390 = vsel %vm2976, %v4281, 0
      %v4393 = vsel %vm2976, %v4282, 0
      %v4396 = vsel %vm2976, %v4283, 0
      %v4399 = vsel %vm2976, %v4284, 0
      %4401 = vmatprep.subr.mxu0 0.0
      %4402 = vmatpush1.msra.mxu0 %v4285
      %4403 = vmatprep.subr.mxu0 0.0
      %4404 = vmatpush1.msra.mxu0 0.0
      %4405 = vmatprep.subr.mxu0 0.0
      %4406 = vmatpush1.msra.mxu0 0.0
      %4407 = vmatprep.subr.mxu0 0.0
      %4408 = vmatpush1.msra.mxu0 0.0
      %4409 = vmatprep.subr.mxu0 0.0
      %4410 = vmatpush1.msra.mxu0 0.0
      %4411 = vmatprep.subr.mxu0 0.0
      %4412 = vmatpush1.msra.mxu0 0.0
      %4413 = vmatprep.subr.mxu0 0.0
      %4414 = vmatpush1.msra.mxu0 0.0
      %4415 = vmatprep.subr.mxu0 0.0
      %4416 = vmatpush1.msra.mxu0 0.0
      %4417 = vmatprep.subr.mxu0 0.0
      %4418 = vmatpush1.msra.mxu0 0.0
      %4419 = vmatprep.subr.mxu0 0.0
      %4420 = vmatpush1.msra.mxu0 0.0
      %4421 = vmatprep.subr.mxu0 0.0
      %4422 = vmatpush1.msra.mxu0 0.0
      %4423 = vmatprep.subr.mxu0 0.0
      %4424 = vmatpush1.msra.mxu0 0.0
      %4425 = vmatprep.subr.mxu0 0.0
      %4426 = vmatpush1.msra.mxu0 0.0
      %4427 = vmatprep.subr.mxu0 0.0
      %4428 = vmatpush1.msra.mxu0 0.0
      %4429 = vmatprep.subr.mxu0 0.0
      %4430 = vmatpush1.msra.mxu0 0.0
      %4431 = vmatprep.subr.mxu0 0.0
      %4432 = vmatpush1.msra.mxu0 0.0
      %4433 = vmatprep.subr.mxu0 0.0
      %4434 = vmatpush1.msra.mxu0 0.0
      %4435 = vmatprep.subr.mxu0 0.0
      %4436 = vmatpush1.msra.mxu0 0.0
      %4437 = vmatprep.subr.mxu0 0.0
      %4438 = vmatpush1.msra.mxu0 0.0
      %4439 = vmatprep.subr.mxu0 0.0
      %4440 = vmatpush1.msra.mxu0 0.0
      %4441 = vmatprep.subr.mxu0 0.0
      %4442 = vmatpush1.msra.mxu0 0.0
      %4443 = vmatprep.subr.mxu0 0.0
      %4444 = vmatpush1.msra.mxu0 0.0
      %4445 = vmatprep.subr.mxu0 0.0
      %4446 = vmatpush1.msra.mxu0 0.0
      %4447 = vmatprep.subr.mxu0 0.0
      %4448 = vmatpush1.msra.mxu0 0.0
      %4449 = vmatprep.subr.mxu0 0.0
      %4450 = vmatpush1.msra.mxu0 0.0
      %4451 = vmatprep.subr.mxu0 0.0
      %4452 = vmatpush1.msra.mxu0 0.0
      %4453 = vmatprep.subr.mxu0 0.0
      %4454 = vmatpush1.msra.mxu0 0.0
      %4455 = vmatprep.subr.mxu0 0.0
      %4456 = vmatpush1.msra.mxu0 0.0
      %4457 = vmatprep.subr.mxu0 0.0
      %4458 = vmatpush1.msra.mxu0 0.0
      %4459 = vmatprep.subr.mxu0 0.0
      %4460 = vmatpush1.msra.mxu0 0.0
      %4461 = vmatprep.subr.mxu0 0.0
      %4462 = vmatpush1.msra.mxu0 0.0
      %4463 = vmatprep.subr.mxu0 0.0
      %4464 = vmatpush1.msra.mxu0 0.0
      %4465 = vmatprep.mubr.f32.mxu0 0.0
      %4466 = vmatmul.mubr.f32.gmra.mrb[0].mxu0 %v4390
      %v4467 = vpop.f32.mrb[0].mxu0
      %v4468 = vadd.f32 %v4371, %v4467
      %v4469 = vpop.f32.mrb[0].mxu0
      %4470 = vmatprep.mubr.f32.mxu0 0.0
      %4471 = vmatmul.mubr.f32.gmra.mrb[0].mxu0 %v4393
      %v4472 = vpop.f32.mrb[0].mxu0
      %v4473 = vadd.f32 %v4376, %v4472
      %v4474 = vpop.f32.mrb[0].mxu0
      %4475 = vmatprep.mubr.f32.mxu0 0.0
      %4476 = vmatmul.mubr.f32.gmra.mrb[0].mxu0 %v4396
      %v4477 = vpop.f32.mrb[0].mxu0
      %v4478 = vadd.f32 %v4381, %v4477
      %v4479 = vpop.f32.mrb[0].mxu0
      %4480 = vmatprep.mubr.f32.mxu0 0.0
      %4481 = vmatmul.mubr.f32.gmra.mrb[0].mxu0 %v4399
      %v4482 = vpop.f32.mrb[0].mxu0
      %v4483 = vadd.f32 %v4386, %v4482
      %v4484 = vpop.f32.mrb[0].mxu0
      %4485 = vdwg.mxu0
      %v4486 = vld [vmem:[#allocation4 + $0x7] sm:$0xff]
      %v4487 = vld [vmem:[#allocation4 + $0xf] sm:$0xff]
      %v4488 = vld [vmem:[#allocation4 + $0x17] sm:$0xff]
      %v4489 = vld [vmem:[#allocation4 + $0x1f] sm:$0xff]
      %s4490 = scalar_lea.vmem %s7, 16
      %v4491 = vld [vmem:[%s4490] sm:$0xff]
      %v4493 = vsel %vm2976, %v4486, 0
      %v4496 = vsel %vm2976, %v4487, 0
      %v4499 = vsel %vm2976, %v4488, 0
      %v4502 = vsel %vm2976, %v4489, 0
      %4504 = vmatprep.subr.mxu0 0.0
      %4505 = vmatpush1.msra.mxu0 %v4491
      %4506 = vmatprep.subr.mxu0 0.0
      %4507 = vmatpush1.msra.mxu0 0.0
      %4508 = vmatprep.subr.mxu0 0.0
      %4509 = vmatpush1.msra.mxu0 0.0
      %4510 = vmatprep.subr.mxu0 0.0
      %4511 = vmatpush1.msra.mxu0 0.0
      %4512 = vmatprep.subr.mxu0 0.0
      %4513 = vmatpush1.msra.mxu0 0.0
      %4514 = vmatprep.subr.mxu0 0.0
      %4515 = vmatpush1.msra.mxu0 0.0
      %4516 = vmatprep.subr.mxu0 0.0
      %4517 = vmatpush1.msra.mxu0 0.0
      %4518 = vmatprep.subr.mxu0 0.0
      %4519 = vmatpush1.msra.mxu0 0.0
      %4520 = vmatprep.subr.mxu0 0.0
      %4521 = vmatpush1.msra.mxu0 0.0
      %4522 = vmatprep.subr.mxu0 0.0
      %4523 = vmatpush1.msra.mxu0 0.0
      %4524 = vmatprep.subr.mxu0 0.0
      %4525 = vmatpush1.msra.mxu0 0.0
      %4526 = vmatprep.subr.mxu0 0.0
      %4527 = vmatpush1.msra.mxu0 0.0
      %4528 = vmatprep.subr.mxu0 0.0
      %4529 = vmatpush1.msra.mxu0 0.0
      %4530 = vmatprep.subr.mxu0 0.0
      %4531 = vmatpush1.msra.mxu0 0.0
      %4532 = vmatprep.subr.mxu0 0.0
      %4533 = vmatpush1.msra.mxu0 0.0
      %4534 = vmatprep.subr.mxu0 0.0
      %4535 = vmatpush1.msra.mxu0 0.0
      %4536 = vmatprep.subr.mxu0 0.0
      %4537 = vmatpush1.msra.mxu0 0.0
      %4538 = vmatprep.subr.mxu0 0.0
      %4539 = vmatpush1.msra.mxu0 0.0
      %4540 = vmatprep.subr.mxu0 0.0
      %4541 = vmatpush1.msra.mxu0 0.0
      %4542 = vmatprep.subr.mxu0 0.0
      %4543 = vmatpush1.msra.mxu0 0.0
      %4544 = vmatprep.subr.mxu0 0.0
      %4545 = vmatpush1.msra.mxu0 0.0
      %4546 = vmatprep.subr.mxu0 0.0
      %4547 = vmatpush1.msra.mxu0 0.0
      %4548 = vmatprep.subr.mxu0 0.0
      %4549 = vmatpush1.msra.mxu0 0.0
      %4550 = vmatprep.subr.mxu0 0.0
      %4551 = vmatpush1.msra.mxu0 0.0
      %4552 = vmatprep.subr.mxu0 0.0
      %4553 = vmatpush1.msra.mxu0 0.0
      %4554 = vmatprep.subr.mxu0 0.0
      %4555 = vmatpush1.msra.mxu0 0.0
      %4556 = vmatprep.subr.mxu0 0.0
      %4557 = vmatpush1.msra.mxu0 0.0
      %4558 = vmatprep.subr.mxu0 0.0
      %4559 = vmatpush1.msra.mxu0 0.0
      %4560 = vmatprep.subr.mxu0 0.0
      %4561 = vmatpush1.msra.mxu0 0.0
      %4562 = vmatprep.subr.mxu0 0.0
      %4563 = vmatpush1.msra.mxu0 0.0
      %4564 = vmatprep.subr.mxu0 0.0
      %4565 = vmatpush1.msra.mxu0 0.0
      %4566 = vmatprep.subr.mxu0 0.0
      %4567 = vmatpush1.msra.mxu0 0.0
      %4568 = vmatprep.mubr.f32.mxu0 0.0
      %4569 = vmatmul.mubr.f32.gmra.mrb[0].mxu0 %v4493
      %v4570 = vpop.f32.mrb[0].mxu0
      %v4571 = vadd.f32 0.0, %v4570
      %v4572 = vpop.f32.mrb[0].mxu0
      %4573 = vmatprep.mubr.f32.mxu0 0.0
      %4574 = vmatmul.mubr.f32.gmra.mrb[0].mxu0 %v4496
      %v4575 = vpop.f32.mrb[0].mxu0
      %v4576 = vadd.f32 0.0, %v4575
      %v4577 = vpop.f32.mrb[0].mxu0
      %4578 = vmatprep.mubr.f32.mxu0 0.0
      %4579 = vmatmul.mubr.f32.gmra.mrb[0].mxu0 %v4499
      %v4580 = vpop.f32.mrb[0].mxu0
      %v4581 = vadd.f32 0.0, %v4580
      %v4582 = vpop.f32.mrb[0].mxu0
      %4583 = vmatprep.mubr.f32.mxu0 0.0
      %4584 = vmatmul.mubr.f32.gmra.mrb[0].mxu0 %v4502
      %v4585 = vpop.f32.mrb[0].mxu0
      %v4586 = vadd.f32 0.0, %v4585
      %v4587 = vpop.f32.mrb[0].mxu0
      %4588 = vdwg.mxu0
      %v4589 = vadd.f32 %v4468, %v4571
      %v4590 = vadd.f32 %v4473, %v4576
      %v4591 = vadd.f32 %v4478, %v4581
      %v4592 = vadd.f32 %v4483, %v4586
      %v4593 = vld [vmem:[#allocation4 + $0x8] sm:$0xff]
      %v4594 = vld [vmem:[#allocation4 + $0x10] sm:$0xff]
      %v4595 = vld [vmem:[#allocation4 + $0x18] sm:$0xff]
      %v4596 = vld [vmem:[#allocation4 + $0x20] sm:$0xff]
      %s4597 = scalar_lea.vmem %s7, 24
      %v4598 = vld [vmem:[%s4597] sm:$0xff]
      %v4600 = vsel %vm2976, %v4593, 0
      %v4603 = vsel %vm2976, %v4594, 0
      %v4606 = vsel %vm2976, %v4595, 0
      %v4609 = vsel %vm2976, %v4596, 0
      %4611 = vmatprep.subr.mxu0 0.0
      %4612 = vmatpush1.msra.mxu0 %v4598
      %4613 = vmatprep.subr.mxu0 0.0
      %4614 = vmatpush1.msra.mxu0 0.0
      %4615 = vmatprep.subr.mxu0 0.0
      %4616 = vmatpush1.msra.mxu0 0.0
      %4617 = vmatprep.subr.mxu0 0.0
      %4618 = vmatpush1.msra.mxu0 0.0
      %4619 = vmatprep.subr.mxu0 0.0
      %4620 = vmatpush1.msra.mxu0 0.0
      %4621 = vmatprep.subr.mxu0 0.0
      %4622 = vmatpush1.msra.mxu0 0.0
      %4623 = vmatprep.subr.mxu0 0.0
      %4624 = vmatpush1.msra.mxu0 0.0
      %4625 = vmatprep.subr.mxu0 0.0
      %4626 = vmatpush1.msra.mxu0 0.0
      %4627 = vmatprep.subr.mxu0 0.0
      %4628 = vmatpush1.msra.mxu0 0.0
      %4629 = vmatprep.subr.mxu0 0.0
      %4630 = vmatpush1.msra.mxu0 0.0
      %4631 = vmatprep.subr.mxu0 0.0
      %4632 = vmatpush1.msra.mxu0 0.0
      %4633 = vmatprep.subr.mxu0 0.0
      %4634 = vmatpush1.msra.mxu0 0.0
      %4635 = vmatprep.subr.mxu0 0.0
      %4636 = vmatpush1.msra.mxu0 0.0
      %4637 = vmatprep.subr.mxu0 0.0
      %4638 = vmatpush1.msra.mxu0 0.0
      %4639 = vmatprep.subr.mxu0 0.0
      %4640 = vmatpush1.msra.mxu0 0.0
      %4641 = vmatprep.subr.mxu0 0.0
      %4642 = vmatpush1.msra.mxu0 0.0
      %4643 = vmatprep.subr.mxu0 0.0
      %4644 = vmatpush1.msra.mxu0 0.0
      %4645 = vmatprep.subr.mxu0 0.0
      %4646 = vmatpush1.msra.mxu0 0.0
      %4647 = vmatprep.subr.mxu0 0.0
      %4648 = vmatpush1.msra.mxu0 0.0
      %4649 = vmatprep.subr.mxu0 0.0
      %4650 = vmatpush1.msra.mxu0 0.0
      %4651 = vmatprep.subr.mxu0 0.0
      %4652 = vmatpush1.msra.mxu0 0.0
      %4653 = vmatprep.subr.mxu0 0.0
      %4654 = vmatpush1.msra.mxu0 0.0
      %4655 = vmatprep.subr.mxu0 0.0
      %4656 = vmatpush1.msra.mxu0 0.0
      %4657 = vmatprep.subr.mxu0 0.0
      %4658 = vmatpush1.msra.mxu0 0.0
      %4659 = vmatprep.subr.mxu0 0.0
      %4660 = vmatpush1.msra.mxu0 0.0
      %4661 = vmatprep.subr.mxu0 0.0
      %4662 = vmatpush1.msra.mxu0 0.0
      %4663 = vmatprep.subr.mxu0 0.0
      %4664 = vmatpush1.msra.mxu0 0.0
      %4665 = vmatprep.subr.mxu0 0.0
      %4666 = vmatpush1.msra.mxu0 0.0
      %4667 = vmatprep.subr.mxu0 0.0
      %4668 = vmatpush1.msra.mxu0 0.0
      %4669 = vmatprep.subr.mxu0 0.0
      %4670 = vmatpush1.msra.mxu0 0.0
      %4671 = vmatprep.subr.mxu0 0.0
      %4672 = vmatpush1.msra.mxu0 0.0
      %4673 = vmatprep.subr.mxu0 0.0
      %4674 = vmatpush1.msra.mxu0 0.0
      %4675 = vmatprep.mubr.f32.mxu0 0.0
      %4676 = vmatmul.mubr.f32.gmra.mrb[0].mxu0 %v4600
      %v4677 = vpop.f32.mrb[0].mxu0
      %v4678 = vadd.f32 0.0, %v4677
      %v4679 = vpop.f32.mrb[0].mxu0
      %4680 = vmatprep.mubr.f32.mxu0 0.0
      %4681 = vmatmul.mubr.f32.gmra.mrb[0].mxu0 %v4603
      %v4682 = vpop.f32.mrb[0].mxu0
      %v4683 = vadd.f32 0.0, %v4682
      %v4684 = vpop.f32.mrb[0].mxu0
      %4685 = vmatprep.mubr.f32.mxu0 0.0
      %4686 = vmatmul.mubr.f32.gmra.mrb[0].mxu0 %v4606
      %v4687 = vpop.f32.mrb[0].mxu0
      %v4688 = vadd.f32 0.0, %v4687
      %v4689 = vpop.f32.mrb[0].mxu0
      %4690 = vmatprep.mubr.f32.mxu0 0.0
      %4691 = vmatmul.mubr.f32.gmra.mrb[0].mxu0 %v4609
      %v4692 = vpop.f32.mrb[0].mxu0
      %v4693 = vadd.f32 0.0, %v4692
      %v4694 = vpop.f32.mrb[0].mxu0
      %4695 = vdwg.mxu0
      %v4696 = vadd.f32 %v4589, %v4678
      %v4697 = vadd.f32 %v4590, %v4683
      %v4698 = vadd.f32 %v4591, %v4688
      %v4699 = vadd.f32 %v4592, %v4693
      %v4700 = vld [vmem:[#allocation4 + $0x9] sm:$0xff]
      %v4701 = vld [vmem:[#allocation4 + $0x11] sm:$0xff]
      %v4702 = vld [vmem:[#allocation4 + $0x19] sm:$0xff]
      %v4703 = vld [vmem:[#allocation4 + $0x21] sm:$0xff]
      %s4704 = scalar_lea.vmem %s7, 32
      %v4705 = vld [vmem:[%s4704] sm:$0xff]
      %v4707 = vsel %vm2976, %v4700, 0
      %v4710 = vsel %vm2976, %v4701, 0
      %v4713 = vsel %vm2976, %v4702, 0
      %v4716 = vsel %vm2976, %v4703, 0
      %4718 = vmatprep.subr.mxu0 0.0
      %4719 = vmatpush1.msra.mxu0 %v4705
      %4720 = vmatprep.subr.mxu0 0.0
      %4721 = vmatpush1.msra.mxu0 0.0
      %4722 = vmatprep.subr.mxu0 0.0
      %4723 = vmatpush1.msra.mxu0 0.0
      %4724 = vmatprep.subr.mxu0 0.0
      %4725 = vmatpush1.msra.mxu0 0.0
      %4726 = vmatprep.subr.mxu0 0.0
      %4727 = vmatpush1.msra.mxu0 0.0
      %4728 = vmatprep.subr.mxu0 0.0
      %4729 = vmatpush1.msra.mxu0 0.0
      %4730 = vmatprep.subr.mxu0 0.0
      %4731 = vmatpush1.msra.mxu0 0.0
      %4732 = vmatprep.subr.mxu0 0.0
      %4733 = vmatpush1.msra.mxu0 0.0
      %4734 = vmatprep.subr.mxu0 0.0
      %4735 = vmatpush1.msra.mxu0 0.0
      %4736 = vmatprep.subr.mxu0 0.0
      %4737 = vmatpush1.msra.mxu0 0.0
      %4738 = vmatprep.subr.mxu0 0.0
      %4739 = vmatpush1.msra.mxu0 0.0
      %4740 = vmatprep.subr.mxu0 0.0
      %4741 = vmatpush1.msra.mxu0 0.0
      %4742 = vmatprep.subr.mxu0 0.0
      %4743 = vmatpush1.msra.mxu0 0.0
      %4744 = vmatprep.subr.mxu0 0.0
      %4745 = vmatpush1.msra.mxu0 0.0
      %4746 = vmatprep.subr.mxu0 0.0
      %4747 = vmatpush1.msra.mxu0 0.0
      %4748 = vmatprep.subr.mxu0 0.0
      %4749 = vmatpush1.msra.mxu0 0.0
      %4750 = vmatprep.subr.mxu0 0.0
      %4751 = vmatpush1.msra.mxu0 0.0
      %4752 = vmatprep.subr.mxu0 0.0
      %4753 = vmatpush1.msra.mxu0 0.0
      %4754 = vmatprep.subr.mxu0 0.0
      %4755 = vmatpush1.msra.mxu0 0.0
      %4756 = vmatprep.subr.mxu0 0.0
      %4757 = vmatpush1.msra.mxu0 0.0
      %4758 = vmatprep.subr.mxu0 0.0
      %4759 = vmatpush1.msra.mxu0 0.0
      %4760 = vmatprep.subr.mxu0 0.0
      %4761 = vmatpush1.msra.mxu0 0.0
      %4762 = vmatprep.subr.mxu0 0.0
      %4763 = vmatpush1.msra.mxu0 0.0
      %4764 = vmatprep.subr.mxu0 0.0
      %4765 = vmatpush1.msra.mxu0 0.0
      %4766 = vmatprep.subr.mxu0 0.0
      %4767 = vmatpush1.msra.mxu0 0.0
      %4768 = vmatprep.subr.mxu0 0.0
      %4769 = vmatpush1.msra.mxu0 0.0
      %4770 = vmatprep.subr.mxu0 0.0
      %4771 = vmatpush1.msra.mxu0 0.0
      %4772 = vmatprep.subr.mxu0 0.0
      %4773 = vmatpush1.msra.mxu0 0.0
      %4774 = vmatprep.subr.mxu0 0.0
      %4775 = vmatpush1.msra.mxu0 0.0
      %4776 = vmatprep.subr.mxu0 0.0
      %4777 = vmatpush1.msra.mxu0 0.0
      %4778 = vmatprep.subr.mxu0 0.0
      %4779 = vmatpush1.msra.mxu0 0.0
      %4780 = vmatprep.subr.mxu0 0.0
      %4781 = vmatpush1.msra.mxu0 0.0
      %4782 = vmatprep.mubr.f32.mxu0 0.0
      %4783 = vmatmul.mubr.f32.gmra.mrb[0].mxu0 %v4707
      %v4784 = vpop.f32.mrb[0].mxu0
      %v4785 = vadd.f32 0.0, %v4784
      %v4786 = vpop.f32.mrb[0].mxu0
      %4787 = vmatprep.mubr.f32.mxu0 0.0
      %4788 = vmatmul.mubr.f32.gmra.mrb[0].mxu0 %v4710
      %v4789 = vpop.f32.mrb[0].mxu0
      %v4790 = vadd.f32 0.0, %v4789
      %v4791 = vpop.f32.mrb[0].mxu0
      %4792 = vmatprep.mubr.f32.mxu0 0.0
      %4793 = vmatmul.mubr.f32.gmra.mrb[0].mxu0 %v4713
      %v4794 = vpop.f32.mrb[0].mxu0
      %v4795 = vadd.f32 0.0, %v4794
      %v4796 = vpop.f32.mrb[0].mxu0
      %4797 = vmatprep.mubr.f32.mxu0 0.0
      %4798 = vmatmul.mubr.f32.gmra.mrb[0].mxu0 %v4716
      %v4799 = vpop.f32.mrb[0].mxu0
      %v4800 = vadd.f32 0.0, %v4799
      %v4801 = vpop.f32.mrb[0].mxu0
      %4802 = vdwg.mxu0
      %v4803 = vadd.f32 %v4696, %v4785
      %v4804 = vadd.f32 %v4697, %v4790
      %v4805 = vadd.f32 %v4698, %v4795
      %v4806 = vadd.f32 %v4699, %v4800
      %v4807 = vld [vmem:[#allocation4 + $0xa] sm:$0xff]
      %v4808 = vld [vmem:[#allocation4 + $0x12] sm:$0xff]
      %v4809 = vld [vmem:[#allocation4 + $0x1a] sm:$0xff]
      %v4810 = vld [vmem:[#allocation4 + $0x22] sm:$0xff]
      %s4811 = scalar_lea.vmem %s7, 40
      %v4812 = vld [vmem:[%s4811] sm:$0xff]
      %v4814 = vsel %vm2976, %v4807, 0
      %v4817 = vsel %vm2976, %v4808, 0
      %v4820 = vsel %vm2976, %v4809, 0
      %v4823 = vsel %vm2976, %v4810, 0
      %4825 = vmatprep.subr.mxu0 0.0
      %4826 = vmatpush1.msra.mxu0 %v4812
      %4827 = vmatprep.subr.mxu0 0.0
      %4828 = vmatpush1.msra.mxu0 0.0
      %4829 = vmatprep.subr.mxu0 0.0
      %4830 = vmatpush1.msra.mxu0 0.0
      %4831 = vmatprep.subr.mxu0 0.0
      %4832 = vmatpush1.msra.mxu0 0.0
      %4833 = vmatprep.subr.mxu0 0.0
      %4834 = vmatpush1.msra.mxu0 0.0
      %4835 = vmatprep.subr.mxu0 0.0
      %4836 = vmatpush1.msra.mxu0 0.0
      %4837 = vmatprep.subr.mxu0 0.0
      %4838 = vmatpush1.msra.mxu0 0.0
      %4839 = vmatprep.subr.mxu0 0.0
      %4840 = vmatpush1.msra.mxu0 0.0
      %4841 = vmatprep.subr.mxu0 0.0
      %4842 = vmatpush1.msra.mxu0 0.0
      %4843 = vmatprep.subr.mxu0 0.0
      %4844 = vmatpush1.msra.mxu0 0.0
      %4845 = vmatprep.subr.mxu0 0.0
      %4846 = vmatpush1.msra.mxu0 0.0
      %4847 = vmatprep.subr.mxu0 0.0
      %4848 = vmatpush1.msra.mxu0 0.0
      %4849 = vmatprep.subr.mxu0 0.0
      %4850 = vmatpush1.msra.mxu0 0.0
      %4851 = vmatprep.subr.mxu0 0.0
      %4852 = vmatpush1.msra.mxu0 0.0
      %4853 = vmatprep.subr.mxu0 0.0
      %4854 = vmatpush1.msra.mxu0 0.0
      %4855 = vmatprep.subr.mxu0 0.0
      %4856 = vmatpush1.msra.mxu0 0.0
      %4857 = vmatprep.subr.mxu0 0.0
      %4858 = vmatpush1.msra.mxu0 0.0
      %4859 = vmatprep.subr.mxu0 0.0
      %4860 = vmatpush1.msra.mxu0 0.0
      %4861 = vmatprep.subr.mxu0 0.0
      %4862 = vmatpush1.msra.mxu0 0.0
      %4863 = vmatprep.subr.mxu0 0.0
      %4864 = vmatpush1.msra.mxu0 0.0
      %4865 = vmatprep.subr.mxu0 0.0
      %4866 = vmatpush1.msra.mxu0 0.0
      %4867 = vmatprep.subr.mxu0 0.0
      %4868 = vmatpush1.msra.mxu0 0.0
      %4869 = vmatprep.subr.mxu0 0.0
      %4870 = vmatpush1.msra.mxu0 0.0
      %4871 = vmatprep.subr.mxu0 0.0
      %4872 = vmatpush1.msra.mxu0 0.0
      %4873 = vmatprep.subr.mxu0 0.0
      %4874 = vmatpush1.msra.mxu0 0.0
      %4875 = vmatprep.subr.mxu0 0.0
      %4876 = vmatpush1.msra.mxu0 0.0
      %4877 = vmatprep.subr.mxu0 0.0
      %4878 = vmatpush1.msra.mxu0 0.0
      %4879 = vmatprep.subr.mxu0 0.0
      %4880 = vmatpush1.msra.mxu0 0.0
      %4881 = vmatprep.subr.mxu0 0.0
      %4882 = vmatpush1.msra.mxu0 0.0
      %4883 = vmatprep.subr.mxu0 0.0
      %4884 = vmatpush1.msra.mxu0 0.0
      %4885 = vmatprep.subr.mxu0 0.0
      %4886 = vmatpush1.msra.mxu0 0.0
      %4887 = vmatprep.subr.mxu0 0.0
      %4888 = vmatpush1.msra.mxu0 0.0
      %4889 = vmatprep.mubr.f32.mxu0 0.0
      %4890 = vmatmul.mubr.f32.gmra.mrb[0].mxu0 %v4814
      %v4891 = vpop.f32.mrb[0].mxu0
      %v4892 = vadd.f32 0.0, %v4891
      %v4893 = vpop.f32.mrb[0].mxu0
      %4894 = vmatprep.mubr.f32.mxu0 0.0
      %4895 = vmatmul.mubr.f32.gmra.mrb[0].mxu0 %v4817
      %v4896 = vpop.f32.mrb[0].mxu0
      %v4897 = vadd.f32 0.0, %v4896
      %v4898 = vpop.f32.mrb[0].mxu0
      %4899 = vmatprep.mubr.f32.mxu0 0.0
      %4900 = vmatmul.mubr.f32.gmra.mrb[0].mxu0 %v4820
      %v4901 = vpop.f32.mrb[0].mxu0
      %v4902 = vadd.f32 0.0, %v4901
      %v4903 = vpop.f32.mrb[0].mxu0
      %4904 = vmatprep.mubr.f32.mxu0 0.0
      %4905 = vmatmul.mubr.f32.gmra.mrb[0].mxu0 %v4823
      %v4906 = vpop.f32.mrb[0].mxu0
      %v4907 = vadd.f32 0.0, %v4906
      %v4908 = vpop.f32.mrb[0].mxu0
      %4909 = vdwg.mxu0
      %v4910 = vadd.f32 %v4803, %v4892
      %v4911 = vadd.f32 %v4804, %v4897
      %v4912 = vadd.f32 %v4805, %v4902
      %v4913 = vadd.f32 %v4806, %v4907
      %v4914 = vld [vmem:[#allocation4 + $0xb] sm:$0xff]
      %v4915 = vld [vmem:[#allocation4 + $0x13] sm:$0xff]
      %v4916 = vld [vmem:[#allocation4 + $0x1b] sm:$0xff]
      %v4917 = vld [vmem:[#allocation4 + $0x23] sm:$0xff]
      %s4918 = scalar_lea.vmem %s7, 48
      %v4919 = vld [vmem:[%s4918] sm:$0xff]
      %v4921 = vsel %vm2976, %v4914, 0
      %v4924 = vsel %vm2976, %v4915, 0
      %v4927 = vsel %vm2976, %v4916, 0
      %v4930 = vsel %vm2976, %v4917, 0
      %4932 = vmatprep.subr.mxu0 0.0
      %4933 = vmatpush1.msra.mxu0 %v4919
      %4934 = vmatprep.subr.mxu0 0.0
      %4935 = vmatpush1.msra.mxu0 0.0
      %4936 = vmatprep.subr.mxu0 0.0
      %4937 = vmatpush1.msra.mxu0 0.0
      %4938 = vmatprep.subr.mxu0 0.0
      %4939 = vmatpush1.msra.mxu0 0.0
      %4940 = vmatprep.subr.mxu0 0.0
      %4941 = vmatpush1.msra.mxu0 0.0
      %4942 = vmatprep.subr.mxu0 0.0
      %4943 = vmatpush1.msra.mxu0 0.0
      %4944 = vmatprep.subr.mxu0 0.0
      %4945 = vmatpush1.msra.mxu0 0.0
      %4946 = vmatprep.subr.mxu0 0.0
      %4947 = vmatpush1.msra.mxu0 0.0
      %4948 = vmatprep.subr.mxu0 0.0
      %4949 = vmatpush1.msra.mxu0 0.0
      %4950 = vmatprep.subr.mxu0 0.0
      %4951 = vmatpush1.msra.mxu0 0.0
      %4952 = vmatprep.subr.mxu0 0.0
      %4953 = vmatpush1.msra.mxu0 0.0
      %4954 = vmatprep.subr.mxu0 0.0
      %4955 = vmatpush1.msra.mxu0 0.0
      %4956 = vmatprep.subr.mxu0 0.0
      %4957 = vmatpush1.msra.mxu0 0.0
      %4958 = vmatprep.subr.mxu0 0.0
      %4959 = vmatpush1.msra.mxu0 0.0
      %4960 = vmatprep.subr.mxu0 0.0
      %4961 = vmatpush1.msra.mxu0 0.0
      %4962 = vmatprep.subr.mxu0 0.0
      %4963 = vmatpush1.msra.mxu0 0.0
      %4964 = vmatprep.subr.mxu0 0.0
      %4965 = vmatpush1.msra.mxu0 0.0
      %4966 = vmatprep.subr.mxu0 0.0
      %4967 = vmatpush1.msra.mxu0 0.0
      %4968 = vmatprep.subr.mxu0 0.0
      %4969 = vmatpush1.msra.mxu0 0.0
      %4970 = vmatprep.subr.mxu0 0.0
      %4971 = vmatpush1.msra.mxu0 0.0
      %4972 = vmatprep.subr.mxu0 0.0
      %4973 = vmatpush1.msra.mxu0 0.0
      %4974 = vmatprep.subr.mxu0 0.0
      %4975 = vmatpush1.msra.mxu0 0.0
      %4976 = vmatprep.subr.mxu0 0.0
      %4977 = vmatpush1.msra.mxu0 0.0
      %4978 = vmatprep.subr.mxu0 0.0
      %4979 = vmatpush1.msra.mxu0 0.0
      %4980 = vmatprep.subr.mxu0 0.0
      %4981 = vmatpush1.msra.mxu0 0.0
      %4982 = vmatprep.subr.mxu0 0.0
      %4983 = vmatpush1.msra.mxu0 0.0
      %4984 = vmatprep.subr.mxu0 0.0
      %4985 = vmatpush1.msra.mxu0 0.0
      %4986 = vmatprep.subr.mxu0 0.0
      %4987 = vmatpush1.msra.mxu0 0.0
      %4988 = vmatprep.subr.mxu0 0.0
      %4989 = vmatpush1.msra.mxu0 0.0
      %4990 = vmatprep.subr.mxu0 0.0
      %4991 = vmatpush1.msra.mxu0 0.0
      %4992 = vmatprep.subr.mxu0 0.0
      %4993 = vmatpush1.msra.mxu0 0.0
      %4994 = vmatprep.subr.mxu0 0.0
      %4995 = vmatpush1.msra.mxu0 0.0
      %4996 = vmatprep.mubr.f32.mxu0 0.0
      %4997 = vmatmul.mubr.f32.gmra.mrb[0].mxu0 %v4921
      %v4998 = vpop.f32.mrb[0].mxu0
      %v4999 = vadd.f32 0.0, %v4998
      %v5000 = vpop.f32.mrb[0].mxu0
      %5001 = vmatprep.mubr.f32.mxu0 0.0
      %5002 = vmatmul.mubr.f32.gmra.mrb[0].mxu0 %v4924
      %v5003 = vpop.f32.mrb[0].mxu0
      %v5004 = vadd.f32 0.0, %v5003
      %v5005 = vpop.f32.mrb[0].mxu0
      %5006 = vmatprep.mubr.f32.mxu0 0.0
      %5007 = vmatmul.mubr.f32.gmra.mrb[0].mxu0 %v4927
      %v5008 = vpop.f32.mrb[0].mxu0
      %v5009 = vadd.f32 0.0, %v5008
      %v5010 = vpop.f32.mrb[0].mxu0
      %5011 = vmatprep.mubr.f32.mxu0 0.0
      %5012 = vmatmul.mubr.f32.gmra.mrb[0].mxu0 %v4930
      %v5013 = vpop.f32.mrb[0].mxu0
      %v5014 = vadd.f32 0.0, %v5013
      %v5015 = vpop.f32.mrb[0].mxu0
      %5016 = vdwg.mxu0
      %v5017 = vadd.f32 %v4910, %v4999
      %v5018 = vadd.f32 %v4911, %v5004
      %v5019 = vadd.f32 %v4912, %v5009
      %v5020 = vadd.f32 %v4913, %v5014
      %v5021 = vld [vmem:[#allocation4 + $0xc] sm:$0xff]
      %v5022 = vld [vmem:[#allocation4 + $0x14] sm:$0xff]
      %v5023 = vld [vmem:[#allocation4 + $0x1c] sm:$0xff]
      %v5024 = vld [vmem:[#allocation4 + $0x24] sm:$0xff]
      %s5025 = scalar_lea.vmem %s7, 56
      %v5026 = vld [vmem:[%s5025] sm:$0xff]
      %v5028 = vsel %vm2976, %v5021, 0
      %v5031 = vsel %vm2976, %v5022, 0
      %v5034 = vsel %vm2976, %v5023, 0
      %v5037 = vsel %vm2976, %v5024, 0
      %5039 = vmatprep.subr.mxu0 0.0
      %5040 = vmatpush1.msra.mxu0 %v5026
      %5041 = vmatprep.subr.mxu0 0.0
      %5042 = vmatpush1.msra.mxu0 0.0
      %5043 = vmatprep.subr.mxu0 0.0
      %5044 = vmatpush1.msra.mxu0 0.0
      %5045 = vmatprep.subr.mxu0 0.0
      %5046 = vmatpush1.msra.mxu0 0.0
      %5047 = vmatprep.subr.mxu0 0.0
      %5048 = vmatpush1.msra.mxu0 0.0
      %5049 = vmatprep.subr.mxu0 0.0
      %5050 = vmatpush1.msra.mxu0 0.0
      %5051 = vmatprep.subr.mxu0 0.0
      %5052 = vmatpush1.msra.mxu0 0.0
      %5053 = vmatprep.subr.mxu0 0.0
      %5054 = vmatpush1.msra.mxu0 0.0
      %5055 = vmatprep.subr.mxu0 0.0
      %5056 = vmatpush1.msra.mxu0 0.0
      %5057 = vmatprep.subr.mxu0 0.0
      %5058 = vmatpush1.msra.mxu0 0.0
      %5059 = vmatprep.subr.mxu0 0.0
      %5060 = vmatpush1.msra.mxu0 0.0
      %5061 = vmatprep.subr.mxu0 0.0
      %5062 = vmatpush1.msra.mxu0 0.0
      %5063 = vmatprep.subr.mxu0 0.0
      %5064 = vmatpush1.msra.mxu0 0.0
      %5065 = vmatprep.subr.mxu0 0.0
      %5066 = vmatpush1.msra.mxu0 0.0
      %5067 = vmatprep.subr.mxu0 0.0
      %5068 = vmatpush1.msra.mxu0 0.0
      %5069 = vmatprep.subr.mxu0 0.0
      %5070 = vmatpush1.msra.mxu0 0.0
      %5071 = vmatprep.subr.mxu0 0.0
      %5072 = vmatpush1.msra.mxu0 0.0
      %5073 = vmatprep.subr.mxu0 0.0
      %5074 = vmatpush1.msra.mxu0 0.0
      %5075 = vmatprep.subr.mxu0 0.0
      %5076 = vmatpush1.msra.mxu0 0.0
      %5077 = vmatprep.subr.mxu0 0.0
      %5078 = vmatpush1.msra.mxu0 0.0
      %5079 = vmatprep.subr.mxu0 0.0
      %5080 = vmatpush1.msra.mxu0 0.0
      %5081 = vmatprep.subr.mxu0 0.0
      %5082 = vmatpush1.msra.mxu0 0.0
      %5083 = vmatprep.subr.mxu0 0.0
      %5084 = vmatpush1.msra.mxu0 0.0
      %5085 = vmatprep.subr.mxu0 0.0
      %5086 = vmatpush1.msra.mxu0 0.0
      %5087 = vmatprep.subr.mxu0 0.0
      %5088 = vmatpush1.msra.mxu0 0.0
      %5089 = vmatprep.subr.mxu0 0.0
      %5090 = vmatpush1.msra.mxu0 0.0
      %5091 = vmatprep.subr.mxu0 0.0
      %5092 = vmatpush1.msra.mxu0 0.0
      %5093 = vmatprep.subr.mxu0 0.0
      %5094 = vmatpush1.msra.mxu0 0.0
      %5095 = vmatprep.subr.mxu0 0.0
      %5096 = vmatpush1.msra.mxu0 0.0
      %5097 = vmatprep.subr.mxu0 0.0
      %5098 = vmatpush1.msra.mxu0 0.0
      %5099 = vmatprep.subr.mxu0 0.0
      %5100 = vmatpush1.msra.mxu0 0.0
      %5101 = vmatprep.subr.mxu0 0.0
      %5102 = vmatpush1.msra.mxu0 0.0
      %5103 = vmatprep.mubr.f32.mxu0 0.0
      %5104 = vmatmul.mubr.f32.gmra.mrb[0].mxu0 %v5028
      %v5105 = vpop.f32.mrb[0].mxu0
      %v5106 = vadd.f32 0.0, %v5105
      %v5107 = vpop.f32.mrb[0].mxu0
      %5108 = vmatprep.mubr.f32.mxu0 0.0
      %5109 = vmatmul.mubr.f32.gmra.mrb[0].mxu0 %v5031
      %v5110 = vpop.f32.mrb[0].mxu0
      %v5111 = vadd.f32 0.0, %v5110
      %v5112 = vpop.f32.mrb[0].mxu0
      %5113 = vmatprep.mubr.f32.mxu0 0.0
      %5114 = vmatmul.mubr.f32.gmra.mrb[0].mxu0 %v5034
      %v5115 = vpop.f32.mrb[0].mxu0
      %v5116 = vadd.f32 0.0, %v5115
      %v5117 = vpop.f32.mrb[0].mxu0
      %5118 = vmatprep.mubr.f32.mxu0 0.0
      %5119 = vmatmul.mubr.f32.gmra.mrb[0].mxu0 %v5037
      %v5120 = vpop.f32.mrb[0].mxu0
      %v5121 = vadd.f32 0.0, %v5120
      %v5122 = vpop.f32.mrb[0].mxu0
      %5123 = vdwg.mxu0
      %v5124 = vadd.f32 %v5017, %v5106
      %v5125 = vadd.f32 %v5018, %v5111
      %v5126 = vadd.f32 %v5019, %v5116
      %v5127 = vadd.f32 %v5020, %v5121
      %v5128 = vld [vmem:[%s8] sm:$0x1]
      %v5129 = vlaneseq
      %v5130 = vshrl.u32 %v5129, 7
      %v5131 = vsub.s32 0, %v5130
      %v5132 = vrot.slane %v5128, %v5131
      %v5133 = vadd.f32 %v5124, %v5132
      %v5134 = vadd.f32 %v5125, %v5132
      %v5135 = vadd.f32 %v5126, %v5132
      %v5136 = vadd.f32 %v5127, %v5132
      %v5137 = vmax.f32 %v5133, 0.0
      %v5138 = vmax.f32 %v5134, 0.0
      %v5139 = vmax.f32 %v5135, 0.0
      %v5140 = vmax.f32 %v5136, 0.0
      %v5141 = vld [vmem:[%s8 + $0x1] sm:$0x1]
      %v5142 = vlaneseq
      %v5143 = vshrl.u32 %v5142, 7
      %v5144 = vsub.s32 0, %v5143
      %v5145 = vrot.slane %v5141, %v5144
      %v5146 = vmul.f32 %v5137, %v5145
      %v5147 = vmul.f32 %v5138, %v5145
      %v5148 = vmul.f32 %v5139, %v5145
      %v5149 = vmul.f32 %v5140, %v5145
      %v5150 = vld [vmem:[%s8 + $0x2] sm:$0x1]
      %v5151 = vlaneseq
      %v5152 = vshrl.u32 %v5151, 7
      %v5153 = vsub.s32 0, %v5152
      %v5154 = vrot.slane %v5150, %v5153
      %v5155 = vadd.f32 %v5146, %v5154
      %v5156 = vadd.f32 %v5147, %v5154
      %v5157 = vadd.f32 %v5148, %v5154
      %v5158 = vadd.f32 %v5149, %v5154
      %5159 = vst.msk [vmem:[#allocation5] sm:$0xff] %vm2976, %v5155
      %5160 = vst.msk [vmem:[#allocation5 + $0x8] sm:$0xff] %vm2976, %v5156
      %5161 = vst.msk [vmem:[#allocation5 + $0x10] sm:$0xff] %vm2976, %v5157
      %5162 = vst.msk [vmem:[#allocation5 + $0x18] sm:$0xff] %vm2976, %v5158
      %v5163 = vld [vmem:[#allocation5] ss:$2 sm:$0xff]
      %s5164 = scalar_lea.vmem [#allocation5], 16
      %v5165 = vld [vmem:[%s5164] ss:$2 sm:$0xff]
      %s5166 = scalar_lea.vmem [#allocation5], 1
      %v5167 = vld [vmem:[%s5166] ss:$2 sm:$0xff]
      %s5168 = scalar_lea.vmem [#allocation5], 17
      %v5169 = vld [vmem:[%s5168] ss:$2 sm:$0xff]
      %v5170 = vmax.f32 %v5163, %v5167
      %v5171 = vmax.f32 %v5165, %v5169
      %5172 = vst.msk [vmem:[#allocation5] sm:$0xff] %vm2976, 0.0
      %5173 = vst.msk [vmem:[#allocation5 + $0x18] sm:$0xff] %vm2976, 0.0
      %5174 = vst.msk [vmem:[#allocation5 + $0x8] sm:$0xff] %vm2976, %v5170
      %5175 = vst.msk [vmem:[#allocation5 + $0x10] sm:$0xff] %vm2976, %v5171
      %v5176 = vld [vmem:[#allocation5 + $0x5] sm:$0xff]
      %v5177 = vld [vmem:[#allocation5 + $0xd] sm:$0xff]
      %v5178 = vld [vmem:[%s9] sm:$0xff]
      %v5179 = vld [vmem:[#allocation5 + $0x6] sm:$0xff]
      %v5180 = vld [vmem:[#allocation5 + $0xe] sm:$0xff]
      %s5181 = scalar_lea.vmem %s9, 8
      %v5182 = vld [vmem:[%s5181] sm:$0xff]
      %v5184 = vsel %vm2976, %v5179, 0
      %v5187 = vsel %vm2976, %v5180, 0
      %5189 = vmatprep.subr.mxu0 0.0
      %5190 = vmatpush1.msra.mxu0 %v5182
      %5191 = vmatprep.subr.mxu0 0.0
      %5192 = vmatpush1.msra.mxu0 0.0
      %5193 = vmatprep.subr.mxu0 0.0
      %5194 = vmatpush1.msra.mxu0 0.0
      %5195 = vmatprep.subr.mxu0 0.0
      %5196 = vmatpush1.msra.mxu0 0.0
      %5197 = vmatprep.subr.mxu0 0.0
      %5198 = vmatpush1.msra.mxu0 0.0
      %5199 = vmatprep.subr.mxu0 0.0
      %5200 = vmatpush1.msra.mxu0 0.0
      %5201 = vmatprep.subr.mxu0 0.0
      %5202 = vmatpush1.msra.mxu0 0.0
      %5203 = vmatprep.subr.mxu0 0.0
      %5204 = vmatpush1.msra.mxu0 0.0
      %5205 = vmatprep.subr.mxu0 0.0
      %5206 = vmatpush1.msra.mxu0 0.0
      %5207 = vmatprep.subr.mxu0 0.0
      %5208 = vmatpush1.msra.mxu0 0.0
      %5209 = vmatprep.subr.mxu0 0.0
      %5210 = vmatpush1.msra.mxu0 0.0
      %5211 = vmatprep.subr.mxu0 0.0
      %5212 = vmatpush1.msra.mxu0 0.0
      %5213 = vmatprep.subr.mxu0 0.0
      %5214 = vmatpush1.msra.mxu0 0.0
      %5215 = vmatprep.subr.mxu0 0.0
      %5216 = vmatpush1.msra.mxu0 0.0
      %5217 = vmatprep.subr.mxu0 0.0
      %5218 = vmatpush1.msra.mxu0 0.0
      %5219 = vmatprep.subr.mxu0 0.0
      %5220 = vmatpush1.msra.mxu0 0.0
      %5221 = vmatprep.subr.mxu0 0.0
      %5222 = vmatpush1.msra.mxu0 0.0
      %5223 = vmatprep.subr.mxu0 0.0
      %5224 = vmatpush1.msra.mxu0 0.0
      %5225 = vmatprep.subr.mxu0 0.0
      %5226 = vmatpush1.msra.mxu0 0.0
      %5227 = vmatprep.subr.mxu0 0.0
      %5228 = vmatpush1.msra.mxu0 0.0
      %5229 = vmatprep.subr.mxu0 0.0
      %5230 = vmatpush1.msra.mxu0 0.0
      %5231 = vmatprep.subr.mxu0 0.0
      %5232 = vmatpush1.msra.mxu0 0.0
      %5233 = vmatprep.subr.mxu0 0.0
      %5234 = vmatpush1.msra.mxu0 0.0
      %5235 = vmatprep.subr.mxu0 0.0
      %5236 = vmatpush1.msra.mxu0 0.0
      %5237 = vmatprep.subr.mxu0 0.0
      %5238 = vmatpush1.msra.mxu0 0.0
      %5239 = vmatprep.subr.mxu0 0.0
      %5240 = vmatpush1.msra.mxu0 0.0
      %5241 = vmatprep.subr.mxu0 0.0
      %5242 = vmatpush1.msra.mxu0 0.0
      %5243 = vmatprep.subr.mxu0 0.0
      %5244 = vmatpush1.msra.mxu0 0.0
      %5245 = vmatprep.subr.mxu0 0.0
      %5246 = vmatpush1.msra.mxu0 0.0
      %5247 = vmatprep.subr.mxu0 0.0
      %5248 = vmatpush1.msra.mxu0 0.0
      %5249 = vmatprep.subr.mxu0 0.0
      %5250 = vmatpush1.msra.mxu0 0.0
      %5251 = vmatprep.subr.mxu0 0.0
      %5252 = vmatpush1.msra.mxu0 0.0
      %5253 = vmatprep.mubr.f32.mxu0 0.0
      %5254 = vmatmul.mubr.f32.gmra.mrb[0].mxu0 %v5184
      %v5255 = vpop.f32.mrb[0].mxu0
      %v5256 = vadd.f32 0.0, %v5255
      %v5257 = vpop.f32.mrb[0].mxu0
      %5258 = vmatprep.mubr.f32.mxu0 0.0
      %5259 = vmatmul.mubr.f32.gmra.mrb[0].mxu0 %v5187
      %v5260 = vpop.f32.mrb[0].mxu0
      %v5261 = vadd.f32 0.0, %v5260
      %v5262 = vpop.f32.mrb[0].mxu0
      %5263 = vdwg.mxu0
      %v5265 = vsel %vm2976, %v5176, 0
      %v5268 = vsel %vm2976, %v5177, 0
      %5270 = vmatprep.subr.mxu0 0.0
      %5271 = vmatpush1.msra.mxu0 %v5178
      %5272 = vmatprep.subr.mxu0 0.0
      %5273 = vmatpush1.msra.mxu0 0.0
      %5274 = vmatprep.subr.mxu0 0.0
      %5275 = vmatpush1.msra.mxu0 0.0
      %5276 = vmatprep.subr.mxu0 0.0
      %5277 = vmatpush1.msra.mxu0 0.0
      %5278 = vmatprep.subr.mxu0 0.0
      %5279 = vmatpush1.msra.mxu0 0.0
      %5280 = vmatprep.subr.mxu0 0.0
      %5281 = vmatpush1.msra.mxu0 0.0
      %5282 = vmatprep.subr.mxu0 0.0
      %5283 = vmatpush1.msra.mxu0 0.0
      %5284 = vmatprep.subr.mxu0 0.0
      %5285 = vmatpush1.msra.mxu0 0.0
      %5286 = vmatprep.subr.mxu0 0.0
      %5287 = vmatpush1.msra.mxu0 0.0
      %5288 = vmatprep.subr.mxu0 0.0
      %5289 = vmatpush1.msra.mxu0 0.0
      %5290 = vmatprep.subr.mxu0 0.0
      %5291 = vmatpush1.msra.mxu0 0.0
      %5292 = vmatprep.subr.mxu0 0.0
      %5293 = vmatpush1.msra.mxu0 0.0
      %5294 = vmatprep.subr.mxu0 0.0
      %5295 = vmatpush1.msra.mxu0 0.0
      %5296 = vmatprep.subr.mxu0 0.0
      %5297 = vmatpush1.msra.mxu0 0.0
      %5298 = vmatprep.subr.mxu0 0.0
      %5299 = vmatpush1.msra.mxu0 0.0
      %5300 = vmatprep.subr.mxu0 0.0
      %5301 = vmatpush1.msra.mxu0 0.0
      %5302 = vmatprep.subr.mxu0 0.0
      %5303 = vmatpush1.msra.mxu0 0.0
      %5304 = vmatprep.subr.mxu0 0.0
      %5305 = vmatpush1.msra.mxu0 0.0
      %5306 = vmatprep.subr.mxu0 0.0
      %5307 = vmatpush1.msra.mxu0 0.0
      %5308 = vmatprep.subr.mxu0 0.0
      %5309 = vmatpush1.msra.mxu0 0.0
      %5310 = vmatprep.subr.mxu0 0.0
      %5311 = vmatpush1.msra.mxu0 0.0
      %5312 = vmatprep.subr.mxu0 0.0
      %5313 = vmatpush1.msra.mxu0 0.0
      %5314 = vmatprep.subr.mxu0 0.0
      %5315 = vmatpush1.msra.mxu0 0.0
      %5316 = vmatprep.subr.mxu0 0.0
      %5317 = vmatpush1.msra.mxu0 0.0
      %5318 = vmatprep.subr.mxu0 0.0
      %5319 = vmatpush1.msra.mxu0 0.0
      %5320 = vmatprep.subr.mxu0 0.0
      %5321 = vmatpush1.msra.mxu0 0.0
      %5322 = vmatprep.subr.mxu0 0.0
      %5323 = vmatpush1.msra.mxu0 0.0
      %5324 = vmatprep.subr.mxu0 0.0
      %5325 = vmatpush1.msra.mxu0 0.0
      %5326 = vmatprep.subr.mxu0 0.0
      %5327 = vmatpush1.msra.mxu0 0.0
      %5328 = vmatprep.subr.mxu0 0.0
      %5329 = vmatpush1.msra.mxu0 0.0
      %5330 = vmatprep.subr.mxu0 0.0
      %5331 = vmatpush1.msra.mxu0 0.0
      %5332 = vmatprep.subr.mxu0 0.0
      %5333 = vmatpush1.msra.mxu0 0.0
      %5334 = vmatprep.mubr.f32.mxu0 0.0
      %5335 = vmatmul.mubr.f32.gmra.mrb[0].mxu0 %v5265
      %v5336 = vpop.f32.mrb[0].mxu0
      %v5337 = vadd.f32 %v5256, %v5336
      %v5338 = vpop.f32.mrb[0].mxu0
      %5339 = vmatprep.mubr.f32.mxu0 0.0
      %5340 = vmatmul.mubr.f32.gmra.mrb[0].mxu0 %v5268
      %v5341 = vpop.f32.mrb[0].mxu0
      %v5342 = vadd.f32 %v5261, %v5341
      %v5343 = vpop.f32.mrb[0].mxu0
      %5344 = vdwg.mxu0
      %v5345 = vld [vmem:[#allocation5 + $0x7] sm:$0xff]
      %v5346 = vld [vmem:[#allocation5 + $0xf] sm:$0xff]
      %s5347 = scalar_lea.vmem %s9, 16
      %v5348 = vld [vmem:[%s5347] sm:$0xff]
      %v5350 = vsel %vm2976, %v5345, 0
      %v5353 = vsel %vm2976, %v5346, 0
      %5355 = vmatprep.subr.mxu0 0.0
      %5356 = vmatpush1.msra.mxu0 %v5348
      %5357 = vmatprep.subr.mxu0 0.0
      %5358 = vmatpush1.msra.mxu0 0.0
      %5359 = vmatprep.subr.mxu0 0.0
      %5360 = vmatpush1.msra.mxu0 0.0
      %5361 = vmatprep.subr.mxu0 0.0
      %5362 = vmatpush1.msra.mxu0 0.0
      %5363 = vmatprep.subr.mxu0 0.0
      %5364 = vmatpush1.msra.mxu0 0.0
      %5365 = vmatprep.subr.mxu0 0.0
      %5366 = vmatpush1.msra.mxu0 0.0
      %5367 = vmatprep.subr.mxu0 0.0
      %5368 = vmatpush1.msra.mxu0 0.0
      %5369 = vmatprep.subr.mxu0 0.0
      %5370 = vmatpush1.msra.mxu0 0.0
      %5371 = vmatprep.subr.mxu0 0.0
      %5372 = vmatpush1.msra.mxu0 0.0
      %5373 = vmatprep.subr.mxu0 0.0
      %5374 = vmatpush1.msra.mxu0 0.0
      %5375 = vmatprep.subr.mxu0 0.0
      %5376 = vmatpush1.msra.mxu0 0.0
      %5377 = vmatprep.subr.mxu0 0.0
      %5378 = vmatpush1.msra.mxu0 0.0
      %5379 = vmatprep.subr.mxu0 0.0
      %5380 = vmatpush1.msra.mxu0 0.0
      %5381 = vmatprep.subr.mxu0 0.0
      %5382 = vmatpush1.msra.mxu0 0.0
      %5383 = vmatprep.subr.mxu0 0.0
      %5384 = vmatpush1.msra.mxu0 0.0
      %5385 = vmatprep.subr.mxu0 0.0
      %5386 = vmatpush1.msra.mxu0 0.0
      %5387 = vmatprep.subr.mxu0 0.0
      %5388 = vmatpush1.msra.mxu0 0.0
      %5389 = vmatprep.subr.mxu0 0.0
      %5390 = vmatpush1.msra.mxu0 0.0
      %5391 = vmatprep.subr.mxu0 0.0
      %5392 = vmatpush1.msra.mxu0 0.0
      %5393 = vmatprep.subr.mxu0 0.0
      %5394 = vmatpush1.msra.mxu0 0.0
      %5395 = vmatprep.subr.mxu0 0.0
      %5396 = vmatpush1.msra.mxu0 0.0
      %5397 = vmatprep.subr.mxu0 0.0
      %5398 = vmatpush1.msra.mxu0 0.0
      %5399 = vmatprep.subr.mxu0 0.0
      %5400 = vmatpush1.msra.mxu0 0.0
      %5401 = vmatprep.subr.mxu0 0.0
      %5402 = vmatpush1.msra.mxu0 0.0
      %5403 = vmatprep.subr.mxu0 0.0
      %5404 = vmatpush1.msra.mxu0 0.0
      %5405 = vmatprep.subr.mxu0 0.0
      %5406 = vmatpush1.msra.mxu0 0.0
      %5407 = vmatprep.subr.mxu0 0.0
      %5408 = vmatpush1.msra.mxu0 0.0
      %5409 = vmatprep.subr.mxu0 0.0
      %5410 = vmatpush1.msra.mxu0 0.0
      %5411 = vmatprep.subr.mxu0 0.0
      %5412 = vmatpush1.msra.mxu0 0.0
      %5413 = vmatprep.subr.mxu0 0.0
      %5414 = vmatpush1.msra.mxu0 0.0
      %5415 = vmatprep.subr.mxu0 0.0
      %5416 = vmatpush1.msra.mxu0 0.0
      %5417 = vmatprep.subr.mxu0 0.0
      %5418 = vmatpush1.msra.mxu0 0.0
      %5419 = vmatprep.mubr.f32.mxu0 0.0
      %5420 = vmatmul.mubr.f32.gmra.mrb[0].mxu0 %v5350
      %v5421 = vpop.f32.mrb[0].mxu0
      %v5422 = vadd.f32 0.0, %v5421
      %v5423 = vpop.f32.mrb[0].mxu0
      %5424 = vmatprep.mubr.f32.mxu0 0.0
      %5425 = vmatmul.mubr.f32.gmra.mrb[0].mxu0 %v5353
      %v5426 = vpop.f32.mrb[0].mxu0
      %v5427 = vadd.f32 0.0, %v5426
      %v5428 = vpop.f32.mrb[0].mxu0
      %5429 = vdwg.mxu0
      %v5430 = vadd.f32 %v5337, %v5422
      %v5431 = vadd.f32 %v5342, %v5427
      %v5432 = vld [vmem:[#allocation5 + $0x8] sm:$0xff]
      %v5433 = vld [vmem:[#allocation5 + $0x10] sm:$0xff]
      %s5434 = scalar_lea.vmem %s9, 24
      %v5435 = vld [vmem:[%s5434] sm:$0xff]
      %v5437 = vsel %vm2976, %v5432, 0
      %v5440 = vsel %vm2976, %v5433, 0
      %5442 = vmatprep.subr.mxu0 0.0
      %5443 = vmatpush1.msra.mxu0 %v5435
      %5444 = vmatprep.subr.mxu0 0.0
      %5445 = vmatpush1.msra.mxu0 0.0
      %5446 = vmatprep.subr.mxu0 0.0
      %5447 = vmatpush1.msra.mxu0 0.0
      %5448 = vmatprep.subr.mxu0 0.0
      %5449 = vmatpush1.msra.mxu0 0.0
      %5450 = vmatprep.subr.mxu0 0.0
      %5451 = vmatpush1.msra.mxu0 0.0
      %5452 = vmatprep.subr.mxu0 0.0
      %5453 = vmatpush1.msra.mxu0 0.0
      %5454 = vmatprep.subr.mxu0 0.0
      %5455 = vmatpush1.msra.mxu0 0.0
      %5456 = vmatprep.subr.mxu0 0.0
      %5457 = vmatpush1.msra.mxu0 0.0
      %5458 = vmatprep.subr.mxu0 0.0
      %5459 = vmatpush1.msra.mxu0 0.0
      %5460 = vmatprep.subr.mxu0 0.0
      %5461 = vmatpush1.msra.mxu0 0.0
      %5462 = vmatprep.subr.mxu0 0.0
      %5463 = vmatpush1.msra.mxu0 0.0
      %5464 = vmatprep.subr.mxu0 0.0
      %5465 = vmatpush1.msra.mxu0 0.0
      %5466 = vmatprep.subr.mxu0 0.0
      %5467 = vmatpush1.msra.mxu0 0.0
      %5468 = vmatprep.subr.mxu0 0.0
      %5469 = vmatpush1.msra.mxu0 0.0
      %5470 = vmatprep.subr.mxu0 0.0
      %5471 = vmatpush1.msra.mxu0 0.0
      %5472 = vmatprep.subr.mxu0 0.0
      %5473 = vmatpush1.msra.mxu0 0.0
      %5474 = vmatprep.subr.mxu0 0.0
      %5475 = vmatpush1.msra.mxu0 0.0
      %5476 = vmatprep.subr.mxu0 0.0
      %5477 = vmatpush1.msra.mxu0 0.0
      %5478 = vmatprep.subr.mxu0 0.0
      %5479 = vmatpush1.msra.mxu0 0.0
      %5480 = vmatprep.subr.mxu0 0.0
      %5481 = vmatpush1.msra.mxu0 0.0
      %5482 = vmatprep.subr.mxu0 0.0
      %5483 = vmatpush1.msra.mxu0 0.0
      %5484 = vmatprep.subr.mxu0 0.0
      %5485 = vmatpush1.msra.mxu0 0.0
      %5486 = vmatprep.subr.mxu0 0.0
      %5487 = vmatpush1.msra.mxu0 0.0
      %5488 = vmatprep.subr.mxu0 0.0
      %5489 = vmatpush1.msra.mxu0 0.0
      %5490 = vmatprep.subr.mxu0 0.0
      %5491 = vmatpush1.msra.mxu0 0.0
      %5492 = vmatprep.subr.mxu0 0.0
      %5493 = vmatpush1.msra.mxu0 0.0
      %5494 = vmatprep.subr.mxu0 0.0
      %5495 = vmatpush1.msra.mxu0 0.0
      %5496 = vmatprep.subr.mxu0 0.0
      %5497 = vmatpush1.msra.mxu0 0.0
      %5498 = vmatprep.subr.mxu0 0.0
      %5499 = vmatpush1.msra.mxu0 0.0
      %5500 = vmatprep.subr.mxu0 0.0
      %5501 = vmatpush1.msra.mxu0 0.0
      %5502 = vmatprep.subr.mxu0 0.0
      %5503 = vmatpush1.msra.mxu0 0.0
      %5504 = vmatprep.subr.mxu0 0.0
      %5505 = vmatpush1.msra.mxu0 0.0
      %5506 = vmatprep.mubr.f32.mxu0 0.0
      %5507 = vmatmul.mubr.f32.gmra.mrb[0].mxu0 %v5437
      %v5508 = vpop.f32.mrb[0].mxu0
      %v5509 = vadd.f32 0.0, %v5508
      %v5510 = vpop.f32.mrb[0].mxu0
      %5511 = vmatprep.mubr.f32.mxu0 0.0
      %5512 = vmatmul.mubr.f32.gmra.mrb[0].mxu0 %v5440
      %v5513 = vpop.f32.mrb[0].mxu0
      %v5514 = vadd.f32 0.0, %v5513
      %v5515 = vpop.f32.mrb[0].mxu0
      %5516 = vdwg.mxu0
      %v5517 = vadd.f32 %v5430, %v5509
      %v5518 = vadd.f32 %v5431, %v5514
      %v5519 = vld [vmem:[#allocation5 + $0x9] sm:$0xff]
      %v5520 = vld [vmem:[#allocation5 + $0x11] sm:$0xff]
      %s5521 = scalar_lea.vmem %s9, 32
      %v5522 = vld [vmem:[%s5521] sm:$0xff]
      %v5524 = vsel %vm2976, %v5519, 0
      %v5527 = vsel %vm2976, %v5520, 0
      %5529 = vmatprep.subr.mxu0 0.0
      %5530 = vmatpush1.msra.mxu0 %v5522
      %5531 = vmatprep.subr.mxu0 0.0
      %5532 = vmatpush1.msra.mxu0 0.0
      %5533 = vmatprep.subr.mxu0 0.0
      %5534 = vmatpush1.msra.mxu0 0.0
      %5535 = vmatprep.subr.mxu0 0.0
      %5536 = vmatpush1.msra.mxu0 0.0
      %5537 = vmatprep.subr.mxu0 0.0
      %5538 = vmatpush1.msra.mxu0 0.0
      %5539 = vmatprep.subr.mxu0 0.0
      %5540 = vmatpush1.msra.mxu0 0.0
      %5541 = vmatprep.subr.mxu0 0.0
      %5542 = vmatpush1.msra.mxu0 0.0
      %5543 = vmatprep.subr.mxu0 0.0
      %5544 = vmatpush1.msra.mxu0 0.0
      %5545 = vmatprep.subr.mxu0 0.0
      %5546 = vmatpush1.msra.mxu0 0.0
      %5547 = vmatprep.subr.mxu0 0.0
      %5548 = vmatpush1.msra.mxu0 0.0
      %5549 = vmatprep.subr.mxu0 0.0
      %5550 = vmatpush1.msra.mxu0 0.0
      %5551 = vmatprep.subr.mxu0 0.0
      %5552 = vmatpush1.msra.mxu0 0.0
      %5553 = vmatprep.subr.mxu0 0.0
      %5554 = vmatpush1.msra.mxu0 0.0
      %5555 = vmatprep.subr.mxu0 0.0
      %5556 = vmatpush1.msra.mxu0 0.0
      %5557 = vmatprep.subr.mxu0 0.0
      %5558 = vmatpush1.msra.mxu0 0.0
      %5559 = vmatprep.subr.mxu0 0.0
      %5560 = vmatpush1.msra.mxu0 0.0
      %5561 = vmatprep.subr.mxu0 0.0
      %5562 = vmatpush1.msra.mxu0 0.0
      %5563 = vmatprep.subr.mxu0 0.0
      %5564 = vmatpush1.msra.mxu0 0.0
      %5565 = vmatprep.subr.mxu0 0.0
      %5566 = vmatpush1.msra.mxu0 0.0
      %5567 = vmatprep.subr.mxu0 0.0
      %5568 = vmatpush1.msra.mxu0 0.0
      %5569 = vmatprep.subr.mxu0 0.0
      %5570 = vmatpush1.msra.mxu0 0.0
      %5571 = vmatprep.subr.mxu0 0.0
      %5572 = vmatpush1.msra.mxu0 0.0
      %5573 = vmatprep.subr.mxu0 0.0
      %5574 = vmatpush1.msra.mxu0 0.0
      %5575 = vmatprep.subr.mxu0 0.0
      %5576 = vmatpush1.msra.mxu0 0.0
      %5577 = vmatprep.subr.mxu0 0.0
      %5578 = vmatpush1.msra.mxu0 0.0
      %5579 = vmatprep.subr.mxu0 0.0
      %5580 = vmatpush1.msra.mxu0 0.0
      %5581 = vmatprep.subr.mxu0 0.0
      %5582 = vmatpush1.msra.mxu0 0.0
      %5583 = vmatprep.subr.mxu0 0.0
      %5584 = vmatpush1.msra.mxu0 0.0
      %5585 = vmatprep.subr.mxu0 0.0
      %5586 = vmatpush1.msra.mxu0 0.0
      %5587 = vmatprep.subr.mxu0 0.0
      %5588 = vmatpush1.msra.mxu0 0.0
      %5589 = vmatprep.subr.mxu0 0.0
      %5590 = vmatpush1.msra.mxu0 0.0
      %5591 = vmatprep.subr.mxu0 0.0
      %5592 = vmatpush1.msra.mxu0 0.0
      %5593 = vmatprep.mubr.f32.mxu0 0.0
      %5594 = vmatmul.mubr.f32.gmra.mrb[0].mxu0 %v5524
      %v5595 = vpop.f32.mrb[0].mxu0
      %v5596 = vadd.f32 0.0, %v5595
      %v5597 = vpop.f32.mrb[0].mxu0
      %5598 = vmatprep.mubr.f32.mxu0 0.0
      %5599 = vmatmul.mubr.f32.gmra.mrb[0].mxu0 %v5527
      %v5600 = vpop.f32.mrb[0].mxu0
      %v5601 = vadd.f32 0.0, %v5600
      %v5602 = vpop.f32.mrb[0].mxu0
      %5603 = vdwg.mxu0
      %v5604 = vadd.f32 %v5517, %v5596
      %v5605 = vadd.f32 %v5518, %v5601
      %v5606 = vld [vmem:[#allocation5 + $0xa] sm:$0xff]
      %v5607 = vld [vmem:[#allocation5 + $0x12] sm:$0xff]
      %s5608 = scalar_lea.vmem %s9, 40
      %v5609 = vld [vmem:[%s5608] sm:$0xff]
      %v5611 = vsel %vm2976, %v5606, 0
      %v5614 = vsel %vm2976, %v5607, 0
      %5616 = vmatprep.subr.mxu0 0.0
      %5617 = vmatpush1.msra.mxu0 %v5609
      %5618 = vmatprep.subr.mxu0 0.0
      %5619 = vmatpush1.msra.mxu0 0.0
      %5620 = vmatprep.subr.mxu0 0.0
      %5621 = vmatpush1.msra.mxu0 0.0
      %5622 = vmatprep.subr.mxu0 0.0
      %5623 = vmatpush1.msra.mxu0 0.0
      %5624 = vmatprep.subr.mxu0 0.0
      %5625 = vmatpush1.msra.mxu0 0.0
      %5626 = vmatprep.subr.mxu0 0.0
      %5627 = vmatpush1.msra.mxu0 0.0
      %5628 = vmatprep.subr.mxu0 0.0
      %5629 = vmatpush1.msra.mxu0 0.0
      %5630 = vmatprep.subr.mxu0 0.0
      %5631 = vmatpush1.msra.mxu0 0.0
      %5632 = vmatprep.subr.mxu0 0.0
      %5633 = vmatpush1.msra.mxu0 0.0
      %5634 = vmatprep.subr.mxu0 0.0
      %5635 = vmatpush1.msra.mxu0 0.0
      %5636 = vmatprep.subr.mxu0 0.0
      %5637 = vmatpush1.msra.mxu0 0.0
      %5638 = vmatprep.subr.mxu0 0.0
      %5639 = vmatpush1.msra.mxu0 0.0
      %5640 = vmatprep.subr.mxu0 0.0
      %5641 = vmatpush1.msra.mxu0 0.0
      %5642 = vmatprep.subr.mxu0 0.0
      %5643 = vmatpush1.msra.mxu0 0.0
      %5644 = vmatprep.subr.mxu0 0.0
      %5645 = vmatpush1.msra.mxu0 0.0
      %5646 = vmatprep.subr.mxu0 0.0
      %5647 = vmatpush1.msra.mxu0 0.0
      %5648 = vmatprep.subr.mxu0 0.0
      %5649 = vmatpush1.msra.mxu0 0.0
      %5650 = vmatprep.subr.mxu0 0.0
      %5651 = vmatpush1.msra.mxu0 0.0
      %5652 = vmatprep.subr.mxu0 0.0
      %5653 = vmatpush1.msra.mxu0 0.0
      %5654 = vmatprep.subr.mxu0 0.0
      %5655 = vmatpush1.msra.mxu0 0.0
      %5656 = vmatprep.subr.mxu0 0.0
      %5657 = vmatpush1.msra.mxu0 0.0
      %5658 = vmatprep.subr.mxu0 0.0
      %5659 = vmatpush1.msra.mxu0 0.0
      %5660 = vmatprep.subr.mxu0 0.0
      %5661 = vmatpush1.msra.mxu0 0.0
      %5662 = vmatprep.subr.mxu0 0.0
      %5663 = vmatpush1.msra.mxu0 0.0
      %5664 = vmatprep.subr.mxu0 0.0
      %5665 = vmatpush1.msra.mxu0 0.0
      %5666 = vmatprep.subr.mxu0 0.0
      %5667 = vmatpush1.msra.mxu0 0.0
      %5668 = vmatprep.subr.mxu0 0.0
      %5669 = vmatpush1.msra.mxu0 0.0
      %5670 = vmatprep.subr.mxu0 0.0
      %5671 = vmatpush1.msra.mxu0 0.0
      %5672 = vmatprep.subr.mxu0 0.0
      %5673 = vmatpush1.msra.mxu0 0.0
      %5674 = vmatprep.subr.mxu0 0.0
      %5675 = vmatpush1.msra.mxu0 0.0
      %5676 = vmatprep.subr.mxu0 0.0
      %5677 = vmatpush1.msra.mxu0 0.0
      %5678 = vmatprep.subr.mxu0 0.0
      %5679 = vmatpush1.msra.mxu0 0.0
      %5680 = vmatprep.mubr.f32.mxu0 0.0
      %5681 = vmatmul.mubr.f32.gmra.mrb[0].mxu0 %v5611
      %v5682 = vpop.f32.mrb[0].mxu0
      %v5683 = vadd.f32 0.0, %v5682
      %v5684 = vpop.f32.mrb[0].mxu0
      %5685 = vmatprep.mubr.f32.mxu0 0.0
      %5686 = vmatmul.mubr.f32.gmra.mrb[0].mxu0 %v5614
      %v5687 = vpop.f32.mrb[0].mxu0
      %v5688 = vadd.f32 0.0, %v5687
      %v5689 = vpop.f32.mrb[0].mxu0
      %5690 = vdwg.mxu0
      %v5691 = vadd.f32 %v5604, %v5683
      %v5692 = vadd.f32 %v5605, %v5688
      %v5693 = vld [vmem:[#allocation5 + $0xb] sm:$0xff]
      %v5694 = vld [vmem:[#allocation5 + $0x13] sm:$0xff]
      %s5695 = scalar_lea.vmem %s9, 48
      %v5696 = vld [vmem:[%s5695] sm:$0xff]
      %v5698 = vsel %vm2976, %v5693, 0
      %v5701 = vsel %vm2976, %v5694, 0
      %5703 = vmatprep.subr.mxu0 0.0
      %5704 = vmatpush1.msra.mxu0 %v5696
      %5705 = vmatprep.subr.mxu0 0.0
      %5706 = vmatpush1.msra.mxu0 0.0
      %5707 = vmatprep.subr.mxu0 0.0
      %5708 = vmatpush1.msra.mxu0 0.0
      %5709 = vmatprep.subr.mxu0 0.0
      %5710 = vmatpush1.msra.mxu0 0.0
      %5711 = vmatprep.subr.mxu0 0.0
      %5712 = vmatpush1.msra.mxu0 0.0
      %5713 = vmatprep.subr.mxu0 0.0
      %5714 = vmatpush1.msra.mxu0 0.0
      %5715 = vmatprep.subr.mxu0 0.0
      %5716 = vmatpush1.msra.mxu0 0.0
      %5717 = vmatprep.subr.mxu0 0.0
      %5718 = vmatpush1.msra.mxu0 0.0
      %5719 = vmatprep.subr.mxu0 0.0
      %5720 = vmatpush1.msra.mxu0 0.0
      %5721 = vmatprep.subr.mxu0 0.0
      %5722 = vmatpush1.msra.mxu0 0.0
      %5723 = vmatprep.subr.mxu0 0.0
      %5724 = vmatpush1.msra.mxu0 0.0
      %5725 = vmatprep.subr.mxu0 0.0
      %5726 = vmatpush1.msra.mxu0 0.0
      %5727 = vmatprep.subr.mxu0 0.0
      %5728 = vmatpush1.msra.mxu0 0.0
      %5729 = vmatprep.subr.mxu0 0.0
      %5730 = vmatpush1.msra.mxu0 0.0
      %5731 = vmatprep.subr.mxu0 0.0
      %5732 = vmatpush1.msra.mxu0 0.0
      %5733 = vmatprep.subr.mxu0 0.0
      %5734 = vmatpush1.msra.mxu0 0.0
      %5735 = vmatprep.subr.mxu0 0.0
      %5736 = vmatpush1.msra.mxu0 0.0
      %5737 = vmatprep.subr.mxu0 0.0
      %5738 = vmatpush1.msra.mxu0 0.0
      %5739 = vmatprep.subr.mxu0 0.0
      %5740 = vmatpush1.msra.mxu0 0.0
      %5741 = vmatprep.subr.mxu0 0.0
      %5742 = vmatpush1.msra.mxu0 0.0
      %5743 = vmatprep.subr.mxu0 0.0
      %5744 = vmatpush1.msra.mxu0 0.0
      %5745 = vmatprep.subr.mxu0 0.0
      %5746 = vmatpush1.msra.mxu0 0.0
      %5747 = vmatprep.subr.mxu0 0.0
      %5748 = vmatpush1.msra.mxu0 0.0
      %5749 = vmatprep.subr.mxu0 0.0
      %5750 = vmatpush1.msra.mxu0 0.0
      %5751 = vmatprep.subr.mxu0 0.0
      %5752 = vmatpush1.msra.mxu0 0.0
      %5753 = vmatprep.subr.mxu0 0.0
      %5754 = vmatpush1.msra.mxu0 0.0
      %5755 = vmatprep.subr.mxu0 0.0
      %5756 = vmatpush1.msra.mxu0 0.0
      %5757 = vmatprep.subr.mxu0 0.0
      %5758 = vmatpush1.msra.mxu0 0.0
      %5759 = vmatprep.subr.mxu0 0.0
      %5760 = vmatpush1.msra.mxu0 0.0
      %5761 = vmatprep.subr.mxu0 0.0
      %5762 = vmatpush1.msra.mxu0 0.0
      %5763 = vmatprep.subr.mxu0 0.0
      %5764 = vmatpush1.msra.mxu0 0.0
      %5765 = vmatprep.subr.mxu0 0.0
      %5766 = vmatpush1.msra.mxu0 0.0
      %5767 = vmatprep.mubr.f32.mxu0 0.0
      %5768 = vmatmul.mubr.f32.gmra.mrb[0].mxu0 %v5698
      %v5769 = vpop.f32.mrb[0].mxu0
      %v5770 = vadd.f32 0.0, %v5769
      %v5771 = vpop.f32.mrb[0].mxu0
      %5772 = vmatprep.mubr.f32.mxu0 0.0
      %5773 = vmatmul.mubr.f32.gmra.mrb[0].mxu0 %v5701
      %v5774 = vpop.f32.mrb[0].mxu0
      %v5775 = vadd.f32 0.0, %v5774
      %v5776 = vpop.f32.mrb[0].mxu0
      %5777 = vdwg.mxu0
      %v5778 = vadd.f32 %v5691, %v5770
      %v5779 = vadd.f32 %v5692, %v5775
      %v5780 = vld [vmem:[#allocation5 + $0xc] sm:$0xff]
      %v5781 = vld [vmem:[#allocation5 + $0x14] sm:$0xff]
      %s5782 = scalar_lea.vmem %s9, 56
      %v5783 = vld [vmem:[%s5782] sm:$0xff]
      %v5785 = vsel %vm2976, %v5780, 0
      %v5788 = vsel %vm2976, %v5781, 0
      %5790 = vmatprep.subr.mxu0 0.0
      %5791 = vmatpush1.msra.mxu0 %v5783
      %5792 = vmatprep.subr.mxu0 0.0
      %5793 = vmatpush1.msra.mxu0 0.0
      %5794 = vmatprep.subr.mxu0 0.0
      %5795 = vmatpush1.msra.mxu0 0.0
      %5796 = vmatprep.subr.mxu0 0.0
      %5797 = vmatpush1.msra.mxu0 0.0
      %5798 = vmatprep.subr.mxu0 0.0
      %5799 = vmatpush1.msra.mxu0 0.0
      %5800 = vmatprep.subr.mxu0 0.0
      %5801 = vmatpush1.msra.mxu0 0.0
      %5802 = vmatprep.subr.mxu0 0.0
      %5803 = vmatpush1.msra.mxu0 0.0
      %5804 = vmatprep.subr.mxu0 0.0
      %5805 = vmatpush1.msra.mxu0 0.0
      %5806 = vmatprep.subr.mxu0 0.0
      %5807 = vmatpush1.msra.mxu0 0.0
      %5808 = vmatprep.subr.mxu0 0.0
      %5809 = vmatpush1.msra.mxu0 0.0
      %5810 = vmatprep.subr.mxu0 0.0
      %5811 = vmatpush1.msra.mxu0 0.0
      %5812 = vmatprep.subr.mxu0 0.0
      %5813 = vmatpush1.msra.mxu0 0.0
      %5814 = vmatprep.subr.mxu0 0.0
      %5815 = vmatpush1.msra.mxu0 0.0
      %5816 = vmatprep.subr.mxu0 0.0
      %5817 = vmatpush1.msra.mxu0 0.0
      %5818 = vmatprep.subr.mxu0 0.0
      %5819 = vmatpush1.msra.mxu0 0.0
      %5820 = vmatprep.subr.mxu0 0.0
      %5821 = vmatpush1.msra.mxu0 0.0
      %5822 = vmatprep.subr.mxu0 0.0
      %5823 = vmatpush1.msra.mxu0 0.0
      %5824 = vmatprep.subr.mxu0 0.0
      %5825 = vmatpush1.msra.mxu0 0.0
      %5826 = vmatprep.subr.mxu0 0.0
      %5827 = vmatpush1.msra.mxu0 0.0
      %5828 = vmatprep.subr.mxu0 0.0
      %5829 = vmatpush1.msra.mxu0 0.0
      %5830 = vmatprep.subr.mxu0 0.0
      %5831 = vmatpush1.msra.mxu0 0.0
      %5832 = vmatprep.subr.mxu0 0.0
      %5833 = vmatpush1.msra.mxu0 0.0
      %5834 = vmatprep.subr.mxu0 0.0
      %5835 = vmatpush1.msra.mxu0 0.0
      %5836 = vmatprep.subr.mxu0 0.0
      %5837 = vmatpush1.msra.mxu0 0.0
      %5838 = vmatprep.subr.mxu0 0.0
      %5839 = vmatpush1.msra.mxu0 0.0
      %5840 = vmatprep.subr.mxu0 0.0
      %5841 = vmatpush1.msra.mxu0 0.0
      %5842 = vmatprep.subr.mxu0 0.0
      %5843 = vmatpush1.msra.mxu0 0.0
      %5844 = vmatprep.subr.mxu0 0.0
      %5845 = vmatpush1.msra.mxu0 0.0
      %5846 = vmatprep.subr.mxu0 0.0
      %5847 = vmatpush1.msra.mxu0 0.0
      %5848 = vmatprep.subr.mxu0 0.0
      %5849 = vmatpush1.msra.mxu0 0.0
      %5850 = vmatprep.subr.mxu0 0.0
      %5851 = vmatpush1.msra.mxu0 0.0
      %5852 = vmatprep.subr.mxu0 0.0
      %5853 = vmatpush1.msra.mxu0 0.0
      %5854 = vmatprep.mubr.f32.mxu0 0.0
      %5855 = vmatmul.mubr.f32.gmra.mrb[0].mxu0 %v5785
      %v5856 = vpop.f32.mrb[0].mxu0
      %v5857 = vadd.f32 0.0, %v5856
      %v5858 = vpop.f32.mrb[0].mxu0
      %5859 = vmatprep.mubr.f32.mxu0 0.0
      %5860 = vmatmul.mubr.f32.gmra.mrb[0].mxu0 %v5788
      %v5861 = vpop.f32.mrb[0].mxu0
      %v5862 = vadd.f32 0.0, %v5861
      %v5863 = vpop.f32.mrb[0].mxu0
      %5864 = vdwg.mxu0
      %v5865 = vadd.f32 %v5778, %v5857
      %v5866 = vadd.f32 %v5779, %v5862
      %v5867 = vld [vmem:[%s10] sm:$0x1]
      %v5868 = vlaneseq
      %v5869 = vshrl.u32 %v5868, 7
      %v5870 = vsub.s32 0, %v5869
      %v5871 = vrot.slane %v5867, %v5870
      %v5872 = vadd.f32 %v5865, %v5871
      %v5873 = vadd.f32 %v5866, %v5871
      %v5874 = vmax.f32 %v5872, 0.0
      %v5875 = vmax.f32 %v5873, 0.0
      %v5876 = vld [vmem:[%s10 + $0x1] sm:$0x1]
      %v5877 = vlaneseq
      %v5878 = vshrl.u32 %v5877, 7
      %v5879 = vsub.s32 0, %v5878
      %v5880 = vrot.slane %v5876, %v5879
      %v5881 = vmul.f32 %v5874, %v5880
      %v5882 = vmul.f32 %v5875, %v5880
      %v5883 = vld [vmem:[%s10 + $0x2] sm:$0x1]
      %v5884 = vlaneseq
      %v5885 = vshrl.u32 %v5884, 7
      %v5886 = vsub.s32 0, %v5885
      %v5887 = vrot.slane %v5883, %v5886
      %v5888 = vadd.f32 %v5881, %v5887
      %v5889 = vadd.f32 %v5882, %v5887
      %5890 = vst.msk [vmem:[#allocation6] sm:$0xff] %vm532, %v5888
      %5891 = vst.msk [vmem:[#allocation6 + $0x8] sm:$0xff] %vm532, %v5889
      %v5892 = vld [vmem:[#allocation6] ss:$2 sm:$0xff]
      %s5893 = scalar_lea.vmem [#allocation6], 1
      %v5894 = vld [vmem:[%s5893] ss:$2 sm:$0xff]
      %v5895 = vmax.f32 %v5892, %v5894
      %5896 = vst.msk [vmem:[#allocation6] sm:$0xff] %vm532, 0.0
      %5897 = vst.msk [vmem:[#allocation6 + $0x10] sm:$0xff] %vm532, 0.0
      %5898 = vst.msk [vmem:[#allocation6 + $0x8] sm:$0xff] %vm532, %v5895
      %v5899 = vld [vmem:[#allocation6 + $0x5] sm:$0xff]
      %v5900 = vld [vmem:[%s11] sm:$0xff]
      %v5901 = vld [vmem:[%s11 + $0x8] sm:$0xff]
      %v5902 = vld [vmem:[#allocation6 + $0x6] sm:$0xff]
      %s5903 = scalar_lea.vmem %s11, 16
      %v5904 = vld [vmem:[%s5903] sm:$0xff]
      %v5905 = vld [vmem:[%s5903 + $0x8] sm:$0xff]
      %v5907 = vsel %vm532, %v5902, 0
      %5909 = vmatprep.subr.mxu0 0.0
      %5910 = vmatpush1.msra.mxu0 %v5904
      %5911 = vmatprep.subr.mxu0 0.0
      %5912 = vmatpush1.msra.mxu0 %v5905
      %5913 = vmatprep.subr.mxu0 0.0
      %5914 = vmatpush1.msra.mxu0 0.0
      %5915 = vmatprep.subr.mxu0 0.0
      %5916 = vmatpush1.msra.mxu0 0.0
      %5917 = vmatprep.subr.mxu0 0.0
      %5918 = vmatpush1.msra.mxu0 0.0
      %5919 = vmatprep.subr.mxu0 0.0
      %5920 = vmatpush1.msra.mxu0 0.0
      %5921 = vmatprep.subr.mxu0 0.0
      %5922 = vmatpush1.msra.mxu0 0.0
      %5923 = vmatprep.subr.mxu0 0.0
      %5924 = vmatpush1.msra.mxu0 0.0
      %5925 = vmatprep.subr.mxu0 0.0
      %5926 = vmatpush1.msra.mxu0 0.0
      %5927 = vmatprep.subr.mxu0 0.0
      %5928 = vmatpush1.msra.mxu0 0.0
      %5929 = vmatprep.subr.mxu0 0.0
      %5930 = vmatpush1.msra.mxu0 0.0
      %5931 = vmatprep.subr.mxu0 0.0
      %5932 = vmatpush1.msra.mxu0 0.0
      %5933 = vmatprep.subr.mxu0 0.0
      %5934 = vmatpush1.msra.mxu0 0.0
      %5935 = vmatprep.subr.mxu0 0.0
      %5936 = vmatpush1.msra.mxu0 0.0
      %5937 = vmatprep.subr.mxu0 0.0
      %5938 = vmatpush1.msra.mxu0 0.0
      %5939 = vmatprep.subr.mxu0 0.0
      %5940 = vmatpush1.msra.mxu0 0.0
      %5941 = vmatprep.subr.mxu0 0.0
      %5942 = vmatpush1.msra.mxu0 0.0
      %5943 = vmatprep.subr.mxu0 0.0
      %5944 = vmatpush1.msra.mxu0 0.0
      %5945 = vmatprep.subr.mxu0 0.0
      %5946 = vmatpush1.msra.mxu0 0.0
      %5947 = vmatprep.subr.mxu0 0.0
      %5948 = vmatpush1.msra.mxu0 0.0
      %5949 = vmatprep.subr.mxu0 0.0
      %5950 = vmatpush1.msra.mxu0 0.0
      %5951 = vmatprep.subr.mxu0 0.0
      %5952 = vmatpush1.msra.mxu0 0.0
      %5953 = vmatprep.subr.mxu0 0.0
      %5954 = vmatpush1.msra.mxu0 0.0
      %5955 = vmatprep.subr.mxu0 0.0
      %5956 = vmatpush1.msra.mxu0 0.0
      %5957 = vmatprep.subr.mxu0 0.0
      %5958 = vmatpush1.msra.mxu0 0.0
      %5959 = vmatprep.subr.mxu0 0.0
      %5960 = vmatpush1.msra.mxu0 0.0
      %5961 = vmatprep.subr.mxu0 0.0
      %5962 = vmatpush1.msra.mxu0 0.0
      %5963 = vmatprep.subr.mxu0 0.0
      %5964 = vmatpush1.msra.mxu0 0.0
      %5965 = vmatprep.subr.mxu0 0.0
      %5966 = vmatpush1.msra.mxu0 0.0
      %5967 = vmatprep.subr.mxu0 0.0
      %5968 = vmatpush1.msra.mxu0 0.0
      %5969 = vmatprep.subr.mxu0 0.0
      %5970 = vmatpush1.msra.mxu0 0.0
      %5971 = vmatprep.subr.mxu0 0.0
      %5972 = vmatpush1.msra.mxu0 0.0
      %5973 = vmatprep.mubr.f32.mxu0 0.0
      %5974 = vmatmul.mubr.f32.gmra.mrb[0].mxu0 %v5907
      %v5975 = vpop.f32.mrb[0].mxu0
      %v5976 = vadd.f32 0.0, %v5975
      %v5977 = vpop.f32.mrb[0].mxu0
      %5978 = vdwg.mxu0
      %v5980 = vsel %vm532, %v5899, 0
      %5982 = vmatprep.subr.mxu0 0.0
      %5983 = vmatpush1.msra.mxu0 %v5900
      %5984 = vmatprep.subr.mxu0 0.0
      %5985 = vmatpush1.msra.mxu0 %v5901
      %5986 = vmatprep.subr.mxu0 0.0
      %5987 = vmatpush1.msra.mxu0 0.0
      %5988 = vmatprep.subr.mxu0 0.0
      %5989 = vmatpush1.msra.mxu0 0.0
      %5990 = vmatprep.subr.mxu0 0.0
      %5991 = vmatpush1.msra.mxu0 0.0
      %5992 = vmatprep.subr.mxu0 0.0
      %5993 = vmatpush1.msra.mxu0 0.0
      %5994 = vmatprep.subr.mxu0 0.0
      %5995 = vmatpush1.msra.mxu0 0.0
      %5996 = vmatprep.subr.mxu0 0.0
      %5997 = vmatpush1.msra.mxu0 0.0
      %5998 = vmatprep.subr.mxu0 0.0
      %5999 = vmatpush1.msra.mxu0 0.0
      %6000 = vmatprep.subr.mxu0 0.0
      %6001 = vmatpush1.msra.mxu0 0.0
      %6002 = vmatprep.subr.mxu0 0.0
      %6003 = vmatpush1.msra.mxu0 0.0
      %6004 = vmatprep.subr.mxu0 0.0
      %6005 = vmatpush1.msra.mxu0 0.0
      %6006 = vmatprep.subr.mxu0 0.0
      %6007 = vmatpush1.msra.mxu0 0.0
      %6008 = vmatprep.subr.mxu0 0.0
      %6009 = vmatpush1.msra.mxu0 0.0
      %6010 = vmatprep.subr.mxu0 0.0
      %6011 = vmatpush1.msra.mxu0 0.0
      %6012 = vmatprep.subr.mxu0 0.0
      %6013 = vmatpush1.msra.mxu0 0.0
      %6014 = vmatprep.subr.mxu0 0.0
      %6015 = vmatpush1.msra.mxu0 0.0
      %6016 = vmatprep.subr.mxu0 0.0
      %6017 = vmatpush1.msra.mxu0 0.0
      %6018 = vmatprep.subr.mxu0 0.0
      %6019 = vmatpush1.msra.mxu0 0.0
      %6020 = vmatprep.subr.mxu0 0.0
      %6021 = vmatpush1.msra.mxu0 0.0
      %6022 = vmatprep.subr.mxu0 0.0
      %6023 = vmatpush1.msra.mxu0 0.0
      %6024 = vmatprep.subr.mxu0 0.0
      %6025 = vmatpush1.msra.mxu0 0.0
      %6026 = vmatprep.subr.mxu0 0.0
      %6027 = vmatpush1.msra.mxu0 0.0
      %6028 = vmatprep.subr.mxu0 0.0
      %6029 = vmatpush1.msra.mxu0 0.0
      %6030 = vmatprep.subr.mxu0 0.0
      %6031 = vmatpush1.msra.mxu0 0.0
      %6032 = vmatprep.subr.mxu0 0.0
      %6033 = vmatpush1.msra.mxu0 0.0
      %6034 = vmatprep.subr.mxu0 0.0
      %6035 = vmatpush1.msra.mxu0 0.0
      %6036 = vmatprep.subr.mxu0 0.0
      %6037 = vmatpush1.msra.mxu0 0.0
      %6038 = vmatprep.subr.mxu0 0.0
      %6039 = vmatpush1.msra.mxu0 0.0
      %6040 = vmatprep.subr.mxu0 0.0
      %6041 = vmatpush1.msra.mxu0 0.0
      %6042 = vmatprep.subr.mxu0 0.0
      %6043 = vmatpush1.msra.mxu0 0.0
      %6044 = vmatprep.subr.mxu0 0.0
      %6045 = vmatpush1.msra.mxu0 0.0
      %6046 = vmatprep.mubr.f32.mxu0 0.0
      %6047 = vmatmul.mubr.f32.gmra.mrb[0].mxu0 %v5980
      %v6048 = vpop.f32.mrb[0].mxu0
      %v6049 = vadd.f32 %v5976, %v6048
      %v6050 = vpop.f32.mrb[0].mxu0
      %6051 = vdwg.mxu0
      %v6052 = vld [vmem:[#allocation6 + $0x7] sm:$0xff]
      %s6053 = scalar_lea.vmem %s11, 32
      %v6054 = vld [vmem:[%s6053] sm:$0xff]
      %v6055 = vld [vmem:[%s6053 + $0x8] sm:$0xff]
      %v6057 = vsel %vm532, %v6052, 0
      %6059 = vmatprep.subr.mxu0 0.0
      %6060 = vmatpush1.msra.mxu0 %v6054
      %6061 = vmatprep.subr.mxu0 0.0
      %6062 = vmatpush1.msra.mxu0 %v6055
      %6063 = vmatprep.subr.mxu0 0.0
      %6064 = vmatpush1.msra.mxu0 0.0
      %6065 = vmatprep.subr.mxu0 0.0
      %6066 = vmatpush1.msra.mxu0 0.0
      %6067 = vmatprep.subr.mxu0 0.0
      %6068 = vmatpush1.msra.mxu0 0.0
      %6069 = vmatprep.subr.mxu0 0.0
      %6070 = vmatpush1.msra.mxu0 0.0
      %6071 = vmatprep.subr.mxu0 0.0
      %6072 = vmatpush1.msra.mxu0 0.0
      %6073 = vmatprep.subr.mxu0 0.0
      %6074 = vmatpush1.msra.mxu0 0.0
      %6075 = vmatprep.subr.mxu0 0.0
      %6076 = vmatpush1.msra.mxu0 0.0
      %6077 = vmatprep.subr.mxu0 0.0
      %6078 = vmatpush1.msra.mxu0 0.0
      %6079 = vmatprep.subr.mxu0 0.0
      %6080 = vmatpush1.msra.mxu0 0.0
      %6081 = vmatprep.subr.mxu0 0.0
      %6082 = vmatpush1.msra.mxu0 0.0
      %6083 = vmatprep.subr.mxu0 0.0
      %6084 = vmatpush1.msra.mxu0 0.0
      %6085 = vmatprep.subr.mxu0 0.0
      %6086 = vmatpush1.msra.mxu0 0.0
      %6087 = vmatprep.subr.mxu0 0.0
      %6088 = vmatpush1.msra.mxu0 0.0
      %6089 = vmatprep.subr.mxu0 0.0
      %6090 = vmatpush1.msra.mxu0 0.0
      %6091 = vmatprep.subr.mxu0 0.0
      %6092 = vmatpush1.msra.mxu0 0.0
      %6093 = vmatprep.subr.mxu0 0.0
      %6094 = vmatpush1.msra.mxu0 0.0
      %6095 = vmatprep.subr.mxu0 0.0
      %6096 = vmatpush1.msra.mxu0 0.0
      %6097 = vmatprep.subr.mxu0 0.0
      %6098 = vmatpush1.msra.mxu0 0.0
      %6099 = vmatprep.subr.mxu0 0.0
      %6100 = vmatpush1.msra.mxu0 0.0
      %6101 = vmatprep.subr.mxu0 0.0
      %6102 = vmatpush1.msra.mxu0 0.0
      %6103 = vmatprep.subr.mxu0 0.0
      %6104 = vmatpush1.msra.mxu0 0.0
      %6105 = vmatprep.subr.mxu0 0.0
      %6106 = vmatpush1.msra.mxu0 0.0
      %6107 = vmatprep.subr.mxu0 0.0
      %6108 = vmatpush1.msra.mxu0 0.0
      %6109 = vmatprep.subr.mxu0 0.0
      %6110 = vmatpush1.msra.mxu0 0.0
      %6111 = vmatprep.subr.mxu0 0.0
      %6112 = vmatpush1.msra.mxu0 0.0
      %6113 = vmatprep.subr.mxu0 0.0
      %6114 = vmatpush1.msra.mxu0 0.0
      %6115 = vmatprep.subr.mxu0 0.0
      %6116 = vmatpush1.msra.mxu0 0.0
      %6117 = vmatprep.subr.mxu0 0.0
      %6118 = vmatpush1.msra.mxu0 0.0
      %6119 = vmatprep.subr.mxu0 0.0
      %6120 = vmatpush1.msra.mxu0 0.0
      %6121 = vmatprep.subr.mxu0 0.0
      %6122 = vmatpush1.msra.mxu0 0.0
      %6123 = vmatprep.mubr.f32.mxu0 0.0
      %6124 = vmatmul.mubr.f32.gmra.mrb[0].mxu0 %v6057
      %v6125 = vpop.f32.mrb[0].mxu0
      %v6126 = vadd.f32 0.0, %v6125
      %v6127 = vpop.f32.mrb[0].mxu0
      %6128 = vdwg.mxu0
      %v6129 = vadd.f32 %v6049, %v6126
      %v6130 = vld [vmem:[#allocation6 + $0x8] sm:$0xff]
      %s6131 = scalar_lea.vmem %s11, 48
      %v6132 = vld [vmem:[%s6131] sm:$0xff]
      %v6133 = vld [vmem:[%s6131 + $0x8] sm:$0xff]
      %v6135 = vsel %vm532, %v6130, 0
      %6137 = vmatprep.subr.mxu0 0.0
      %6138 = vmatpush1.msra.mxu0 %v6132
      %6139 = vmatprep.subr.mxu0 0.0
      %6140 = vmatpush1.msra.mxu0 %v6133
      %6141 = vmatprep.subr.mxu0 0.0
      %6142 = vmatpush1.msra.mxu0 0.0
      %6143 = vmatprep.subr.mxu0 0.0
      %6144 = vmatpush1.msra.mxu0 0.0
      %6145 = vmatprep.subr.mxu0 0.0
      %6146 = vmatpush1.msra.mxu0 0.0
      %6147 = vmatprep.subr.mxu0 0.0
      %6148 = vmatpush1.msra.mxu0 0.0
      %6149 = vmatprep.subr.mxu0 0.0
      %6150 = vmatpush1.msra.mxu0 0.0
      %6151 = vmatprep.subr.mxu0 0.0
      %6152 = vmatpush1.msra.mxu0 0.0
      %6153 = vmatprep.subr.mxu0 0.0
      %6154 = vmatpush1.msra.mxu0 0.0
      %6155 = vmatprep.subr.mxu0 0.0
      %6156 = vmatpush1.msra.mxu0 0.0
      %6157 = vmatprep.subr.mxu0 0.0
      %6158 = vmatpush1.msra.mxu0 0.0
      %6159 = vmatprep.subr.mxu0 0.0
      %6160 = vmatpush1.msra.mxu0 0.0
      %6161 = vmatprep.subr.mxu0 0.0
      %6162 = vmatpush1.msra.mxu0 0.0
      %6163 = vmatprep.subr.mxu0 0.0
      %6164 = vmatpush1.msra.mxu0 0.0
      %6165 = vmatprep.subr.mxu0 0.0
      %6166 = vmatpush1.msra.mxu0 0.0
      %6167 = vmatprep.subr.mxu0 0.0
      %6168 = vmatpush1.msra.mxu0 0.0
      %6169 = vmatprep.subr.mxu0 0.0
      %6170 = vmatpush1.msra.mxu0 0.0
      %6171 = vmatprep.subr.mxu0 0.0
      %6172 = vmatpush1.msra.mxu0 0.0
      %6173 = vmatprep.subr.mxu0 0.0
      %6174 = vmatpush1.msra.mxu0 0.0
      %6175 = vmatprep.subr.mxu0 0.0
      %6176 = vmatpush1.msra.mxu0 0.0
      %6177 = vmatprep.subr.mxu0 0.0
      %6178 = vmatpush1.msra.mxu0 0.0
      %6179 = vmatprep.subr.mxu0 0.0
      %6180 = vmatpush1.msra.mxu0 0.0
      %6181 = vmatprep.subr.mxu0 0.0
      %6182 = vmatpush1.msra.mxu0 0.0
      %6183 = vmatprep.subr.mxu0 0.0
      %6184 = vmatpush1.msra.mxu0 0.0
      %6185 = vmatprep.subr.mxu0 0.0
      %6186 = vmatpush1.msra.mxu0 0.0
      %6187 = vmatprep.subr.mxu0 0.0
      %6188 = vmatpush1.msra.mxu0 0.0
      %6189 = vmatprep.subr.mxu0 0.0
      %6190 = vmatpush1.msra.mxu0 0.0
      %6191 = vmatprep.subr.mxu0 0.0
      %6192 = vmatpush1.msra.mxu0 0.0
      %6193 = vmatprep.subr.mxu0 0.0
      %6194 = vmatpush1.msra.mxu0 0.0
      %6195 = vmatprep.subr.mxu0 0.0
      %6196 = vmatpush1.msra.mxu0 0.0
      %6197 = vmatprep.subr.mxu0 0.0
      %6198 = vmatpush1.msra.mxu0 0.0
      %6199 = vmatprep.subr.mxu0 0.0
      %6200 = vmatpush1.msra.mxu0 0.0
      %6201 = vmatprep.mubr.f32.mxu0 0.0
      %6202 = vmatmul.mubr.f32.gmra.mrb[0].mxu0 %v6135
      %v6203 = vpop.f32.mrb[0].mxu0
      %v6204 = vadd.f32 0.0, %v6203
      %v6205 = vpop.f32.mrb[0].mxu0
      %6206 = vdwg.mxu0
      %v6207 = vadd.f32 %v6129, %v6204
      %v6208 = vld [vmem:[#allocation6 + $0x9] sm:$0xff]
      %s6209 = scalar_lea.vmem %s11, 64
      %v6210 = vld [vmem:[%s6209] sm:$0xff]
      %v6211 = vld [vmem:[%s6209 + $0x8] sm:$0xff]
      %v6213 = vsel %vm532, %v6208, 0
      %6215 = vmatprep.subr.mxu0 0.0
      %6216 = vmatpush1.msra.mxu0 %v6210
      %6217 = vmatprep.subr.mxu0 0.0
      %6218 = vmatpush1.msra.mxu0 %v6211
      %6219 = vmatprep.subr.mxu0 0.0
      %6220 = vmatpush1.msra.mxu0 0.0
      %6221 = vmatprep.subr.mxu0 0.0
      %6222 = vmatpush1.msra.mxu0 0.0
      %6223 = vmatprep.subr.mxu0 0.0
      %6224 = vmatpush1.msra.mxu0 0.0
      %6225 = vmatprep.subr.mxu0 0.0
      %6226 = vmatpush1.msra.mxu0 0.0
      %6227 = vmatprep.subr.mxu0 0.0
      %6228 = vmatpush1.msra.mxu0 0.0
      %6229 = vmatprep.subr.mxu0 0.0
      %6230 = vmatpush1.msra.mxu0 0.0
      %6231 = vmatprep.subr.mxu0 0.0
      %6232 = vmatpush1.msra.mxu0 0.0
      %6233 = vmatprep.subr.mxu0 0.0
      %6234 = vmatpush1.msra.mxu0 0.0
      %6235 = vmatprep.subr.mxu0 0.0
      %6236 = vmatpush1.msra.mxu0 0.0
      %6237 = vmatprep.subr.mxu0 0.0
      %6238 = vmatpush1.msra.mxu0 0.0
      %6239 = vmatprep.subr.mxu0 0.0
      %6240 = vmatpush1.msra.mxu0 0.0
      %6241 = vmatprep.subr.mxu0 0.0
      %6242 = vmatpush1.msra.mxu0 0.0
      %6243 = vmatprep.subr.mxu0 0.0
      %6244 = vmatpush1.msra.mxu0 0.0
      %6245 = vmatprep.subr.mxu0 0.0
      %6246 = vmatpush1.msra.mxu0 0.0
      %6247 = vmatprep.subr.mxu0 0.0
      %6248 = vmatpush1.msra.mxu0 0.0
      %6249 = vmatprep.subr.mxu0 0.0
      %6250 = vmatpush1.msra.mxu0 0.0
      %6251 = vmatprep.subr.mxu0 0.0
      %6252 = vmatpush1.msra.mxu0 0.0
      %6253 = vmatprep.subr.mxu0 0.0
      %6254 = vmatpush1.msra.mxu0 0.0
      %6255 = vmatprep.subr.mxu0 0.0
      %6256 = vmatpush1.msra.mxu0 0.0
      %6257 = vmatprep.subr.mxu0 0.0
      %6258 = vmatpush1.msra.mxu0 0.0
      %6259 = vmatprep.subr.mxu0 0.0
      %6260 = vmatpush1.msra.mxu0 0.0
      %6261 = vmatprep.subr.mxu0 0.0
      %6262 = vmatpush1.msra.mxu0 0.0
      %6263 = vmatprep.subr.mxu0 0.0
      %6264 = vmatpush1.msra.mxu0 0.0
      %6265 = vmatprep.subr.mxu0 0.0
      %6266 = vmatpush1.msra.mxu0 0.0
      %6267 = vmatprep.subr.mxu0 0.0
      %6268 = vmatpush1.msra.mxu0 0.0
      %6269 = vmatprep.subr.mxu0 0.0
      %6270 = vmatpush1.msra.mxu0 0.0
      %6271 = vmatprep.subr.mxu0 0.0
      %6272 = vmatpush1.msra.mxu0 0.0
      %6273 = vmatprep.subr.mxu0 0.0
      %6274 = vmatpush1.msra.mxu0 0.0
      %6275 = vmatprep.subr.mxu0 0.0
      %6276 = vmatpush1.msra.mxu0 0.0
      %6277 = vmatprep.subr.mxu0 0.0
      %6278 = vmatpush1.msra.mxu0 0.0
      %6279 = vmatprep.mubr.f32.mxu0 0.0
      %6280 = vmatmul.mubr.f32.gmra.mrb[0].mxu0 %v6213
      %v6281 = vpop.f32.mrb[0].mxu0
      %v6282 = vadd.f32 0.0, %v6281
      %v6283 = vpop.f32.mrb[0].mxu0
      %6284 = vdwg.mxu0
      %v6285 = vadd.f32 %v6207, %v6282
      %v6286 = vld [vmem:[#allocation6 + $0xa] sm:$0xff]
      %s6287 = scalar_lea.vmem %s11, 80
      %v6288 = vld [vmem:[%s6287] sm:$0xff]
      %v6289 = vld [vmem:[%s6287 + $0x8] sm:$0xff]
      %v6291 = vsel %vm532, %v6286, 0
      %6293 = vmatprep.subr.mxu0 0.0
      %6294 = vmatpush1.msra.mxu0 %v6288
      %6295 = vmatprep.subr.mxu0 0.0
      %6296 = vmatpush1.msra.mxu0 %v6289
      %6297 = vmatprep.subr.mxu0 0.0
      %6298 = vmatpush1.msra.mxu0 0.0
      %6299 = vmatprep.subr.mxu0 0.0
      %6300 = vmatpush1.msra.mxu0 0.0
      %6301 = vmatprep.subr.mxu0 0.0
      %6302 = vmatpush1.msra.mxu0 0.0
      %6303 = vmatprep.subr.mxu0 0.0
      %6304 = vmatpush1.msra.mxu0 0.0
      %6305 = vmatprep.subr.mxu0 0.0
      %6306 = vmatpush1.msra.mxu0 0.0
      %6307 = vmatprep.subr.mxu0 0.0
      %6308 = vmatpush1.msra.mxu0 0.0
      %6309 = vmatprep.subr.mxu0 0.0
      %6310 = vmatpush1.msra.mxu0 0.0
      %6311 = vmatprep.subr.mxu0 0.0
      %6312 = vmatpush1.msra.mxu0 0.0
      %6313 = vmatprep.subr.mxu0 0.0
      %6314 = vmatpush1.msra.mxu0 0.0
      %6315 = vmatprep.subr.mxu0 0.0
      %6316 = vmatpush1.msra.mxu0 0.0
      %6317 = vmatprep.subr.mxu0 0.0
      %6318 = vmatpush1.msra.mxu0 0.0
      %6319 = vmatprep.subr.mxu0 0.0
      %6320 = vmatpush1.msra.mxu0 0.0
      %6321 = vmatprep.subr.mxu0 0.0
      %6322 = vmatpush1.msra.mxu0 0.0
      %6323 = vmatprep.subr.mxu0 0.0
      %6324 = vmatpush1.msra.mxu0 0.0
      %6325 = vmatprep.subr.mxu0 0.0
      %6326 = vmatpush1.msra.mxu0 0.0
      %6327 = vmatprep.subr.mxu0 0.0
      %6328 = vmatpush1.msra.mxu0 0.0
      %6329 = vmatprep.subr.mxu0 0.0
      %6330 = vmatpush1.msra.mxu0 0.0
      %6331 = vmatprep.subr.mxu0 0.0
      %6332 = vmatpush1.msra.mxu0 0.0
      %6333 = vmatprep.subr.mxu0 0.0
      %6334 = vmatpush1.msra.mxu0 0.0
      %6335 = vmatprep.subr.mxu0 0.0
      %6336 = vmatpush1.msra.mxu0 0.0
      %6337 = vmatprep.subr.mxu0 0.0
      %6338 = vmatpush1.msra.mxu0 0.0
      %6339 = vmatprep.subr.mxu0 0.0
      %6340 = vmatpush1.msra.mxu0 0.0
      %6341 = vmatprep.subr.mxu0 0.0
      %6342 = vmatpush1.msra.mxu0 0.0
      %6343 = vmatprep.subr.mxu0 0.0
      %6344 = vmatpush1.msra.mxu0 0.0
      %6345 = vmatprep.subr.mxu0 0.0
      %6346 = vmatpush1.msra.mxu0 0.0
      %6347 = vmatprep.subr.mxu0 0.0
      %6348 = vmatpush1.msra.mxu0 0.0
      %6349 = vmatprep.subr.mxu0 0.0
      %6350 = vmatpush1.msra.mxu0 0.0
      %6351 = vmatprep.subr.mxu0 0.0
      %6352 = vmatpush1.msra.mxu0 0.0
      %6353 = vmatprep.subr.mxu0 0.0
      %6354 = vmatpush1.msra.mxu0 0.0
      %6355 = vmatprep.subr.mxu0 0.0
      %6356 = vmatpush1.msra.mxu0 0.0
      %6357 = vmatprep.mubr.f32.mxu0 0.0
      %6358 = vmatmul.mubr.f32.gmra.mrb[0].mxu0 %v6291
      %v6359 = vpop.f32.mrb[0].mxu0
      %v6360 = vadd.f32 0.0, %v6359
      %v6361 = vpop.f32.mrb[0].mxu0
      %6362 = vdwg.mxu0
      %v6363 = vadd.f32 %v6285, %v6360
      %v6364 = vld [vmem:[#allocation6 + $0xb] sm:$0xff]
      %s6365 = scalar_lea.vmem %s11, 96
      %v6366 = vld [vmem:[%s6365] sm:$0xff]
      %v6367 = vld [vmem:[%s6365 + $0x8] sm:$0xff]
      %v6369 = vsel %vm532, %v6364, 0
      %6371 = vmatprep.subr.mxu0 0.0
      %6372 = vmatpush1.msra.mxu0 %v6366
      %6373 = vmatprep.subr.mxu0 0.0
      %6374 = vmatpush1.msra.mxu0 %v6367
      %6375 = vmatprep.subr.mxu0 0.0
      %6376 = vmatpush1.msra.mxu0 0.0
      %6377 = vmatprep.subr.mxu0 0.0
      %6378 = vmatpush1.msra.mxu0 0.0
      %6379 = vmatprep.subr.mxu0 0.0
      %6380 = vmatpush1.msra.mxu0 0.0
      %6381 = vmatprep.subr.mxu0 0.0
      %6382 = vmatpush1.msra.mxu0 0.0
      %6383 = vmatprep.subr.mxu0 0.0
      %6384 = vmatpush1.msra.mxu0 0.0
      %6385 = vmatprep.subr.mxu0 0.0
      %6386 = vmatpush1.msra.mxu0 0.0
      %6387 = vmatprep.subr.mxu0 0.0
      %6388 = vmatpush1.msra.mxu0 0.0
      %6389 = vmatprep.subr.mxu0 0.0
      %6390 = vmatpush1.msra.mxu0 0.0
      %6391 = vmatprep.subr.mxu0 0.0
      %6392 = vmatpush1.msra.mxu0 0.0
      %6393 = vmatprep.subr.mxu0 0.0
      %6394 = vmatpush1.msra.mxu0 0.0
      %6395 = vmatprep.subr.mxu0 0.0
      %6396 = vmatpush1.msra.mxu0 0.0
      %6397 = vmatprep.subr.mxu0 0.0
      %6398 = vmatpush1.msra.mxu0 0.0
      %6399 = vmatprep.subr.mxu0 0.0
      %6400 = vmatpush1.msra.mxu0 0.0
      %6401 = vmatprep.subr.mxu0 0.0
      %6402 = vmatpush1.msra.mxu0 0.0
      %6403 = vmatprep.subr.mxu0 0.0
      %6404 = vmatpush1.msra.mxu0 0.0
      %6405 = vmatprep.subr.mxu0 0.0
      %6406 = vmatpush1.msra.mxu0 0.0
      %6407 = vmatprep.subr.mxu0 0.0
      %6408 = vmatpush1.msra.mxu0 0.0
      %6409 = vmatprep.subr.mxu0 0.0
      %6410 = vmatpush1.msra.mxu0 0.0
      %6411 = vmatprep.subr.mxu0 0.0
      %6412 = vmatpush1.msra.mxu0 0.0
      %6413 = vmatprep.subr.mxu0 0.0
      %6414 = vmatpush1.msra.mxu0 0.0
      %6415 = vmatprep.subr.mxu0 0.0
      %6416 = vmatpush1.msra.mxu0 0.0
      %6417 = vmatprep.subr.mxu0 0.0
      %6418 = vmatpush1.msra.mxu0 0.0
      %6419 = vmatprep.subr.mxu0 0.0
      %6420 = vmatpush1.msra.mxu0 0.0
      %6421 = vmatprep.subr.mxu0 0.0
      %6422 = vmatpush1.msra.mxu0 0.0
      %6423 = vmatprep.subr.mxu0 0.0
      %6424 = vmatpush1.msra.mxu0 0.0
      %6425 = vmatprep.subr.mxu0 0.0
      %6426 = vmatpush1.msra.mxu0 0.0
      %6427 = vmatprep.subr.mxu0 0.0
      %6428 = vmatpush1.msra.mxu0 0.0
      %6429 = vmatprep.subr.mxu0 0.0
      %6430 = vmatpush1.msra.mxu0 0.0
      %6431 = vmatprep.subr.mxu0 0.0
      %6432 = vmatpush1.msra.mxu0 0.0
      %6433 = vmatprep.subr.mxu0 0.0
      %6434 = vmatpush1.msra.mxu0 0.0
      %6435 = vmatprep.mubr.f32.mxu0 0.0
      %6436 = vmatmul.mubr.f32.gmra.mrb[0].mxu0 %v6369
      %v6437 = vpop.f32.mrb[0].mxu0
      %v6438 = vadd.f32 0.0, %v6437
      %v6439 = vpop.f32.mrb[0].mxu0
      %6440 = vdwg.mxu0
      %v6441 = vadd.f32 %v6363, %v6438
      %v6442 = vld [vmem:[#allocation6 + $0xc] sm:$0xff]
      %s6443 = scalar_lea.vmem %s11, 112
      %v6444 = vld [vmem:[%s6443] sm:$0xff]
      %v6445 = vld [vmem:[%s6443 + $0x8] sm:$0xff]
      %v6447 = vsel %vm532, %v6442, 0
      %6449 = vmatprep.subr.mxu0 0.0
      %6450 = vmatpush1.msra.mxu0 %v6444
      %6451 = vmatprep.subr.mxu0 0.0
      %6452 = vmatpush1.msra.mxu0 %v6445
      %6453 = vmatprep.subr.mxu0 0.0
      %6454 = vmatpush1.msra.mxu0 0.0
      %6455 = vmatprep.subr.mxu0 0.0
      %6456 = vmatpush1.msra.mxu0 0.0
      %6457 = vmatprep.subr.mxu0 0.0
      %6458 = vmatpush1.msra.mxu0 0.0
      %6459 = vmatprep.subr.mxu0 0.0
      %6460 = vmatpush1.msra.mxu0 0.0
      %6461 = vmatprep.subr.mxu0 0.0
      %6462 = vmatpush1.msra.mxu0 0.0
      %6463 = vmatprep.subr.mxu0 0.0
      %6464 = vmatpush1.msra.mxu0 0.0
      %6465 = vmatprep.subr.mxu0 0.0
      %6466 = vmatpush1.msra.mxu0 0.0
      %6467 = vmatprep.subr.mxu0 0.0
      %6468 = vmatpush1.msra.mxu0 0.0
      %6469 = vmatprep.subr.mxu0 0.0
      %6470 = vmatpush1.msra.mxu0 0.0
      %6471 = vmatprep.subr.mxu0 0.0
      %6472 = vmatpush1.msra.mxu0 0.0
      %6473 = vmatprep.subr.mxu0 0.0
      %6474 = vmatpush1.msra.mxu0 0.0
      %6475 = vmatprep.subr.mxu0 0.0
      %6476 = vmatpush1.msra.mxu0 0.0
      %6477 = vmatprep.subr.mxu0 0.0
      %6478 = vmatpush1.msra.mxu0 0.0
      %6479 = vmatprep.subr.mxu0 0.0
      %6480 = vmatpush1.msra.mxu0 0.0
      %6481 = vmatprep.subr.mxu0 0.0
      %6482 = vmatpush1.msra.mxu0 0.0
      %6483 = vmatprep.subr.mxu0 0.0
      %6484 = vmatpush1.msra.mxu0 0.0
      %6485 = vmatprep.subr.mxu0 0.0
      %6486 = vmatpush1.msra.mxu0 0.0
      %6487 = vmatprep.subr.mxu0 0.0
      %6488 = vmatpush1.msra.mxu0 0.0
      %6489 = vmatprep.subr.mxu0 0.0
      %6490 = vmatpush1.msra.mxu0 0.0
      %6491 = vmatprep.subr.mxu0 0.0
      %6492 = vmatpush1.msra.mxu0 0.0
      %6493 = vmatprep.subr.mxu0 0.0
      %6494 = vmatpush1.msra.mxu0 0.0
      %6495 = vmatprep.subr.mxu0 0.0
      %6496 = vmatpush1.msra.mxu0 0.0
      %6497 = vmatprep.subr.mxu0 0.0
      %6498 = vmatpush1.msra.mxu0 0.0
      %6499 = vmatprep.subr.mxu0 0.0
      %6500 = vmatpush1.msra.mxu0 0.0
      %6501 = vmatprep.subr.mxu0 0.0
      %6502 = vmatpush1.msra.mxu0 0.0
      %6503 = vmatprep.subr.mxu0 0.0
      %6504 = vmatpush1.msra.mxu0 0.0
      %6505 = vmatprep.subr.mxu0 0.0
      %6506 = vmatpush1.msra.mxu0 0.0
      %6507 = vmatprep.subr.mxu0 0.0
      %6508 = vmatpush1.msra.mxu0 0.0
      %6509 = vmatprep.subr.mxu0 0.0
      %6510 = vmatpush1.msra.mxu0 0.0
      %6511 = vmatprep.subr.mxu0 0.0
      %6512 = vmatpush1.msra.mxu0 0.0
      %6513 = vmatprep.mubr.f32.mxu0 0.0
      %6514 = vmatmul.mubr.f32.gmra.mrb[0].mxu0 %v6447
      %v6515 = vpop.f32.mrb[0].mxu0
      %v6516 = vadd.f32 0.0, %v6515
      %v6517 = vpop.f32.mrb[0].mxu0
      %6518 = vdwg.mxu0
      %v6519 = vadd.f32 %v6441, %v6516
      %v6520 = vld [vmem:[%s12] sm:$0x1]
      %v6521 = vlaneseq
      %v6522 = vshrl.u32 %v6521, 7
      %v6523 = vsub.s32 0, %v6522
      %v6524 = vrot.slane %v6520, %v6523
      %v6525 = vadd.f32 %v6519, %v6524
      %v6526 = vmax.f32 %v6525, 0.0
      %v6527 = vld [vmem:[%s12 + $0x1] sm:$0x1]
      %v6528 = vlaneseq
      %v6529 = vshrl.u32 %v6528, 7
      %v6530 = vsub.s32 0, %v6529
      %v6531 = vrot.slane %v6527, %v6530
      %v6532 = vmul.f32 %v6526, %v6531
      %v6533 = vld [vmem:[%s12 + $0x2] sm:$0x1]
      %v6534 = vlaneseq
      %v6535 = vshrl.u32 %v6534, 7
      %v6536 = vsub.s32 0, %v6535
      %v6537 = vrot.slane %v6533, %v6536
      %v6538 = vadd.f32 %v6532, %v6537
      %6539 = vst.msk [vmem:[#allocation7] sm:$0xff] %vm960, %v6538
      %v6540 = vld [vmem:[#allocation7] ss:$2 sm:$0xf]
      %s6541 = scalar_lea.vmem [#allocation7], 1
      %v6542 = vld [vmem:[%s6541] ss:$2 sm:$0xf]
      %v6543 = vmax.f32 %v6540, %v6542
      %v6544 = vld [vmem:[%s14] sm:$0x7]
      %v6545 = vld [vmem:[%s13] sm:$0xff]
      %v6546 = vld [vmem:[%s13 + $0x8] sm:$0xff]
      %v6547 = vld [vmem:[%s13 + $0x10] sm:$0xff]
      %v6548 = vld [vmem:[%s13 + $0x18] sm:$0xff]
      %v6549 = vld [vmem:[%s13 + $0x20] sm:$0xff]
      %v6550 = vld [vmem:[%s13 + $0x28] sm:$0xff]
      %v6551 = vld [vmem:[%s13 + $0x30] sm:$0xff]
      %v6552 = vld [vmem:[%s13 + $0x38] sm:$0xff]
      %v6553 = vld [vmem:[%s13 + $0x40] sm:$0xff]
      %v6554 = vld [vmem:[%s13 + $0x48] sm:$0xff]
      %v6555 = vld [vmem:[%s13 + $0x50] sm:$0xff]
      %v6556 = vld [vmem:[%s13 + $0x58] sm:$0xff]
      %v6558 = vsel %vm960, %v6543, 0
      %6560 = vmatprep.subr.mxu0 %v6546
      %6561 = vmatpush1.msra.mxu0 %v6545
      %6562 = vmatprep.subr.mxu0 %v6549
      %6563 = vmatpush1.msra.mxu0 %v6548
      %6564 = vmatprep.subr.mxu0 %v6552
      %6565 = vmatpush1.msra.mxu0 %v6551
      %6566 = vmatprep.subr.mxu0 %v6555
      %6567 = vmatpush1.msra.mxu0 %v6554
      %6568 = vmatprep.subr.mxu0 0.0
      %6569 = vmatpush1.msra.mxu0 0.0
      %6570 = vmatprep.subr.mxu0 0.0
      %6571 = vmatpush1.msra.mxu0 0.0
      %6572 = vmatprep.subr.mxu0 0.0
      %6573 = vmatpush1.msra.mxu0 0.0
      %6574 = vmatprep.subr.mxu0 0.0
      %6575 = vmatpush1.msra.mxu0 0.0
      %6576 = vmatprep.subr.mxu0 0.0
      %6577 = vmatpush1.msra.mxu0 0.0
      %6578 = vmatprep.subr.mxu0 0.0
      %6579 = vmatpush1.msra.mxu0 0.0
      %6580 = vmatprep.subr.mxu0 0.0
      %6581 = vmatpush1.msra.mxu0 0.0
      %6582 = vmatprep.subr.mxu0 0.0
      %6583 = vmatpush1.msra.mxu0 0.0
      %6584 = vmatprep.subr.mxu0 0.0
      %6585 = vmatpush1.msra.mxu0 0.0
      %6586 = vmatprep.subr.mxu0 0.0
      %6587 = vmatpush1.msra.mxu0 0.0
      %6588 = vmatprep.subr.mxu0 0.0
      %6589 = vmatpush1.msra.mxu0 0.0
      %6590 = vmatprep.subr.mxu0 0.0
      %6591 = vmatpush1.msra.mxu0 0.0
      %6592 = vmatprep.subr.mxu0 0.0
      %6593 = vmatpush1.msra.mxu0 0.0
      %6594 = vmatprep.subr.mxu0 0.0
      %6595 = vmatpush1.msra.mxu0 0.0
      %6596 = vmatprep.subr.mxu0 0.0
      %6597 = vmatpush1.msra.mxu0 0.0
      %6598 = vmatprep.subr.mxu0 0.0
      %6599 = vmatpush1.msra.mxu0 0.0
      %6600 = vmatprep.subr.mxu0 0.0
      %6601 = vmatpush1.msra.mxu0 0.0
      %6602 = vmatprep.subr.mxu0 0.0
      %6603 = vmatpush1.msra.mxu0 0.0
      %6604 = vmatprep.subr.mxu0 0.0
      %6605 = vmatpush1.msra.mxu0 0.0
      %6606 = vmatprep.subr.mxu0 0.0
      %6607 = vmatpush1.msra.mxu0 0.0
      %6608 = vmatprep.subr.mxu0 0.0
      %6609 = vmatpush1.msra.mxu0 0.0
      %6610 = vmatprep.subr.mxu0 0.0
      %6611 = vmatpush1.msra.mxu0 0.0
      %6612 = vmatprep.subr.mxu0 0.0
      %6613 = vmatpush1.msra.mxu0 0.0
      %6614 = vmatprep.subr.mxu0 0.0
      %6615 = vmatpush1.msra.mxu0 0.0
      %6616 = vmatprep.subr.mxu0 0.0
      %6617 = vmatpush1.msra.mxu0 0.0
      %6618 = vmatprep.subr.mxu0 0.0
      %6619 = vmatpush1.msra.mxu0 0.0
      %6620 = vmatprep.subr.mxu0 0.0
      %6621 = vmatpush1.msra.mxu0 0.0
      %6622 = vmatprep.subr.mxu0 0.0
      %6623 = vmatpush1.msra.mxu0 0.0
      %6624 = vmatprep.mubr.f32.mxu0 0.0
      %6625 = vmatmul.mubr.f32.gmra.mrb[0].mxu0 %v6558
      %v6626 = vpop.f32.mrb[0].mxu0
      %v6627 = vadd.f32 0.0, %v6626
      %v6628 = vpop.f32.mrb[0].mxu0
      %v6629 = vadd.f32 0.0, %v6628
      %6630 = vdwg.mxu0
      %6631 = vmatprep.subr.mxu0 0.0
      %6632 = vmatpush1.msra.mxu0 %v6547
      %6633 = vmatprep.subr.mxu0 0.0
      %6634 = vmatpush1.msra.mxu0 %v6550
      %6635 = vmatprep.subr.mxu0 0.0
      %6636 = vmatpush1.msra.mxu0 %v6553
      %6637 = vmatprep.subr.mxu0 0.0
      %6638 = vmatpush1.msra.mxu0 %v6556
      %6639 = vmatprep.subr.mxu0 0.0
      %6640 = vmatpush1.msra.mxu0 0.0
      %6641 = vmatprep.subr.mxu0 0.0
      %6642 = vmatpush1.msra.mxu0 0.0
      %6643 = vmatprep.subr.mxu0 0.0
      %6644 = vmatpush1.msra.mxu0 0.0
      %6645 = vmatprep.subr.mxu0 0.0
      %6646 = vmatpush1.msra.mxu0 0.0
      %6647 = vmatprep.subr.mxu0 0.0
      %6648 = vmatpush1.msra.mxu0 0.0
      %6649 = vmatprep.subr.mxu0 0.0
      %6650 = vmatpush1.msra.mxu0 0.0
      %6651 = vmatprep.subr.mxu0 0.0
      %6652 = vmatpush1.msra.mxu0 0.0
      %6653 = vmatprep.subr.mxu0 0.0
      %6654 = vmatpush1.msra.mxu0 0.0
      %6655 = vmatprep.subr.mxu0 0.0
      %6656 = vmatpush1.msra.mxu0 0.0
      %6657 = vmatprep.subr.mxu0 0.0
      %6658 = vmatpush1.msra.mxu0 0.0
      %6659 = vmatprep.subr.mxu0 0.0
      %6660 = vmatpush1.msra.mxu0 0.0
      %6661 = vmatprep.subr.mxu0 0.0
      %6662 = vmatpush1.msra.mxu0 0.0
      %6663 = vmatprep.subr.mxu0 0.0
      %6664 = vmatpush1.msra.mxu0 0.0
      %6665 = vmatprep.subr.mxu0 0.0
      %6666 = vmatpush1.msra.mxu0 0.0
      %6667 = vmatprep.subr.mxu0 0.0
      %6668 = vmatpush1.msra.mxu0 0.0
      %6669 = vmatprep.subr.mxu0 0.0
      %6670 = vmatpush1.msra.mxu0 0.0
      %6671 = vmatprep.subr.mxu0 0.0
      %6672 = vmatpush1.msra.mxu0 0.0
      %6673 = vmatprep.subr.mxu0 0.0
      %6674 = vmatpush1.msra.mxu0 0.0
      %6675 = vmatprep.subr.mxu0 0.0
      %6676 = vmatpush1.msra.mxu0 0.0
      %6677 = vmatprep.subr.mxu0 0.0
      %6678 = vmatpush1.msra.mxu0 0.0
      %6679 = vmatprep.subr.mxu0 0.0
      %6680 = vmatpush1.msra.mxu0 0.0
      %6681 = vmatprep.subr.mxu0 0.0
      %6682 = vmatpush1.msra.mxu0 0.0
      %6683 = vmatprep.subr.mxu0 0.0
      %6684 = vmatpush1.msra.mxu0 0.0
      %6685 = vmatprep.subr.mxu0 0.0
      %6686 = vmatpush1.msra.mxu0 0.0
      %6687 = vmatprep.subr.mxu0 0.0
      %6688 = vmatpush1.msra.mxu0 0.0
      %6689 = vmatprep.subr.mxu0 0.0
      %6690 = vmatpush1.msra.mxu0 0.0
      %6691 = vmatprep.subr.mxu0 0.0
      %6692 = vmatpush1.msra.mxu0 0.0
      %6693 = vmatprep.subr.mxu0 0.0
      %6694 = vmatpush1.msra.mxu0 0.0
      %6695 = vmatprep.mubr.f32.mxu0 0.0
      %6696 = vmatmul.mubr.f32.gmra.mrb[0].mxu0 %v6558
      %v6697 = vpop.f32.mrb[0].mxu0
      %v6698 = vadd.f32 0.0, %v6697
      %v6699 = vpop.f32.mrb[0].mxu0
      %6700 = vdwg.mxu0
      %v6704 = vcombine.low %v6627, %v6629
      %v6706 = vunpack.c.l.s4 1966171168
      %v6707 = vunpack.c.0.s8 %v6706
      %v6708 = vlaneseq
      %v6709 = vshrl.u32 %v6708, 7
      %v6710 = vsub.s32 %v6707, %v6709
      %v6711 = vrot.slane %v6704, %v6710
      %v6713 = vunpack.c.l.s4 1966171168
      %v6714 = vunpack.c.0.s8 %v6713
      %v6715 = vlaneseq
      %v6716 = vshrl.u32 %v6715, 7
      %v6717 = vsub.s32 %v6714, %v6716
      %v6718 = vrot.slane %v6698, %v6717
      %v6719 = vcombine.low %v6711, %v6718
      %v6721 = vunpack.c.l.s4 1966171168
      %v6722 = vunpack.c.0.s8 %v6721
      %v6723 = vlaneseq
      %v6724 = vshrl.u32 %v6723, 7
      %v6725 = vsub.s32 %v6722, %v6724
      %v6726 = vrot.slane %v6719, %v6725
      %v6728 = vadd.f32 %v6544, %v6726
      %s6729 = scalar_lea.vmem %s13, 96
      %v6730 = vld [vmem:[%s6729] sm:$0xff]
      %v6731 = vld [vmem:[%s6729 + $0x8] sm:$0xff]
      %v6732 = vld [vmem:[%s6729 + $0x10] sm:$0xff]
      %v6733 = vld [vmem:[%s6729 + $0x18] sm:$0xff]
      %v6734 = vld [vmem:[%s6729 + $0x20] sm:$0xff]
      %v6735 = vld [vmem:[%s6729 + $0x28] sm:$0xff]
      %v6736 = vld [vmem:[%s6729 + $0x30] sm:$0xff]
      %v6737 = vld [vmem:[%s6729 + $0x38] sm:$0xff]
      %v6738 = vld [vmem:[%s6729 + $0x40] sm:$0xff]
      %v6739 = vld [vmem:[%s6729 + $0x48] sm:$0xff]
      %v6740 = vld [vmem:[%s6729 + $0x50] sm:$0xff]
      %v6741 = vld [vmem:[%s6729 + $0x58] sm:$0xff]
      %v6742 = vrot.slane %v6543, 1
      %v6743 = vsel %vm960, %v6742, 0
      %6745 = vmatprep.subr.mxu0 %v6731
      %6746 = vmatpush1.msra.mxu0 %v6730
      %6747 = vmatprep.subr.mxu0 %v6734
      %6748 = vmatpush1.msra.mxu0 %v6733
      %6749 = vmatprep.subr.mxu0 %v6737
      %6750 = vmatpush1.msra.mxu0 %v6736
      %6751 = vmatprep.subr.mxu0 %v6740
      %6752 = vmatpush1.msra.mxu0 %v6739
      %6753 = vmatprep.subr.mxu0 0.0
      %6754 = vmatpush1.msra.mxu0 0.0
      %6755 = vmatprep.subr.mxu0 0.0
      %6756 = vmatpush1.msra.mxu0 0.0
      %6757 = vmatprep.subr.mxu0 0.0
      %6758 = vmatpush1.msra.mxu0 0.0
      %6759 = vmatprep.subr.mxu0 0.0
      %6760 = vmatpush1.msra.mxu0 0.0
      %6761 = vmatprep.subr.mxu0 0.0
      %6762 = vmatpush1.msra.mxu0 0.0
      %6763 = vmatprep.subr.mxu0 0.0
      %6764 = vmatpush1.msra.mxu0 0.0
      %6765 = vmatprep.subr.mxu0 0.0
      %6766 = vmatpush1.msra.mxu0 0.0
      %6767 = vmatprep.subr.mxu0 0.0
      %6768 = vmatpush1.msra.mxu0 0.0
      %6769 = vmatprep.subr.mxu0 0.0
      %6770 = vmatpush1.msra.mxu0 0.0
      %6771 = vmatprep.subr.mxu0 0.0
      %6772 = vmatpush1.msra.mxu0 0.0
      %6773 = vmatprep.subr.mxu0 0.0
      %6774 = vmatpush1.msra.mxu0 0.0
      %6775 = vmatprep.subr.mxu0 0.0
      %6776 = vmatpush1.msra.mxu0 0.0
      %6777 = vmatprep.subr.mxu0 0.0
      %6778 = vmatpush1.msra.mxu0 0.0
      %6779 = vmatprep.subr.mxu0 0.0
      %6780 = vmatpush1.msra.mxu0 0.0
      %6781 = vmatprep.subr.mxu0 0.0
      %6782 = vmatpush1.msra.mxu0 0.0
      %6783 = vmatprep.subr.mxu0 0.0
      %6784 = vmatpush1.msra.mxu0 0.0
      %6785 = vmatprep.subr.mxu0 0.0
      %6786 = vmatpush1.msra.mxu0 0.0
      %6787 = vmatprep.subr.mxu0 0.0
      %6788 = vmatpush1.msra.mxu0 0.0
      %6789 = vmatprep.subr.mxu0 0.0
      %6790 = vmatpush1.msra.mxu0 0.0
      %6791 = vmatprep.subr.mxu0 0.0
      %6792 = vmatpush1.msra.mxu0 0.0
      %6793 = vmatprep.subr.mxu0 0.0
      %6794 = vmatpush1.msra.mxu0 0.0
      %6795 = vmatprep.subr.mxu0 0.0
      %6796 = vmatpush1.msra.mxu0 0.0
      %6797 = vmatprep.subr.mxu0 0.0
      %6798 = vmatpush1.msra.mxu0 0.0
      %6799 = vmatprep.subr.mxu0 0.0
      %6800 = vmatpush1.msra.mxu0 0.0
      %6801 = vmatprep.subr.mxu0 0.0
      %6802 = vmatpush1.msra.mxu0 0.0
      %6803 = vmatprep.subr.mxu0 0.0
      %6804 = vmatpush1.msra.mxu0 0.0
      %6805 = vmatprep.subr.mxu0 0.0
      %6806 = vmatpush1.msra.mxu0 0.0
      %6807 = vmatprep.subr.mxu0 0.0
      %6808 = vmatpush1.msra.mxu0 0.0
      %6809 = vmatprep.mubr.f32.mxu0 0.0
      %6810 = vmatmul.mubr.f32.gmra.mrb[0].mxu0 %v6743
      %v6811 = vpop.f32.mrb[0].mxu0
      %v6812 = vadd.f32 0.0, %v6811
      %v6813 = vpop.f32.mrb[0].mxu0
      %v6814 = vadd.f32 0.0, %v6813
      %6815 = vdwg.mxu0
      %6816 = vmatprep.subr.mxu0 0.0
      %6817 = vmatpush1.msra.mxu0 %v6732
      %6818 = vmatprep.subr.mxu0 0.0
      %6819 = vmatpush1.msra.mxu0 %v6735
      %6820 = vmatprep.subr.mxu0 0.0
      %6821 = vmatpush1.msra.mxu0 %v6738
      %6822 = vmatprep.subr.mxu0 0.0
      %6823 = vmatpush1.msra.mxu0 %v6741
      %6824 = vmatprep.subr.mxu0 0.0
      %6825 = vmatpush1.msra.mxu0 0.0
      %6826 = vmatprep.subr.mxu0 0.0
      %6827 = vmatpush1.msra.mxu0 0.0
      %6828 = vmatprep.subr.mxu0 0.0
      %6829 = vmatpush1.msra.mxu0 0.0
      %6830 = vmatprep.subr.mxu0 0.0
      %6831 = vmatpush1.msra.mxu0 0.0
      %6832 = vmatprep.subr.mxu0 0.0
      %6833 = vmatpush1.msra.mxu0 0.0
      %6834 = vmatprep.subr.mxu0 0.0
      %6835 = vmatpush1.msra.mxu0 0.0
      %6836 = vmatprep.subr.mxu0 0.0
      %6837 = vmatpush1.msra.mxu0 0.0
      %6838 = vmatprep.subr.mxu0 0.0
      %6839 = vmatpush1.msra.mxu0 0.0
      %6840 = vmatprep.subr.mxu0 0.0
      %6841 = vmatpush1.msra.mxu0 0.0
      %6842 = vmatprep.subr.mxu0 0.0
      %6843 = vmatpush1.msra.mxu0 0.0
      %6844 = vmatprep.subr.mxu0 0.0
      %6845 = vmatpush1.msra.mxu0 0.0
      %6846 = vmatprep.subr.mxu0 0.0
      %6847 = vmatpush1.msra.mxu0 0.0
      %6848 = vmatprep.subr.mxu0 0.0
      %6849 = vmatpush1.msra.mxu0 0.0
      %6850 = vmatprep.subr.mxu0 0.0
      %6851 = vmatpush1.msra.mxu0 0.0
      %6852 = vmatprep.subr.mxu0 0.0
      %6853 = vmatpush1.msra.mxu0 0.0
      %6854 = vmatprep.subr.mxu0 0.0
      %6855 = vmatpush1.msra.mxu0 0.0
      %6856 = vmatprep.subr.mxu0 0.0
      %6857 = vmatpush1.msra.mxu0 0.0
      %6858 = vmatprep.subr.mxu0 0.0
      %6859 = vmatpush1.msra.mxu0 0.0
      %6860 = vmatprep.subr.mxu0 0.0
      %6861 = vmatpush1.msra.mxu0 0.0
      %6862 = vmatprep.subr.mxu0 0.0
      %6863 = vmatpush1.msra.mxu0 0.0
      %6864 = vmatprep.subr.mxu0 0.0
      %6865 = vmatpush1.msra.mxu0 0.0
      %6866 = vmatprep.subr.mxu0 0.0
      %6867 = vmatpush1.msra.mxu0 0.0
      %6868 = vmatprep.subr.mxu0 0.0
      %6869 = vmatpush1.msra.mxu0 0.0
      %6870 = vmatprep.subr.mxu0 0.0
      %6871 = vmatpush1.msra.mxu0 0.0
      %6872 = vmatprep.subr.mxu0 0.0
      %6873 = vmatpush1.msra.mxu0 0.0
      %6874 = vmatprep.subr.mxu0 0.0
      %6875 = vmatpush1.msra.mxu0 0.0
      %6876 = vmatprep.subr.mxu0 0.0
      %6877 = vmatpush1.msra.mxu0 0.0
      %6878 = vmatprep.subr.mxu0 0.0
      %6879 = vmatpush1.msra.mxu0 0.0
      %6880 = vmatprep.mubr.f32.mxu0 0.0
      %6881 = vmatmul.mubr.f32.gmra.mrb[0].mxu0 %v6743
      %v6882 = vpop.f32.mrb[0].mxu0
      %v6883 = vadd.f32 0.0, %v6882
      %v6884 = vpop.f32.mrb[0].mxu0
      %6885 = vdwg.mxu0
      %v6889 = vcombine.low %v6812, %v6814
      %v6891 = vunpack.c.l.s4 1966171168
      %v6892 = vunpack.c.0.s8 %v6891
      %v6893 = vlaneseq
      %v6894 = vshrl.u32 %v6893, 7
      %v6895 = vsub.s32 %v6892, %v6894
      %v6896 = vrot.slane %v6889, %v6895
      %v6898 = vunpack.c.l.s4 1966171168
      %v6899 = vunpack.c.0.s8 %v6898
      %v6900 = vlaneseq
      %v6901 = vshrl.u32 %v6900, 7
      %v6902 = vsub.s32 %v6899, %v6901
      %v6903 = vrot.slane %v6883, %v6902
      %v6904 = vcombine.low %v6896, %v6903
      %v6906 = vunpack.c.l.s4 1966171168
      %v6907 = vunpack.c.0.s8 %v6906
      %v6908 = vlaneseq
      %v6909 = vshrl.u32 %v6908, 7
      %v6910 = vsub.s32 %v6907, %v6909
      %v6911 = vrot.slane %v6904, %v6910
      %v6913 = vadd.f32 %v6728, %v6911
      %s6914 = scalar_lea.vmem %s13, 192
      %v6915 = vld [vmem:[%s6914] sm:$0xff]
      %v6916 = vld [vmem:[%s6914 + $0x8] sm:$0xff]
      %v6917 = vld [vmem:[%s6914 + $0x10] sm:$0xff]
      %v6918 = vld [vmem:[%s6914 + $0x18] sm:$0xff]
      %v6919 = vld [vmem:[%s6914 + $0x20] sm:$0xff]
      %v6920 = vld [vmem:[%s6914 + $0x28] sm:$0xff]
      %v6921 = vld [vmem:[%s6914 + $0x30] sm:$0xff]
      %v6922 = vld [vmem:[%s6914 + $0x38] sm:$0xff]
      %v6923 = vld [vmem:[%s6914 + $0x40] sm:$0xff]
      %v6924 = vld [vmem:[%s6914 + $0x48] sm:$0xff]
      %v6925 = vld [vmem:[%s6914 + $0x50] sm:$0xff]
      %v6926 = vld [vmem:[%s6914 + $0x58] sm:$0xff]
      %v6927 = vrot.slane %v6543, 2
      %v6928 = vsel %vm960, %v6927, 0
      %6930 = vmatprep.subr.mxu0 %v6916
      %6931 = vmatpush1.msra.mxu0 %v6915
      %6932 = vmatprep.subr.mxu0 %v6919
      %6933 = vmatpush1.msra.mxu0 %v6918
      %6934 = vmatprep.subr.mxu0 %v6922
      %6935 = vmatpush1.msra.mxu0 %v6921
      %6936 = vmatprep.subr.mxu0 %v6925
      %6937 = vmatpush1.msra.mxu0 %v6924
      %6938 = vmatprep.subr.mxu0 0.0
      %6939 = vmatpush1.msra.mxu0 0.0
      %6940 = vmatprep.subr.mxu0 0.0
      %6941 = vmatpush1.msra.mxu0 0.0
      %6942 = vmatprep.subr.mxu0 0.0
      %6943 = vmatpush1.msra.mxu0 0.0
      %6944 = vmatprep.subr.mxu0 0.0
      %6945 = vmatpush1.msra.mxu0 0.0
      %6946 = vmatprep.subr.mxu0 0.0
      %6947 = vmatpush1.msra.mxu0 0.0
      %6948 = vmatprep.subr.mxu0 0.0
      %6949 = vmatpush1.msra.mxu0 0.0
      %6950 = vmatprep.subr.mxu0 0.0
      %6951 = vmatpush1.msra.mxu0 0.0
      %6952 = vmatprep.subr.mxu0 0.0
      %6953 = vmatpush1.msra.mxu0 0.0
      %6954 = vmatprep.subr.mxu0 0.0
      %6955 = vmatpush1.msra.mxu0 0.0
      %6956 = vmatprep.subr.mxu0 0.0
      %6957 = vmatpush1.msra.mxu0 0.0
      %6958 = vmatprep.subr.mxu0 0.0
      %6959 = vmatpush1.msra.mxu0 0.0
      %6960 = vmatprep.subr.mxu0 0.0
      %6961 = vmatpush1.msra.mxu0 0.0
      %6962 = vmatprep.subr.mxu0 0.0
      %6963 = vmatpush1.msra.mxu0 0.0
      %6964 = vmatprep.subr.mxu0 0.0
      %6965 = vmatpush1.msra.mxu0 0.0
      %6966 = vmatprep.subr.mxu0 0.0
      %6967 = vmatpush1.msra.mxu0 0.0
      %6968 = vmatprep.subr.mxu0 0.0
      %6969 = vmatpush1.msra.mxu0 0.0
      %6970 = vmatprep.subr.mxu0 0.0
      %6971 = vmatpush1.msra.mxu0 0.0
      %6972 = vmatprep.subr.mxu0 0.0
      %6973 = vmatpush1.msra.mxu0 0.0
      %6974 = vmatprep.subr.mxu0 0.0
      %6975 = vmatpush1.msra.mxu0 0.0
      %6976 = vmatprep.subr.mxu0 0.0
      %6977 = vmatpush1.msra.mxu0 0.0
      %6978 = vmatprep.subr.mxu0 0.0
      %6979 = vmatpush1.msra.mxu0 0.0
      %6980 = vmatprep.subr.mxu0 0.0
      %6981 = vmatpush1.msra.mxu0 0.0
      %6982 = vmatprep.subr.mxu0 0.0
      %6983 = vmatpush1.msra.mxu0 0.0
      %6984 = vmatprep.subr.mxu0 0.0
      %6985 = vmatpush1.msra.mxu0 0.0
      %6986 = vmatprep.subr.mxu0 0.0
      %6987 = vmatpush1.msra.mxu0 0.0
      %6988 = vmatprep.subr.mxu0 0.0
      %6989 = vmatpush1.msra.mxu0 0.0
      %6990 = vmatprep.subr.mxu0 0.0
      %6991 = vmatpush1.msra.mxu0 0.0
      %6992 = vmatprep.subr.mxu0 0.0
      %6993 = vmatpush1.msra.mxu0 0.0
      %6994 = vmatprep.mubr.f32.mxu0 0.0
      %6995 = vmatmul.mubr.f32.gmra.mrb[0].mxu0 %v6928
      %v6996 = vpop.f32.mrb[0].mxu0
      %v6997 = vadd.f32 0.0, %v6996
      %v6998 = vpop.f32.mrb[0].mxu0
      %v6999 = vadd.f32 0.0, %v6998
      %7000 = vdwg.mxu0
      %7001 = vmatprep.subr.mxu0 0.0
      %7002 = vmatpush1.msra.mxu0 %v6917
      %7003 = vmatprep.subr.mxu0 0.0
      %7004 = vmatpush1.msra.mxu0 %v6920
      %7005 = vmatprep.subr.mxu0 0.0
      %7006 = vmatpush1.msra.mxu0 %v6923
      %7007 = vmatprep.subr.mxu0 0.0
      %7008 = vmatpush1.msra.mxu0 %v6926
      %7009 = vmatprep.subr.mxu0 0.0
      %7010 = vmatpush1.msra.mxu0 0.0
      %7011 = vmatprep.subr.mxu0 0.0
      %7012 = vmatpush1.msra.mxu0 0.0
      %7013 = vmatprep.subr.mxu0 0.0
      %7014 = vmatpush1.msra.mxu0 0.0
      %7015 = vmatprep.subr.mxu0 0.0
      %7016 = vmatpush1.msra.mxu0 0.0
      %7017 = vmatprep.subr.mxu0 0.0
      %7018 = vmatpush1.msra.mxu0 0.0
      %7019 = vmatprep.subr.mxu0 0.0
      %7020 = vmatpush1.msra.mxu0 0.0
      %7021 = vmatprep.subr.mxu0 0.0
      %7022 = vmatpush1.msra.mxu0 0.0
      %7023 = vmatprep.subr.mxu0 0.0
      %7024 = vmatpush1.msra.mxu0 0.0
      %7025 = vmatprep.subr.mxu0 0.0
      %7026 = vmatpush1.msra.mxu0 0.0
      %7027 = vmatprep.subr.mxu0 0.0
      %7028 = vmatpush1.msra.mxu0 0.0
      %7029 = vmatprep.subr.mxu0 0.0
      %7030 = vmatpush1.msra.mxu0 0.0
      %7031 = vmatprep.subr.mxu0 0.0
      %7032 = vmatpush1.msra.mxu0 0.0
      %7033 = vmatprep.subr.mxu0 0.0
      %7034 = vmatpush1.msra.mxu0 0.0
      %7035 = vmatprep.subr.mxu0 0.0
      %7036 = vmatpush1.msra.mxu0 0.0
      %7037 = vmatprep.subr.mxu0 0.0
      %7038 = vmatpush1.msra.mxu0 0.0
      %7039 = vmatprep.subr.mxu0 0.0
      %7040 = vmatpush1.msra.mxu0 0.0
      %7041 = vmatprep.subr.mxu0 0.0
      %7042 = vmatpush1.msra.mxu0 0.0
      %7043 = vmatprep.subr.mxu0 0.0
      %7044 = vmatpush1.msra.mxu0 0.0
      %7045 = vmatprep.subr.mxu0 0.0
      %7046 = vmatpush1.msra.mxu0 0.0
      %7047 = vmatprep.subr.mxu0 0.0
      %7048 = vmatpush1.msra.mxu0 0.0
      %7049 = vmatprep.subr.mxu0 0.0
      %7050 = vmatpush1.msra.mxu0 0.0
      %7051 = vmatprep.subr.mxu0 0.0
      %7052 = vmatpush1.msra.mxu0 0.0
      %7053 = vmatprep.subr.mxu0 0.0
      %7054 = vmatpush1.msra.mxu0 0.0
      %7055 = vmatprep.subr.mxu0 0.0
      %7056 = vmatpush1.msra.mxu0 0.0
      %7057 = vmatprep.subr.mxu0 0.0
      %7058 = vmatpush1.msra.mxu0 0.0
      %7059 = vmatprep.subr.mxu0 0.0
      %7060 = vmatpush1.msra.mxu0 0.0
      %7061 = vmatprep.subr.mxu0 0.0
      %7062 = vmatpush1.msra.mxu0 0.0
      %7063 = vmatprep.subr.mxu0 0.0
      %7064 = vmatpush1.msra.mxu0 0.0
      %7065 = vmatprep.mubr.f32.mxu0 0.0
      %7066 = vmatmul.mubr.f32.gmra.mrb[0].mxu0 %v6928
      %v7067 = vpop.f32.mrb[0].mxu0
      %v7068 = vadd.f32 0.0, %v7067
      %v7069 = vpop.f32.mrb[0].mxu0
      %7070 = vdwg.mxu0
      %v7074 = vcombine.low %v6997, %v6999
      %v7076 = vunpack.c.l.s4 1966171168
      %v7077 = vunpack.c.0.s8 %v7076
      %v7078 = vlaneseq
      %v7079 = vshrl.u32 %v7078, 7
      %v7080 = vsub.s32 %v7077, %v7079
      %v7081 = vrot.slane %v7074, %v7080
      %v7083 = vunpack.c.l.s4 1966171168
      %v7084 = vunpack.c.0.s8 %v7083
      %v7085 = vlaneseq
      %v7086 = vshrl.u32 %v7085, 7
      %v7087 = vsub.s32 %v7084, %v7086
      %v7088 = vrot.slane %v7068, %v7087
      %v7089 = vcombine.low %v7081, %v7088
      %v7091 = vunpack.c.l.s4 1966171168
      %v7092 = vunpack.c.0.s8 %v7091
      %v7093 = vlaneseq
      %v7094 = vshrl.u32 %v7093, 7
      %v7095 = vsub.s32 %v7092, %v7094
      %v7096 = vrot.slane %v7089, %v7095
      %v7098 = vadd.f32 %v6913, %v7096
      %s7099 = scalar_lea.vmem %s13, 288
      %v7100 = vld [vmem:[%s7099] sm:$0xff]
      %v7101 = vld [vmem:[%s7099 + $0x8] sm:$0xff]
      %v7102 = vld [vmem:[%s7099 + $0x10] sm:$0xff]
      %v7103 = vld [vmem:[%s7099 + $0x18] sm:$0xff]
      %v7104 = vld [vmem:[%s7099 + $0x20] sm:$0xff]
      %v7105 = vld [vmem:[%s7099 + $0x28] sm:$0xff]
      %v7106 = vld [vmem:[%s7099 + $0x30] sm:$0xff]
      %v7107 = vld [vmem:[%s7099 + $0x38] sm:$0xff]
      %v7108 = vld [vmem:[%s7099 + $0x40] sm:$0xff]
      %v7109 = vld [vmem:[%s7099 + $0x48] sm:$0xff]
      %v7110 = vld [vmem:[%s7099 + $0x50] sm:$0xff]
      %v7111 = vld [vmem:[%s7099 + $0x58] sm:$0xff]
      %v7112 = vrot.slane %v6543, 3
      %v7113 = vsel %vm960, %v7112, 0
      %7115 = vmatprep.subr.mxu0 %v7101
      %7116 = vmatpush1.msra.mxu0 %v7100
      %7117 = vmatprep.subr.mxu0 %v7104
      %7118 = vmatpush1.msra.mxu0 %v7103
      %7119 = vmatprep.subr.mxu0 %v7107
      %7120 = vmatpush1.msra.mxu0 %v7106
      %7121 = vmatprep.subr.mxu0 %v7110
      %7122 = vmatpush1.msra.mxu0 %v7109
      %7123 = vmatprep.subr.mxu0 0.0
      %7124 = vmatpush1.msra.mxu0 0.0
      %7125 = vmatprep.subr.mxu0 0.0
      %7126 = vmatpush1.msra.mxu0 0.0
      %7127 = vmatprep.subr.mxu0 0.0
      %7128 = vmatpush1.msra.mxu0 0.0
      %7129 = vmatprep.subr.mxu0 0.0
      %7130 = vmatpush1.msra.mxu0 0.0
      %7131 = vmatprep.subr.mxu0 0.0
      %7132 = vmatpush1.msra.mxu0 0.0
      %7133 = vmatprep.subr.mxu0 0.0
      %7134 = vmatpush1.msra.mxu0 0.0
      %7135 = vmatprep.subr.mxu0 0.0
      %7136 = vmatpush1.msra.mxu0 0.0
      %7137 = vmatprep.subr.mxu0 0.0
      %7138 = vmatpush1.msra.mxu0 0.0
      %7139 = vmatprep.subr.mxu0 0.0
      %7140 = vmatpush1.msra.mxu0 0.0
      %7141 = vmatprep.subr.mxu0 0.0
      %7142 = vmatpush1.msra.mxu0 0.0
      %7143 = vmatprep.subr.mxu0 0.0
      %7144 = vmatpush1.msra.mxu0 0.0
      %7145 = vmatprep.subr.mxu0 0.0
      %7146 = vmatpush1.msra.mxu0 0.0
      %7147 = vmatprep.subr.mxu0 0.0
      %7148 = vmatpush1.msra.mxu0 0.0
      %7149 = vmatprep.subr.mxu0 0.0
      %7150 = vmatpush1.msra.mxu0 0.0
      %7151 = vmatprep.subr.mxu0 0.0
      %7152 = vmatpush1.msra.mxu0 0.0
      %7153 = vmatprep.subr.mxu0 0.0
      %7154 = vmatpush1.msra.mxu0 0.0
      %7155 = vmatprep.subr.mxu0 0.0
      %7156 = vmatpush1.msra.mxu0 0.0
      %7157 = vmatprep.subr.mxu0 0.0
      %7158 = vmatpush1.msra.mxu0 0.0
      %7159 = vmatprep.subr.mxu0 0.0
      %7160 = vmatpush1.msra.mxu0 0.0
      %7161 = vmatprep.subr.mxu0 0.0
      %7162 = vmatpush1.msra.mxu0 0.0
      %7163 = vmatprep.subr.mxu0 0.0
      %7164 = vmatpush1.msra.mxu0 0.0
      %7165 = vmatprep.subr.mxu0 0.0
      %7166 = vmatpush1.msra.mxu0 0.0
      %7167 = vmatprep.subr.mxu0 0.0
      %7168 = vmatpush1.msra.mxu0 0.0
      %7169 = vmatprep.subr.mxu0 0.0
      %7170 = vmatpush1.msra.mxu0 0.0
      %7171 = vmatprep.subr.mxu0 0.0
      %7172 = vmatpush1.msra.mxu0 0.0
      %7173 = vmatprep.subr.mxu0 0.0
      %7174 = vmatpush1.msra.mxu0 0.0
      %7175 = vmatprep.subr.mxu0 0.0
      %7176 = vmatpush1.msra.mxu0 0.0
      %7177 = vmatprep.subr.mxu0 0.0
      %7178 = vmatpush1.msra.mxu0 0.0
      %7179 = vmatprep.mubr.f32.mxu0 0.0
      %7180 = vmatmul.mubr.f32.gmra.mrb[0].mxu0 %v7113
      %v7181 = vpop.f32.mrb[0].mxu0
      %v7182 = vadd.f32 0.0, %v7181
      %v7183 = vpop.f32.mrb[0].mxu0
      %v7184 = vadd.f32 0.0, %v7183
      %7185 = vdwg.mxu0
      %7186 = vmatprep.subr.mxu0 0.0
      %7187 = vmatpush1.msra.mxu0 %v7102
      %7188 = vmatprep.subr.mxu0 0.0
      %7189 = vmatpush1.msra.mxu0 %v7105
      %7190 = vmatprep.subr.mxu0 0.0
      %7191 = vmatpush1.msra.mxu0 %v7108
      %7192 = vmatprep.subr.mxu0 0.0
      %7193 = vmatpush1.msra.mxu0 %v7111
      %7194 = vmatprep.subr.mxu0 0.0
      %7195 = vmatpush1.msra.mxu0 0.0
      %7196 = vmatprep.subr.mxu0 0.0
      %7197 = vmatpush1.msra.mxu0 0.0
      %7198 = vmatprep.subr.mxu0 0.0
      %7199 = vmatpush1.msra.mxu0 0.0
      %7200 = vmatprep.subr.mxu0 0.0
      %7201 = vmatpush1.msra.mxu0 0.0
      %7202 = vmatprep.subr.mxu0 0.0
      %7203 = vmatpush1.msra.mxu0 0.0
      %7204 = vmatprep.subr.mxu0 0.0
      %7205 = vmatpush1.msra.mxu0 0.0
      %7206 = vmatprep.subr.mxu0 0.0
      %7207 = vmatpush1.msra.mxu0 0.0
      %7208 = vmatprep.subr.mxu0 0.0
      %7209 = vmatpush1.msra.mxu0 0.0
      %7210 = vmatprep.subr.mxu0 0.0
      %7211 = vmatpush1.msra.mxu0 0.0
      %7212 = vmatprep.subr.mxu0 0.0
      %7213 = vmatpush1.msra.mxu0 0.0
      %7214 = vmatprep.subr.mxu0 0.0
      %7215 = vmatpush1.msra.mxu0 0.0
      %7216 = vmatprep.subr.mxu0 0.0
      %7217 = vmatpush1.msra.mxu0 0.0
      %7218 = vmatprep.subr.mxu0 0.0
      %7219 = vmatpush1.msra.mxu0 0.0
      %7220 = vmatprep.subr.mxu0 0.0
      %7221 = vmatpush1.msra.mxu0 0.0
      %7222 = vmatprep.subr.mxu0 0.0
      %7223 = vmatpush1.msra.mxu0 0.0
      %7224 = vmatprep.subr.mxu0 0.0
      %7225 = vmatpush1.msra.mxu0 0.0
      %7226 = vmatprep.subr.mxu0 0.0
      %7227 = vmatpush1.msra.mxu0 0.0
      %7228 = vmatprep.subr.mxu0 0.0
      %7229 = vmatpush1.msra.mxu0 0.0
      %7230 = vmatprep.subr.mxu0 0.0
      %7231 = vmatpush1.msra.mxu0 0.0
      %7232 = vmatprep.subr.mxu0 0.0
      %7233 = vmatpush1.msra.mxu0 0.0
      %7234 = vmatprep.subr.mxu0 0.0
      %7235 = vmatpush1.msra.mxu0 0.0
      %7236 = vmatprep.subr.mxu0 0.0
      %7237 = vmatpush1.msra.mxu0 0.0
      %7238 = vmatprep.subr.mxu0 0.0
      %7239 = vmatpush1.msra.mxu0 0.0
      %7240 = vmatprep.subr.mxu0 0.0
      %7241 = vmatpush1.msra.mxu0 0.0
      %7242 = vmatprep.subr.mxu0 0.0
      %7243 = vmatpush1.msra.mxu0 0.0
      %7244 = vmatprep.subr.mxu0 0.0
      %7245 = vmatpush1.msra.mxu0 0.0
      %7246 = vmatprep.subr.mxu0 0.0
      %7247 = vmatpush1.msra.mxu0 0.0
      %7248 = vmatprep.subr.mxu0 0.0
      %7249 = vmatpush1.msra.mxu0 0.0
      %7250 = vmatprep.mubr.f32.mxu0 0.0
      %7251 = vmatmul.mubr.f32.gmra.mrb[0].mxu0 %v7113
      %v7252 = vpop.f32.mrb[0].mxu0
      %v7253 = vadd.f32 0.0, %v7252
      %v7254 = vpop.f32.mrb[0].mxu0
      %7255 = vdwg.mxu0
      %v7259 = vcombine.low %v7182, %v7184
      %v7261 = vunpack.c.l.s4 1966171168
      %v7262 = vunpack.c.0.s8 %v7261
      %v7263 = vlaneseq
      %v7264 = vshrl.u32 %v7263, 7
      %v7265 = vsub.s32 %v7262, %v7264
      %v7266 = vrot.slane %v7259, %v7265
      %v7268 = vunpack.c.l.s4 1966171168
      %v7269 = vunpack.c.0.s8 %v7268
      %v7270 = vlaneseq
      %v7271 = vshrl.u32 %v7270, 7
      %v7272 = vsub.s32 %v7269, %v7271
      %v7273 = vrot.slane %v7253, %v7272
      %v7274 = vcombine.low %v7266, %v7273
      %v7276 = vunpack.c.l.s4 1966171168
      %v7277 = vunpack.c.0.s8 %v7276
      %v7278 = vlaneseq
      %v7279 = vshrl.u32 %v7278, 7
      %v7280 = vsub.s32 %v7277, %v7279
      %v7281 = vrot.slane %v7274, %v7280
      %v7283 = vadd.f32 %v7098, %v7281
      %v7284 = vsub.f32 0.0, %v7283
      %v7285 = vmul.f32 %v7284, 1.442695
      %v7286 = vpow.pop %v7285
      %v7287 = vadd.f32 %v7286, 1.0
      %v7288 = vrcp.pop %v7287
      %v7289 = vmul.f32 1.0, %v7288
      %v7290 = vlaneseq
      %vm7291 = vcmp.ge.s32.totalorder %v7290, 0
      %vm7292 = vcmp.lt.s32.totalorder %v7290, 360
      %vm7293 = vmand %vm7291, %vm7292
      %7294 = vst.msk [vmem:[%s492] sm:$0x7] %vm7293, %v7289
      %p7295 = scmp.lt.s32.totalorder %s26, 1
      %s7296 = scalar_select %p7295, %s26, 1
      %s7297 = smul.addr %s7296, 3
      %s7298 = scalar_lea.vmem %s15, %s7297
      // Predicated region
      $region81: #{crepe_forward.1} parent=79 // pred_check
        %p7299 = pneg %p364
      $region82: #{crepe_forward.1} parent=79 // pred_check_branch
        %7301 = sbr.rel (%p7299) target = $region84
      $region83: #{crepe_forward.1} parent=79 // pred_region
        _
      $region84: #{crepe_forward.1} parent=79 // pred_fallthru
        _
    $region80: #{crepe_forward.1} parent=5 // pred_fallthru
      _
    %p7302 = scmp.le.s32.totalorder 2, %s21
    // Predicated region
    $region85: #{crepe_forward.1} parent=5 // pred_check
      %p7303 = pneg %p7302
    $region86: #{crepe_forward.1} parent=5 // pred_check_branch
      %7305 = sbr.rel (%p7303) target = $region88
    $region87: #{crepe_forward.1} parent=5 // pred_region
      %s7306 = ssub.s32 %s21, 2
      // Predicated region
      $region89: #{crepe_forward.1} parent=87 // pred_check
        %p7307 = pneg %p370
      $region90: #{crepe_forward.1} parent=87 // pred_check_branch
        %7309 = sbr.rel (%p7307) target = $region92
      $region91: #{crepe_forward.1} parent=87 // pred_region
        %p7310 = scmp.lt.s32.totalorder %s27, 1
        %s7311 = scalar_select %p7310, %s27, 1
        %s7312 = smul.addr %s7311, 3
        %s7313 = scalar_lea.vmem %s15, %s7312
      $region92: #{crepe_forward.1} parent=87 // pred_fallthru
        _
    $region88: #{crepe_forward.1} parent=5 // pred_fallthru
      _
  $region6: #{crepe_forward.1} parent=0 // loop_footer
    %s25 = sadd.s32 1, %s21
  $region7: #{crepe_forward.1} parent=0 // loop_footer_branch
    %20 = sbr.rel target = $region3
  $region8: #{crepe_forward.1} parent=0 // loop_exit
    _

</llo_original>
